<compile_context>
chip_gen: v6e
topology: v6e:2x2x1
jax: 0.10.0
libtpu: 0.0.40
codegen_flags: <defaults>
</compile_context>

<pallas_src>
import jax
import jax.numpy as jnp
from jax.experimental import pallas as pl
from jax.experimental.pallas import tpu as pltpu


_NUM_LAYERS = 3
_KSIZE = 3


def _afp_kernel(x_ref, w_ref, b_ref, o_ref, act_ref):
    # x_ref  : (1, C, H, W)   VMEM  input block (one batch element)
    # w_ref  : (L*C*C*9,)     SMEM  BN-folded conv weights, flat index
    #                               ((l*C + co)*C + ci)*9 + dy*3 + dx
    # b_ref  : (L*C,)         SMEM  BN-folded biases, flat index l*C + co
    # o_ref  : (1, C, H, W)   VMEM  output block
    # act_ref: (C, H+2, W+2)  VMEM  zero-padded activation planes (halo = 1)
    C, Hp, Wp = act_ref.shape
    H, W = Hp - 2, Wp - 2
    L, K = _NUM_LAYERS, _KSIZE

    # Zero the halo, then drop this batch element into the interior.
    act_ref[...] = jnp.zeros_like(act_ref)
    for ci in range(C):
        act_ref[ci, 1:H + 1, 1:W + 1] = x_ref[0, ci]

    for l in range(L):
        # Load the padded planes and pre-slice the 9 shifted (H, W) views once
        # per layer; they are reused by every output channel.
        shifted = []
        for ci in range(C):
            plane = act_ref[ci]                                 # (H+2, W+2)
            shifted.append([plane[dy:dy + H, dx:dx + W]
                            for dy in range(K) for dx in range(K)])

        outs = []
        for co in range(C):
            acc = jnp.full((H, W), b_ref[l * C + co], dtype=jnp.float32)
            for ci in range(C):
                base = ((l * C + co) * C + ci) * (K * K)
                for k in range(K * K):
                    acc = acc + w_ref[base + k] * shifted[ci][k]
            outs.append(jnp.maximum(acc, 0.0))                  # ReLU (BN folded)

        if l < L - 1:
            # Feed the next layer; the halo stays zero (padding=1 each layer).
            for co in range(C):
                act_ref[co, 1:H + 1, 1:W + 1] = outs[co]
        else:
            for co in range(C):
                o_ref[0, co] = outs[co].astype(o_ref.dtype)


def attribute_feature_processor(x, conv_w, conv_b, gamma, beta, mean, var, *,
                                eps=1e-5):
    """Fused 3 x (Conv3x3(pad=1) + BatchNorm(eval) + ReLU).

    x      : [N, C, H, W] float32 (NCHW, same as PyTorch)
    conv_w : [3, C, C, 3, 3]   (layer, out_ch, in_ch, kh, kw) -- PyTorch OIHW
    conv_b : [3, C]
    gamma, beta, mean, var : [3, C]   BatchNorm2d affine params / running stats
    """
    N, C, H, W = x.shape
    assert conv_w.shape == (_NUM_LAYERS, C, C, _KSIZE, _KSIZE)

    # ---- fold BatchNorm (inference mode) into conv weights / biases ----
    # TODO(synk): training-mode BN (batch statistics) would need a batch-wide
    # reduction pass; only inference-mode BN (running stats) is implemented.
    scale = gamma / jnp.sqrt(var + eps)                          # (L, C)
    w_fold = conv_w * scale[:, :, None, None, None]              # (L, C, C, 3, 3)
    b_fold = (conv_b - mean) * scale + beta                      # (L, C)
    w_flat = w_fold.reshape(-1).astype(jnp.float32)              # (L*C*C*9,)
    b_flat = b_fold.reshape(-1).astype(jnp.float32)              # (L*C,)

    return pl.pallas_call(
        _afp_kernel,
        out_shape=jax.ShapeDtypeStruct((N, C, H, W), x.dtype),
        grid_spec=pltpu.PrefetchScalarGridSpec(
            num_scalar_prefetch=0,
            grid=(N,),                                 # >=2 steps -> both v7x TCs
            in_specs=[
                pl.BlockSpec((1, C, H, W), lambda n: (n, 0, 0, 0)),  # x per batch
                pl.BlockSpec(memory_space=pltpu.SMEM),               # folded W
                pl.BlockSpec(memory_space=pltpu.SMEM),               # folded b
            ],
            out_specs=pl.BlockSpec((1, C, H, W), lambda n: (n, 0, 0, 0)),
            scratch_shapes=[pltpu.VMEM((C, H + 2, W + 2), jnp.float32)],
        ),
        compiler_params=pltpu.CompilerParams(
            dimension_semantics=("parallel",)),
    )(x, w_flat, b_flat)


def _reference(x, conv_w, conv_b, gamma, beta, mean, var, eps=1e-5):
    """Pure-JAX reference matching PyTorch Conv2d + BatchNorm2d(eval) + ReLU."""
    y = x
    for l in range(_NUM_LAYERS):
        y = jax.lax.conv_general_dilated(
            y, conv_w[l], window_strides=(1, 1), padding=((1, 1), (1, 1)),
            dimension_numbers=("NCHW", "OIHW", "NCHW"))
        y = y + conv_b[l].reshape(1, -1, 1, 1)
        y = (y - mean[l].reshape(1, -1, 1, 1)) / jnp.sqrt(
            var[l].reshape(1, -1, 1, 1) + eps)
        y = y * gamma[l].reshape(1, -1, 1, 1) + beta[l].reshape(1, -1, 1, 1)
        y = jnp.maximum(y, 0.0)
    return y


if __name__ == "__main__":
    key = jax.random.PRNGKey(0)
    N, C, H, W = 2, 4, 16, 16

    ks = jax.random.split(key, 7)
    x = jax.random.normal(ks[0], (N, C, H, W), dtype=jnp.float32)

    # Deterministic parameters (shapes match nn.Conv2d / nn.BatchNorm2d).
    conv_w = 0.2 * jax.random.normal(ks[1], (_NUM_LAYERS, C, C, 3, 3), jnp.float32)
    conv_b = 0.1 * jax.random.normal(ks[2], (_NUM_LAYERS, C), jnp.float32)
    gamma = 1.0 + 0.1 * jax.random.normal(ks[3], (_NUM_LAYERS, C), jnp.float32)
    beta = 0.1 * jax.random.normal(ks[4], (_NUM_LAYERS, C), jnp.float32)
    mean = 0.1 * jax.random.normal(ks[5], (_NUM_LAYERS, C), jnp.float32)
    var = 1.0 + 0.1 * jnp.abs(jax.random.normal(ks[6], (_NUM_LAYERS, C), jnp.float32))

    out = attribute_feature_processor(x, conv_w, conv_b, gamma, beta, mean, var)
    out = jax.block_until_ready(out)

    ref = _reference(x, conv_w, conv_b, gamma, beta, mean, var)
    assert out.shape == (N, C, H, W)
    assert jnp.allclose(out, ref, atol=1e-4, rtol=1e-4), "mismatch vs reference"

    print("KERNEL_OK")
</pallas_src>

<mosaic_0001>
module attributes {stable_mosaic.version = 11 : i64} {
  func.func @_afp_kernel(%arg0: i32, %arg1: memref<1x4x16x16xf32, #tpu.memory_space<vmem>>, %arg2: memref<432xf32, #tpu.memory_space<smem>>, %arg3: memref<12xf32, #tpu.memory_space<smem>>, %arg4: memref<1x4x16x16xf32, #tpu.memory_space<vmem>>, %arg5: memref<4x18x18xf32, #tpu.memory_space<vmem>>) attributes {dimension_semantics = [#tpu.dimension_semantics<parallel>], iteration_bounds = array<i64: 2>, scalar_prefetch = 0 : i64, scratch_operands = 1 : i64, tpu.core_type = #tpu.core_type<tc>, window_params = [{transform_indices = @transform_0, window_bounds = array<i64: 1, 4, 16, 16>}, {transform_indices = @transform_1, window_bounds = array<i64: 432>}, {transform_indices = @transform_2, window_bounds = array<i64: 12>}, {transform_indices = @transform_3, window_bounds = array<i64: 1, 4, 16, 16>}]} {
    %cst = arith.constant 0.000000e+00 : f32
    %0 = vector.broadcast %cst : f32 to vector<4x18x18xf32>
    %c0 = arith.constant 0 : index
    %c0_0 = arith.constant 0 : index
    %c0_1 = arith.constant 0 : index
    %1 = vector.load %arg5[%c0, %c0_0, %c0_1] : memref<4x18x18xf32, #tpu.memory_space<vmem>>, vector<4x18x18xf32>
    tpu.vector_store %arg5[%c0, %c0_0, %c0_1], %0 {strides = array<i32>} : memref<4x18x18xf32, #tpu.memory_space<vmem>>, vector<4x18x18xf32>,
    %c0_2 = arith.constant 0 : index
    %c0_3 = arith.constant 0 : index
    %c0_4 = arith.constant 0 : index
    %c0_5 = arith.constant 0 : index
    %2 = vector.load %arg1[%c0_2, %c0_3, %c0_4, %c0_5] : memref<1x4x16x16xf32, #tpu.memory_space<vmem>>, vector<1x1x16x16xf32>
    %3 = vector.shape_cast %2 : vector<1x1x16x16xf32> to vector<16x16xf32>
    %c0_6 = arith.constant 0 : index
    %c1 = arith.constant 1 : index
    %c1_7 = arith.constant 1 : index
    %4 = vector.load %arg5[%c0_6, %c1, %c1_7] : memref<4x18x18xf32, #tpu.memory_space<vmem>>, vector<1x16x16xf32>
    %5 = vector.shape_cast %4 : vector<1x16x16xf32> to vector<16x16xf32>
    %6 = vector.shape_cast %3 : vector<16x16xf32> to vector<1x16x16xf32>
    tpu.vector_store %arg5[%c0_6, %c1, %c1_7], %6 {strides = array<i32>} : memref<4x18x18xf32, #tpu.memory_space<vmem>>, vector<1x16x16xf32>,
    %c0_8 = arith.constant 0 : index
    %c1_9 = arith.constant 1 : index
    %c0_10 = arith.constant 0 : index
    %c0_11 = arith.constant 0 : index
    %7 = vector.load %arg1[%c0_8, %c1_9, %c0_10, %c0_11] : memref<1x4x16x16xf32, #tpu.memory_space<vmem>>, vector<1x1x16x16xf32>
    %8 = vector.shape_cast %7 : vector<1x1x16x16xf32> to vector<16x16xf32>
    %c1_12 = arith.constant 1 : index
    %c1_13 = arith.constant 1 : index
    %c1_14 = arith.constant 1 : index
    %9 = vector.load %arg5[%c1_12, %c1_13, %c1_14] : memref<4x18x18xf32, #tpu.memory_space<vmem>>, vector<1x16x16xf32>
    %10 = vector.shape_cast %9 : vector<1x16x16xf32> to vector<16x16xf32>
    %11 = vector.shape_cast %8 : vector<16x16xf32> to vector<1x16x16xf32>
    tpu.vector_store %arg5[%c1_12, %c1_13, %c1_14], %11 {strides = array<i32>} : memref<4x18x18xf32, #tpu.memory_space<vmem>>, vector<1x16x16xf32>,
    %c0_15 = arith.constant 0 : index
    %c2 = arith.constant 2 : index
    %c0_16 = arith.constant 0 : index
    %c0_17 = arith.constant 0 : index
    %12 = vector.load %arg1[%c0_15, %c2, %c0_16, %c0_17] : memref<1x4x16x16xf32, #tpu.memory_space<vmem>>, vector<1x1x16x16xf32>
    %13 = vector.shape_cast %12 : vector<1x1x16x16xf32> to vector<16x16xf32>
    %c2_18 = arith.constant 2 : index
    %c1_19 = arith.constant 1 : index
    %c1_20 = arith.constant 1 : index
    %14 = vector.load %arg5[%c2_18, %c1_19, %c1_20] : memref<4x18x18xf32, #tpu.memory_space<vmem>>, vector<1x16x16xf32>
    %15 = vector.shape_cast %14 : vector<1x16x16xf32> to vector<16x16xf32>
    %16 = vector.shape_cast %13 : vector<16x16xf32> to vector<1x16x16xf32>
    tpu.vector_store %arg5[%c2_18, %c1_19, %c1_20], %16 {strides = array<i32>} : memref<4x18x18xf32, #tpu.memory_space<vmem>>, vector<1x16x16xf32>,
    %c0_21 = arith.constant 0 : index
    %c3 = arith.constant 3 : index
    %c0_22 = arith.constant 0 : index
    %c0_23 = arith.constant 0 : index
    %17 = vector.load %arg1[%c0_21, %c3, %c0_22, %c0_23] : memref<1x4x16x16xf32, #tpu.memory_space<vmem>>, vector<1x1x16x16xf32>
    %18 = vector.shape_cast %17 : vector<1x1x16x16xf32> to vector<16x16xf32>
    %c3_24 = arith.constant 3 : index
    %c1_25 = arith.constant 1 : index
    %c1_26 = arith.constant 1 : index
    %19 = vector.load %arg5[%c3_24, %c1_25, %c1_26] : memref<4x18x18xf32, #tpu.memory_space<vmem>>, vector<1x16x16xf32>
    %20 = vector.shape_cast %19 : vector<1x16x16xf32> to vector<16x16xf32>
    %21 = vector.shape_cast %18 : vector<16x16xf32> to vector<1x16x16xf32>
    tpu.vector_store %arg5[%c3_24, %c1_25, %c1_26], %21 {strides = array<i32>} : memref<4x18x18xf32, #tpu.memory_space<vmem>>, vector<1x16x16xf32>,
    %c0_27 = arith.constant 0 : index
    %c0_28 = arith.constant 0 : index
    %c0_29 = arith.constant 0 : index
    %22 = vector.load %arg5[%c0_27, %c0_28, %c0_29] : memref<4x18x18xf32, #tpu.memory_space<vmem>>, vector<1x18x18xf32>
    %23 = vector.shape_cast %22 : vector<1x18x18xf32> to vector<18x18xf32>
    %24 = vector.extract_strided_slice %23 {offsets = [0, 0], sizes = [16, 16], strides = [1, 1]} : vector<18x18xf32> to vector<16x16xf32>
    %25 = vector.extract_strided_slice %23 {offsets = [0, 1], sizes = [16, 16], strides = [1, 1]} : vector<18x18xf32> to vector<16x16xf32>
    %26 = vector.extract_strided_slice %23 {offsets = [0, 2], sizes = [16, 16], strides = [1, 1]} : vector<18x18xf32> to vector<16x16xf32>
    %27 = vector.extract_strided_slice %23 {offsets = [1, 0], sizes = [16, 16], strides = [1, 1]} : vector<18x18xf32> to vector<16x16xf32>
    %28 = vector.extract_strided_slice %23 {offsets = [1, 1], sizes = [16, 16], strides = [1, 1]} : vector<18x18xf32> to vector<16x16xf32>
    %29 = vector.extract_strided_slice %23 {offsets = [1, 2], sizes = [16, 16], strides = [1, 1]} : vector<18x18xf32> to vector<16x16xf32>
    %30 = vector.extract_strided_slice %23 {offsets = [2, 0], sizes = [16, 16], strides = [1, 1]} : vector<18x18xf32> to vector<16x16xf32>
    %31 = vector.extract_strided_slice %23 {offsets = [2, 1], sizes = [16, 16], strides = [1, 1]} : vector<18x18xf32> to vector<16x16xf32>
    %32 = vector.extract_strided_slice %23 {offsets = [2, 2], sizes = [16, 16], strides = [1, 1]} : vector<18x18xf32> to vector<16x16xf32>
    %c1_30 = arith.constant 1 : index
    %c0_31 = arith.constant 0 : index
    %c0_32 = arith.constant 0 : index
    %33 = vector.load %arg5[%c1_30, %c0_31, %c0_32] : memref<4x18x18xf32, #tpu.memory_space<vmem>>, vector<1x18x18xf32>
    %34 = vector.shape_cast %33 : vector<1x18x18xf32> to vector<18x18xf32>
    %35 = vector.extract_strided_slice %34 {offsets = [0, 0], sizes = [16, 16], strides = [1, 1]} : vector<18x18xf32> to vector<16x16xf32>
    %36 = vector.extract_strided_slice %34 {offsets = [0, 1], sizes = [16, 16], strides = [1, 1]} : vector<18x18xf32> to vector<16x16xf32>
    %37 = vector.extract_strided_slice %34 {offsets = [0, 2], sizes = [16, 16], strides = [1, 1]} : vector<18x18xf32> to vector<16x16xf32>
    %38 = vector.extract_strided_slice %34 {offsets = [1, 0], sizes = [16, 16], strides = [1, 1]} : vector<18x18xf32> to vector<16x16xf32>
    %39 = vector.extract_strided_slice %34 {offsets = [1, 1], sizes = [16, 16], strides = [1, 1]} : vector<18x18xf32> to vector<16x16xf32>
    %40 = vector.extract_strided_slice %34 {offsets = [1, 2], sizes = [16, 16], strides = [1, 1]} : vector<18x18xf32> to vector<16x16xf32>
    %41 = vector.extract_strided_slice %34 {offsets = [2, 0], sizes = [16, 16], strides = [1, 1]} : vector<18x18xf32> to vector<16x16xf32>
    %42 = vector.extract_strided_slice %34 {offsets = [2, 1], sizes = [16, 16], strides = [1, 1]} : vector<18x18xf32> to vector<16x16xf32>
    %43 = vector.extract_strided_slice %34 {offsets = [2, 2], sizes = [16, 16], strides = [1, 1]} : vector<18x18xf32> to vector<16x16xf32>
    %c2_33 = arith.constant 2 : index
    %c0_34 = arith.constant 0 : index
    %c0_35 = arith.constant 0 : index
    %44 = vector.load %arg5[%c2_33, %c0_34, %c0_35] : memref<4x18x18xf32, #tpu.memory_space<vmem>>, vector<1x18x18xf32>
    %45 = vector.shape_cast %44 : vector<1x18x18xf32> to vector<18x18xf32>
    %46 = vector.extract_strided_slice %45 {offsets = [0, 0], sizes = [16, 16], strides = [1, 1]} : vector<18x18xf32> to vector<16x16xf32>
    %47 = vector.extract_strided_slice %45 {offsets = [0, 1], sizes = [16, 16], strides = [1, 1]} : vector<18x18xf32> to vector<16x16xf32>
    %48 = vector.extract_strided_slice %45 {offsets = [0, 2], sizes = [16, 16], strides = [1, 1]} : vector<18x18xf32> to vector<16x16xf32>
    %49 = vector.extract_strided_slice %45 {offsets = [1, 0], sizes = [16, 16], strides = [1, 1]} : vector<18x18xf32> to vector<16x16xf32>
    %50 = vector.extract_strided_slice %45 {offsets = [1, 1], sizes = [16, 16], strides = [1, 1]} : vector<18x18xf32> to vector<16x16xf32>
    %51 = vector.extract_strided_slice %45 {offsets = [1, 2], sizes = [16, 16], strides = [1, 1]} : vector<18x18xf32> to vector<16x16xf32>
    %52 = vector.extract_strided_slice %45 {offsets = [2, 0], sizes = [16, 16], strides = [1, 1]} : vector<18x18xf32> to vector<16x16xf32>
    %53 = vector.extract_strided_slice %45 {offsets = [2, 1], sizes = [16, 16], strides = [1, 1]} : vector<18x18xf32> to vector<16x16xf32>
    %54 = vector.extract_strided_slice %45 {offsets = [2, 2], sizes = [16, 16], strides = [1, 1]} : vector<18x18xf32> to vector<16x16xf32>
    %c3_36 = arith.constant 3 : index
    %c0_37 = arith.constant 0 : index
    %c0_38 = arith.constant 0 : index
    %55 = vector.load %arg5[%c3_36, %c0_37, %c0_38] : memref<4x18x18xf32, #tpu.memory_space<vmem>>, vector<1x18x18xf32>
    %56 = vector.shape_cast %55 : vector<1x18x18xf32> to vector<18x18xf32>
    %57 = vector.extract_strided_slice %56 {offsets = [0, 0], sizes = [16, 16], strides = [1, 1]} : vector<18x18xf32> to vector<16x16xf32>
    %58 = vector.extract_strided_slice %56 {offsets = [0, 1], sizes = [16, 16], strides = [1, 1]} : vector<18x18xf32> to vector<16x16xf32>
    %59 = vector.extract_strided_slice %56 {offsets = [0, 2], sizes = [16, 16], strides = [1, 1]} : vector<18x18xf32> to vector<16x16xf32>
    %60 = vector.extract_strided_slice %56 {offsets = [1, 0], sizes = [16, 16], strides = [1, 1]} : vector<18x18xf32> to vector<16x16xf32>
    %61 = vector.extract_strided_slice %56 {offsets = [1, 1], sizes = [16, 16], strides = [1, 1]} : vector<18x18xf32> to vector<16x16xf32>
    %62 = vector.extract_strided_slice %56 {offsets = [1, 2], sizes = [16, 16], strides = [1, 1]} : vector<18x18xf32> to vector<16x16xf32>
    %63 = vector.extract_strided_slice %56 {offsets = [2, 0], sizes = [16, 16], strides = [1, 1]} : vector<18x18xf32> to vector<16x16xf32>
    %64 = vector.extract_strided_slice %56 {offsets = [2, 1], sizes = [16, 16], strides = [1, 1]} : vector<18x18xf32> to vector<16x16xf32>
    %65 = vector.extract_strided_slice %56 {offsets = [2, 2], sizes = [16, 16], strides = [1, 1]} : vector<18x18xf32> to vector<16x16xf32>
    %c0_39 = arith.constant 0 : index
    %66 = memref.load %arg3[%c0_39] : memref<12xf32, #tpu.memory_space<smem>>
    %67 = vector.broadcast %66 : f32 to vector<16x16xf32>
    %c0_40 = arith.constant 0 : index
    %68 = memref.load %arg2[%c0_40] : memref<432xf32, #tpu.memory_space<smem>>
    %69 = vector.broadcast %68 : f32 to vector<16x16xf32>
    %70 = arith.mulf %69, %24 : vector<16x16xf32>
    %71 = arith.addf %67, %70 : vector<16x16xf32>
    %c1_41 = arith.constant 1 : index
    %72 = memref.load %arg2[%c1_41] : memref<432xf32, #tpu.memory_space<smem>>
    %73 = vector.broadcast %72 : f32 to vector<16x16xf32>
    %74 = arith.mulf %73, %25 : vector<16x16xf32>
    %75 = arith.addf %71, %74 : vector<16x16xf32>
    %c2_42 = arith.constant 2 : index
    %76 = memref.load %arg2[%c2_42] : memref<432xf32, #tpu.memory_space<smem>>
    %77 = vector.broadcast %76 : f32 to vector<16x16xf32>
    %78 = arith.mulf %77, %26 : vector<16x16xf32>
    %79 = arith.addf %75, %78 : vector<16x16xf32>
    %c3_43 = arith.constant 3 : index
    %80 = memref.load %arg2[%c3_43] : memref<432xf32, #tpu.memory_space<smem>>
    %81 = vector.broadcast %80 : f32 to vector<16x16xf32>
    %82 = arith.mulf %81, %27 : vector<16x16xf32>
    %83 = arith.addf %79, %82 : vector<16x16xf32>
    %c4 = arith.constant 4 : index
    %84 = memref.load %arg2[%c4] : memref<432xf32, #tpu.memory_space<smem>>
    %85 = vector.broadcast %84 : f32 to vector<16x16xf32>
    %86 = arith.mulf %85, %28 : vector<16x16xf32>
    %87 = arith.addf %83, %86 : vector<16x16xf32>
    %c5 = arith.constant 5 : index
    %88 = memref.load %arg2[%c5] : memref<432xf32, #tpu.memory_space<smem>>
    %89 = vector.broadcast %88 : f32 to vector<16x16xf32>
    %90 = arith.mulf %89, %29 : vector<16x16xf32>
    %91 = arith.addf %87, %90 : vector<16x16xf32>
    %c6 = arith.constant 6 : index
    %92 = memref.load %arg2[%c6] : memref<432xf32, #tpu.memory_space<smem>>
    %93 = vector.broadcast %92 : f32 to vector<16x16xf32>
    %94 = arith.mulf %93, %30 : vector<16x16xf32>
    %95 = arith.addf %91, %94 : vector<16x16xf32>
    %c7 = arith.constant 7 : index
    %96 = memref.load %arg2[%c7] : memref<432xf32, #tpu.memory_space<smem>>
    %97 = vector.broadcast %96 : f32 to vector<16x16xf32>
    %98 = arith.mulf %97, %31 : vector<16x16xf32>
    %99 = arith.addf %95, %98 : vector<16x16xf32>
    %c8 = arith.constant 8 : index
    %100 = memref.load %arg2[%c8] : memref<432xf32, #tpu.memory_space<smem>>
    %101 = vector.broadcast %100 : f32 to vector<16x16xf32>
    %102 = arith.mulf %101, %32 : vector<16x16xf32>
    %103 = arith.addf %99, %102 : vector<16x16xf32>
    %c9 = arith.constant 9 : index
    %104 = memref.load %arg2[%c9] : memref<432xf32, #tpu.memory_space<smem>>
    %105 = vector.broadcast %104 : f32 to vector<16x16xf32>
    %106 = arith.mulf %105, %35 : vector<16x16xf32>
    %107 = arith.addf %103, %106 : vector<16x16xf32>
    %c10 = arith.constant 10 : index
    %108 = memref.load %arg2[%c10] : memref<432xf32, #tpu.memory_space<smem>>
    %109 = vector.broadcast %108 : f32 to vector<16x16xf32>
    %110 = arith.mulf %109, %36 : vector<16x16xf32>
    %111 = arith.addf %107, %110 : vector<16x16xf32>
    %c11 = arith.constant 11 : index
    %112 = memref.load %arg2[%c11] : memref<432xf32, #tpu.memory_space<smem>>
    %113 = vector.broadcast %112 : f32 to vector<16x16xf32>
    %114 = arith.mulf %113, %37 : vector<16x16xf32>
    %115 = arith.addf %111, %114 : vector<16x16xf32>
    %c12 = arith.constant 12 : index
    %116 = memref.load %arg2[%c12] : memref<432xf32, #tpu.memory_space<smem>>
    %117 = vector.broadcast %116 : f32 to vector<16x16xf32>
    %118 = arith.mulf %117, %38 : vector<16x16xf32>
    %119 = arith.addf %115, %118 : vector<16x16xf32>
    %c13 = arith.constant 13 : index
    %120 = memref.load %arg2[%c13] : memref<432xf32, #tpu.memory_space<smem>>
    %121 = vector.broadcast %120 : f32 to vector<16x16xf32>
    %122 = arith.mulf %121, %39 : vector<16x16xf32>
    %123 = arith.addf %119, %122 : vector<16x16xf32>
    %c14 = arith.constant 14 : index
    %124 = memref.load %arg2[%c14] : memref<432xf32, #tpu.memory_space<smem>>
    %125 = vector.broadcast %124 : f32 to vector<16x16xf32>
    %126 = arith.mulf %125, %40 : vector<16x16xf32>
    %127 = arith.addf %123, %126 : vector<16x16xf32>
    %c15 = arith.constant 15 : index
    %128 = memref.load %arg2[%c15] : memref<432xf32, #tpu.memory_space<smem>>
    %129 = vector.broadcast %128 : f32 to vector<16x16xf32>
    %130 = arith.mulf %129, %41 : vector<16x16xf32>
    %131 = arith.addf %127, %130 : vector<16x16xf32>
    %c16 = arith.constant 16 : index
    %132 = memref.load %arg2[%c16] : memref<432xf32, #tpu.memory_space<smem>>
    %133 = vector.broadcast %132 : f32 to vector<16x16xf32>
    %134 = arith.mulf %133, %42 : vector<16x16xf32>
    %135 = arith.addf %131, %134 : vector<16x16xf32>
    %c17 = arith.constant 17 : index
    %136 = memref.load %arg2[%c17] : memref<432xf32, #tpu.memory_space<smem>>
    %137 = vector.broadcast %136 : f32 to vector<16x16xf32>
    %138 = arith.mulf %137, %43 : vector<16x16xf32>
    %139 = arith.addf %135, %138 : vector<16x16xf32>
    %c18 = arith.constant 18 : index
    %140 = memref.load %arg2[%c18] : memref<432xf32, #tpu.memory_space<smem>>
    %141 = vector.broadcast %140 : f32 to vector<16x16xf32>
    %142 = arith.mulf %141, %46 : vector<16x16xf32>
    %143 = arith.addf %139, %142 : vector<16x16xf32>
    %c19 = arith.constant 19 : index
    %144 = memref.load %arg2[%c19] : memref<432xf32, #tpu.memory_space<smem>>
    %145 = vector.broadcast %144 : f32 to vector<16x16xf32>
    %146 = arith.mulf %145, %47 : vector<16x16xf32>
    %147 = arith.addf %143, %146 : vector<16x16xf32>
    %c20 = arith.constant 20 : index
    %148 = memref.load %arg2[%c20] : memref<432xf32, #tpu.memory_space<smem>>
    %149 = vector.broadcast %148 : f32 to vector<16x16xf32>
    %150 = arith.mulf %149, %48 : vector<16x16xf32>
    %151 = arith.addf %147, %150 : vector<16x16xf32>
    %c21 = arith.constant 21 : index
    %152 = memref.load %arg2[%c21] : memref<432xf32, #tpu.memory_space<smem>>
    %153 = vector.broadcast %152 : f32 to vector<16x16xf32>
    %154 = arith.mulf %153, %49 : vector<16x16xf32>
    %155 = arith.addf %151, %154 : vector<16x16xf32>
    %c22 = arith.constant 22 : index
    %156 = memref.load %arg2[%c22] : memref<432xf32, #tpu.memory_space<smem>>
    %157 = vector.broadcast %156 : f32 to vector<16x16xf32>
    %158 = arith.mulf %157, %50 : vector<16x16xf32>
    %159 = arith.addf %155, %158 : vector<16x16xf32>
    %c23 = arith.constant 23 : index
    %160 = memref.load %arg2[%c23] : memref<432xf32, #tpu.memory_space<smem>>
    %161 = vector.broadcast %160 : f32 to vector<16x16xf32>
    %162 = arith.mulf %161, %51 : vector<16x16xf32>
    %163 = arith.addf %159, %162 : vector<16x16xf32>
    %c24 = arith.constant 24 : index
    %164 = memref.load %arg2[%c24] : memref<432xf32, #tpu.memory_space<smem>>
    %165 = vector.broadcast %164 : f32 to vector<16x16xf32>
    %166 = arith.mulf %165, %52 : vector<16x16xf32>
    %167 = arith.addf %163, %166 : vector<16x16xf32>
    %c25 = arith.constant 25 : index
    %168 = memref.load %arg2[%c25] : memref<432xf32, #tpu.memory_space<smem>>
    %169 = vector.broadcast %168 : f32 to vector<16x16xf32>
    %170 = arith.mulf %169, %53 : vector<16x16xf32>
    %171 = arith.addf %167, %170 : vector<16x16xf32>
    %c26 = arith.constant 26 : index
    %172 = memref.load %arg2[%c26] : memref<432xf32, #tpu.memory_space<smem>>
    %173 = vector.broadcast %172 : f32 to vector<16x16xf32>
    %174 = arith.mulf %173, %54 : vector<16x16xf32>
    %175 = arith.addf %171, %174 : vector<16x16xf32>
    %c27 = arith.constant 27 : index
    %176 = memref.load %arg2[%c27] : memref<432xf32, #tpu.memory_space<smem>>
    %177 = vector.broadcast %176 : f32 to vector<16x16xf32>
    %178 = arith.mulf %177, %57 : vector<16x16xf32>
    %179 = arith.addf %175, %178 : vector<16x16xf32>
    %c28 = arith.constant 28 : index
    %180 = memref.load %arg2[%c28] : memref<432xf32, #tpu.memory_space<smem>>
    %181 = vector.broadcast %180 : f32 to vector<16x16xf32>
    %182 = arith.mulf %181, %58 : vector<16x16xf32>
    %183 = arith.addf %179, %182 : vector<16x16xf32>
    %c29 = arith.constant 29 : index
    %184 = memref.load %arg2[%c29] : memref<432xf32, #tpu.memory_space<smem>>
    %185 = vector.broadcast %184 : f32 to vector<16x16xf32>
    %186 = arith.mulf %185, %59 : vector<16x16xf32>
    %187 = arith.addf %183, %186 : vector<16x16xf32>
    %c30 = arith.constant 30 : index
    %188 = memref.load %arg2[%c30] : memref<432xf32, #tpu.memory_space<smem>>
    %189 = vector.broadcast %188 : f32 to vector<16x16xf32>
    %190 = arith.mulf %189, %60 : vector<16x16xf32>
    %191 = arith.addf %187, %190 : vector<16x16xf32>
    %c31 = arith.constant 31 : index
    %192 = memref.load %arg2[%c31] : memref<432xf32, #tpu.memory_space<smem>>
    %193 = vector.broadcast %192 : f32 to vector<16x16xf32>
    %194 = arith.mulf %193, %61 : vector<16x16xf32>
    %195 = arith.addf %191, %194 : vector<16x16xf32>
    %c32 = arith.constant 32 : index
    %196 = memref.load %arg2[%c32] : memref<432xf32, #tpu.memory_space<smem>>
    %197 = vector.broadcast %196 : f32 to vector<16x16xf32>
    %198 = arith.mulf %197, %62 : vector<16x16xf32>
    %199 = arith.addf %195, %198 : vector<16x16xf32>
    %c33 = arith.constant 33 : index
    %200 = memref.load %arg2[%c33] : memref<432xf32, #tpu.memory_space<smem>>
    %201 = vector.broadcast %200 : f32 to vector<16x16xf32>
    %202 = arith.mulf %201, %63 : vector<16x16xf32>
    %203 = arith.addf %199, %202 : vector<16x16xf32>
    %c34 = arith.constant 34 : index
    %204 = memref.load %arg2[%c34] : memref<432xf32, #tpu.memory_space<smem>>
    %205 = vector.broadcast %204 : f32 to vector<16x16xf32>
    %206 = arith.mulf %205, %64 : vector<16x16xf32>
    %207 = arith.addf %203, %206 : vector<16x16xf32>
    %c35 = arith.constant 35 : index
    %208 = memref.load %arg2[%c35] : memref<432xf32, #tpu.memory_space<smem>>
    %209 = vector.broadcast %208 : f32 to vector<16x16xf32>
    %210 = arith.mulf %209, %65 : vector<16x16xf32>
    %211 = arith.addf %207, %210 : vector<16x16xf32>
    %cst_44 = arith.constant 0.000000e+00 : f32
    %212 = vector.broadcast %cst_44 : f32 to vector<16x16xf32>
    %213 = arith.maximumf %211, %212 : vector<16x16xf32>
    %c1_45 = arith.constant 1 : index
    %214 = memref.load %arg3[%c1_45] : memref<12xf32, #tpu.memory_space<smem>>
    %215 = vector.broadcast %214 : f32 to vector<16x16xf32>
    %c36 = arith.constant 36 : index
    %216 = memref.load %arg2[%c36] : memref<432xf32, #tpu.memory_space<smem>>
    %217 = vector.broadcast %216 : f32 to vector<16x16xf32>
    %218 = arith.mulf %217, %24 : vector<16x16xf32>
    %219 = arith.addf %215, %218 : vector<16x16xf32>
    %c37 = arith.constant 37 : index
    %220 = memref.load %arg2[%c37] : memref<432xf32, #tpu.memory_space<smem>>
    %221 = vector.broadcast %220 : f32 to vector<16x16xf32>
    %222 = arith.mulf %221, %25 : vector<16x16xf32>
    %223 = arith.addf %219, %222 : vector<16x16xf32>
    %c38 = arith.constant 38 : index
    %224 = memref.load %arg2[%c38] : memref<432xf32, #tpu.memory_space<smem>>
    %225 = vector.broadcast %224 : f32 to vector<16x16xf32>
    %226 = arith.mulf %225, %26 : vector<16x16xf32>
    %227 = arith.addf %223, %226 : vector<16x16xf32>
    %c39 = arith.constant 39 : index
    %228 = memref.load %arg2[%c39] : memref<432xf32, #tpu.memory_space<smem>>
    %229 = vector.broadcast %228 : f32 to vector<16x16xf32>
    %230 = arith.mulf %229, %27 : vector<16x16xf32>
    %231 = arith.addf %227, %230 : vector<16x16xf32>
    %c40 = arith.constant 40 : index
    %232 = memref.load %arg2[%c40] : memref<432xf32, #tpu.memory_space<smem>>
    %233 = vector.broadcast %232 : f32 to vector<16x16xf32>
    %234 = arith.mulf %233, %28 : vector<16x16xf32>
    %235 = arith.addf %231, %234 : vector<16x16xf32>
    %c41 = arith.constant 41 : index
    %236 = memref.load %arg2[%c41] : memref<432xf32, #tpu.memory_space<smem>>
    %237 = vector.broadcast %236 : f32 to vector<16x16xf32>
    %238 = arith.mulf %237, %29 : vector<16x16xf32>
    %239 = arith.addf %235, %238 : vector<16x16xf32>
    %c42 = arith.constant 42 : index
    %240 = memref.load %arg2[%c42] : memref<432xf32, #tpu.memory_space<smem>>
    %241 = vector.broadcast %240 : f32 to vector<16x16xf32>
    %242 = arith.mulf %241, %30 : vector<16x16xf32>
    %243 = arith.addf %239, %242 : vector<16x16xf32>
    %c43 = arith.constant 43 : index
    %244 = memref.load %arg2[%c43] : memref<432xf32, #tpu.memory_space<smem>>
    %245 = vector.broadcast %244 : f32 to vector<16x16xf32>
    %246 = arith.mulf %245, %31 : vector<16x16xf32>
    %247 = arith.addf %243, %246 : vector<16x16xf32>
    %c44 = arith.constant 44 : index
    %248 = memref.load %arg2[%c44] : memref<432xf32, #tpu.memory_space<smem>>
    %249 = vector.broadcast %248 : f32 to vector<16x16xf32>
    %250 = arith.mulf %249, %32 : vector<16x16xf32>
    %251 = arith.addf %247, %250 : vector<16x16xf32>
    %c45 = arith.constant 45 : index
    %252 = memref.load %arg2[%c45] : memref<432xf32, #tpu.memory_space<smem>>
    %253 = vector.broadcast %252 : f32 to vector<16x16xf32>
    %254 = arith.mulf %253, %35 : vector<16x16xf32>
    %255 = arith.addf %251, %254 : vector<16x16xf32>
    %c46 = arith.constant 46 : index
    %256 = memref.load %arg2[%c46] : memref<432xf32, #tpu.memory_space<smem>>
    %257 = vector.broadcast %256 : f32 to vector<16x16xf32>
    %258 = arith.mulf %257, %36 : vector<16x16xf32>
    %259 = arith.addf %255, %258 : vector<16x16xf32>
    %c47 = arith.constant 47 : index
    %260 = memref.load %arg2[%c47] : memref<432xf32, #tpu.memory_space<smem>>
    %261 = vector.broadcast %260 : f32 to vector<16x16xf32>
    %262 = arith.mulf %261, %37 : vector<16x16xf32>
    %263 = arith.addf %259, %262 : vector<16x16xf32>
    %c48 = arith.constant 48 : index
    %264 = memref.load %arg2[%c48] : memref<432xf32, #tpu.memory_space<smem>>
    %265 = vector.broadcast %264 : f32 to vector<16x16xf32>
    %266 = arith.mulf %265, %38 : vector<16x16xf32>
    %267 = arith.addf %263, %266 : vector<16x16xf32>
    %c49 = arith.constant 49 : index
    %268 = memref.load %arg2[%c49] : memref<432xf32, #tpu.memory_space<smem>>
    %269 = vector.broadcast %268 : f32 to vector<16x16xf32>
    %270 = arith.mulf %269, %39 : vector<16x16xf32>
    %271 = arith.addf %267, %270 : vector<16x16xf32>
    %c50 = arith.constant 50 : index
    %272 = memref.load %arg2[%c50] : memref<432xf32, #tpu.memory_space<smem>>
    %273 = vector.broadcast %272 : f32 to vector<16x16xf32>
    %274 = arith.mulf %273, %40 : vector<16x16xf32>
    %275 = arith.addf %271, %274 : vector<16x16xf32>
    %c51 = arith.constant 51 : index
    %276 = memref.load %arg2[%c51] : memref<432xf32, #tpu.memory_space<smem>>
    %277 = vector.broadcast %276 : f32 to vector<16x16xf32>
    %278 = arith.mulf %277, %41 : vector<16x16xf32>
    %279 = arith.addf %275, %278 : vector<16x16xf32>
    %c52 = arith.constant 52 : index
    %280 = memref.load %arg2[%c52] : memref<432xf32, #tpu.memory_space<smem>>
    %281 = vector.broadcast %280 : f32 to vector<16x16xf32>
    %282 = arith.mulf %281, %42 : vector<16x16xf32>
    %283 = arith.addf %279, %282 : vector<16x16xf32>
    %c53 = arith.constant 53 : index
    %284 = memref.load %arg2[%c53] : memref<432xf32, #tpu.memory_space<smem>>
    %285 = vector.broadcast %284 : f32 to vector<16x16xf32>
    %286 = arith.mulf %285, %43 : vector<16x16xf32>
    %287 = arith.addf %283, %286 : vector<16x16xf32>
    %c54 = arith.constant 54 : index
    %288 = memref.load %arg2[%c54] : memref<432xf32, #tpu.memory_space<smem>>
    %289 = vector.broadcast %288 : f32 to vector<16x16xf32>
    %290 = arith.mulf %289, %46 : vector<16x16xf32>
    %291 = arith.addf %287, %290 : vector<16x16xf32>
    %c55 = arith.constant 55 : index
    %292 = memref.load %arg2[%c55] : memref<432xf32, #tpu.memory_space<smem>>
    %293 = vector.broadcast %292 : f32 to vector<16x16xf32>
    %294 = arith.mulf %293, %47 : vector<16x16xf32>
    %295 = arith.addf %291, %294 : vector<16x16xf32>
    %c56 = arith.constant 56 : index
    %296 = memref.load %arg2[%c56] : memref<432xf32, #tpu.memory_space<smem>>
    %297 = vector.broadcast %296 : f32 to vector<16x16xf32>
    %298 = arith.mulf %297, %48 : vector<16x16xf32>
    %299 = arith.addf %295, %298 : vector<16x16xf32>
    %c57 = arith.constant 57 : index
    %300 = memref.load %arg2[%c57] : memref<432xf32, #tpu.memory_space<smem>>
    %301 = vector.broadcast %300 : f32 to vector<16x16xf32>
    %302 = arith.mulf %301, %49 : vector<16x16xf32>
    %303 = arith.addf %299, %302 : vector<16x16xf32>
    %c58 = arith.constant 58 : index
    %304 = memref.load %arg2[%c58] : memref<432xf32, #tpu.memory_space<smem>>
    %305 = vector.broadcast %304 : f32 to vector<16x16xf32>
    %306 = arith.mulf %305, %50 : vector<16x16xf32>
    %307 = arith.addf %303, %306 : vector<16x16xf32>
    %c59 = arith.constant 59 : index
    %308 = memref.load %arg2[%c59] : memref<432xf32, #tpu.memory_space<smem>>
    %309 = vector.broadcast %308 : f32 to vector<16x16xf32>
    %310 = arith.mulf %309, %51 : vector<16x16xf32>
    %311 = arith.addf %307, %310 : vector<16x16xf32>
    %c60 = arith.constant 60 : index
    %312 = memref.load %arg2[%c60] : memref<432xf32, #tpu.memory_space<smem>>
    %313 = vector.broadcast %312 : f32 to vector<16x16xf32>
    %314 = arith.mulf %313, %52 : vector<16x16xf32>
    %315 = arith.addf %311, %314 : vector<16x16xf32>
    %c61 = arith.constant 61 : index
    %316 = memref.load %arg2[%c61] : memref<432xf32, #tpu.memory_space<smem>>
    %317 = vector.broadcast %316 : f32 to vector<16x16xf32>
    %318 = arith.mulf %317, %53 : vector<16x16xf32>
    %319 = arith.addf %315, %318 : vector<16x16xf32>
    %c62 = arith.constant 62 : index
    %320 = memref.load %arg2[%c62] : memref<432xf32, #tpu.memory_space<smem>>
    %321 = vector.broadcast %320 : f32 to vector<16x16xf32>
    %322 = arith.mulf %321, %54 : vector<16x16xf32>
    %323 = arith.addf %319, %322 : vector<16x16xf32>
    %c63 = arith.constant 63 : index
    %324 = memref.load %arg2[%c63] : memref<432xf32, #tpu.memory_space<smem>>
    %325 = vector.broadcast %324 : f32 to vector<16x16xf32>
    %326 = arith.mulf %325, %57 : vector<16x16xf32>
    %327 = arith.addf %323, %326 : vector<16x16xf32>
    %c64 = arith.constant 64 : index
    %328 = memref.load %arg2[%c64] : memref<432xf32, #tpu.memory_space<smem>>
    %329 = vector.broadcast %328 : f32 to vector<16x16xf32>
    %330 = arith.mulf %329, %58 : vector<16x16xf32>
    %331 = arith.addf %327, %330 : vector<16x16xf32>
    %c65 = arith.constant 65 : index
    %332 = memref.load %arg2[%c65] : memref<432xf32, #tpu.memory_space<smem>>
    %333 = vector.broadcast %332 : f32 to vector<16x16xf32>
    %334 = arith.mulf %333, %59 : vector<16x16xf32>
    %335 = arith.addf %331, %334 : vector<16x16xf32>
    %c66 = arith.constant 66 : index
    %336 = memref.load %arg2[%c66] : memref<432xf32, #tpu.memory_space<smem>>
    %337 = vector.broadcast %336 : f32 to vector<16x16xf32>
    %338 = arith.mulf %337, %60 : vector<16x16xf32>
    %339 = arith.addf %335, %338 : vector<16x16xf32>
    %c67 = arith.constant 67 : index
    %340 = memref.load %arg2[%c67] : memref<432xf32, #tpu.memory_space<smem>>
    %341 = vector.broadcast %340 : f32 to vector<16x16xf32>
    %342 = arith.mulf %341, %61 : vector<16x16xf32>
    %343 = arith.addf %339, %342 : vector<16x16xf32>
    %c68 = arith.constant 68 : index
    %344 = memref.load %arg2[%c68] : memref<432xf32, #tpu.memory_space<smem>>
    %345 = vector.broadcast %344 : f32 to vector<16x16xf32>
    %346 = arith.mulf %345, %62 : vector<16x16xf32>
    %347 = arith.addf %343, %346 : vector<16x16xf32>
    %c69 = arith.constant 69 : index
    %348 = memref.load %arg2[%c69] : memref<432xf32, #tpu.memory_space<smem>>
    %349 = vector.broadcast %348 : f32 to vector<16x16xf32>
    %350 = arith.mulf %349, %63 : vector<16x16xf32>
    %351 = arith.addf %347, %350 : vector<16x16xf32>
    %c70 = arith.constant 70 : index
    %352 = memref.load %arg2[%c70] : memref<432xf32, #tpu.memory_space<smem>>
    %353 = vector.broadcast %352 : f32 to vector<16x16xf32>
    %354 = arith.mulf %353, %64 : vector<16x16xf32>
    %355 = arith.addf %351, %354 : vector<16x16xf32>
    %c71 = arith.constant 71 : index
    %356 = memref.load %arg2[%c71] : memref<432xf32, #tpu.memory_space<smem>>
    %357 = vector.broadcast %356 : f32 to vector<16x16xf32>
    %358 = arith.mulf %357, %65 : vector<16x16xf32>
    %359 = arith.addf %355, %358 : vector<16x16xf32>
    %cst_46 = arith.constant 0.000000e+00 : f32
    %360 = vector.broadcast %cst_46 : f32 to vector<16x16xf32>
    %361 = arith.maximumf %359, %360 : vector<16x16xf32>
    %c2_47 = arith.constant 2 : index
    %362 = memref.load %arg3[%c2_47] : memref<12xf32, #tpu.memory_space<smem>>
    %363 = vector.broadcast %362 : f32 to vector<16x16xf32>
    %c72 = arith.constant 72 : index
    %364 = memref.load %arg2[%c72] : memref<432xf32, #tpu.memory_space<smem>>
    %365 = vector.broadcast %364 : f32 to vector<16x16xf32>
    %366 = arith.mulf %365, %24 : vector<16x16xf32>
    %367 = arith.addf %363, %366 : vector<16x16xf32>
    %c73 = arith.constant 73 : index
    %368 = memref.load %arg2[%c73] : memref<432xf32, #tpu.memory_space<smem>>
    %369 = vector.broadcast %368 : f32 to vector<16x16xf32>
    %370 = arith.mulf %369, %25 : vector<16x16xf32>
    %371 = arith.addf %367, %370 : vector<16x16xf32>
    %c74 = arith.constant 74 : index
    %372 = memref.load %arg2[%c74] : memref<432xf32, #tpu.memory_space<smem>>
    %373 = vector.broadcast %372 : f32 to vector<16x16xf32>
    %374 = arith.mulf %373, %26 : vector<16x16xf32>
    %375 = arith.addf %371, %374 : vector<16x16xf32>
    %c75 = arith.constant 75 : index
    %376 = memref.load %arg2[%c75] : memref<432xf32, #tpu.memory_space<smem>>
    %377 = vector.broadcast %376 : f32 to vector<16x16xf32>
    %378 = arith.mulf %377, %27 : vector<16x16xf32>
    %379 = arith.addf %375, %378 : vector<16x16xf32>
    %c76 = arith.constant 76 : index
    %380 = memref.load %arg2[%c76] : memref<432xf32, #tpu.memory_space<smem>>
    %381 = vector.broadcast %380 : f32 to vector<16x16xf32>
    %382 = arith.mulf %381, %28 : vector<16x16xf32>
    %383 = arith.addf %379, %382 : vector<16x16xf32>
    %c77 = arith.constant 77 : index
    %384 = memref.load %arg2[%c77] : memref<432xf32, #tpu.memory_space<smem>>
    %385 = vector.broadcast %384 : f32 to vector<16x16xf32>
    %386 = arith.mulf %385, %29 : vector<16x16xf32>
    %387 = arith.addf %383, %386 : vector<16x16xf32>
    %c78 = arith.constant 78 : index
    %388 = memref.load %arg2[%c78] : memref<432xf32, #tpu.memory_space<smem>>
    %389 = vector.broadcast %388 : f32 to vector<16x16xf32>
    %390 = arith.mulf %389, %30 : vector<16x16xf32>
    %391 = arith.addf %387, %390 : vector<16x16xf32>
    %c79 = arith.constant 79 : index
    %392 = memref.load %arg2[%c79] : memref<432xf32, #tpu.memory_space<smem>>
    %393 = vector.broadcast %392 : f32 to vector<16x16xf32>
    %394 = arith.mulf %393, %31 : vector<16x16xf32>
    %395 = arith.addf %391, %394 : vector<16x16xf32>
    %c80 = arith.constant 80 : index
    %396 = memref.load %arg2[%c80] : memref<432xf32, #tpu.memory_space<smem>>
    %397 = vector.broadcast %396 : f32 to vector<16x16xf32>
    %398 = arith.mulf %397, %32 : vector<16x16xf32>
    %399 = arith.addf %395, %398 : vector<16x16xf32>
    %c81 = arith.constant 81 : index
    %400 = memref.load %arg2[%c81] : memref<432xf32, #tpu.memory_space<smem>>
    %401 = vector.broadcast %400 : f32 to vector<16x16xf32>
    %402 = arith.mulf %401, %35 : vector<16x16xf32>
    %403 = arith.addf %399, %402 : vector<16x16xf32>
    %c82 = arith.constant 82 : index
    %404 = memref.load %arg2[%c82] : memref<432xf32, #tpu.memory_space<smem>>
    %405 = vector.broadcast %404 : f32 to vector<16x16xf32>
    %406 = arith.mulf %405, %36 : vector<16x16xf32>
    %407 = arith.addf %403, %406 : vector<16x16xf32>
    %c83 = arith.constant 83 : index
    %408 = memref.load %arg2[%c83] : memref<432xf32, #tpu.memory_space<smem>>
    %409 = vector.broadcast %408 : f32 to vector<16x16xf32>
    %410 = arith.mulf %409, %37 : vector<16x16xf32>
    %411 = arith.addf %407, %410 : vector<16x16xf32>
    %c84 = arith.constant 84 : index
    %412 = memref.load %arg2[%c84] : memref<432xf32, #tpu.memory_space<smem>>
    %413 = vector.broadcast %412 : f32 to vector<16x16xf32>
    %414 = arith.mulf %413, %38 : vector<16x16xf32>
    %415 = arith.addf %411, %414 : vector<16x16xf32>
    %c85 = arith.constant 85 : index
    %416 = memref.load %arg2[%c85] : memref<432xf32, #tpu.memory_space<smem>>
    %417 = vector.broadcast %416 : f32 to vector<16x16xf32>
    %418 = arith.mulf %417, %39 : vector<16x16xf32>
    %419 = arith.addf %415, %418 : vector<16x16xf32>
    %c86 = arith.constant 86 : index
    %420 = memref.load %arg2[%c86] : memref<432xf32, #tpu.memory_space<smem>>
    %421 = vector.broadcast %420 : f32 to vector<16x16xf32>
    %422 = arith.mulf %421, %40 : vector<16x16xf32>
    %423 = arith.addf %419, %422 : vector<16x16xf32>
    %c87 = arith.constant 87 : index
    %424 = memref.load %arg2[%c87] : memref<432xf32, #tpu.memory_space<smem>>
    %425 = vector.broadcast %424 : f32 to vector<16x16xf32>
    %426 = arith.mulf %425, %41 : vector<16x16xf32>
    %427 = arith.addf %423, %426 : vector<16x16xf32>
    %c88 = arith.constant 88 : index
    %428 = memref.load %arg2[%c88] : memref<432xf32, #tpu.memory_space<smem>>
    %429 = vector.broadcast %428 : f32 to vector<16x16xf32>
    %430 = arith.mulf %429, %42 : vector<16x16xf32>
    %431 = arith.addf %427, %430 : vector<16x16xf32>
    %c89 = arith.constant 89 : index
    %432 = memref.load %arg2[%c89] : memref<432xf32, #tpu.memory_space<smem>>
    %433 = vector.broadcast %432 : f32 to vector<16x16xf32>
    %434 = arith.mulf %433, %43 : vector<16x16xf32>
    %435 = arith.addf %431, %434 : vector<16x16xf32>
    %c90 = arith.constant 90 : index
    %436 = memref.load %arg2[%c90] : memref<432xf32, #tpu.memory_space<smem>>
    %437 = vector.broadcast %436 : f32 to vector<16x16xf32>
    %438 = arith.mulf %437, %46 : vector<16x16xf32>
    %439 = arith.addf %435, %438 : vector<16x16xf32>
    %c91 = arith.constant 91 : index
    %440 = memref.load %arg2[%c91] : memref<432xf32, #tpu.memory_space<smem>>
    %441 = vector.broadcast %440 : f32 to vector<16x16xf32>
    %442 = arith.mulf %441, %47 : vector<16x16xf32>
    %443 = arith.addf %439, %442 : vector<16x16xf32>
    %c92 = arith.constant 92 : index
    %444 = memref.load %arg2[%c92] : memref<432xf32, #tpu.memory_space<smem>>
    %445 = vector.broadcast %444 : f32 to vector<16x16xf32>
    %446 = arith.mulf %445, %48 : vector<16x16xf32>
    %447 = arith.addf %443, %446 : vector<16x16xf32>
    %c93 = arith.constant 93 : index
    %448 = memref.load %arg2[%c93] : memref<432xf32, #tpu.memory_space<smem>>
    %449 = vector.broadcast %448 : f32 to vector<16x16xf32>
    %450 = arith.mulf %449, %49 : vector<16x16xf32>
    %451 = arith.addf %447, %450 : vector<16x16xf32>
    %c94 = arith.constant 94 : index
    %452 = memref.load %arg2[%c94] : memref<432xf32, #tpu.memory_space<smem>>
    %453 = vector.broadcast %452 : f32 to vector<16x16xf32>
    %454 = arith.mulf %453, %50 : vector<16x16xf32>
    %455 = arith.addf %451, %454 : vector<16x16xf32>
    %c95 = arith.constant 95 : index
    %456 = memref.load %arg2[%c95] : memref<432xf32, #tpu.memory_space<smem>>
    %457 = vector.broadcast %456 : f32 to vector<16x16xf32>
    %458 = arith.mulf %457, %51 : vector<16x16xf32>
    %459 = arith.addf %455, %458 : vector<16x16xf32>
    %c96 = arith.constant 96 : index
    %460 = memref.load %arg2[%c96] : memref<432xf32, #tpu.memory_space<smem>>
    %461 = vector.broadcast %460 : f32 to vector<16x16xf32>
    %462 = arith.mulf %461, %52 : vector<16x16xf32>
    %463 = arith.addf %459, %462 : vector<16x16xf32>
    %c97 = arith.constant 97 : index
    %464 = memref.load %arg2[%c97] : memref<432xf32, #tpu.memory_space<smem>>
    %465 = vector.broadcast %464 : f32 to vector<16x16xf32>
    %466 = arith.mulf %465, %53 : vector<16x16xf32>
    %467 = arith.addf %463, %466 : vector<16x16xf32>
    %c98 = arith.constant 98 : index
    %468 = memref.load %arg2[%c98] : memref<432xf32, #tpu.memory_space<smem>>
    %469 = vector.broadcast %468 : f32 to vector<16x16xf32>
    %470 = arith.mulf %469, %54 : vector<16x16xf32>
    %471 = arith.addf %467, %470 : vector<16x16xf32>
    %c99 = arith.constant 99 : index
    %472 = memref.load %arg2[%c99] : memref<432xf32, #tpu.memory_space<smem>>
    %473 = vector.broadcast %472 : f32 to vector<16x16xf32>
    %474 = arith.mulf %473, %57 : vector<16x16xf32>
    %475 = arith.addf %471, %474 : vector<16x16xf32>
    %c100 = arith.constant 100 : index
    %476 = memref.load %arg2[%c100] : memref<432xf32, #tpu.memory_space<smem>>
    %477 = vector.broadcast %476 : f32 to vector<16x16xf32>
    %478 = arith.mulf %477, %58 : vector<16x16xf32>
    %479 = arith.addf %475, %478 : vector<16x16xf32>
    %c101 = arith.constant 101 : index
    %480 = memref.load %arg2[%c101] : memref<432xf32, #tpu.memory_space<smem>>
    %481 = vector.broadcast %480 : f32 to vector<16x16xf32>
    %482 = arith.mulf %481, %59 : vector<16x16xf32>
    %483 = arith.addf %479, %482 : vector<16x16xf32>
    %c102 = arith.constant 102 : index
    %484 = memref.load %arg2[%c102] : memref<432xf32, #tpu.memory_space<smem>>
    %485 = vector.broadcast %484 : f32 to vector<16x16xf32>
    %486 = arith.mulf %485, %60 : vector<16x16xf32>
    %487 = arith.addf %483, %486 : vector<16x16xf32>
    %c103 = arith.constant 103 : index
    %488 = memref.load %arg2[%c103] : memref<432xf32, #tpu.memory_space<smem>>
    %489 = vector.broadcast %488 : f32 to vector<16x16xf32>
    %490 = arith.mulf %489, %61 : vector<16x16xf32>
    %491 = arith.addf %487, %490 : vector<16x16xf32>
    %c104 = arith.constant 104 : index
    %492 = memref.load %arg2[%c104] : memref<432xf32, #tpu.memory_space<smem>>
    %493 = vector.broadcast %492 : f32 to vector<16x16xf32>
    %494 = arith.mulf %493, %62 : vector<16x16xf32>
    %495 = arith.addf %491, %494 : vector<16x16xf32>
    %c105 = arith.constant 105 : index
    %496 = memref.load %arg2[%c105] : memref<432xf32, #tpu.memory_space<smem>>
    %497 = vector.broadcast %496 : f32 to vector<16x16xf32>
    %498 = arith.mulf %497, %63 : vector<16x16xf32>
    %499 = arith.addf %495, %498 : vector<16x16xf32>
    %c106 = arith.constant 106 : index
    %500 = memref.load %arg2[%c106] : memref<432xf32, #tpu.memory_space<smem>>
    %501 = vector.broadcast %500 : f32 to vector<16x16xf32>
    %502 = arith.mulf %501, %64 : vector<16x16xf32>
    %503 = arith.addf %499, %502 : vector<16x16xf32>
    %c107 = arith.constant 107 : index
    %504 = memref.load %arg2[%c107] : memref<432xf32, #tpu.memory_space<smem>>
    %505 = vector.broadcast %504 : f32 to vector<16x16xf32>
    %506 = arith.mulf %505, %65 : vector<16x16xf32>
    %507 = arith.addf %503, %506 : vector<16x16xf32>
    %cst_48 = arith.constant 0.000000e+00 : f32
    %508 = vector.broadcast %cst_48 : f32 to vector<16x16xf32>
    %509 = arith.maximumf %507, %508 : vector<16x16xf32>
    %c3_49 = arith.constant 3 : index
    %510 = memref.load %arg3[%c3_49] : memref<12xf32, #tpu.memory_space<smem>>
    %511 = vector.broadcast %510 : f32 to vector<16x16xf32>
    %c108 = arith.constant 108 : index
    %512 = memref.load %arg2[%c108] : memref<432xf32, #tpu.memory_space<smem>>
    %513 = vector.broadcast %512 : f32 to vector<16x16xf32>
    %514 = arith.mulf %513, %24 : vector<16x16xf32>
    %515 = arith.addf %511, %514 : vector<16x16xf32>
    %c109 = arith.constant 109 : index
    %516 = memref.load %arg2[%c109] : memref<432xf32, #tpu.memory_space<smem>>
    %517 = vector.broadcast %516 : f32 to vector<16x16xf32>
    %518 = arith.mulf %517, %25 : vector<16x16xf32>
    %519 = arith.addf %515, %518 : vector<16x16xf32>
    %c110 = arith.constant 110 : index
    %520 = memref.load %arg2[%c110] : memref<432xf32, #tpu.memory_space<smem>>
    %521 = vector.broadcast %520 : f32 to vector<16x16xf32>
    %522 = arith.mulf %521, %26 : vector<16x16xf32>
    %523 = arith.addf %519, %522 : vector<16x16xf32>
    %c111 = arith.constant 111 : index
    %524 = memref.load %arg2[%c111] : memref<432xf32, #tpu.memory_space<smem>>
    %525 = vector.broadcast %524 : f32 to vector<16x16xf32>
    %526 = arith.mulf %525, %27 : vector<16x16xf32>
    %527 = arith.addf %523, %526 : vector<16x16xf32>
    %c112 = arith.constant 112 : index
    %528 = memref.load %arg2[%c112] : memref<432xf32, #tpu.memory_space<smem>>
    %529 = vector.broadcast %528 : f32 to vector<16x16xf32>
    %530 = arith.mulf %529, %28 : vector<16x16xf32>
    %531 = arith.addf %527, %530 : vector<16x16xf32>
    %c113 = arith.constant 113 : index
    %532 = memref.load %arg2[%c113] : memref<432xf32, #tpu.memory_space<smem>>
    %533 = vector.broadcast %532 : f32 to vector<16x16xf32>
    %534 = arith.mulf %533, %29 : vector<16x16xf32>
    %535 = arith.addf %531, %534 : vector<16x16xf32>
    %c114 = arith.constant 114 : index
    %536 = memref.load %arg2[%c114] : memref<432xf32, #tpu.memory_space<smem>>
    %537 = vector.broadcast %536 : f32 to vector<16x16xf32>
    %538 = arith.mulf %537, %30 : vector<16x16xf32>
    %539 = arith.addf %535, %538 : vector<16x16xf32>
    %c115 = arith.constant 115 : index
    %540 = memref.load %arg2[%c115] : memref<432xf32, #tpu.memory_space<smem>>
    %541 = vector.broadcast %540 : f32 to vector<16x16xf32>
    %542 = arith.mulf %541, %31 : vector<16x16xf32>
    %543 = arith.addf %539, %542 : vector<16x16xf32>
    %c116 = arith.constant 116 : index
    %544 = memref.load %arg2[%c116] : memref<432xf32, #tpu.memory_space<smem>>
    %545 = vector.broadcast %544 : f32 to vector<16x16xf32>
    %546 = arith.mulf %545, %32 : vector<16x16xf32>
    %547 = arith.addf %543, %546 : vector<16x16xf32>
    %c117 = arith.constant 117 : index
    %548 = memref.load %arg2[%c117] : memref<432xf32, #tpu.memory_space<smem>>
    %549 = vector.broadcast %548 : f32 to vector<16x16xf32>
    %550 = arith.mulf %549, %35 : vector<16x16xf32>
    %551 = arith.addf %547, %550 : vector<16x16xf32>
    %c118 = arith.constant 118 : index
    %552 = memref.load %arg2[%c118] : memref<432xf32, #tpu.memory_space<smem>>
    %553 = vector.broadcast %552 : f32 to vector<16x16xf32>
    %554 = arith.mulf %553, %36 : vector<16x16xf32>
    %555 = arith.addf %551, %554 : vector<16x16xf32>
    %c119 = arith.constant 119 : index
    %556 = memref.load %arg2[%c119] : memref<432xf32, #tpu.memory_space<smem>>
    %557 = vector.broadcast %556 : f32 to vector<16x16xf32>
    %558 = arith.mulf %557, %37 : vector<16x16xf32>
    %559 = arith.addf %555, %558 : vector<16x16xf32>
    %c120 = arith.constant 120 : index
    %560 = memref.load %arg2[%c120] : memref<432xf32, #tpu.memory_space<smem>>
    %561 = vector.broadcast %560 : f32 to vector<16x16xf32>
    %562 = arith.mulf %561, %38 : vector<16x16xf32>
    %563 = arith.addf %559, %562 : vector<16x16xf32>
    %c121 = arith.constant 121 : index
    %564 = memref.load %arg2[%c121] : memref<432xf32, #tpu.memory_space<smem>>
    %565 = vector.broadcast %564 : f32 to vector<16x16xf32>
    %566 = arith.mulf %565, %39 : vector<16x16xf32>
    %567 = arith.addf %563, %566 : vector<16x16xf32>
    %c122 = arith.constant 122 : index
    %568 = memref.load %arg2[%c122] : memref<432xf32, #tpu.memory_space<smem>>
    %569 = vector.broadcast %568 : f32 to vector<16x16xf32>
    %570 = arith.mulf %569, %40 : vector<16x16xf32>
    %571 = arith.addf %567, %570 : vector<16x16xf32>
    %c123 = arith.constant 123 : index
    %572 = memref.load %arg2[%c123] : memref<432xf32, #tpu.memory_space<smem>>
    %573 = vector.broadcast %572 : f32 to vector<16x16xf32>
    %574 = arith.mulf %573, %41 : vector<16x16xf32>
    %575 = arith.addf %571, %574 : vector<16x16xf32>
    %c124 = arith.constant 124 : index
    %576 = memref.load %arg2[%c124] : memref<432xf32, #tpu.memory_space<smem>>
    %577 = vector.broadcast %576 : f32 to vector<16x16xf32>
    %578 = arith.mulf %577, %42 : vector<16x16xf32>
    %579 = arith.addf %575, %578 : vector<16x16xf32>
    %c125 = arith.constant 125 : index
    %580 = memref.load %arg2[%c125] : memref<432xf32, #tpu.memory_space<smem>>
    %581 = vector.broadcast %580 : f32 to vector<16x16xf32>
    %582 = arith.mulf %581, %43 : vector<16x16xf32>
    %583 = arith.addf %579, %582 : vector<16x16xf32>
    %c126 = arith.constant 126 : index
    %584 = memref.load %arg2[%c126] : memref<432xf32, #tpu.memory_space<smem>>
    %585 = vector.broadcast %584 : f32 to vector<16x16xf32>
    %586 = arith.mulf %585, %46 : vector<16x16xf32>
    %587 = arith.addf %583, %586 : vector<16x16xf32>
    %c127 = arith.constant 127 : index
    %588 = memref.load %arg2[%c127] : memref<432xf32, #tpu.memory_space<smem>>
    %589 = vector.broadcast %588 : f32 to vector<16x16xf32>
    %590 = arith.mulf %589, %47 : vector<16x16xf32>
    %591 = arith.addf %587, %590 : vector<16x16xf32>
    %c128 = arith.constant 128 : index
    %592 = memref.load %arg2[%c128] : memref<432xf32, #tpu.memory_space<smem>>
    %593 = vector.broadcast %592 : f32 to vector<16x16xf32>
    %594 = arith.mulf %593, %48 : vector<16x16xf32>
    %595 = arith.addf %591, %594 : vector<16x16xf32>
    %c129 = arith.constant 129 : index
    %596 = memref.load %arg2[%c129] : memref<432xf32, #tpu.memory_space<smem>>
    %597 = vector.broadcast %596 : f32 to vector<16x16xf32>
    %598 = arith.mulf %597, %49 : vector<16x16xf32>
    %599 = arith.addf %595, %598 : vector<16x16xf32>
    %c130 = arith.constant 130 : index
    %600 = memref.load %arg2[%c130] : memref<432xf32, #tpu.memory_space<smem>>
    %601 = vector.broadcast %600 : f32 to vector<16x16xf32>
    %602 = arith.mulf %601, %50 : vector<16x16xf32>
    %603 = arith.addf %599, %602 : vector<16x16xf32>
    %c131 = arith.constant 131 : index
    %604 = memref.load %arg2[%c131] : memref<432xf32, #tpu.memory_space<smem>>
    %605 = vector.broadcast %604 : f32 to vector<16x16xf32>
    %606 = arith.mulf %605, %51 : vector<16x16xf32>
    %607 = arith.addf %603, %606 : vector<16x16xf32>
    %c132 = arith.constant 132 : index
    %608 = memref.load %arg2[%c132] : memref<432xf32, #tpu.memory_space<smem>>
    %609 = vector.broadcast %608 : f32 to vector<16x16xf32>
    %610 = arith.mulf %609, %52 : vector<16x16xf32>
    %611 = arith.addf %607, %610 : vector<16x16xf32>
    %c133 = arith.constant 133 : index
    %612 = memref.load %arg2[%c133] : memref<432xf32, #tpu.memory_space<smem>>
    %613 = vector.broadcast %612 : f32 to vector<16x16xf32>
    %614 = arith.mulf %613, %53 : vector<16x16xf32>
    %615 = arith.addf %611, %614 : vector<16x16xf32>
    %c134 = arith.constant 134 : index
    %616 = memref.load %arg2[%c134] : memref<432xf32, #tpu.memory_space<smem>>
    %617 = vector.broadcast %616 : f32 to vector<16x16xf32>
    %618 = arith.mulf %617, %54 : vector<16x16xf32>
    %619 = arith.addf %615, %618 : vector<16x16xf32>
    %c135 = arith.constant 135 : index
    %620 = memref.load %arg2[%c135] : memref<432xf32, #tpu.memory_space<smem>>
    %621 = vector.broadcast %620 : f32 to vector<16x16xf32>
    %622 = arith.mulf %621, %57 : vector<16x16xf32>
    %623 = arith.addf %619, %622 : vector<16x16xf32>
    %c136 = arith.constant 136 : index
    %624 = memref.load %arg2[%c136] : memref<432xf32, #tpu.memory_space<smem>>
    %625 = vector.broadcast %624 : f32 to vector<16x16xf32>
    %626 = arith.mulf %625, %58 : vector<16x16xf32>
    %627 = arith.addf %623, %626 : vector<16x16xf32>
    %c137 = arith.constant 137 : index
    %628 = memref.load %arg2[%c137] : memref<432xf32, #tpu.memory_space<smem>>
    %629 = vector.broadcast %628 : f32 to vector<16x16xf32>
    %630 = arith.mulf %629, %59 : vector<16x16xf32>
    %631 = arith.addf %627, %630 : vector<16x16xf32>
    %c138 = arith.constant 138 : index
    %632 = memref.load %arg2[%c138] : memref<432xf32, #tpu.memory_space<smem>>
    %633 = vector.broadcast %632 : f32 to vector<16x16xf32>
    %634 = arith.mulf %633, %60 : vector<16x16xf32>
    %635 = arith.addf %631, %634 : vector<16x16xf32>
    %c139 = arith.constant 139 : index
    %636 = memref.load %arg2[%c139] : memref<432xf32, #tpu.memory_space<smem>>
    %637 = vector.broadcast %636 : f32 to vector<16x16xf32>
    %638 = arith.mulf %637, %61 : vector<16x16xf32>
    %639 = arith.addf %635, %638 : vector<16x16xf32>
    %c140 = arith.constant 140 : index
    %640 = memref.load %arg2[%c140] : memref<432xf32, #tpu.memory_space<smem>>
    %641 = vector.broadcast %640 : f32 to vector<16x16xf32>
    %642 = arith.mulf %641, %62 : vector<16x16xf32>
    %643 = arith.addf %639, %642 : vector<16x16xf32>
    %c141 = arith.constant 141 : index
    %644 = memref.load %arg2[%c141] : memref<432xf32, #tpu.memory_space<smem>>
    %645 = vector.broadcast %644 : f32 to vector<16x16xf32>
    %646 = arith.mulf %645, %63 : vector<16x16xf32>
    %647 = arith.addf %643, %646 : vector<16x16xf32>
    %c142 = arith.constant 142 : index
    %648 = memref.load %arg2[%c142] : memref<432xf32, #tpu.memory_space<smem>>
    %649 = vector.broadcast %648 : f32 to vector<16x16xf32>
    %650 = arith.mulf %649, %64 : vector<16x16xf32>
    %651 = arith.addf %647, %650 : vector<16x16xf32>
    %c143 = arith.constant 143 : index
    %652 = memref.load %arg2[%c143] : memref<432xf32, #tpu.memory_space<smem>>
    %653 = vector.broadcast %652 : f32 to vector<16x16xf32>
    %654 = arith.mulf %653, %65 : vector<16x16xf32>
    %655 = arith.addf %651, %654 : vector<16x16xf32>
    %cst_50 = arith.constant 0.000000e+00 : f32
    %656 = vector.broadcast %cst_50 : f32 to vector<16x16xf32>
    %657 = arith.maximumf %655, %656 : vector<16x16xf32>
    %c0_51 = arith.constant 0 : index
    %c1_52 = arith.constant 1 : index
    %c1_53 = arith.constant 1 : index
    %658 = vector.load %arg5[%c0_51, %c1_52, %c1_53] : memref<4x18x18xf32, #tpu.memory_space<vmem>>, vector<1x16x16xf32>
    %659 = vector.shape_cast %658 : vector<1x16x16xf32> to vector<16x16xf32>
    %660 = vector.shape_cast %213 : vector<16x16xf32> to vector<1x16x16xf32>
    tpu.vector_store %arg5[%c0_51, %c1_52, %c1_53], %660 {strides = array<i32>} : memref<4x18x18xf32, #tpu.memory_space<vmem>>, vector<1x16x16xf32>,
    %c1_54 = arith.constant 1 : index
    %c1_55 = arith.constant 1 : index
    %c1_56 = arith.constant 1 : index
    %661 = vector.load %arg5[%c1_54, %c1_55, %c1_56] : memref<4x18x18xf32, #tpu.memory_space<vmem>>, vector<1x16x16xf32>
    %662 = vector.shape_cast %661 : vector<1x16x16xf32> to vector<16x16xf32>
    %663 = vector.shape_cast %361 : vector<16x16xf32> to vector<1x16x16xf32>
    tpu.vector_store %arg5[%c1_54, %c1_55, %c1_56], %663 {strides = array<i32>} : memref<4x18x18xf32, #tpu.memory_space<vmem>>, vector<1x16x16xf32>,
    %c2_57 = arith.constant 2 : index
    %c1_58 = arith.constant 1 : index
    %c1_59 = arith.constant 1 : index
    %664 = vector.load %arg5[%c2_57, %c1_58, %c1_59] : memref<4x18x18xf32, #tpu.memory_space<vmem>>, vector<1x16x16xf32>
    %665 = vector.shape_cast %664 : vector<1x16x16xf32> to vector<16x16xf32>
    %666 = vector.shape_cast %509 : vector<16x16xf32> to vector<1x16x16xf32>
    tpu.vector_store %arg5[%c2_57, %c1_58, %c1_59], %666 {strides = array<i32>} : memref<4x18x18xf32, #tpu.memory_space<vmem>>, vector<1x16x16xf32>,
    %c3_60 = arith.constant 3 : index
    %c1_61 = arith.constant 1 : index
    %c1_62 = arith.constant 1 : index
    %667 = vector.load %arg5[%c3_60, %c1_61, %c1_62] : memref<4x18x18xf32, #tpu.memory_space<vmem>>, vector<1x16x16xf32>
    %668 = vector.shape_cast %667 : vector<1x16x16xf32> to vector<16x16xf32>
    %669 = vector.shape_cast %657 : vector<16x16xf32> to vector<1x16x16xf32>
    tpu.vector_store %arg5[%c3_60, %c1_61, %c1_62], %669 {strides = array<i32>} : memref<4x18x18xf32, #tpu.memory_space<vmem>>, vector<1x16x16xf32>,
    %c0_63 = arith.constant 0 : index
    %c0_64 = arith.constant 0 : index
    %c0_65 = arith.constant 0 : index
    %670 = vector.load %arg5[%c0_63, %c0_64, %c0_65] : memref<4x18x18xf32, #tpu.memory_space<vmem>>, vector<1x18x18xf32>
    %671 = vector.shape_cast %670 : vector<1x18x18xf32> to vector<18x18xf32>
    %672 = vector.extract_strided_slice %671 {offsets = [0, 0], sizes = [16, 16], strides = [1, 1]} : vector<18x18xf32> to vector<16x16xf32>
    %673 = vector.extract_strided_slice %671 {offsets = [0, 1], sizes = [16, 16], strides = [1, 1]} : vector<18x18xf32> to vector<16x16xf32>
    %674 = vector.extract_strided_slice %671 {offsets = [0, 2], sizes = [16, 16], strides = [1, 1]} : vector<18x18xf32> to vector<16x16xf32>
    %675 = vector.extract_strided_slice %671 {offsets = [1, 0], sizes = [16, 16], strides = [1, 1]} : vector<18x18xf32> to vector<16x16xf32>
    %676 = vector.extract_strided_slice %671 {offsets = [1, 1], sizes = [16, 16], strides = [1, 1]} : vector<18x18xf32> to vector<16x16xf32>
    %677 = vector.extract_strided_slice %671 {offsets = [1, 2], sizes = [16, 16], strides = [1, 1]} : vector<18x18xf32> to vector<16x16xf32>
    %678 = vector.extract_strided_slice %671 {offsets = [2, 0], sizes = [16, 16], strides = [1, 1]} : vector<18x18xf32> to vector<16x16xf32>
    %679 = vector.extract_strided_slice %671 {offsets = [2, 1], sizes = [16, 16], strides = [1, 1]} : vector<18x18xf32> to vector<16x16xf32>
    %680 = vector.extract_strided_slice %671 {offsets = [2, 2], sizes = [16, 16], strides = [1, 1]} : vector<18x18xf32> to vector<16x16xf32>
    %c1_66 = arith.constant 1 : index
    %c0_67 = arith.constant 0 : index
    %c0_68 = arith.constant 0 : index
    %681 = vector.load %arg5[%c1_66, %c0_67, %c0_68] : memref<4x18x18xf32, #tpu.memory_space<vmem>>, vector<1x18x18xf32>
    %682 = vector.shape_cast %681 : vector<1x18x18xf32> to vector<18x18xf32>
    %683 = vector.extract_strided_slice %682 {offsets = [0, 0], sizes = [16, 16], strides = [1, 1]} : vector<18x18xf32> to vector<16x16xf32>
    %684 = vector.extract_strided_slice %682 {offsets = [0, 1], sizes = [16, 16], strides = [1, 1]} : vector<18x18xf32> to vector<16x16xf32>
    %685 = vector.extract_strided_slice %682 {offsets = [0, 2], sizes = [16, 16], strides = [1, 1]} : vector<18x18xf32> to vector<16x16xf32>
    %686 = vector.extract_strided_slice %682 {offsets = [1, 0], sizes = [16, 16], strides = [1, 1]} : vector<18x18xf32> to vector<16x16xf32>
    %687 = vector.extract_strided_slice %682 {offsets = [1, 1], sizes = [16, 16], strides = [1, 1]} : vector<18x18xf32> to vector<16x16xf32>
    %688 = vector.extract_strided_slice %682 {offsets = [1, 2], sizes = [16, 16], strides = [1, 1]} : vector<18x18xf32> to vector<16x16xf32>
    %689 = vector.extract_strided_slice %682 {offsets = [2, 0], sizes = [16, 16], strides = [1, 1]} : vector<18x18xf32> to vector<16x16xf32>
    %690 = vector.extract_strided_slice %682 {offsets = [2, 1], sizes = [16, 16], strides = [1, 1]} : vector<18x18xf32> to vector<16x16xf32>
    %691 = vector.extract_strided_slice %682 {offsets = [2, 2], sizes = [16, 16], strides = [1, 1]} : vector<18x18xf32> to vector<16x16xf32>
    %c2_69 = arith.constant 2 : index
    %c0_70 = arith.constant 0 : index
    %c0_71 = arith.constant 0 : index
    %692 = vector.load %arg5[%c2_69, %c0_70, %c0_71] : memref<4x18x18xf32, #tpu.memory_space<vmem>>, vector<1x18x18xf32>
    %693 = vector.shape_cast %692 : vector<1x18x18xf32> to vector<18x18xf32>
    %694 = vector.extract_strided_slice %693 {offsets = [0, 0], sizes = [16, 16], strides = [1, 1]} : vector<18x18xf32> to vector<16x16xf32>
    %695 = vector.extract_strided_slice %693 {offsets = [0, 1], sizes = [16, 16], strides = [1, 1]} : vector<18x18xf32> to vector<16x16xf32>
    %696 = vector.extract_strided_slice %693 {offsets = [0, 2], sizes = [16, 16], strides = [1, 1]} : vector<18x18xf32> to vector<16x16xf32>
    %697 = vector.extract_strided_slice %693 {offsets = [1, 0], sizes = [16, 16], strides = [1, 1]} : vector<18x18xf32> to vector<16x16xf32>
    %698 = vector.extract_strided_slice %693 {offsets = [1, 1], sizes = [16, 16], strides = [1, 1]} : vector<18x18xf32> to vector<16x16xf32>
    %699 = vector.extract_strided_slice %693 {offsets = [1, 2], sizes = [16, 16], strides = [1, 1]} : vector<18x18xf32> to vector<16x16xf32>
    %700 = vector.extract_strided_slice %693 {offsets = [2, 0], sizes = [16, 16], strides = [1, 1]} : vector<18x18xf32> to vector<16x16xf32>
    %701 = vector.extract_strided_slice %693 {offsets = [2, 1], sizes = [16, 16], strides = [1, 1]} : vector<18x18xf32> to vector<16x16xf32>
    %702 = vector.extract_strided_slice %693 {offsets = [2, 2], sizes = [16, 16], strides = [1, 1]} : vector<18x18xf32> to vector<16x16xf32>
    %c3_72 = arith.constant 3 : index
    %c0_73 = arith.constant 0 : index
    %c0_74 = arith.constant 0 : index
    %703 = vector.load %arg5[%c3_72, %c0_73, %c0_74] : memref<4x18x18xf32, #tpu.memory_space<vmem>>, vector<1x18x18xf32>
    %704 = vector.shape_cast %703 : vector<1x18x18xf32> to vector<18x18xf32>
    %705 = vector.extract_strided_slice %704 {offsets = [0, 0], sizes = [16, 16], strides = [1, 1]} : vector<18x18xf32> to vector<16x16xf32>
    %706 = vector.extract_strided_slice %704 {offsets = [0, 1], sizes = [16, 16], strides = [1, 1]} : vector<18x18xf32> to vector<16x16xf32>
    %707 = vector.extract_strided_slice %704 {offsets = [0, 2], sizes = [16, 16], strides = [1, 1]} : vector<18x18xf32> to vector<16x16xf32>
    %708 = vector.extract_strided_slice %704 {offsets = [1, 0], sizes = [16, 16], strides = [1, 1]} : vector<18x18xf32> to vector<16x16xf32>
    %709 = vector.extract_strided_slice %704 {offsets = [1, 1], sizes = [16, 16], strides = [1, 1]} : vector<18x18xf32> to vector<16x16xf32>
    %710 = vector.extract_strided_slice %704 {offsets = [1, 2], sizes = [16, 16], strides = [1, 1]} : vector<18x18xf32> to vector<16x16xf32>
    %711 = vector.extract_strided_slice %704 {offsets = [2, 0], sizes = [16, 16], strides = [1, 1]} : vector<18x18xf32> to vector<16x16xf32>
    %712 = vector.extract_strided_slice %704 {offsets = [2, 1], sizes = [16, 16], strides = [1, 1]} : vector<18x18xf32> to vector<16x16xf32>
    %713 = vector.extract_strided_slice %704 {offsets = [2, 2], sizes = [16, 16], strides = [1, 1]} : vector<18x18xf32> to vector<16x16xf32>
    %c4_75 = arith.constant 4 : index
    %714 = memref.load %arg3[%c4_75] : memref<12xf32, #tpu.memory_space<smem>>
    %715 = vector.broadcast %714 : f32 to vector<16x16xf32>
    %c144 = arith.constant 144 : index
    %716 = memref.load %arg2[%c144] : memref<432xf32, #tpu.memory_space<smem>>
    %717 = vector.broadcast %716 : f32 to vector<16x16xf32>
    %718 = arith.mulf %717, %672 : vector<16x16xf32>
    %719 = arith.addf %715, %718 : vector<16x16xf32>
    %c145 = arith.constant 145 : index
    %720 = memref.load %arg2[%c145] : memref<432xf32, #tpu.memory_space<smem>>
    %721 = vector.broadcast %720 : f32 to vector<16x16xf32>
    %722 = arith.mulf %721, %673 : vector<16x16xf32>
    %723 = arith.addf %719, %722 : vector<16x16xf32>
    %c146 = arith.constant 146 : index
    %724 = memref.load %arg2[%c146] : memref<432xf32, #tpu.memory_space<smem>>
    %725 = vector.broadcast %724 : f32 to vector<16x16xf32>
    %726 = arith.mulf %725, %674 : vector<16x16xf32>
    %727 = arith.addf %723, %726 : vector<16x16xf32>
    %c147 = arith.constant 147 : index
    %728 = memref.load %arg2[%c147] : memref<432xf32, #tpu.memory_space<smem>>
    %729 = vector.broadcast %728 : f32 to vector<16x16xf32>
    %730 = arith.mulf %729, %675 : vector<16x16xf32>
    %731 = arith.addf %727, %730 : vector<16x16xf32>
    %c148 = arith.constant 148 : index
    %732 = memref.load %arg2[%c148] : memref<432xf32, #tpu.memory_space<smem>>
    %733 = vector.broadcast %732 : f32 to vector<16x16xf32>
    %734 = arith.mulf %733, %676 : vector<16x16xf32>
    %735 = arith.addf %731, %734 : vector<16x16xf32>
    %c149 = arith.constant 149 : index
    %736 = memref.load %arg2[%c149] : memref<432xf32, #tpu.memory_space<smem>>
    %737 = vector.broadcast %736 : f32 to vector<16x16xf32>
    %738 = arith.mulf %737, %677 : vector<16x16xf32>
    %739 = arith.addf %735, %738 : vector<16x16xf32>
    %c150 = arith.constant 150 : index
    %740 = memref.load %arg2[%c150] : memref<432xf32, #tpu.memory_space<smem>>
    %741 = vector.broadcast %740 : f32 to vector<16x16xf32>
    %742 = arith.mulf %741, %678 : vector<16x16xf32>
    %743 = arith.addf %739, %742 : vector<16x16xf32>
    %c151 = arith.constant 151 : index
    %744 = memref.load %arg2[%c151] : memref<432xf32, #tpu.memory_space<smem>>
    %745 = vector.broadcast %744 : f32 to vector<16x16xf32>
    %746 = arith.mulf %745, %679 : vector<16x16xf32>
    %747 = arith.addf %743, %746 : vector<16x16xf32>
    %c152 = arith.constant 152 : index
    %748 = memref.load %arg2[%c152] : memref<432xf32, #tpu.memory_space<smem>>
    %749 = vector.broadcast %748 : f32 to vector<16x16xf32>
    %750 = arith.mulf %749, %680 : vector<16x16xf32>
    %751 = arith.addf %747, %750 : vector<16x16xf32>
    %c153 = arith.constant 153 : index
    %752 = memref.load %arg2[%c153] : memref<432xf32, #tpu.memory_space<smem>>
    %753 = vector.broadcast %752 : f32 to vector<16x16xf32>
    %754 = arith.mulf %753, %683 : vector<16x16xf32>
    %755 = arith.addf %751, %754 : vector<16x16xf32>
    %c154 = arith.constant 154 : index
    %756 = memref.load %arg2[%c154] : memref<432xf32, #tpu.memory_space<smem>>
    %757 = vector.broadcast %756 : f32 to vector<16x16xf32>
    %758 = arith.mulf %757, %684 : vector<16x16xf32>
    %759 = arith.addf %755, %758 : vector<16x16xf32>
    %c155 = arith.constant 155 : index
    %760 = memref.load %arg2[%c155] : memref<432xf32, #tpu.memory_space<smem>>
    %761 = vector.broadcast %760 : f32 to vector<16x16xf32>
    %762 = arith.mulf %761, %685 : vector<16x16xf32>
    %763 = arith.addf %759, %762 : vector<16x16xf32>
    %c156 = arith.constant 156 : index
    %764 = memref.load %arg2[%c156] : memref<432xf32, #tpu.memory_space<smem>>
    %765 = vector.broadcast %764 : f32 to vector<16x16xf32>
    %766 = arith.mulf %765, %686 : vector<16x16xf32>
    %767 = arith.addf %763, %766 : vector<16x16xf32>
    %c157 = arith.constant 157 : index
    %768 = memref.load %arg2[%c157] : memref<432xf32, #tpu.memory_space<smem>>
    %769 = vector.broadcast %768 : f32 to vector<16x16xf32>
    %770 = arith.mulf %769, %687 : vector<16x16xf32>
    %771 = arith.addf %767, %770 : vector<16x16xf32>
    %c158 = arith.constant 158 : index
    %772 = memref.load %arg2[%c158] : memref<432xf32, #tpu.memory_space<smem>>
    %773 = vector.broadcast %772 : f32 to vector<16x16xf32>
    %774 = arith.mulf %773, %688 : vector<16x16xf32>
    %775 = arith.addf %771, %774 : vector<16x16xf32>
    %c159 = arith.constant 159 : index
    %776 = memref.load %arg2[%c159] : memref<432xf32, #tpu.memory_space<smem>>
    %777 = vector.broadcast %776 : f32 to vector<16x16xf32>
    %778 = arith.mulf %777, %689 : vector<16x16xf32>
    %779 = arith.addf %775, %778 : vector<16x16xf32>
    %c160 = arith.constant 160 : index
    %780 = memref.load %arg2[%c160] : memref<432xf32, #tpu.memory_space<smem>>
    %781 = vector.broadcast %780 : f32 to vector<16x16xf32>
    %782 = arith.mulf %781, %690 : vector<16x16xf32>
    %783 = arith.addf %779, %782 : vector<16x16xf32>
    %c161 = arith.constant 161 : index
    %784 = memref.load %arg2[%c161] : memref<432xf32, #tpu.memory_space<smem>>
    %785 = vector.broadcast %784 : f32 to vector<16x16xf32>
    %786 = arith.mulf %785, %691 : vector<16x16xf32>
    %787 = arith.addf %783, %786 : vector<16x16xf32>
    %c162 = arith.constant 162 : index
    %788 = memref.load %arg2[%c162] : memref<432xf32, #tpu.memory_space<smem>>
    %789 = vector.broadcast %788 : f32 to vector<16x16xf32>
    %790 = arith.mulf %789, %694 : vector<16x16xf32>
    %791 = arith.addf %787, %790 : vector<16x16xf32>
    %c163 = arith.constant 163 : index
    %792 = memref.load %arg2[%c163] : memref<432xf32, #tpu.memory_space<smem>>
    %793 = vector.broadcast %792 : f32 to vector<16x16xf32>
    %794 = arith.mulf %793, %695 : vector<16x16xf32>
    %795 = arith.addf %791, %794 : vector<16x16xf32>
    %c164 = arith.constant 164 : index
    %796 = memref.load %arg2[%c164] : memref<432xf32, #tpu.memory_space<smem>>
    %797 = vector.broadcast %796 : f32 to vector<16x16xf32>
    %798 = arith.mulf %797, %696 : vector<16x16xf32>
    %799 = arith.addf %795, %798 : vector<16x16xf32>
    %c165 = arith.constant 165 : index
    %800 = memref.load %arg2[%c165] : memref<432xf32, #tpu.memory_space<smem>>
    %801 = vector.broadcast %800 : f32 to vector<16x16xf32>
    %802 = arith.mulf %801, %697 : vector<16x16xf32>
    %803 = arith.addf %799, %802 : vector<16x16xf32>
    %c166 = arith.constant 166 : index
    %804 = memref.load %arg2[%c166] : memref<432xf32, #tpu.memory_space<smem>>
    %805 = vector.broadcast %804 : f32 to vector<16x16xf32>
    %806 = arith.mulf %805, %698 : vector<16x16xf32>
    %807 = arith.addf %803, %806 : vector<16x16xf32>
    %c167 = arith.constant 167 : index
    %808 = memref.load %arg2[%c167] : memref<432xf32, #tpu.memory_space<smem>>
    %809 = vector.broadcast %808 : f32 to vector<16x16xf32>
    %810 = arith.mulf %809, %699 : vector<16x16xf32>
    %811 = arith.addf %807, %810 : vector<16x16xf32>
    %c168 = arith.constant 168 : index
    %812 = memref.load %arg2[%c168] : memref<432xf32, #tpu.memory_space<smem>>
    %813 = vector.broadcast %812 : f32 to vector<16x16xf32>
    %814 = arith.mulf %813, %700 : vector<16x16xf32>
    %815 = arith.addf %811, %814 : vector<16x16xf32>
    %c169 = arith.constant 169 : index
    %816 = memref.load %arg2[%c169] : memref<432xf32, #tpu.memory_space<smem>>
    %817 = vector.broadcast %816 : f32 to vector<16x16xf32>
    %818 = arith.mulf %817, %701 : vector<16x16xf32>
    %819 = arith.addf %815, %818 : vector<16x16xf32>
    %c170 = arith.constant 170 : index
    %820 = memref.load %arg2[%c170] : memref<432xf32, #tpu.memory_space<smem>>
    %821 = vector.broadcast %820 : f32 to vector<16x16xf32>
    %822 = arith.mulf %821, %702 : vector<16x16xf32>
    %823 = arith.addf %819, %822 : vector<16x16xf32>
    %c171 = arith.constant 171 : index
    %824 = memref.load %arg2[%c171] : memref<432xf32, #tpu.memory_space<smem>>
    %825 = vector.broadcast %824 : f32 to vector<16x16xf32>
    %826 = arith.mulf %825, %705 : vector<16x16xf32>
    %827 = arith.addf %823, %826 : vector<16x16xf32>
    %c172 = arith.constant 172 : index
    %828 = memref.load %arg2[%c172] : memref<432xf32, #tpu.memory_space<smem>>
    %829 = vector.broadcast %828 : f32 to vector<16x16xf32>
    %830 = arith.mulf %829, %706 : vector<16x16xf32>
    %831 = arith.addf %827, %830 : vector<16x16xf32>
    %c173 = arith.constant 173 : index
    %832 = memref.load %arg2[%c173] : memref<432xf32, #tpu.memory_space<smem>>
    %833 = vector.broadcast %832 : f32 to vector<16x16xf32>
    %834 = arith.mulf %833, %707 : vector<16x16xf32>
    %835 = arith.addf %831, %834 : vector<16x16xf32>
    %c174 = arith.constant 174 : index
    %836 = memref.load %arg2[%c174] : memref<432xf32, #tpu.memory_space<smem>>
    %837 = vector.broadcast %836 : f32 to vector<16x16xf32>
    %838 = arith.mulf %837, %708 : vector<16x16xf32>
    %839 = arith.addf %835, %838 : vector<16x16xf32>
    %c175 = arith.constant 175 : index
    %840 = memref.load %arg2[%c175] : memref<432xf32, #tpu.memory_space<smem>>
    %841 = vector.broadcast %840 : f32 to vector<16x16xf32>
    %842 = arith.mulf %841, %709 : vector<16x16xf32>
    %843 = arith.addf %839, %842 : vector<16x16xf32>
    %c176 = arith.constant 176 : index
    %844 = memref.load %arg2[%c176] : memref<432xf32, #tpu.memory_space<smem>>
    %845 = vector.broadcast %844 : f32 to vector<16x16xf32>
    %846 = arith.mulf %845, %710 : vector<16x16xf32>
    %847 = arith.addf %843, %846 : vector<16x16xf32>
    %c177 = arith.constant 177 : index
    %848 = memref.load %arg2[%c177] : memref<432xf32, #tpu.memory_space<smem>>
    %849 = vector.broadcast %848 : f32 to vector<16x16xf32>
    %850 = arith.mulf %849, %711 : vector<16x16xf32>
    %851 = arith.addf %847, %850 : vector<16x16xf32>
    %c178 = arith.constant 178 : index
    %852 = memref.load %arg2[%c178] : memref<432xf32, #tpu.memory_space<smem>>
    %853 = vector.broadcast %852 : f32 to vector<16x16xf32>
    %854 = arith.mulf %853, %712 : vector<16x16xf32>
    %855 = arith.addf %851, %854 : vector<16x16xf32>
    %c179 = arith.constant 179 : index
    %856 = memref.load %arg2[%c179] : memref<432xf32, #tpu.memory_space<smem>>
    %857 = vector.broadcast %856 : f32 to vector<16x16xf32>
    %858 = arith.mulf %857, %713 : vector<16x16xf32>
    %859 = arith.addf %855, %858 : vector<16x16xf32>
    %cst_76 = arith.constant 0.000000e+00 : f32
    %860 = vector.broadcast %cst_76 : f32 to vector<16x16xf32>
    %861 = arith.maximumf %859, %860 : vector<16x16xf32>
    %c5_77 = arith.constant 5 : index
    %862 = memref.load %arg3[%c5_77] : memref<12xf32, #tpu.memory_space<smem>>
    %863 = vector.broadcast %862 : f32 to vector<16x16xf32>
    %c180 = arith.constant 180 : index
    %864 = memref.load %arg2[%c180] : memref<432xf32, #tpu.memory_space<smem>>
    %865 = vector.broadcast %864 : f32 to vector<16x16xf32>
    %866 = arith.mulf %865, %672 : vector<16x16xf32>
    %867 = arith.addf %863, %866 : vector<16x16xf32>
    %c181 = arith.constant 181 : index
    %868 = memref.load %arg2[%c181] : memref<432xf32, #tpu.memory_space<smem>>
    %869 = vector.broadcast %868 : f32 to vector<16x16xf32>
    %870 = arith.mulf %869, %673 : vector<16x16xf32>
    %871 = arith.addf %867, %870 : vector<16x16xf32>
    %c182 = arith.constant 182 : index
    %872 = memref.load %arg2[%c182] : memref<432xf32, #tpu.memory_space<smem>>
    %873 = vector.broadcast %872 : f32 to vector<16x16xf32>
    %874 = arith.mulf %873, %674 : vector<16x16xf32>
    %875 = arith.addf %871, %874 : vector<16x16xf32>
    %c183 = arith.constant 183 : index
    %876 = memref.load %arg2[%c183] : memref<432xf32, #tpu.memory_space<smem>>
    %877 = vector.broadcast %876 : f32 to vector<16x16xf32>
    %878 = arith.mulf %877, %675 : vector<16x16xf32>
    %879 = arith.addf %875, %878 : vector<16x16xf32>
    %c184 = arith.constant 184 : index
    %880 = memref.load %arg2[%c184] : memref<432xf32, #tpu.memory_space<smem>>
    %881 = vector.broadcast %880 : f32 to vector<16x16xf32>
    %882 = arith.mulf %881, %676 : vector<16x16xf32>
    %883 = arith.addf %879, %882 : vector<16x16xf32>
    %c185 = arith.constant 185 : index
    %884 = memref.load %arg2[%c185] : memref<432xf32, #tpu.memory_space<smem>>
    %885 = vector.broadcast %884 : f32 to vector<16x16xf32>
    %886 = arith.mulf %885, %677 : vector<16x16xf32>
    %887 = arith.addf %883, %886 : vector<16x16xf32>
    %c186 = arith.constant 186 : index
    %888 = memref.load %arg2[%c186] : memref<432xf32, #tpu.memory_space<smem>>
    %889 = vector.broadcast %888 : f32 to vector<16x16xf32>
    %890 = arith.mulf %889, %678 : vector<16x16xf32>
    %891 = arith.addf %887, %890 : vector<16x16xf32>
    %c187 = arith.constant 187 : index
    %892 = memref.load %arg2[%c187] : memref<432xf32, #tpu.memory_space<smem>>
    %893 = vector.broadcast %892 : f32 to vector<16x16xf32>
    %894 = arith.mulf %893, %679 : vector<16x16xf32>
    %895 = arith.addf %891, %894 : vector<16x16xf32>
    %c188 = arith.constant 188 : index
    %896 = memref.load %arg2[%c188] : memref<432xf32, #tpu.memory_space<smem>>
    %897 = vector.broadcast %896 : f32 to vector<16x16xf32>
    %898 = arith.mulf %897, %680 : vector<16x16xf32>
    %899 = arith.addf %895, %898 : vector<16x16xf32>
    %c189 = arith.constant 189 : index
    %900 = memref.load %arg2[%c189] : memref<432xf32, #tpu.memory_space<smem>>
    %901 = vector.broadcast %900 : f32 to vector<16x16xf32>
    %902 = arith.mulf %901, %683 : vector<16x16xf32>
    %903 = arith.addf %899, %902 : vector<16x16xf32>
    %c190 = arith.constant 190 : index
    %904 = memref.load %arg2[%c190] : memref<432xf32, #tpu.memory_space<smem>>
    %905 = vector.broadcast %904 : f32 to vector<16x16xf32>
    %906 = arith.mulf %905, %684 : vector<16x16xf32>
    %907 = arith.addf %903, %906 : vector<16x16xf32>
    %c191 = arith.constant 191 : index
    %908 = memref.load %arg2[%c191] : memref<432xf32, #tpu.memory_space<smem>>
    %909 = vector.broadcast %908 : f32 to vector<16x16xf32>
    %910 = arith.mulf %909, %685 : vector<16x16xf32>
    %911 = arith.addf %907, %910 : vector<16x16xf32>
    %c192 = arith.constant 192 : index
    %912 = memref.load %arg2[%c192] : memref<432xf32, #tpu.memory_space<smem>>
    %913 = vector.broadcast %912 : f32 to vector<16x16xf32>
    %914 = arith.mulf %913, %686 : vector<16x16xf32>
    %915 = arith.addf %911, %914 : vector<16x16xf32>
    %c193 = arith.constant 193 : index
    %916 = memref.load %arg2[%c193] : memref<432xf32, #tpu.memory_space<smem>>
    %917 = vector.broadcast %916 : f32 to vector<16x16xf32>
    %918 = arith.mulf %917, %687 : vector<16x16xf32>
    %919 = arith.addf %915, %918 : vector<16x16xf32>
    %c194 = arith.constant 194 : index
    %920 = memref.load %arg2[%c194] : memref<432xf32, #tpu.memory_space<smem>>
    %921 = vector.broadcast %920 : f32 to vector<16x16xf32>
    %922 = arith.mulf %921, %688 : vector<16x16xf32>
    %923 = arith.addf %919, %922 : vector<16x16xf32>
    %c195 = arith.constant 195 : index
    %924 = memref.load %arg2[%c195] : memref<432xf32, #tpu.memory_space<smem>>
    %925 = vector.broadcast %924 : f32 to vector<16x16xf32>
    %926 = arith.mulf %925, %689 : vector<16x16xf32>
    %927 = arith.addf %923, %926 : vector<16x16xf32>
    %c196 = arith.constant 196 : index
    %928 = memref.load %arg2[%c196] : memref<432xf32, #tpu.memory_space<smem>>
    %929 = vector.broadcast %928 : f32 to vector<16x16xf32>
    %930 = arith.mulf %929, %690 : vector<16x16xf32>
    %931 = arith.addf %927, %930 : vector<16x16xf32>
    %c197 = arith.constant 197 : index
    %932 = memref.load %arg2[%c197] : memref<432xf32, #tpu.memory_space<smem>>
    %933 = vector.broadcast %932 : f32 to vector<16x16xf32>
    %934 = arith.mulf %933, %691 : vector<16x16xf32>
    %935 = arith.addf %931, %934 : vector<16x16xf32>
    %c198 = arith.constant 198 : index
    %936 = memref.load %arg2[%c198] : memref<432xf32, #tpu.memory_space<smem>>
    %937 = vector.broadcast %936 : f32 to vector<16x16xf32>
    %938 = arith.mulf %937, %694 : vector<16x16xf32>
    %939 = arith.addf %935, %938 : vector<16x16xf32>
    %c199 = arith.constant 199 : index
    %940 = memref.load %arg2[%c199] : memref<432xf32, #tpu.memory_space<smem>>
    %941 = vector.broadcast %940 : f32 to vector<16x16xf32>
    %942 = arith.mulf %941, %695 : vector<16x16xf32>
    %943 = arith.addf %939, %942 : vector<16x16xf32>
    %c200 = arith.constant 200 : index
    %944 = memref.load %arg2[%c200] : memref<432xf32, #tpu.memory_space<smem>>
    %945 = vector.broadcast %944 : f32 to vector<16x16xf32>
    %946 = arith.mulf %945, %696 : vector<16x16xf32>
    %947 = arith.addf %943, %946 : vector<16x16xf32>
    %c201 = arith.constant 201 : index
    %948 = memref.load %arg2[%c201] : memref<432xf32, #tpu.memory_space<smem>>
    %949 = vector.broadcast %948 : f32 to vector<16x16xf32>
    %950 = arith.mulf %949, %697 : vector<16x16xf32>
    %951 = arith.addf %947, %950 : vector<16x16xf32>
    %c202 = arith.constant 202 : index
    %952 = memref.load %arg2[%c202] : memref<432xf32, #tpu.memory_space<smem>>
    %953 = vector.broadcast %952 : f32 to vector<16x16xf32>
    %954 = arith.mulf %953, %698 : vector<16x16xf32>
    %955 = arith.addf %951, %954 : vector<16x16xf32>
    %c203 = arith.constant 203 : index
    %956 = memref.load %arg2[%c203] : memref<432xf32, #tpu.memory_space<smem>>
    %957 = vector.broadcast %956 : f32 to vector<16x16xf32>
    %958 = arith.mulf %957, %699 : vector<16x16xf32>
    %959 = arith.addf %955, %958 : vector<16x16xf32>
    %c204 = arith.constant 204 : index
    %960 = memref.load %arg2[%c204] : memref<432xf32, #tpu.memory_space<smem>>
    %961 = vector.broadcast %960 : f32 to vector<16x16xf32>
    %962 = arith.mulf %961, %700 : vector<16x16xf32>
    %963 = arith.addf %959, %962 : vector<16x16xf32>
    %c205 = arith.constant 205 : index
    %964 = memref.load %arg2[%c205] : memref<432xf32, #tpu.memory_space<smem>>
    %965 = vector.broadcast %964 : f32 to vector<16x16xf32>
    %966 = arith.mulf %965, %701 : vector<16x16xf32>
    %967 = arith.addf %963, %966 : vector<16x16xf32>
    %c206 = arith.constant 206 : index
    %968 = memref.load %arg2[%c206] : memref<432xf32, #tpu.memory_space<smem>>
    %969 = vector.broadcast %968 : f32 to vector<16x16xf32>
    %970 = arith.mulf %969, %702 : vector<16x16xf32>
    %971 = arith.addf %967, %970 : vector<16x16xf32>
    %c207 = arith.constant 207 : index
    %972 = memref.load %arg2[%c207] : memref<432xf32, #tpu.memory_space<smem>>
    %973 = vector.broadcast %972 : f32 to vector<16x16xf32>
    %974 = arith.mulf %973, %705 : vector<16x16xf32>
    %975 = arith.addf %971, %974 : vector<16x16xf32>
    %c208 = arith.constant 208 : index
    %976 = memref.load %arg2[%c208] : memref<432xf32, #tpu.memory_space<smem>>
    %977 = vector.broadcast %976 : f32 to vector<16x16xf32>
    %978 = arith.mulf %977, %706 : vector<16x16xf32>
    %979 = arith.addf %975, %978 : vector<16x16xf32>
    %c209 = arith.constant 209 : index
    %980 = memref.load %arg2[%c209] : memref<432xf32, #tpu.memory_space<smem>>
    %981 = vector.broadcast %980 : f32 to vector<16x16xf32>
    %982 = arith.mulf %981, %707 : vector<16x16xf32>
    %983 = arith.addf %979, %982 : vector<16x16xf32>
    %c210 = arith.constant 210 : index
    %984 = memref.load %arg2[%c210] : memref<432xf32, #tpu.memory_space<smem>>
    %985 = vector.broadcast %984 : f32 to vector<16x16xf32>
    %986 = arith.mulf %985, %708 : vector<16x16xf32>
    %987 = arith.addf %983, %986 : vector<16x16xf32>
    %c211 = arith.constant 211 : index
    %988 = memref.load %arg2[%c211] : memref<432xf32, #tpu.memory_space<smem>>
    %989 = vector.broadcast %988 : f32 to vector<16x16xf32>
    %990 = arith.mulf %989, %709 : vector<16x16xf32>
    %991 = arith.addf %987, %990 : vector<16x16xf32>
    %c212 = arith.constant 212 : index
    %992 = memref.load %arg2[%c212] : memref<432xf32, #tpu.memory_space<smem>>
    %993 = vector.broadcast %992 : f32 to vector<16x16xf32>
    %994 = arith.mulf %993, %710 : vector<16x16xf32>
    %995 = arith.addf %991, %994 : vector<16x16xf32>
    %c213 = arith.constant 213 : index
    %996 = memref.load %arg2[%c213] : memref<432xf32, #tpu.memory_space<smem>>
    %997 = vector.broadcast %996 : f32 to vector<16x16xf32>
    %998 = arith.mulf %997, %711 : vector<16x16xf32>
    %999 = arith.addf %995, %998 : vector<16x16xf32>
    %c214 = arith.constant 214 : index
    %1000 = memref.load %arg2[%c214] : memref<432xf32, #tpu.memory_space<smem>>
    %1001 = vector.broadcast %1000 : f32 to vector<16x16xf32>
    %1002 = arith.mulf %1001, %712 : vector<16x16xf32>
    %1003 = arith.addf %999, %1002 : vector<16x16xf32>
    %c215 = arith.constant 215 : index
    %1004 = memref.load %arg2[%c215] : memref<432xf32, #tpu.memory_space<smem>>
    %1005 = vector.broadcast %1004 : f32 to vector<16x16xf32>
    %1006 = arith.mulf %1005, %713 : vector<16x16xf32>
    %1007 = arith.addf %1003, %1006 : vector<16x16xf32>
    %cst_78 = arith.constant 0.000000e+00 : f32
    %1008 = vector.broadcast %cst_78 : f32 to vector<16x16xf32>
    %1009 = arith.maximumf %1007, %1008 : vector<16x16xf32>
    %c6_79 = arith.constant 6 : index
    %1010 = memref.load %arg3[%c6_79] : memref<12xf32, #tpu.memory_space<smem>>
    %1011 = vector.broadcast %1010 : f32 to vector<16x16xf32>
    %c216 = arith.constant 216 : index
    %1012 = memref.load %arg2[%c216] : memref<432xf32, #tpu.memory_space<smem>>
    %1013 = vector.broadcast %1012 : f32 to vector<16x16xf32>
    %1014 = arith.mulf %1013, %672 : vector<16x16xf32>
    %1015 = arith.addf %1011, %1014 : vector<16x16xf32>
    %c217 = arith.constant 217 : index
    %1016 = memref.load %arg2[%c217] : memref<432xf32, #tpu.memory_space<smem>>
    %1017 = vector.broadcast %1016 : f32 to vector<16x16xf32>
    %1018 = arith.mulf %1017, %673 : vector<16x16xf32>
    %1019 = arith.addf %1015, %1018 : vector<16x16xf32>
    %c218 = arith.constant 218 : index
    %1020 = memref.load %arg2[%c218] : memref<432xf32, #tpu.memory_space<smem>>
    %1021 = vector.broadcast %1020 : f32 to vector<16x16xf32>
    %1022 = arith.mulf %1021, %674 : vector<16x16xf32>
    %1023 = arith.addf %1019, %1022 : vector<16x16xf32>
    %c219 = arith.constant 219 : index
    %1024 = memref.load %arg2[%c219] : memref<432xf32, #tpu.memory_space<smem>>
    %1025 = vector.broadcast %1024 : f32 to vector<16x16xf32>
    %1026 = arith.mulf %1025, %675 : vector<16x16xf32>
    %1027 = arith.addf %1023, %1026 : vector<16x16xf32>
    %c220 = arith.constant 220 : index
    %1028 = memref.load %arg2[%c220] : memref<432xf32, #tpu.memory_space<smem>>
    %1029 = vector.broadcast %1028 : f32 to vector<16x16xf32>
    %1030 = arith.mulf %1029, %676 : vector<16x16xf32>
    %1031 = arith.addf %1027, %1030 : vector<16x16xf32>
    %c221 = arith.constant 221 : index
    %1032 = memref.load %arg2[%c221] : memref<432xf32, #tpu.memory_space<smem>>
    %1033 = vector.broadcast %1032 : f32 to vector<16x16xf32>
    %1034 = arith.mulf %1033, %677 : vector<16x16xf32>
    %1035 = arith.addf %1031, %1034 : vector<16x16xf32>
    %c222 = arith.constant 222 : index
    %1036 = memref.load %arg2[%c222] : memref<432xf32, #tpu.memory_space<smem>>
    %1037 = vector.broadcast %1036 : f32 to vector<16x16xf32>
    %1038 = arith.mulf %1037, %678 : vector<16x16xf32>
    %1039 = arith.addf %1035, %1038 : vector<16x16xf32>
    %c223 = arith.constant 223 : index
    %1040 = memref.load %arg2[%c223] : memref<432xf32, #tpu.memory_space<smem>>
    %1041 = vector.broadcast %1040 : f32 to vector<16x16xf32>
    %1042 = arith.mulf %1041, %679 : vector<16x16xf32>
    %1043 = arith.addf %1039, %1042 : vector<16x16xf32>
    %c224 = arith.constant 224 : index
    %1044 = memref.load %arg2[%c224] : memref<432xf32, #tpu.memory_space<smem>>
    %1045 = vector.broadcast %1044 : f32 to vector<16x16xf32>
    %1046 = arith.mulf %1045, %680 : vector<16x16xf32>
    %1047 = arith.addf %1043, %1046 : vector<16x16xf32>
    %c225 = arith.constant 225 : index
    %1048 = memref.load %arg2[%c225] : memref<432xf32, #tpu.memory_space<smem>>
    %1049 = vector.broadcast %1048 : f32 to vector<16x16xf32>
    %1050 = arith.mulf %1049, %683 : vector<16x16xf32>
    %1051 = arith.addf %1047, %1050 : vector<16x16xf32>
    %c226 = arith.constant 226 : index
    %1052 = memref.load %arg2[%c226] : memref<432xf32, #tpu.memory_space<smem>>
    %1053 = vector.broadcast %1052 : f32 to vector<16x16xf32>
    %1054 = arith.mulf %1053, %684 : vector<16x16xf32>
    %1055 = arith.addf %1051, %1054 : vector<16x16xf32>
    %c227 = arith.constant 227 : index
    %1056 = memref.load %arg2[%c227] : memref<432xf32, #tpu.memory_space<smem>>
    %1057 = vector.broadcast %1056 : f32 to vector<16x16xf32>
    %1058 = arith.mulf %1057, %685 : vector<16x16xf32>
    %1059 = arith.addf %1055, %1058 : vector<16x16xf32>
    %c228 = arith.constant 228 : index
    %1060 = memref.load %arg2[%c228] : memref<432xf32, #tpu.memory_space<smem>>
    %1061 = vector.broadcast %1060 : f32 to vector<16x16xf32>
    %1062 = arith.mulf %1061, %686 : vector<16x16xf32>
    %1063 = arith.addf %1059, %1062 : vector<16x16xf32>
    %c229 = arith.constant 229 : index
    %1064 = memref.load %arg2[%c229] : memref<432xf32, #tpu.memory_space<smem>>
    %1065 = vector.broadcast %1064 : f32 to vector<16x16xf32>
    %1066 = arith.mulf %1065, %687 : vector<16x16xf32>
    %1067 = arith.addf %1063, %1066 : vector<16x16xf32>
    %c230 = arith.constant 230 : index
    %1068 = memref.load %arg2[%c230] : memref<432xf32, #tpu.memory_space<smem>>
    %1069 = vector.broadcast %1068 : f32 to vector<16x16xf32>
    %1070 = arith.mulf %1069, %688 : vector<16x16xf32>
    %1071 = arith.addf %1067, %1070 : vector<16x16xf32>
    %c231 = arith.constant 231 : index
    %1072 = memref.load %arg2[%c231] : memref<432xf32, #tpu.memory_space<smem>>
    %1073 = vector.broadcast %1072 : f32 to vector<16x16xf32>
    %1074 = arith.mulf %1073, %689 : vector<16x16xf32>
    %1075 = arith.addf %1071, %1074 : vector<16x16xf32>
    %c232 = arith.constant 232 : index
    %1076 = memref.load %arg2[%c232] : memref<432xf32, #tpu.memory_space<smem>>
    %1077 = vector.broadcast %1076 : f32 to vector<16x16xf32>
    %1078 = arith.mulf %1077, %690 : vector<16x16xf32>
    %1079 = arith.addf %1075, %1078 : vector<16x16xf32>
    %c233 = arith.constant 233 : index
    %1080 = memref.load %arg2[%c233] : memref<432xf32, #tpu.memory_space<smem>>
    %1081 = vector.broadcast %1080 : f32 to vector<16x16xf32>
    %1082 = arith.mulf %1081, %691 : vector<16x16xf32>
    %1083 = arith.addf %1079, %1082 : vector<16x16xf32>
    %c234 = arith.constant 234 : index
    %1084 = memref.load %arg2[%c234] : memref<432xf32, #tpu.memory_space<smem>>
    %1085 = vector.broadcast %1084 : f32 to vector<16x16xf32>
    %1086 = arith.mulf %1085, %694 : vector<16x16xf32>
    %1087 = arith.addf %1083, %1086 : vector<16x16xf32>
    %c235 = arith.constant 235 : index
    %1088 = memref.load %arg2[%c235] : memref<432xf32, #tpu.memory_space<smem>>
    %1089 = vector.broadcast %1088 : f32 to vector<16x16xf32>
    %1090 = arith.mulf %1089, %695 : vector<16x16xf32>
    %1091 = arith.addf %1087, %1090 : vector<16x16xf32>
    %c236 = arith.constant 236 : index
    %1092 = memref.load %arg2[%c236] : memref<432xf32, #tpu.memory_space<smem>>
    %1093 = vector.broadcast %1092 : f32 to vector<16x16xf32>
    %1094 = arith.mulf %1093, %696 : vector<16x16xf32>
    %1095 = arith.addf %1091, %1094 : vector<16x16xf32>
    %c237 = arith.constant 237 : index
    %1096 = memref.load %arg2[%c237] : memref<432xf32, #tpu.memory_space<smem>>
    %1097 = vector.broadcast %1096 : f32 to vector<16x16xf32>
    %1098 = arith.mulf %1097, %697 : vector<16x16xf32>
    %1099 = arith.addf %1095, %1098 : vector<16x16xf32>
    %c238 = arith.constant 238 : index
    %1100 = memref.load %arg2[%c238] : memref<432xf32, #tpu.memory_space<smem>>
    %1101 = vector.broadcast %1100 : f32 to vector<16x16xf32>
    %1102 = arith.mulf %1101, %698 : vector<16x16xf32>
    %1103 = arith.addf %1099, %1102 : vector<16x16xf32>
    %c239 = arith.constant 239 : index
    %1104 = memref.load %arg2[%c239] : memref<432xf32, #tpu.memory_space<smem>>
    %1105 = vector.broadcast %1104 : f32 to vector<16x16xf32>
    %1106 = arith.mulf %1105, %699 : vector<16x16xf32>
    %1107 = arith.addf %1103, %1106 : vector<16x16xf32>
    %c240 = arith.constant 240 : index
    %1108 = memref.load %arg2[%c240] : memref<432xf32, #tpu.memory_space<smem>>
    %1109 = vector.broadcast %1108 : f32 to vector<16x16xf32>
    %1110 = arith.mulf %1109, %700 : vector<16x16xf32>
    %1111 = arith.addf %1107, %1110 : vector<16x16xf32>
    %c241 = arith.constant 241 : index
    %1112 = memref.load %arg2[%c241] : memref<432xf32, #tpu.memory_space<smem>>
    %1113 = vector.broadcast %1112 : f32 to vector<16x16xf32>
    %1114 = arith.mulf %1113, %701 : vector<16x16xf32>
    %1115 = arith.addf %1111, %1114 : vector<16x16xf32>
    %c242 = arith.constant 242 : index
    %1116 = memref.load %arg2[%c242] : memref<432xf32, #tpu.memory_space<smem>>
    %1117 = vector.broadcast %1116 : f32 to vector<16x16xf32>
    %1118 = arith.mulf %1117, %702 : vector<16x16xf32>
    %1119 = arith.addf %1115, %1118 : vector<16x16xf32>
    %c243 = arith.constant 243 : index
    %1120 = memref.load %arg2[%c243] : memref<432xf32, #tpu.memory_space<smem>>
    %1121 = vector.broadcast %1120 : f32 to vector<16x16xf32>
    %1122 = arith.mulf %1121, %705 : vector<16x16xf32>
    %1123 = arith.addf %1119, %1122 : vector<16x16xf32>
    %c244 = arith.constant 244 : index
    %1124 = memref.load %arg2[%c244] : memref<432xf32, #tpu.memory_space<smem>>
    %1125 = vector.broadcast %1124 : f32 to vector<16x16xf32>
    %1126 = arith.mulf %1125, %706 : vector<16x16xf32>
    %1127 = arith.addf %1123, %1126 : vector<16x16xf32>
    %c245 = arith.constant 245 : index
    %1128 = memref.load %arg2[%c245] : memref<432xf32, #tpu.memory_space<smem>>
    %1129 = vector.broadcast %1128 : f32 to vector<16x16xf32>
    %1130 = arith.mulf %1129, %707 : vector<16x16xf32>
    %1131 = arith.addf %1127, %1130 : vector<16x16xf32>
    %c246 = arith.constant 246 : index
    %1132 = memref.load %arg2[%c246] : memref<432xf32, #tpu.memory_space<smem>>
    %1133 = vector.broadcast %1132 : f32 to vector<16x16xf32>
    %1134 = arith.mulf %1133, %708 : vector<16x16xf32>
    %1135 = arith.addf %1131, %1134 : vector<16x16xf32>
    %c247 = arith.constant 247 : index
    %1136 = memref.load %arg2[%c247] : memref<432xf32, #tpu.memory_space<smem>>
    %1137 = vector.broadcast %1136 : f32 to vector<16x16xf32>
    %1138 = arith.mulf %1137, %709 : vector<16x16xf32>
    %1139 = arith.addf %1135, %1138 : vector<16x16xf32>
    %c248 = arith.constant 248 : index
    %1140 = memref.load %arg2[%c248] : memref<432xf32, #tpu.memory_space<smem>>
    %1141 = vector.broadcast %1140 : f32 to vector<16x16xf32>
    %1142 = arith.mulf %1141, %710 : vector<16x16xf32>
    %1143 = arith.addf %1139, %1142 : vector<16x16xf32>
    %c249 = arith.constant 249 : index
    %1144 = memref.load %arg2[%c249] : memref<432xf32, #tpu.memory_space<smem>>
    %1145 = vector.broadcast %1144 : f32 to vector<16x16xf32>
    %1146 = arith.mulf %1145, %711 : vector<16x16xf32>
    %1147 = arith.addf %1143, %1146 : vector<16x16xf32>
    %c250 = arith.constant 250 : index
    %1148 = memref.load %arg2[%c250] : memref<432xf32, #tpu.memory_space<smem>>
    %1149 = vector.broadcast %1148 : f32 to vector<16x16xf32>
    %1150 = arith.mulf %1149, %712 : vector<16x16xf32>
    %1151 = arith.addf %1147, %1150 : vector<16x16xf32>
    %c251 = arith.constant 251 : index
    %1152 = memref.load %arg2[%c251] : memref<432xf32, #tpu.memory_space<smem>>
    %1153 = vector.broadcast %1152 : f32 to vector<16x16xf32>
    %1154 = arith.mulf %1153, %713 : vector<16x16xf32>
    %1155 = arith.addf %1151, %1154 : vector<16x16xf32>
    %cst_80 = arith.constant 0.000000e+00 : f32
    %1156 = vector.broadcast %cst_80 : f32 to vector<16x16xf32>
    %1157 = arith.maximumf %1155, %1156 : vector<16x16xf32>
    %c7_81 = arith.constant 7 : index
    %1158 = memref.load %arg3[%c7_81] : memref<12xf32, #tpu.memory_space<smem>>
    %1159 = vector.broadcast %1158 : f32 to vector<16x16xf32>
    %c252 = arith.constant 252 : index
    %1160 = memref.load %arg2[%c252] : memref<432xf32, #tpu.memory_space<smem>>
    %1161 = vector.broadcast %1160 : f32 to vector<16x16xf32>
    %1162 = arith.mulf %1161, %672 : vector<16x16xf32>
    %1163 = arith.addf %1159, %1162 : vector<16x16xf32>
    %c253 = arith.constant 253 : index
    %1164 = memref.load %arg2[%c253] : memref<432xf32, #tpu.memory_space<smem>>
    %1165 = vector.broadcast %1164 : f32 to vector<16x16xf32>
    %1166 = arith.mulf %1165, %673 : vector<16x16xf32>
    %1167 = arith.addf %1163, %1166 : vector<16x16xf32>
    %c254 = arith.constant 254 : index
    %1168 = memref.load %arg2[%c254] : memref<432xf32, #tpu.memory_space<smem>>
    %1169 = vector.broadcast %1168 : f32 to vector<16x16xf32>
    %1170 = arith.mulf %1169, %674 : vector<16x16xf32>
    %1171 = arith.addf %1167, %1170 : vector<16x16xf32>
    %c255 = arith.constant 255 : index
    %1172 = memref.load %arg2[%c255] : memref<432xf32, #tpu.memory_space<smem>>
    %1173 = vector.broadcast %1172 : f32 to vector<16x16xf32>
    %1174 = arith.mulf %1173, %675 : vector<16x16xf32>
    %1175 = arith.addf %1171, %1174 : vector<16x16xf32>
    %c256 = arith.constant 256 : index
    %1176 = memref.load %arg2[%c256] : memref<432xf32, #tpu.memory_space<smem>>
    %1177 = vector.broadcast %1176 : f32 to vector<16x16xf32>
    %1178 = arith.mulf %1177, %676 : vector<16x16xf32>
    %1179 = arith.addf %1175, %1178 : vector<16x16xf32>
    %c257 = arith.constant 257 : index
    %1180 = memref.load %arg2[%c257] : memref<432xf32, #tpu.memory_space<smem>>
    %1181 = vector.broadcast %1180 : f32 to vector<16x16xf32>
    %1182 = arith.mulf %1181, %677 : vector<16x16xf32>
    %1183 = arith.addf %1179, %1182 : vector<16x16xf32>
    %c258 = arith.constant 258 : index
    %1184 = memref.load %arg2[%c258] : memref<432xf32, #tpu.memory_space<smem>>
    %1185 = vector.broadcast %1184 : f32 to vector<16x16xf32>
    %1186 = arith.mulf %1185, %678 : vector<16x16xf32>
    %1187 = arith.addf %1183, %1186 : vector<16x16xf32>
    %c259 = arith.constant 259 : index
    %1188 = memref.load %arg2[%c259] : memref<432xf32, #tpu.memory_space<smem>>
    %1189 = vector.broadcast %1188 : f32 to vector<16x16xf32>
    %1190 = arith.mulf %1189, %679 : vector<16x16xf32>
    %1191 = arith.addf %1187, %1190 : vector<16x16xf32>
    %c260 = arith.constant 260 : index
    %1192 = memref.load %arg2[%c260] : memref<432xf32, #tpu.memory_space<smem>>
    %1193 = vector.broadcast %1192 : f32 to vector<16x16xf32>
    %1194 = arith.mulf %1193, %680 : vector<16x16xf32>
    %1195 = arith.addf %1191, %1194 : vector<16x16xf32>
    %c261 = arith.constant 261 : index
    %1196 = memref.load %arg2[%c261] : memref<432xf32, #tpu.memory_space<smem>>
    %1197 = vector.broadcast %1196 : f32 to vector<16x16xf32>
    %1198 = arith.mulf %1197, %683 : vector<16x16xf32>
    %1199 = arith.addf %1195, %1198 : vector<16x16xf32>
    %c262 = arith.constant 262 : index
    %1200 = memref.load %arg2[%c262] : memref<432xf32, #tpu.memory_space<smem>>
    %1201 = vector.broadcast %1200 : f32 to vector<16x16xf32>
    %1202 = arith.mulf %1201, %684 : vector<16x16xf32>
    %1203 = arith.addf %1199, %1202 : vector<16x16xf32>
    %c263 = arith.constant 263 : index
    %1204 = memref.load %arg2[%c263] : memref<432xf32, #tpu.memory_space<smem>>
    %1205 = vector.broadcast %1204 : f32 to vector<16x16xf32>
    %1206 = arith.mulf %1205, %685 : vector<16x16xf32>
    %1207 = arith.addf %1203, %1206 : vector<16x16xf32>
    %c264 = arith.constant 264 : index
    %1208 = memref.load %arg2[%c264] : memref<432xf32, #tpu.memory_space<smem>>
    %1209 = vector.broadcast %1208 : f32 to vector<16x16xf32>
    %1210 = arith.mulf %1209, %686 : vector<16x16xf32>
    %1211 = arith.addf %1207, %1210 : vector<16x16xf32>
    %c265 = arith.constant 265 : index
    %1212 = memref.load %arg2[%c265] : memref<432xf32, #tpu.memory_space<smem>>
    %1213 = vector.broadcast %1212 : f32 to vector<16x16xf32>
    %1214 = arith.mulf %1213, %687 : vector<16x16xf32>
    %1215 = arith.addf %1211, %1214 : vector<16x16xf32>
    %c266 = arith.constant 266 : index
    %1216 = memref.load %arg2[%c266] : memref<432xf32, #tpu.memory_space<smem>>
    %1217 = vector.broadcast %1216 : f32 to vector<16x16xf32>
    %1218 = arith.mulf %1217, %688 : vector<16x16xf32>
    %1219 = arith.addf %1215, %1218 : vector<16x16xf32>
    %c267 = arith.constant 267 : index
    %1220 = memref.load %arg2[%c267] : memref<432xf32, #tpu.memory_space<smem>>
    %1221 = vector.broadcast %1220 : f32 to vector<16x16xf32>
    %1222 = arith.mulf %1221, %689 : vector<16x16xf32>
    %1223 = arith.addf %1219, %1222 : vector<16x16xf32>
    %c268 = arith.constant 268 : index
    %1224 = memref.load %arg2[%c268] : memref<432xf32, #tpu.memory_space<smem>>
    %1225 = vector.broadcast %1224 : f32 to vector<16x16xf32>
    %1226 = arith.mulf %1225, %690 : vector<16x16xf32>
    %1227 = arith.addf %1223, %1226 : vector<16x16xf32>
    %c269 = arith.constant 269 : index
    %1228 = memref.load %arg2[%c269] : memref<432xf32, #tpu.memory_space<smem>>
    %1229 = vector.broadcast %1228 : f32 to vector<16x16xf32>
    %1230 = arith.mulf %1229, %691 : vector<16x16xf32>
    %1231 = arith.addf %1227, %1230 : vector<16x16xf32>
    %c270 = arith.constant 270 : index
    %1232 = memref.load %arg2[%c270] : memref<432xf32, #tpu.memory_space<smem>>
    %1233 = vector.broadcast %1232 : f32 to vector<16x16xf32>
    %1234 = arith.mulf %1233, %694 : vector<16x16xf32>
    %1235 = arith.addf %1231, %1234 : vector<16x16xf32>
    %c271 = arith.constant 271 : index
    %1236 = memref.load %arg2[%c271] : memref<432xf32, #tpu.memory_space<smem>>
    %1237 = vector.broadcast %1236 : f32 to vector<16x16xf32>
    %1238 = arith.mulf %1237, %695 : vector<16x16xf32>
    %1239 = arith.addf %1235, %1238 : vector<16x16xf32>
    %c272 = arith.constant 272 : index
    %1240 = memref.load %arg2[%c272] : memref<432xf32, #tpu.memory_space<smem>>
    %1241 = vector.broadcast %1240 : f32 to vector<16x16xf32>
    %1242 = arith.mulf %1241, %696 : vector<16x16xf32>
    %1243 = arith.addf %1239, %1242 : vector<16x16xf32>
    %c273 = arith.constant 273 : index
    %1244 = memref.load %arg2[%c273] : memref<432xf32, #tpu.memory_space<smem>>
    %1245 = vector.broadcast %1244 : f32 to vector<16x16xf32>
    %1246 = arith.mulf %1245, %697 : vector<16x16xf32>
    %1247 = arith.addf %1243, %1246 : vector<16x16xf32>
    %c274 = arith.constant 274 : index
    %1248 = memref.load %arg2[%c274] : memref<432xf32, #tpu.memory_space<smem>>
    %1249 = vector.broadcast %1248 : f32 to vector<16x16xf32>
    %1250 = arith.mulf %1249, %698 : vector<16x16xf32>
    %1251 = arith.addf %1247, %1250 : vector<16x16xf32>
    %c275 = arith.constant 275 : index
    %1252 = memref.load %arg2[%c275] : memref<432xf32, #tpu.memory_space<smem>>
    %1253 = vector.broadcast %1252 : f32 to vector<16x16xf32>
    %1254 = arith.mulf %1253, %699 : vector<16x16xf32>
    %1255 = arith.addf %1251, %1254 : vector<16x16xf32>
    %c276 = arith.constant 276 : index
    %1256 = memref.load %arg2[%c276] : memref<432xf32, #tpu.memory_space<smem>>
    %1257 = vector.broadcast %1256 : f32 to vector<16x16xf32>
    %1258 = arith.mulf %1257, %700 : vector<16x16xf32>
    %1259 = arith.addf %1255, %1258 : vector<16x16xf32>
    %c277 = arith.constant 277 : index
    %1260 = memref.load %arg2[%c277] : memref<432xf32, #tpu.memory_space<smem>>
    %1261 = vector.broadcast %1260 : f32 to vector<16x16xf32>
    %1262 = arith.mulf %1261, %701 : vector<16x16xf32>
    %1263 = arith.addf %1259, %1262 : vector<16x16xf32>
    %c278 = arith.constant 278 : index
    %1264 = memref.load %arg2[%c278] : memref<432xf32, #tpu.memory_space<smem>>
    %1265 = vector.broadcast %1264 : f32 to vector<16x16xf32>
    %1266 = arith.mulf %1265, %702 : vector<16x16xf32>
    %1267 = arith.addf %1263, %1266 : vector<16x16xf32>
    %c279 = arith.constant 279 : index
    %1268 = memref.load %arg2[%c279] : memref<432xf32, #tpu.memory_space<smem>>
    %1269 = vector.broadcast %1268 : f32 to vector<16x16xf32>
    %1270 = arith.mulf %1269, %705 : vector<16x16xf32>
    %1271 = arith.addf %1267, %1270 : vector<16x16xf32>
    %c280 = arith.constant 280 : index
    %1272 = memref.load %arg2[%c280] : memref<432xf32, #tpu.memory_space<smem>>
    %1273 = vector.broadcast %1272 : f32 to vector<16x16xf32>
    %1274 = arith.mulf %1273, %706 : vector<16x16xf32>
    %1275 = arith.addf %1271, %1274 : vector<16x16xf32>
    %c281 = arith.constant 281 : index
    %1276 = memref.load %arg2[%c281] : memref<432xf32, #tpu.memory_space<smem>>
    %1277 = vector.broadcast %1276 : f32 to vector<16x16xf32>
    %1278 = arith.mulf %1277, %707 : vector<16x16xf32>
    %1279 = arith.addf %1275, %1278 : vector<16x16xf32>
    %c282 = arith.constant 282 : index
    %1280 = memref.load %arg2[%c282] : memref<432xf32, #tpu.memory_space<smem>>
    %1281 = vector.broadcast %1280 : f32 to vector<16x16xf32>
    %1282 = arith.mulf %1281, %708 : vector<16x16xf32>
    %1283 = arith.addf %1279, %1282 : vector<16x16xf32>
    %c283 = arith.constant 283 : index
    %1284 = memref.load %arg2[%c283] : memref<432xf32, #tpu.memory_space<smem>>
    %1285 = vector.broadcast %1284 : f32 to vector<16x16xf32>
    %1286 = arith.mulf %1285, %709 : vector<16x16xf32>
    %1287 = arith.addf %1283, %1286 : vector<16x16xf32>
    %c284 = arith.constant 284 : index
    %1288 = memref.load %arg2[%c284] : memref<432xf32, #tpu.memory_space<smem>>
    %1289 = vector.broadcast %1288 : f32 to vector<16x16xf32>
    %1290 = arith.mulf %1289, %710 : vector<16x16xf32>
    %1291 = arith.addf %1287, %1290 : vector<16x16xf32>
    %c285 = arith.constant 285 : index
    %1292 = memref.load %arg2[%c285] : memref<432xf32, #tpu.memory_space<smem>>
    %1293 = vector.broadcast %1292 : f32 to vector<16x16xf32>
    %1294 = arith.mulf %1293, %711 : vector<16x16xf32>
    %1295 = arith.addf %1291, %1294 : vector<16x16xf32>
    %c286 = arith.constant 286 : index
    %1296 = memref.load %arg2[%c286] : memref<432xf32, #tpu.memory_space<smem>>
    %1297 = vector.broadcast %1296 : f32 to vector<16x16xf32>
    %1298 = arith.mulf %1297, %712 : vector<16x16xf32>
    %1299 = arith.addf %1295, %1298 : vector<16x16xf32>
    %c287 = arith.constant 287 : index
    %1300 = memref.load %arg2[%c287] : memref<432xf32, #tpu.memory_space<smem>>
    %1301 = vector.broadcast %1300 : f32 to vector<16x16xf32>
    %1302 = arith.mulf %1301, %713 : vector<16x16xf32>
    %1303 = arith.addf %1299, %1302 : vector<16x16xf32>
    %cst_82 = arith.constant 0.000000e+00 : f32
    %1304 = vector.broadcast %cst_82 : f32 to vector<16x16xf32>
    %1305 = arith.maximumf %1303, %1304 : vector<16x16xf32>
    %c0_83 = arith.constant 0 : index
    %c1_84 = arith.constant 1 : index
    %c1_85 = arith.constant 1 : index
    %1306 = vector.load %arg5[%c0_83, %c1_84, %c1_85] : memref<4x18x18xf32, #tpu.memory_space<vmem>>, vector<1x16x16xf32>
    %1307 = vector.shape_cast %1306 : vector<1x16x16xf32> to vector<16x16xf32>
    %1308 = vector.shape_cast %861 : vector<16x16xf32> to vector<1x16x16xf32>
    tpu.vector_store %arg5[%c0_83, %c1_84, %c1_85], %1308 {strides = array<i32>} : memref<4x18x18xf32, #tpu.memory_space<vmem>>, vector<1x16x16xf32>,
    %c1_86 = arith.constant 1 : index
    %c1_87 = arith.constant 1 : index
    %c1_88 = arith.constant 1 : index
    %1309 = vector.load %arg5[%c1_86, %c1_87, %c1_88] : memref<4x18x18xf32, #tpu.memory_space<vmem>>, vector<1x16x16xf32>
    %1310 = vector.shape_cast %1309 : vector<1x16x16xf32> to vector<16x16xf32>
    %1311 = vector.shape_cast %1009 : vector<16x16xf32> to vector<1x16x16xf32>
    tpu.vector_store %arg5[%c1_86, %c1_87, %c1_88], %1311 {strides = array<i32>} : memref<4x18x18xf32, #tpu.memory_space<vmem>>, vector<1x16x16xf32>,
    %c2_89 = arith.constant 2 : index
    %c1_90 = arith.constant 1 : index
    %c1_91 = arith.constant 1 : index
    %1312 = vector.load %arg5[%c2_89, %c1_90, %c1_91] : memref<4x18x18xf32, #tpu.memory_space<vmem>>, vector<1x16x16xf32>
    %1313 = vector.shape_cast %1312 : vector<1x16x16xf32> to vector<16x16xf32>
    %1314 = vector.shape_cast %1157 : vector<16x16xf32> to vector<1x16x16xf32>
    tpu.vector_store %arg5[%c2_89, %c1_90, %c1_91], %1314 {strides = array<i32>} : memref<4x18x18xf32, #tpu.memory_space<vmem>>, vector<1x16x16xf32>,
    %c3_92 = arith.constant 3 : index
    %c1_93 = arith.constant 1 : index
    %c1_94 = arith.constant 1 : index
    %1315 = vector.load %arg5[%c3_92, %c1_93, %c1_94] : memref<4x18x18xf32, #tpu.memory_space<vmem>>, vector<1x16x16xf32>
    %1316 = vector.shape_cast %1315 : vector<1x16x16xf32> to vector<16x16xf32>
    %1317 = vector.shape_cast %1305 : vector<16x16xf32> to vector<1x16x16xf32>
    tpu.vector_store %arg5[%c3_92, %c1_93, %c1_94], %1317 {strides = array<i32>} : memref<4x18x18xf32, #tpu.memory_space<vmem>>, vector<1x16x16xf32>,
    %c0_95 = arith.constant 0 : index
    %c0_96 = arith.constant 0 : index
    %c0_97 = arith.constant 0 : index
    %1318 = vector.load %arg5[%c0_95, %c0_96, %c0_97] : memref<4x18x18xf32, #tpu.memory_space<vmem>>, vector<1x18x18xf32>
    %1319 = vector.shape_cast %1318 : vector<1x18x18xf32> to vector<18x18xf32>
    %1320 = vector.extract_strided_slice %1319 {offsets = [0, 0], sizes = [16, 16], strides = [1, 1]} : vector<18x18xf32> to vector<16x16xf32>
    %1321 = vector.extract_strided_slice %1319 {offsets = [0, 1], sizes = [16, 16], strides = [1, 1]} : vector<18x18xf32> to vector<16x16xf32>
    %1322 = vector.extract_strided_slice %1319 {offsets = [0, 2], sizes = [16, 16], strides = [1, 1]} : vector<18x18xf32> to vector<16x16xf32>
    %1323 = vector.extract_strided_slice %1319 {offsets = [1, 0], sizes = [16, 16], strides = [1, 1]} : vector<18x18xf32> to vector<16x16xf32>
    %1324 = vector.extract_strided_slice %1319 {offsets = [1, 1], sizes = [16, 16], strides = [1, 1]} : vector<18x18xf32> to vector<16x16xf32>
    %1325 = vector.extract_strided_slice %1319 {offsets = [1, 2], sizes = [16, 16], strides = [1, 1]} : vector<18x18xf32> to vector<16x16xf32>
    %1326 = vector.extract_strided_slice %1319 {offsets = [2, 0], sizes = [16, 16], strides = [1, 1]} : vector<18x18xf32> to vector<16x16xf32>
    %1327 = vector.extract_strided_slice %1319 {offsets = [2, 1], sizes = [16, 16], strides = [1, 1]} : vector<18x18xf32> to vector<16x16xf32>
    %1328 = vector.extract_strided_slice %1319 {offsets = [2, 2], sizes = [16, 16], strides = [1, 1]} : vector<18x18xf32> to vector<16x16xf32>
    %c1_98 = arith.constant 1 : index
    %c0_99 = arith.constant 0 : index
    %c0_100 = arith.constant 0 : index
    %1329 = vector.load %arg5[%c1_98, %c0_99, %c0_100] : memref<4x18x18xf32, #tpu.memory_space<vmem>>, vector<1x18x18xf32>
    %1330 = vector.shape_cast %1329 : vector<1x18x18xf32> to vector<18x18xf32>
    %1331 = vector.extract_strided_slice %1330 {offsets = [0, 0], sizes = [16, 16], strides = [1, 1]} : vector<18x18xf32> to vector<16x16xf32>
    %1332 = vector.extract_strided_slice %1330 {offsets = [0, 1], sizes = [16, 16], strides = [1, 1]} : vector<18x18xf32> to vector<16x16xf32>
    %1333 = vector.extract_strided_slice %1330 {offsets = [0, 2], sizes = [16, 16], strides = [1, 1]} : vector<18x18xf32> to vector<16x16xf32>
    %1334 = vector.extract_strided_slice %1330 {offsets = [1, 0], sizes = [16, 16], strides = [1, 1]} : vector<18x18xf32> to vector<16x16xf32>
    %1335 = vector.extract_strided_slice %1330 {offsets = [1, 1], sizes = [16, 16], strides = [1, 1]} : vector<18x18xf32> to vector<16x16xf32>
    %1336 = vector.extract_strided_slice %1330 {offsets = [1, 2], sizes = [16, 16], strides = [1, 1]} : vector<18x18xf32> to vector<16x16xf32>
    %1337 = vector.extract_strided_slice %1330 {offsets = [2, 0], sizes = [16, 16], strides = [1, 1]} : vector<18x18xf32> to vector<16x16xf32>
    %1338 = vector.extract_strided_slice %1330 {offsets = [2, 1], sizes = [16, 16], strides = [1, 1]} : vector<18x18xf32> to vector<16x16xf32>
    %1339 = vector.extract_strided_slice %1330 {offsets = [2, 2], sizes = [16, 16], strides = [1, 1]} : vector<18x18xf32> to vector<16x16xf32>
    %c2_101 = arith.constant 2 : index
    %c0_102 = arith.constant 0 : index
    %c0_103 = arith.constant 0 : index
    %1340 = vector.load %arg5[%c2_101, %c0_102, %c0_103] : memref<4x18x18xf32, #tpu.memory_space<vmem>>, vector<1x18x18xf32>
    %1341 = vector.shape_cast %1340 : vector<1x18x18xf32> to vector<18x18xf32>
    %1342 = vector.extract_strided_slice %1341 {offsets = [0, 0], sizes = [16, 16], strides = [1, 1]} : vector<18x18xf32> to vector<16x16xf32>
    %1343 = vector.extract_strided_slice %1341 {offsets = [0, 1], sizes = [16, 16], strides = [1, 1]} : vector<18x18xf32> to vector<16x16xf32>
    %1344 = vector.extract_strided_slice %1341 {offsets = [0, 2], sizes = [16, 16], strides = [1, 1]} : vector<18x18xf32> to vector<16x16xf32>
    %1345 = vector.extract_strided_slice %1341 {offsets = [1, 0], sizes = [16, 16], strides = [1, 1]} : vector<18x18xf32> to vector<16x16xf32>
    %1346 = vector.extract_strided_slice %1341 {offsets = [1, 1], sizes = [16, 16], strides = [1, 1]} : vector<18x18xf32> to vector<16x16xf32>
    %1347 = vector.extract_strided_slice %1341 {offsets = [1, 2], sizes = [16, 16], strides = [1, 1]} : vector<18x18xf32> to vector<16x16xf32>
    %1348 = vector.extract_strided_slice %1341 {offsets = [2, 0], sizes = [16, 16], strides = [1, 1]} : vector<18x18xf32> to vector<16x16xf32>
    %1349 = vector.extract_strided_slice %1341 {offsets = [2, 1], sizes = [16, 16], strides = [1, 1]} : vector<18x18xf32> to vector<16x16xf32>
    %1350 = vector.extract_strided_slice %1341 {offsets = [2, 2], sizes = [16, 16], strides = [1, 1]} : vector<18x18xf32> to vector<16x16xf32>
    %c3_104 = arith.constant 3 : index
    %c0_105 = arith.constant 0 : index
    %c0_106 = arith.constant 0 : index
    %1351 = vector.load %arg5[%c3_104, %c0_105, %c0_106] : memref<4x18x18xf32, #tpu.memory_space<vmem>>, vector<1x18x18xf32>
    %1352 = vector.shape_cast %1351 : vector<1x18x18xf32> to vector<18x18xf32>
    %1353 = vector.extract_strided_slice %1352 {offsets = [0, 0], sizes = [16, 16], strides = [1, 1]} : vector<18x18xf32> to vector<16x16xf32>
    %1354 = vector.extract_strided_slice %1352 {offsets = [0, 1], sizes = [16, 16], strides = [1, 1]} : vector<18x18xf32> to vector<16x16xf32>
    %1355 = vector.extract_strided_slice %1352 {offsets = [0, 2], sizes = [16, 16], strides = [1, 1]} : vector<18x18xf32> to vector<16x16xf32>
    %1356 = vector.extract_strided_slice %1352 {offsets = [1, 0], sizes = [16, 16], strides = [1, 1]} : vector<18x18xf32> to vector<16x16xf32>
    %1357 = vector.extract_strided_slice %1352 {offsets = [1, 1], sizes = [16, 16], strides = [1, 1]} : vector<18x18xf32> to vector<16x16xf32>
    %1358 = vector.extract_strided_slice %1352 {offsets = [1, 2], sizes = [16, 16], strides = [1, 1]} : vector<18x18xf32> to vector<16x16xf32>
    %1359 = vector.extract_strided_slice %1352 {offsets = [2, 0], sizes = [16, 16], strides = [1, 1]} : vector<18x18xf32> to vector<16x16xf32>
    %1360 = vector.extract_strided_slice %1352 {offsets = [2, 1], sizes = [16, 16], strides = [1, 1]} : vector<18x18xf32> to vector<16x16xf32>
    %1361 = vector.extract_strided_slice %1352 {offsets = [2, 2], sizes = [16, 16], strides = [1, 1]} : vector<18x18xf32> to vector<16x16xf32>
    %c8_107 = arith.constant 8 : index
    %1362 = memref.load %arg3[%c8_107] : memref<12xf32, #tpu.memory_space<smem>>
    %1363 = vector.broadcast %1362 : f32 to vector<16x16xf32>
    %c288 = arith.constant 288 : index
    %1364 = memref.load %arg2[%c288] : memref<432xf32, #tpu.memory_space<smem>>
    %1365 = vector.broadcast %1364 : f32 to vector<16x16xf32>
    %1366 = arith.mulf %1365, %1320 : vector<16x16xf32>
    %1367 = arith.addf %1363, %1366 : vector<16x16xf32>
    %c289 = arith.constant 289 : index
    %1368 = memref.load %arg2[%c289] : memref<432xf32, #tpu.memory_space<smem>>
    %1369 = vector.broadcast %1368 : f32 to vector<16x16xf32>
    %1370 = arith.mulf %1369, %1321 : vector<16x16xf32>
    %1371 = arith.addf %1367, %1370 : vector<16x16xf32>
    %c290 = arith.constant 290 : index
    %1372 = memref.load %arg2[%c290] : memref<432xf32, #tpu.memory_space<smem>>
    %1373 = vector.broadcast %1372 : f32 to vector<16x16xf32>
    %1374 = arith.mulf %1373, %1322 : vector<16x16xf32>
    %1375 = arith.addf %1371, %1374 : vector<16x16xf32>
    %c291 = arith.constant 291 : index
    %1376 = memref.load %arg2[%c291] : memref<432xf32, #tpu.memory_space<smem>>
    %1377 = vector.broadcast %1376 : f32 to vector<16x16xf32>
    %1378 = arith.mulf %1377, %1323 : vector<16x16xf32>
    %1379 = arith.addf %1375, %1378 : vector<16x16xf32>
    %c292 = arith.constant 292 : index
    %1380 = memref.load %arg2[%c292] : memref<432xf32, #tpu.memory_space<smem>>
    %1381 = vector.broadcast %1380 : f32 to vector<16x16xf32>
    %1382 = arith.mulf %1381, %1324 : vector<16x16xf32>
    %1383 = arith.addf %1379, %1382 : vector<16x16xf32>
    %c293 = arith.constant 293 : index
    %1384 = memref.load %arg2[%c293] : memref<432xf32, #tpu.memory_space<smem>>
    %1385 = vector.broadcast %1384 : f32 to vector<16x16xf32>
    %1386 = arith.mulf %1385, %1325 : vector<16x16xf32>
    %1387 = arith.addf %1383, %1386 : vector<16x16xf32>
    %c294 = arith.constant 294 : index
    %1388 = memref.load %arg2[%c294] : memref<432xf32, #tpu.memory_space<smem>>
    %1389 = vector.broadcast %1388 : f32 to vector<16x16xf32>
    %1390 = arith.mulf %1389, %1326 : vector<16x16xf32>
    %1391 = arith.addf %1387, %1390 : vector<16x16xf32>
    %c295 = arith.constant 295 : index
    %1392 = memref.load %arg2[%c295] : memref<432xf32, #tpu.memory_space<smem>>
    %1393 = vector.broadcast %1392 : f32 to vector<16x16xf32>
    %1394 = arith.mulf %1393, %1327 : vector<16x16xf32>
    %1395 = arith.addf %1391, %1394 : vector<16x16xf32>
    %c296 = arith.constant 296 : index
    %1396 = memref.load %arg2[%c296] : memref<432xf32, #tpu.memory_space<smem>>
    %1397 = vector.broadcast %1396 : f32 to vector<16x16xf32>
    %1398 = arith.mulf %1397, %1328 : vector<16x16xf32>
    %1399 = arith.addf %1395, %1398 : vector<16x16xf32>
    %c297 = arith.constant 297 : index
    %1400 = memref.load %arg2[%c297] : memref<432xf32, #tpu.memory_space<smem>>
    %1401 = vector.broadcast %1400 : f32 to vector<16x16xf32>
    %1402 = arith.mulf %1401, %1331 : vector<16x16xf32>
    %1403 = arith.addf %1399, %1402 : vector<16x16xf32>
    %c298 = arith.constant 298 : index
    %1404 = memref.load %arg2[%c298] : memref<432xf32, #tpu.memory_space<smem>>
    %1405 = vector.broadcast %1404 : f32 to vector<16x16xf32>
    %1406 = arith.mulf %1405, %1332 : vector<16x16xf32>
    %1407 = arith.addf %1403, %1406 : vector<16x16xf32>
    %c299 = arith.constant 299 : index
    %1408 = memref.load %arg2[%c299] : memref<432xf32, #tpu.memory_space<smem>>
    %1409 = vector.broadcast %1408 : f32 to vector<16x16xf32>
    %1410 = arith.mulf %1409, %1333 : vector<16x16xf32>
    %1411 = arith.addf %1407, %1410 : vector<16x16xf32>
    %c300 = arith.constant 300 : index
    %1412 = memref.load %arg2[%c300] : memref<432xf32, #tpu.memory_space<smem>>
    %1413 = vector.broadcast %1412 : f32 to vector<16x16xf32>
    %1414 = arith.mulf %1413, %1334 : vector<16x16xf32>
    %1415 = arith.addf %1411, %1414 : vector<16x16xf32>
    %c301 = arith.constant 301 : index
    %1416 = memref.load %arg2[%c301] : memref<432xf32, #tpu.memory_space<smem>>
    %1417 = vector.broadcast %1416 : f32 to vector<16x16xf32>
    %1418 = arith.mulf %1417, %1335 : vector<16x16xf32>
    %1419 = arith.addf %1415, %1418 : vector<16x16xf32>
    %c302 = arith.constant 302 : index
    %1420 = memref.load %arg2[%c302] : memref<432xf32, #tpu.memory_space<smem>>
    %1421 = vector.broadcast %1420 : f32 to vector<16x16xf32>
    %1422 = arith.mulf %1421, %1336 : vector<16x16xf32>
    %1423 = arith.addf %1419, %1422 : vector<16x16xf32>
    %c303 = arith.constant 303 : index
    %1424 = memref.load %arg2[%c303] : memref<432xf32, #tpu.memory_space<smem>>
    %1425 = vector.broadcast %1424 : f32 to vector<16x16xf32>
    %1426 = arith.mulf %1425, %1337 : vector<16x16xf32>
    %1427 = arith.addf %1423, %1426 : vector<16x16xf32>
    %c304 = arith.constant 304 : index
    %1428 = memref.load %arg2[%c304] : memref<432xf32, #tpu.memory_space<smem>>
    %1429 = vector.broadcast %1428 : f32 to vector<16x16xf32>
    %1430 = arith.mulf %1429, %1338 : vector<16x16xf32>
    %1431 = arith.addf %1427, %1430 : vector<16x16xf32>
    %c305 = arith.constant 305 : index
    %1432 = memref.load %arg2[%c305] : memref<432xf32, #tpu.memory_space<smem>>
    %1433 = vector.broadcast %1432 : f32 to vector<16x16xf32>
    %1434 = arith.mulf %1433, %1339 : vector<16x16xf32>
    %1435 = arith.addf %1431, %1434 : vector<16x16xf32>
    %c306 = arith.constant 306 : index
    %1436 = memref.load %arg2[%c306] : memref<432xf32, #tpu.memory_space<smem>>
    %1437 = vector.broadcast %1436 : f32 to vector<16x16xf32>
    %1438 = arith.mulf %1437, %1342 : vector<16x16xf32>
    %1439 = arith.addf %1435, %1438 : vector<16x16xf32>
    %c307 = arith.constant 307 : index
    %1440 = memref.load %arg2[%c307] : memref<432xf32, #tpu.memory_space<smem>>
    %1441 = vector.broadcast %1440 : f32 to vector<16x16xf32>
    %1442 = arith.mulf %1441, %1343 : vector<16x16xf32>
    %1443 = arith.addf %1439, %1442 : vector<16x16xf32>
    %c308 = arith.constant 308 : index
    %1444 = memref.load %arg2[%c308] : memref<432xf32, #tpu.memory_space<smem>>
    %1445 = vector.broadcast %1444 : f32 to vector<16x16xf32>
    %1446 = arith.mulf %1445, %1344 : vector<16x16xf32>
    %1447 = arith.addf %1443, %1446 : vector<16x16xf32>
    %c309 = arith.constant 309 : index
    %1448 = memref.load %arg2[%c309] : memref<432xf32, #tpu.memory_space<smem>>
    %1449 = vector.broadcast %1448 : f32 to vector<16x16xf32>
    %1450 = arith.mulf %1449, %1345 : vector<16x16xf32>
    %1451 = arith.addf %1447, %1450 : vector<16x16xf32>
    %c310 = arith.constant 310 : index
    %1452 = memref.load %arg2[%c310] : memref<432xf32, #tpu.memory_space<smem>>
    %1453 = vector.broadcast %1452 : f32 to vector<16x16xf32>
    %1454 = arith.mulf %1453, %1346 : vector<16x16xf32>
    %1455 = arith.addf %1451, %1454 : vector<16x16xf32>
    %c311 = arith.constant 311 : index
    %1456 = memref.load %arg2[%c311] : memref<432xf32, #tpu.memory_space<smem>>
    %1457 = vector.broadcast %1456 : f32 to vector<16x16xf32>
    %1458 = arith.mulf %1457, %1347 : vector<16x16xf32>
    %1459 = arith.addf %1455, %1458 : vector<16x16xf32>
    %c312 = arith.constant 312 : index
    %1460 = memref.load %arg2[%c312] : memref<432xf32, #tpu.memory_space<smem>>
    %1461 = vector.broadcast %1460 : f32 to vector<16x16xf32>
    %1462 = arith.mulf %1461, %1348 : vector<16x16xf32>
    %1463 = arith.addf %1459, %1462 : vector<16x16xf32>
    %c313 = arith.constant 313 : index
    %1464 = memref.load %arg2[%c313] : memref<432xf32, #tpu.memory_space<smem>>
    %1465 = vector.broadcast %1464 : f32 to vector<16x16xf32>
    %1466 = arith.mulf %1465, %1349 : vector<16x16xf32>
    %1467 = arith.addf %1463, %1466 : vector<16x16xf32>
    %c314 = arith.constant 314 : index
    %1468 = memref.load %arg2[%c314] : memref<432xf32, #tpu.memory_space<smem>>
    %1469 = vector.broadcast %1468 : f32 to vector<16x16xf32>
    %1470 = arith.mulf %1469, %1350 : vector<16x16xf32>
    %1471 = arith.addf %1467, %1470 : vector<16x16xf32>
    %c315 = arith.constant 315 : index
    %1472 = memref.load %arg2[%c315] : memref<432xf32, #tpu.memory_space<smem>>
    %1473 = vector.broadcast %1472 : f32 to vector<16x16xf32>
    %1474 = arith.mulf %1473, %1353 : vector<16x16xf32>
    %1475 = arith.addf %1471, %1474 : vector<16x16xf32>
    %c316 = arith.constant 316 : index
    %1476 = memref.load %arg2[%c316] : memref<432xf32, #tpu.memory_space<smem>>
    %1477 = vector.broadcast %1476 : f32 to vector<16x16xf32>
    %1478 = arith.mulf %1477, %1354 : vector<16x16xf32>
    %1479 = arith.addf %1475, %1478 : vector<16x16xf32>
    %c317 = arith.constant 317 : index
    %1480 = memref.load %arg2[%c317] : memref<432xf32, #tpu.memory_space<smem>>
    %1481 = vector.broadcast %1480 : f32 to vector<16x16xf32>
    %1482 = arith.mulf %1481, %1355 : vector<16x16xf32>
    %1483 = arith.addf %1479, %1482 : vector<16x16xf32>
    %c318 = arith.constant 318 : index
    %1484 = memref.load %arg2[%c318] : memref<432xf32, #tpu.memory_space<smem>>
    %1485 = vector.broadcast %1484 : f32 to vector<16x16xf32>
    %1486 = arith.mulf %1485, %1356 : vector<16x16xf32>
    %1487 = arith.addf %1483, %1486 : vector<16x16xf32>
    %c319 = arith.constant 319 : index
    %1488 = memref.load %arg2[%c319] : memref<432xf32, #tpu.memory_space<smem>>
    %1489 = vector.broadcast %1488 : f32 to vector<16x16xf32>
    %1490 = arith.mulf %1489, %1357 : vector<16x16xf32>
    %1491 = arith.addf %1487, %1490 : vector<16x16xf32>
    %c320 = arith.constant 320 : index
    %1492 = memref.load %arg2[%c320] : memref<432xf32, #tpu.memory_space<smem>>
    %1493 = vector.broadcast %1492 : f32 to vector<16x16xf32>
    %1494 = arith.mulf %1493, %1358 : vector<16x16xf32>
    %1495 = arith.addf %1491, %1494 : vector<16x16xf32>
    %c321 = arith.constant 321 : index
    %1496 = memref.load %arg2[%c321] : memref<432xf32, #tpu.memory_space<smem>>
    %1497 = vector.broadcast %1496 : f32 to vector<16x16xf32>
    %1498 = arith.mulf %1497, %1359 : vector<16x16xf32>
    %1499 = arith.addf %1495, %1498 : vector<16x16xf32>
    %c322 = arith.constant 322 : index
    %1500 = memref.load %arg2[%c322] : memref<432xf32, #tpu.memory_space<smem>>
    %1501 = vector.broadcast %1500 : f32 to vector<16x16xf32>
    %1502 = arith.mulf %1501, %1360 : vector<16x16xf32>
    %1503 = arith.addf %1499, %1502 : vector<16x16xf32>
    %c323 = arith.constant 323 : index
    %1504 = memref.load %arg2[%c323] : memref<432xf32, #tpu.memory_space<smem>>
    %1505 = vector.broadcast %1504 : f32 to vector<16x16xf32>
    %1506 = arith.mulf %1505, %1361 : vector<16x16xf32>
    %1507 = arith.addf %1503, %1506 : vector<16x16xf32>
    %cst_108 = arith.constant 0.000000e+00 : f32
    %1508 = vector.broadcast %cst_108 : f32 to vector<16x16xf32>
    %1509 = arith.maximumf %1507, %1508 : vector<16x16xf32>
    %c9_109 = arith.constant 9 : index
    %1510 = memref.load %arg3[%c9_109] : memref<12xf32, #tpu.memory_space<smem>>
    %1511 = vector.broadcast %1510 : f32 to vector<16x16xf32>
    %c324 = arith.constant 324 : index
    %1512 = memref.load %arg2[%c324] : memref<432xf32, #tpu.memory_space<smem>>
    %1513 = vector.broadcast %1512 : f32 to vector<16x16xf32>
    %1514 = arith.mulf %1513, %1320 : vector<16x16xf32>
    %1515 = arith.addf %1511, %1514 : vector<16x16xf32>
    %c325 = arith.constant 325 : index
    %1516 = memref.load %arg2[%c325] : memref<432xf32, #tpu.memory_space<smem>>
    %1517 = vector.broadcast %1516 : f32 to vector<16x16xf32>
    %1518 = arith.mulf %1517, %1321 : vector<16x16xf32>
    %1519 = arith.addf %1515, %1518 : vector<16x16xf32>
    %c326 = arith.constant 326 : index
    %1520 = memref.load %arg2[%c326] : memref<432xf32, #tpu.memory_space<smem>>
    %1521 = vector.broadcast %1520 : f32 to vector<16x16xf32>
    %1522 = arith.mulf %1521, %1322 : vector<16x16xf32>
    %1523 = arith.addf %1519, %1522 : vector<16x16xf32>
    %c327 = arith.constant 327 : index
    %1524 = memref.load %arg2[%c327] : memref<432xf32, #tpu.memory_space<smem>>
    %1525 = vector.broadcast %1524 : f32 to vector<16x16xf32>
    %1526 = arith.mulf %1525, %1323 : vector<16x16xf32>
    %1527 = arith.addf %1523, %1526 : vector<16x16xf32>
    %c328 = arith.constant 328 : index
    %1528 = memref.load %arg2[%c328] : memref<432xf32, #tpu.memory_space<smem>>
    %1529 = vector.broadcast %1528 : f32 to vector<16x16xf32>
    %1530 = arith.mulf %1529, %1324 : vector<16x16xf32>
    %1531 = arith.addf %1527, %1530 : vector<16x16xf32>
    %c329 = arith.constant 329 : index
    %1532 = memref.load %arg2[%c329] : memref<432xf32, #tpu.memory_space<smem>>
    %1533 = vector.broadcast %1532 : f32 to vector<16x16xf32>
    %1534 = arith.mulf %1533, %1325 : vector<16x16xf32>
    %1535 = arith.addf %1531, %1534 : vector<16x16xf32>
    %c330 = arith.constant 330 : index
    %1536 = memref.load %arg2[%c330] : memref<432xf32, #tpu.memory_space<smem>>
    %1537 = vector.broadcast %1536 : f32 to vector<16x16xf32>
    %1538 = arith.mulf %1537, %1326 : vector<16x16xf32>
    %1539 = arith.addf %1535, %1538 : vector<16x16xf32>
    %c331 = arith.constant 331 : index
    %1540 = memref.load %arg2[%c331] : memref<432xf32, #tpu.memory_space<smem>>
    %1541 = vector.broadcast %1540 : f32 to vector<16x16xf32>
    %1542 = arith.mulf %1541, %1327 : vector<16x16xf32>
    %1543 = arith.addf %1539, %1542 : vector<16x16xf32>
    %c332 = arith.constant 332 : index
    %1544 = memref.load %arg2[%c332] : memref<432xf32, #tpu.memory_space<smem>>
    %1545 = vector.broadcast %1544 : f32 to vector<16x16xf32>
    %1546 = arith.mulf %1545, %1328 : vector<16x16xf32>
    %1547 = arith.addf %1543, %1546 : vector<16x16xf32>
    %c333 = arith.constant 333 : index
    %1548 = memref.load %arg2[%c333] : memref<432xf32, #tpu.memory_space<smem>>
    %1549 = vector.broadcast %1548 : f32 to vector<16x16xf32>
    %1550 = arith.mulf %1549, %1331 : vector<16x16xf32>
    %1551 = arith.addf %1547, %1550 : vector<16x16xf32>
    %c334 = arith.constant 334 : index
    %1552 = memref.load %arg2[%c334] : memref<432xf32, #tpu.memory_space<smem>>
    %1553 = vector.broadcast %1552 : f32 to vector<16x16xf32>
    %1554 = arith.mulf %1553, %1332 : vector<16x16xf32>
    %1555 = arith.addf %1551, %1554 : vector<16x16xf32>
    %c335 = arith.constant 335 : index
    %1556 = memref.load %arg2[%c335] : memref<432xf32, #tpu.memory_space<smem>>
    %1557 = vector.broadcast %1556 : f32 to vector<16x16xf32>
    %1558 = arith.mulf %1557, %1333 : vector<16x16xf32>
    %1559 = arith.addf %1555, %1558 : vector<16x16xf32>
    %c336 = arith.constant 336 : index
    %1560 = memref.load %arg2[%c336] : memref<432xf32, #tpu.memory_space<smem>>
    %1561 = vector.broadcast %1560 : f32 to vector<16x16xf32>
    %1562 = arith.mulf %1561, %1334 : vector<16x16xf32>
    %1563 = arith.addf %1559, %1562 : vector<16x16xf32>
    %c337 = arith.constant 337 : index
    %1564 = memref.load %arg2[%c337] : memref<432xf32, #tpu.memory_space<smem>>
    %1565 = vector.broadcast %1564 : f32 to vector<16x16xf32>
    %1566 = arith.mulf %1565, %1335 : vector<16x16xf32>
    %1567 = arith.addf %1563, %1566 : vector<16x16xf32>
    %c338 = arith.constant 338 : index
    %1568 = memref.load %arg2[%c338] : memref<432xf32, #tpu.memory_space<smem>>
    %1569 = vector.broadcast %1568 : f32 to vector<16x16xf32>
    %1570 = arith.mulf %1569, %1336 : vector<16x16xf32>
    %1571 = arith.addf %1567, %1570 : vector<16x16xf32>
    %c339 = arith.constant 339 : index
    %1572 = memref.load %arg2[%c339] : memref<432xf32, #tpu.memory_space<smem>>
    %1573 = vector.broadcast %1572 : f32 to vector<16x16xf32>
    %1574 = arith.mulf %1573, %1337 : vector<16x16xf32>
    %1575 = arith.addf %1571, %1574 : vector<16x16xf32>
    %c340 = arith.constant 340 : index
    %1576 = memref.load %arg2[%c340] : memref<432xf32, #tpu.memory_space<smem>>
    %1577 = vector.broadcast %1576 : f32 to vector<16x16xf32>
    %1578 = arith.mulf %1577, %1338 : vector<16x16xf32>
    %1579 = arith.addf %1575, %1578 : vector<16x16xf32>
    %c341 = arith.constant 341 : index
    %1580 = memref.load %arg2[%c341] : memref<432xf32, #tpu.memory_space<smem>>
    %1581 = vector.broadcast %1580 : f32 to vector<16x16xf32>
    %1582 = arith.mulf %1581, %1339 : vector<16x16xf32>
    %1583 = arith.addf %1579, %1582 : vector<16x16xf32>
    %c342 = arith.constant 342 : index
    %1584 = memref.load %arg2[%c342] : memref<432xf32, #tpu.memory_space<smem>>
    %1585 = vector.broadcast %1584 : f32 to vector<16x16xf32>
    %1586 = arith.mulf %1585, %1342 : vector<16x16xf32>
    %1587 = arith.addf %1583, %1586 : vector<16x16xf32>
    %c343 = arith.constant 343 : index
    %1588 = memref.load %arg2[%c343] : memref<432xf32, #tpu.memory_space<smem>>
    %1589 = vector.broadcast %1588 : f32 to vector<16x16xf32>
    %1590 = arith.mulf %1589, %1343 : vector<16x16xf32>
    %1591 = arith.addf %1587, %1590 : vector<16x16xf32>
    %c344 = arith.constant 344 : index
    %1592 = memref.load %arg2[%c344] : memref<432xf32, #tpu.memory_space<smem>>
    %1593 = vector.broadcast %1592 : f32 to vector<16x16xf32>
    %1594 = arith.mulf %1593, %1344 : vector<16x16xf32>
    %1595 = arith.addf %1591, %1594 : vector<16x16xf32>
    %c345 = arith.constant 345 : index
    %1596 = memref.load %arg2[%c345] : memref<432xf32, #tpu.memory_space<smem>>
    %1597 = vector.broadcast %1596 : f32 to vector<16x16xf32>
    %1598 = arith.mulf %1597, %1345 : vector<16x16xf32>
    %1599 = arith.addf %1595, %1598 : vector<16x16xf32>
    %c346 = arith.constant 346 : index
    %1600 = memref.load %arg2[%c346] : memref<432xf32, #tpu.memory_space<smem>>
    %1601 = vector.broadcast %1600 : f32 to vector<16x16xf32>
    %1602 = arith.mulf %1601, %1346 : vector<16x16xf32>
    %1603 = arith.addf %1599, %1602 : vector<16x16xf32>
    %c347 = arith.constant 347 : index
    %1604 = memref.load %arg2[%c347] : memref<432xf32, #tpu.memory_space<smem>>
    %1605 = vector.broadcast %1604 : f32 to vector<16x16xf32>
    %1606 = arith.mulf %1605, %1347 : vector<16x16xf32>
    %1607 = arith.addf %1603, %1606 : vector<16x16xf32>
    %c348 = arith.constant 348 : index
    %1608 = memref.load %arg2[%c348] : memref<432xf32, #tpu.memory_space<smem>>
    %1609 = vector.broadcast %1608 : f32 to vector<16x16xf32>
    %1610 = arith.mulf %1609, %1348 : vector<16x16xf32>
    %1611 = arith.addf %1607, %1610 : vector<16x16xf32>
    %c349 = arith.constant 349 : index
    %1612 = memref.load %arg2[%c349] : memref<432xf32, #tpu.memory_space<smem>>
    %1613 = vector.broadcast %1612 : f32 to vector<16x16xf32>
    %1614 = arith.mulf %1613, %1349 : vector<16x16xf32>
    %1615 = arith.addf %1611, %1614 : vector<16x16xf32>
    %c350 = arith.constant 350 : index
    %1616 = memref.load %arg2[%c350] : memref<432xf32, #tpu.memory_space<smem>>
    %1617 = vector.broadcast %1616 : f32 to vector<16x16xf32>
    %1618 = arith.mulf %1617, %1350 : vector<16x16xf32>
    %1619 = arith.addf %1615, %1618 : vector<16x16xf32>
    %c351 = arith.constant 351 : index
    %1620 = memref.load %arg2[%c351] : memref<432xf32, #tpu.memory_space<smem>>
    %1621 = vector.broadcast %1620 : f32 to vector<16x16xf32>
    %1622 = arith.mulf %1621, %1353 : vector<16x16xf32>
    %1623 = arith.addf %1619, %1622 : vector<16x16xf32>
    %c352 = arith.constant 352 : index
    %1624 = memref.load %arg2[%c352] : memref<432xf32, #tpu.memory_space<smem>>
    %1625 = vector.broadcast %1624 : f32 to vector<16x16xf32>
    %1626 = arith.mulf %1625, %1354 : vector<16x16xf32>
    %1627 = arith.addf %1623, %1626 : vector<16x16xf32>
    %c353 = arith.constant 353 : index
    %1628 = memref.load %arg2[%c353] : memref<432xf32, #tpu.memory_space<smem>>
    %1629 = vector.broadcast %1628 : f32 to vector<16x16xf32>
    %1630 = arith.mulf %1629, %1355 : vector<16x16xf32>
    %1631 = arith.addf %1627, %1630 : vector<16x16xf32>
    %c354 = arith.constant 354 : index
    %1632 = memref.load %arg2[%c354] : memref<432xf32, #tpu.memory_space<smem>>
    %1633 = vector.broadcast %1632 : f32 to vector<16x16xf32>
    %1634 = arith.mulf %1633, %1356 : vector<16x16xf32>
    %1635 = arith.addf %1631, %1634 : vector<16x16xf32>
    %c355 = arith.constant 355 : index
    %1636 = memref.load %arg2[%c355] : memref<432xf32, #tpu.memory_space<smem>>
    %1637 = vector.broadcast %1636 : f32 to vector<16x16xf32>
    %1638 = arith.mulf %1637, %1357 : vector<16x16xf32>
    %1639 = arith.addf %1635, %1638 : vector<16x16xf32>
    %c356 = arith.constant 356 : index
    %1640 = memref.load %arg2[%c356] : memref<432xf32, #tpu.memory_space<smem>>
    %1641 = vector.broadcast %1640 : f32 to vector<16x16xf32>
    %1642 = arith.mulf %1641, %1358 : vector<16x16xf32>
    %1643 = arith.addf %1639, %1642 : vector<16x16xf32>
    %c357 = arith.constant 357 : index
    %1644 = memref.load %arg2[%c357] : memref<432xf32, #tpu.memory_space<smem>>
    %1645 = vector.broadcast %1644 : f32 to vector<16x16xf32>
    %1646 = arith.mulf %1645, %1359 : vector<16x16xf32>
    %1647 = arith.addf %1643, %1646 : vector<16x16xf32>
    %c358 = arith.constant 358 : index
    %1648 = memref.load %arg2[%c358] : memref<432xf32, #tpu.memory_space<smem>>
    %1649 = vector.broadcast %1648 : f32 to vector<16x16xf32>
    %1650 = arith.mulf %1649, %1360 : vector<16x16xf32>
    %1651 = arith.addf %1647, %1650 : vector<16x16xf32>
    %c359 = arith.constant 359 : index
    %1652 = memref.load %arg2[%c359] : memref<432xf32, #tpu.memory_space<smem>>
    %1653 = vector.broadcast %1652 : f32 to vector<16x16xf32>
    %1654 = arith.mulf %1653, %1361 : vector<16x16xf32>
    %1655 = arith.addf %1651, %1654 : vector<16x16xf32>
    %cst_110 = arith.constant 0.000000e+00 : f32
    %1656 = vector.broadcast %cst_110 : f32 to vector<16x16xf32>
    %1657 = arith.maximumf %1655, %1656 : vector<16x16xf32>
    %c10_111 = arith.constant 10 : index
    %1658 = memref.load %arg3[%c10_111] : memref<12xf32, #tpu.memory_space<smem>>
    %1659 = vector.broadcast %1658 : f32 to vector<16x16xf32>
    %c360 = arith.constant 360 : index
    %1660 = memref.load %arg2[%c360] : memref<432xf32, #tpu.memory_space<smem>>
    %1661 = vector.broadcast %1660 : f32 to vector<16x16xf32>
    %1662 = arith.mulf %1661, %1320 : vector<16x16xf32>
    %1663 = arith.addf %1659, %1662 : vector<16x16xf32>
    %c361 = arith.constant 361 : index
    %1664 = memref.load %arg2[%c361] : memref<432xf32, #tpu.memory_space<smem>>
    %1665 = vector.broadcast %1664 : f32 to vector<16x16xf32>
    %1666 = arith.mulf %1665, %1321 : vector<16x16xf32>
    %1667 = arith.addf %1663, %1666 : vector<16x16xf32>
    %c362 = arith.constant 362 : index
    %1668 = memref.load %arg2[%c362] : memref<432xf32, #tpu.memory_space<smem>>
    %1669 = vector.broadcast %1668 : f32 to vector<16x16xf32>
    %1670 = arith.mulf %1669, %1322 : vector<16x16xf32>
    %1671 = arith.addf %1667, %1670 : vector<16x16xf32>
    %c363 = arith.constant 363 : index
    %1672 = memref.load %arg2[%c363] : memref<432xf32, #tpu.memory_space<smem>>
    %1673 = vector.broadcast %1672 : f32 to vector<16x16xf32>
    %1674 = arith.mulf %1673, %1323 : vector<16x16xf32>
    %1675 = arith.addf %1671, %1674 : vector<16x16xf32>
    %c364 = arith.constant 364 : index
    %1676 = memref.load %arg2[%c364] : memref<432xf32, #tpu.memory_space<smem>>
    %1677 = vector.broadcast %1676 : f32 to vector<16x16xf32>
    %1678 = arith.mulf %1677, %1324 : vector<16x16xf32>
    %1679 = arith.addf %1675, %1678 : vector<16x16xf32>
    %c365 = arith.constant 365 : index
    %1680 = memref.load %arg2[%c365] : memref<432xf32, #tpu.memory_space<smem>>
    %1681 = vector.broadcast %1680 : f32 to vector<16x16xf32>
    %1682 = arith.mulf %1681, %1325 : vector<16x16xf32>
    %1683 = arith.addf %1679, %1682 : vector<16x16xf32>
    %c366 = arith.constant 366 : index
    %1684 = memref.load %arg2[%c366] : memref<432xf32, #tpu.memory_space<smem>>
    %1685 = vector.broadcast %1684 : f32 to vector<16x16xf32>
    %1686 = arith.mulf %1685, %1326 : vector<16x16xf32>
    %1687 = arith.addf %1683, %1686 : vector<16x16xf32>
    %c367 = arith.constant 367 : index
    %1688 = memref.load %arg2[%c367] : memref<432xf32, #tpu.memory_space<smem>>
    %1689 = vector.broadcast %1688 : f32 to vector<16x16xf32>
    %1690 = arith.mulf %1689, %1327 : vector<16x16xf32>
    %1691 = arith.addf %1687, %1690 : vector<16x16xf32>
    %c368 = arith.constant 368 : index
    %1692 = memref.load %arg2[%c368] : memref<432xf32, #tpu.memory_space<smem>>
    %1693 = vector.broadcast %1692 : f32 to vector<16x16xf32>
    %1694 = arith.mulf %1693, %1328 : vector<16x16xf32>
    %1695 = arith.addf %1691, %1694 : vector<16x16xf32>
    %c369 = arith.constant 369 : index
    %1696 = memref.load %arg2[%c369] : memref<432xf32, #tpu.memory_space<smem>>
    %1697 = vector.broadcast %1696 : f32 to vector<16x16xf32>
    %1698 = arith.mulf %1697, %1331 : vector<16x16xf32>
    %1699 = arith.addf %1695, %1698 : vector<16x16xf32>
    %c370 = arith.constant 370 : index
    %1700 = memref.load %arg2[%c370] : memref<432xf32, #tpu.memory_space<smem>>
    %1701 = vector.broadcast %1700 : f32 to vector<16x16xf32>
    %1702 = arith.mulf %1701, %1332 : vector<16x16xf32>
    %1703 = arith.addf %1699, %1702 : vector<16x16xf32>
    %c371 = arith.constant 371 : index
    %1704 = memref.load %arg2[%c371] : memref<432xf32, #tpu.memory_space<smem>>
    %1705 = vector.broadcast %1704 : f32 to vector<16x16xf32>
    %1706 = arith.mulf %1705, %1333 : vector<16x16xf32>
    %1707 = arith.addf %1703, %1706 : vector<16x16xf32>
    %c372 = arith.constant 372 : index
    %1708 = memref.load %arg2[%c372] : memref<432xf32, #tpu.memory_space<smem>>
    %1709 = vector.broadcast %1708 : f32 to vector<16x16xf32>
    %1710 = arith.mulf %1709, %1334 : vector<16x16xf32>
    %1711 = arith.addf %1707, %1710 : vector<16x16xf32>
    %c373 = arith.constant 373 : index
    %1712 = memref.load %arg2[%c373] : memref<432xf32, #tpu.memory_space<smem>>
    %1713 = vector.broadcast %1712 : f32 to vector<16x16xf32>
    %1714 = arith.mulf %1713, %1335 : vector<16x16xf32>
    %1715 = arith.addf %1711, %1714 : vector<16x16xf32>
    %c374 = arith.constant 374 : index
    %1716 = memref.load %arg2[%c374] : memref<432xf32, #tpu.memory_space<smem>>
    %1717 = vector.broadcast %1716 : f32 to vector<16x16xf32>
    %1718 = arith.mulf %1717, %1336 : vector<16x16xf32>
    %1719 = arith.addf %1715, %1718 : vector<16x16xf32>
    %c375 = arith.constant 375 : index
    %1720 = memref.load %arg2[%c375] : memref<432xf32, #tpu.memory_space<smem>>
    %1721 = vector.broadcast %1720 : f32 to vector<16x16xf32>
    %1722 = arith.mulf %1721, %1337 : vector<16x16xf32>
    %1723 = arith.addf %1719, %1722 : vector<16x16xf32>
    %c376 = arith.constant 376 : index
    %1724 = memref.load %arg2[%c376] : memref<432xf32, #tpu.memory_space<smem>>
    %1725 = vector.broadcast %1724 : f32 to vector<16x16xf32>
    %1726 = arith.mulf %1725, %1338 : vector<16x16xf32>
    %1727 = arith.addf %1723, %1726 : vector<16x16xf32>
    %c377 = arith.constant 377 : index
    %1728 = memref.load %arg2[%c377] : memref<432xf32, #tpu.memory_space<smem>>
    %1729 = vector.broadcast %1728 : f32 to vector<16x16xf32>
    %1730 = arith.mulf %1729, %1339 : vector<16x16xf32>
    %1731 = arith.addf %1727, %1730 : vector<16x16xf32>
    %c378 = arith.constant 378 : index
    %1732 = memref.load %arg2[%c378] : memref<432xf32, #tpu.memory_space<smem>>
    %1733 = vector.broadcast %1732 : f32 to vector<16x16xf32>
    %1734 = arith.mulf %1733, %1342 : vector<16x16xf32>
    %1735 = arith.addf %1731, %1734 : vector<16x16xf32>
    %c379 = arith.constant 379 : index
    %1736 = memref.load %arg2[%c379] : memref<432xf32, #tpu.memory_space<smem>>
    %1737 = vector.broadcast %1736 : f32 to vector<16x16xf32>
    %1738 = arith.mulf %1737, %1343 : vector<16x16xf32>
    %1739 = arith.addf %1735, %1738 : vector<16x16xf32>
    %c380 = arith.constant 380 : index
    %1740 = memref.load %arg2[%c380] : memref<432xf32, #tpu.memory_space<smem>>
    %1741 = vector.broadcast %1740 : f32 to vector<16x16xf32>
    %1742 = arith.mulf %1741, %1344 : vector<16x16xf32>
    %1743 = arith.addf %1739, %1742 : vector<16x16xf32>
    %c381 = arith.constant 381 : index
    %1744 = memref.load %arg2[%c381] : memref<432xf32, #tpu.memory_space<smem>>
    %1745 = vector.broadcast %1744 : f32 to vector<16x16xf32>
    %1746 = arith.mulf %1745, %1345 : vector<16x16xf32>
    %1747 = arith.addf %1743, %1746 : vector<16x16xf32>
    %c382 = arith.constant 382 : index
    %1748 = memref.load %arg2[%c382] : memref<432xf32, #tpu.memory_space<smem>>
    %1749 = vector.broadcast %1748 : f32 to vector<16x16xf32>
    %1750 = arith.mulf %1749, %1346 : vector<16x16xf32>
    %1751 = arith.addf %1747, %1750 : vector<16x16xf32>
    %c383 = arith.constant 383 : index
    %1752 = memref.load %arg2[%c383] : memref<432xf32, #tpu.memory_space<smem>>
    %1753 = vector.broadcast %1752 : f32 to vector<16x16xf32>
    %1754 = arith.mulf %1753, %1347 : vector<16x16xf32>
    %1755 = arith.addf %1751, %1754 : vector<16x16xf32>
    %c384 = arith.constant 384 : index
    %1756 = memref.load %arg2[%c384] : memref<432xf32, #tpu.memory_space<smem>>
    %1757 = vector.broadcast %1756 : f32 to vector<16x16xf32>
    %1758 = arith.mulf %1757, %1348 : vector<16x16xf32>
    %1759 = arith.addf %1755, %1758 : vector<16x16xf32>
    %c385 = arith.constant 385 : index
    %1760 = memref.load %arg2[%c385] : memref<432xf32, #tpu.memory_space<smem>>
    %1761 = vector.broadcast %1760 : f32 to vector<16x16xf32>
    %1762 = arith.mulf %1761, %1349 : vector<16x16xf32>
    %1763 = arith.addf %1759, %1762 : vector<16x16xf32>
    %c386 = arith.constant 386 : index
    %1764 = memref.load %arg2[%c386] : memref<432xf32, #tpu.memory_space<smem>>
    %1765 = vector.broadcast %1764 : f32 to vector<16x16xf32>
    %1766 = arith.mulf %1765, %1350 : vector<16x16xf32>
    %1767 = arith.addf %1763, %1766 : vector<16x16xf32>
    %c387 = arith.constant 387 : index
    %1768 = memref.load %arg2[%c387] : memref<432xf32, #tpu.memory_space<smem>>
    %1769 = vector.broadcast %1768 : f32 to vector<16x16xf32>
    %1770 = arith.mulf %1769, %1353 : vector<16x16xf32>
    %1771 = arith.addf %1767, %1770 : vector<16x16xf32>
    %c388 = arith.constant 388 : index
    %1772 = memref.load %arg2[%c388] : memref<432xf32, #tpu.memory_space<smem>>
    %1773 = vector.broadcast %1772 : f32 to vector<16x16xf32>
    %1774 = arith.mulf %1773, %1354 : vector<16x16xf32>
    %1775 = arith.addf %1771, %1774 : vector<16x16xf32>
    %c389 = arith.constant 389 : index
    %1776 = memref.load %arg2[%c389] : memref<432xf32, #tpu.memory_space<smem>>
    %1777 = vector.broadcast %1776 : f32 to vector<16x16xf32>
    %1778 = arith.mulf %1777, %1355 : vector<16x16xf32>
    %1779 = arith.addf %1775, %1778 : vector<16x16xf32>
    %c390 = arith.constant 390 : index
    %1780 = memref.load %arg2[%c390] : memref<432xf32, #tpu.memory_space<smem>>
    %1781 = vector.broadcast %1780 : f32 to vector<16x16xf32>
    %1782 = arith.mulf %1781, %1356 : vector<16x16xf32>
    %1783 = arith.addf %1779, %1782 : vector<16x16xf32>
    %c391 = arith.constant 391 : index
    %1784 = memref.load %arg2[%c391] : memref<432xf32, #tpu.memory_space<smem>>
    %1785 = vector.broadcast %1784 : f32 to vector<16x16xf32>
    %1786 = arith.mulf %1785, %1357 : vector<16x16xf32>
    %1787 = arith.addf %1783, %1786 : vector<16x16xf32>
    %c392 = arith.constant 392 : index
    %1788 = memref.load %arg2[%c392] : memref<432xf32, #tpu.memory_space<smem>>
    %1789 = vector.broadcast %1788 : f32 to vector<16x16xf32>
    %1790 = arith.mulf %1789, %1358 : vector<16x16xf32>
    %1791 = arith.addf %1787, %1790 : vector<16x16xf32>
    %c393 = arith.constant 393 : index
    %1792 = memref.load %arg2[%c393] : memref<432xf32, #tpu.memory_space<smem>>
    %1793 = vector.broadcast %1792 : f32 to vector<16x16xf32>
    %1794 = arith.mulf %1793, %1359 : vector<16x16xf32>
    %1795 = arith.addf %1791, %1794 : vector<16x16xf32>
    %c394 = arith.constant 394 : index
    %1796 = memref.load %arg2[%c394] : memref<432xf32, #tpu.memory_space<smem>>
    %1797 = vector.broadcast %1796 : f32 to vector<16x16xf32>
    %1798 = arith.mulf %1797, %1360 : vector<16x16xf32>
    %1799 = arith.addf %1795, %1798 : vector<16x16xf32>
    %c395 = arith.constant 395 : index
    %1800 = memref.load %arg2[%c395] : memref<432xf32, #tpu.memory_space<smem>>
    %1801 = vector.broadcast %1800 : f32 to vector<16x16xf32>
    %1802 = arith.mulf %1801, %1361 : vector<16x16xf32>
    %1803 = arith.addf %1799, %1802 : vector<16x16xf32>
    %cst_112 = arith.constant 0.000000e+00 : f32
    %1804 = vector.broadcast %cst_112 : f32 to vector<16x16xf32>
    %1805 = arith.maximumf %1803, %1804 : vector<16x16xf32>
    %c11_113 = arith.constant 11 : index
    %1806 = memref.load %arg3[%c11_113] : memref<12xf32, #tpu.memory_space<smem>>
    %1807 = vector.broadcast %1806 : f32 to vector<16x16xf32>
    %c396 = arith.constant 396 : index
    %1808 = memref.load %arg2[%c396] : memref<432xf32, #tpu.memory_space<smem>>
    %1809 = vector.broadcast %1808 : f32 to vector<16x16xf32>
    %1810 = arith.mulf %1809, %1320 : vector<16x16xf32>
    %1811 = arith.addf %1807, %1810 : vector<16x16xf32>
    %c397 = arith.constant 397 : index
    %1812 = memref.load %arg2[%c397] : memref<432xf32, #tpu.memory_space<smem>>
    %1813 = vector.broadcast %1812 : f32 to vector<16x16xf32>
    %1814 = arith.mulf %1813, %1321 : vector<16x16xf32>
    %1815 = arith.addf %1811, %1814 : vector<16x16xf32>
    %c398 = arith.constant 398 : index
    %1816 = memref.load %arg2[%c398] : memref<432xf32, #tpu.memory_space<smem>>
    %1817 = vector.broadcast %1816 : f32 to vector<16x16xf32>
    %1818 = arith.mulf %1817, %1322 : vector<16x16xf32>
    %1819 = arith.addf %1815, %1818 : vector<16x16xf32>
    %c399 = arith.constant 399 : index
    %1820 = memref.load %arg2[%c399] : memref<432xf32, #tpu.memory_space<smem>>
    %1821 = vector.broadcast %1820 : f32 to vector<16x16xf32>
    %1822 = arith.mulf %1821, %1323 : vector<16x16xf32>
    %1823 = arith.addf %1819, %1822 : vector<16x16xf32>
    %c400 = arith.constant 400 : index
    %1824 = memref.load %arg2[%c400] : memref<432xf32, #tpu.memory_space<smem>>
    %1825 = vector.broadcast %1824 : f32 to vector<16x16xf32>
    %1826 = arith.mulf %1825, %1324 : vector<16x16xf32>
    %1827 = arith.addf %1823, %1826 : vector<16x16xf32>
    %c401 = arith.constant 401 : index
    %1828 = memref.load %arg2[%c401] : memref<432xf32, #tpu.memory_space<smem>>
    %1829 = vector.broadcast %1828 : f32 to vector<16x16xf32>
    %1830 = arith.mulf %1829, %1325 : vector<16x16xf32>
    %1831 = arith.addf %1827, %1830 : vector<16x16xf32>
    %c402 = arith.constant 402 : index
    %1832 = memref.load %arg2[%c402] : memref<432xf32, #tpu.memory_space<smem>>
    %1833 = vector.broadcast %1832 : f32 to vector<16x16xf32>
    %1834 = arith.mulf %1833, %1326 : vector<16x16xf32>
    %1835 = arith.addf %1831, %1834 : vector<16x16xf32>
    %c403 = arith.constant 403 : index
    %1836 = memref.load %arg2[%c403] : memref<432xf32, #tpu.memory_space<smem>>
    %1837 = vector.broadcast %1836 : f32 to vector<16x16xf32>
    %1838 = arith.mulf %1837, %1327 : vector<16x16xf32>
    %1839 = arith.addf %1835, %1838 : vector<16x16xf32>
    %c404 = arith.constant 404 : index
    %1840 = memref.load %arg2[%c404] : memref<432xf32, #tpu.memory_space<smem>>
    %1841 = vector.broadcast %1840 : f32 to vector<16x16xf32>
    %1842 = arith.mulf %1841, %1328 : vector<16x16xf32>
    %1843 = arith.addf %1839, %1842 : vector<16x16xf32>
    %c405 = arith.constant 405 : index
    %1844 = memref.load %arg2[%c405] : memref<432xf32, #tpu.memory_space<smem>>
    %1845 = vector.broadcast %1844 : f32 to vector<16x16xf32>
    %1846 = arith.mulf %1845, %1331 : vector<16x16xf32>
    %1847 = arith.addf %1843, %1846 : vector<16x16xf32>
    %c406 = arith.constant 406 : index
    %1848 = memref.load %arg2[%c406] : memref<432xf32, #tpu.memory_space<smem>>
    %1849 = vector.broadcast %1848 : f32 to vector<16x16xf32>
    %1850 = arith.mulf %1849, %1332 : vector<16x16xf32>
    %1851 = arith.addf %1847, %1850 : vector<16x16xf32>
    %c407 = arith.constant 407 : index
    %1852 = memref.load %arg2[%c407] : memref<432xf32, #tpu.memory_space<smem>>
    %1853 = vector.broadcast %1852 : f32 to vector<16x16xf32>
    %1854 = arith.mulf %1853, %1333 : vector<16x16xf32>
    %1855 = arith.addf %1851, %1854 : vector<16x16xf32>
    %c408 = arith.constant 408 : index
    %1856 = memref.load %arg2[%c408] : memref<432xf32, #tpu.memory_space<smem>>
    %1857 = vector.broadcast %1856 : f32 to vector<16x16xf32>
    %1858 = arith.mulf %1857, %1334 : vector<16x16xf32>
    %1859 = arith.addf %1855, %1858 : vector<16x16xf32>
    %c409 = arith.constant 409 : index
    %1860 = memref.load %arg2[%c409] : memref<432xf32, #tpu.memory_space<smem>>
    %1861 = vector.broadcast %1860 : f32 to vector<16x16xf32>
    %1862 = arith.mulf %1861, %1335 : vector<16x16xf32>
    %1863 = arith.addf %1859, %1862 : vector<16x16xf32>
    %c410 = arith.constant 410 : index
    %1864 = memref.load %arg2[%c410] : memref<432xf32, #tpu.memory_space<smem>>
    %1865 = vector.broadcast %1864 : f32 to vector<16x16xf32>
    %1866 = arith.mulf %1865, %1336 : vector<16x16xf32>
    %1867 = arith.addf %1863, %1866 : vector<16x16xf32>
    %c411 = arith.constant 411 : index
    %1868 = memref.load %arg2[%c411] : memref<432xf32, #tpu.memory_space<smem>>
    %1869 = vector.broadcast %1868 : f32 to vector<16x16xf32>
    %1870 = arith.mulf %1869, %1337 : vector<16x16xf32>
    %1871 = arith.addf %1867, %1870 : vector<16x16xf32>
    %c412 = arith.constant 412 : index
    %1872 = memref.load %arg2[%c412] : memref<432xf32, #tpu.memory_space<smem>>
    %1873 = vector.broadcast %1872 : f32 to vector<16x16xf32>
    %1874 = arith.mulf %1873, %1338 : vector<16x16xf32>
    %1875 = arith.addf %1871, %1874 : vector<16x16xf32>
    %c413 = arith.constant 413 : index
    %1876 = memref.load %arg2[%c413] : memref<432xf32, #tpu.memory_space<smem>>
    %1877 = vector.broadcast %1876 : f32 to vector<16x16xf32>
    %1878 = arith.mulf %1877, %1339 : vector<16x16xf32>
    %1879 = arith.addf %1875, %1878 : vector<16x16xf32>
    %c414 = arith.constant 414 : index
    %1880 = memref.load %arg2[%c414] : memref<432xf32, #tpu.memory_space<smem>>
    %1881 = vector.broadcast %1880 : f32 to vector<16x16xf32>
    %1882 = arith.mulf %1881, %1342 : vector<16x16xf32>
    %1883 = arith.addf %1879, %1882 : vector<16x16xf32>
    %c415 = arith.constant 415 : index
    %1884 = memref.load %arg2[%c415] : memref<432xf32, #tpu.memory_space<smem>>
    %1885 = vector.broadcast %1884 : f32 to vector<16x16xf32>
    %1886 = arith.mulf %1885, %1343 : vector<16x16xf32>
    %1887 = arith.addf %1883, %1886 : vector<16x16xf32>
    %c416 = arith.constant 416 : index
    %1888 = memref.load %arg2[%c416] : memref<432xf32, #tpu.memory_space<smem>>
    %1889 = vector.broadcast %1888 : f32 to vector<16x16xf32>
    %1890 = arith.mulf %1889, %1344 : vector<16x16xf32>
    %1891 = arith.addf %1887, %1890 : vector<16x16xf32>
    %c417 = arith.constant 417 : index
    %1892 = memref.load %arg2[%c417] : memref<432xf32, #tpu.memory_space<smem>>
    %1893 = vector.broadcast %1892 : f32 to vector<16x16xf32>
    %1894 = arith.mulf %1893, %1345 : vector<16x16xf32>
    %1895 = arith.addf %1891, %1894 : vector<16x16xf32>
    %c418 = arith.constant 418 : index
    %1896 = memref.load %arg2[%c418] : memref<432xf32, #tpu.memory_space<smem>>
    %1897 = vector.broadcast %1896 : f32 to vector<16x16xf32>
    %1898 = arith.mulf %1897, %1346 : vector<16x16xf32>
    %1899 = arith.addf %1895, %1898 : vector<16x16xf32>
    %c419 = arith.constant 419 : index
    %1900 = memref.load %arg2[%c419] : memref<432xf32, #tpu.memory_space<smem>>
    %1901 = vector.broadcast %1900 : f32 to vector<16x16xf32>
    %1902 = arith.mulf %1901, %1347 : vector<16x16xf32>
    %1903 = arith.addf %1899, %1902 : vector<16x16xf32>
    %c420 = arith.constant 420 : index
    %1904 = memref.load %arg2[%c420] : memref<432xf32, #tpu.memory_space<smem>>
    %1905 = vector.broadcast %1904 : f32 to vector<16x16xf32>
    %1906 = arith.mulf %1905, %1348 : vector<16x16xf32>
    %1907 = arith.addf %1903, %1906 : vector<16x16xf32>
    %c421 = arith.constant 421 : index
    %1908 = memref.load %arg2[%c421] : memref<432xf32, #tpu.memory_space<smem>>
    %1909 = vector.broadcast %1908 : f32 to vector<16x16xf32>
    %1910 = arith.mulf %1909, %1349 : vector<16x16xf32>
    %1911 = arith.addf %1907, %1910 : vector<16x16xf32>
    %c422 = arith.constant 422 : index
    %1912 = memref.load %arg2[%c422] : memref<432xf32, #tpu.memory_space<smem>>
    %1913 = vector.broadcast %1912 : f32 to vector<16x16xf32>
    %1914 = arith.mulf %1913, %1350 : vector<16x16xf32>
    %1915 = arith.addf %1911, %1914 : vector<16x16xf32>
    %c423 = arith.constant 423 : index
    %1916 = memref.load %arg2[%c423] : memref<432xf32, #tpu.memory_space<smem>>
    %1917 = vector.broadcast %1916 : f32 to vector<16x16xf32>
    %1918 = arith.mulf %1917, %1353 : vector<16x16xf32>
    %1919 = arith.addf %1915, %1918 : vector<16x16xf32>
    %c424 = arith.constant 424 : index
    %1920 = memref.load %arg2[%c424] : memref<432xf32, #tpu.memory_space<smem>>
    %1921 = vector.broadcast %1920 : f32 to vector<16x16xf32>
    %1922 = arith.mulf %1921, %1354 : vector<16x16xf32>
    %1923 = arith.addf %1919, %1922 : vector<16x16xf32>
    %c425 = arith.constant 425 : index
    %1924 = memref.load %arg2[%c425] : memref<432xf32, #tpu.memory_space<smem>>
    %1925 = vector.broadcast %1924 : f32 to vector<16x16xf32>
    %1926 = arith.mulf %1925, %1355 : vector<16x16xf32>
    %1927 = arith.addf %1923, %1926 : vector<16x16xf32>
    %c426 = arith.constant 426 : index
    %1928 = memref.load %arg2[%c426] : memref<432xf32, #tpu.memory_space<smem>>
    %1929 = vector.broadcast %1928 : f32 to vector<16x16xf32>
    %1930 = arith.mulf %1929, %1356 : vector<16x16xf32>
    %1931 = arith.addf %1927, %1930 : vector<16x16xf32>
    %c427 = arith.constant 427 : index
    %1932 = memref.load %arg2[%c427] : memref<432xf32, #tpu.memory_space<smem>>
    %1933 = vector.broadcast %1932 : f32 to vector<16x16xf32>
    %1934 = arith.mulf %1933, %1357 : vector<16x16xf32>
    %1935 = arith.addf %1931, %1934 : vector<16x16xf32>
    %c428 = arith.constant 428 : index
    %1936 = memref.load %arg2[%c428] : memref<432xf32, #tpu.memory_space<smem>>
    %1937 = vector.broadcast %1936 : f32 to vector<16x16xf32>
    %1938 = arith.mulf %1937, %1358 : vector<16x16xf32>
    %1939 = arith.addf %1935, %1938 : vector<16x16xf32>
    %c429 = arith.constant 429 : index
    %1940 = memref.load %arg2[%c429] : memref<432xf32, #tpu.memory_space<smem>>
    %1941 = vector.broadcast %1940 : f32 to vector<16x16xf32>
    %1942 = arith.mulf %1941, %1359 : vector<16x16xf32>
    %1943 = arith.addf %1939, %1942 : vector<16x16xf32>
    %c430 = arith.constant 430 : index
    %1944 = memref.load %arg2[%c430] : memref<432xf32, #tpu.memory_space<smem>>
    %1945 = vector.broadcast %1944 : f32 to vector<16x16xf32>
    %1946 = arith.mulf %1945, %1360 : vector<16x16xf32>
    %1947 = arith.addf %1943, %1946 : vector<16x16xf32>
    %c431 = arith.constant 431 : index
    %1948 = memref.load %arg2[%c431] : memref<432xf32, #tpu.memory_space<smem>>
    %1949 = vector.broadcast %1948 : f32 to vector<16x16xf32>
    %1950 = arith.mulf %1949, %1361 : vector<16x16xf32>
    %1951 = arith.addf %1947, %1950 : vector<16x16xf32>
    %cst_114 = arith.constant 0.000000e+00 : f32
    %1952 = vector.broadcast %cst_114 : f32 to vector<16x16xf32>
    %1953 = arith.maximumf %1951, %1952 : vector<16x16xf32>
    %c0_115 = arith.constant 0 : index
    %c0_116 = arith.constant 0 : index
    %c0_117 = arith.constant 0 : index
    %c0_118 = arith.constant 0 : index
    %1954 = vector.load %arg4[%c0_115, %c0_116, %c0_117, %c0_118] : memref<1x4x16x16xf32, #tpu.memory_space<vmem>>, vector<1x1x16x16xf32>
    %1955 = vector.shape_cast %1954 : vector<1x1x16x16xf32> to vector<16x16xf32>
    %1956 = vector.shape_cast %1509 : vector<16x16xf32> to vector<1x1x16x16xf32>
    tpu.vector_store %arg4[%c0_115, %c0_116, %c0_117, %c0_118], %1956 {strides = array<i32>} : memref<1x4x16x16xf32, #tpu.memory_space<vmem>>, vector<1x1x16x16xf32>,
    %c0_119 = arith.constant 0 : index
    %c1_120 = arith.constant 1 : index
    %c0_121 = arith.constant 0 : index
    %c0_122 = arith.constant 0 : index
    %1957 = vector.load %arg4[%c0_119, %c1_120, %c0_121, %c0_122] : memref<1x4x16x16xf32, #tpu.memory_space<vmem>>, vector<1x1x16x16xf32>
    %1958 = vector.shape_cast %1957 : vector<1x1x16x16xf32> to vector<16x16xf32>
    %1959 = vector.shape_cast %1657 : vector<16x16xf32> to vector<1x1x16x16xf32>
    tpu.vector_store %arg4[%c0_119, %c1_120, %c0_121, %c0_122], %1959 {strides = array<i32>} : memref<1x4x16x16xf32, #tpu.memory_space<vmem>>, vector<1x1x16x16xf32>,
    %c0_123 = arith.constant 0 : index
    %c2_124 = arith.constant 2 : index
    %c0_125 = arith.constant 0 : index
    %c0_126 = arith.constant 0 : index
    %1960 = vector.load %arg4[%c0_123, %c2_124, %c0_125, %c0_126] : memref<1x4x16x16xf32, #tpu.memory_space<vmem>>, vector<1x1x16x16xf32>
    %1961 = vector.shape_cast %1960 : vector<1x1x16x16xf32> to vector<16x16xf32>
    %1962 = vector.shape_cast %1805 : vector<16x16xf32> to vector<1x1x16x16xf32>
    tpu.vector_store %arg4[%c0_123, %c2_124, %c0_125, %c0_126], %1962 {strides = array<i32>} : memref<1x4x16x16xf32, #tpu.memory_space<vmem>>, vector<1x1x16x16xf32>,
    %c0_127 = arith.constant 0 : index
    %c3_128 = arith.constant 3 : index
    %c0_129 = arith.constant 0 : index
    %c0_130 = arith.constant 0 : index
    %1963 = vector.load %arg4[%c0_127, %c3_128, %c0_129, %c0_130] : memref<1x4x16x16xf32, #tpu.memory_space<vmem>>, vector<1x1x16x16xf32>
    %1964 = vector.shape_cast %1963 : vector<1x1x16x16xf32> to vector<16x16xf32>
    %1965 = vector.shape_cast %1953 : vector<16x16xf32> to vector<1x1x16x16xf32>
    tpu.vector_store %arg4[%c0_127, %c3_128, %c0_129, %c0_130], %1965 {strides = array<i32>} : memref<1x4x16x16xf32, #tpu.memory_space<vmem>>, vector<1x1x16x16xf32>,
    return
  }
  func.func @transform_0(%arg0: i32) -> (i32, i32, i32, i32) {
    %c0_i32 = arith.constant 0 : i32
    %c0_i32_0 = arith.constant 0 : i32
    %c0_i32_1 = arith.constant 0 : i32
    %c0_i32_2 = arith.constant 0 : i32
    return %arg0, %c0_i32, %c0_i32_0, %c0_i32_1 : i32, i32, i32, i32
  }
  func.func @transform_1(%arg0: i32) -> i32 {
    %c0_i32 = arith.constant 0 : i32
    %c0_i32_0 = arith.constant 0 : i32
    return %c0_i32 : i32
  }
  func.func @transform_2(%arg0: i32) -> i32 {
    %c0_i32 = arith.constant 0 : i32
    %c0_i32_0 = arith.constant 0 : i32
    return %c0_i32 : i32
  }
  func.func @transform_3(%arg0: i32) -> (i32, i32, i32, i32) {
    %c0_i32 = arith.constant 0 : i32
    %c0_i32_0 = arith.constant 0 : i32
    %c0_i32_1 = arith.constant 0 : i32
    %c0_i32_2 = arith.constant 0 : i32
    return %arg0, %c0_i32, %c0_i32_0, %c0_i32_1 : i32, i32, i32, i32
  }
}

</mosaic_0001>

<llo_original>
// kernel: tpu_custom_call.1
$region0: #{tpu_custom_call.1}
  #allocation0 [shape = 'u32[]', space=smem, size = 0x4, offset = 0x4, fixed_abs, tag = 'smem constant byte address 0x4 - core index']
  #allocation1 [shape = 'u32[144,128]{1,0:T(1,128)}', space=vmem, size = 0x12000, scoped, tag = 'internal scratch']
  #allocation2 [shape = 'f32[4,18,18]{2,1,0:T(8,128)}', space=vmem, size = 0xc000, scoped, tag = 'scratch operand']
  %s0 = inlined_call_operand.hbm [shape: f32[2,4,16,16], index: 0, kind: input, shape index: {}]
  %s1 = inlined_call_operand.hbm [shape: f32[432], index: 1, kind: input, shape index: {}]
  %s2 = inlined_call_operand.vmem [shape: f32[12], index: 2, kind: input, shape index: {}]
  %s3 = inlined_call_operand.hbm [shape: f32[2,4,16,16], index: 3, kind: output, shape index: {}]
  %s4 = sld [smem:[#allocation0]]
  $region57: #{tpu_custom_call.1} parent=0
    _
  %s6 = ssub.s32 1, %s4
  %s7 = scalar_select 0, %s6, %s4
  $region1: #{tpu_custom_call.1} parent=0
    #allocation3 [shape = 'u8[65536]{0}', space=vmem, size = 0x10000, scoped, tag = 'input window, operand 0']
    #allocation4 [shape = 's32[2]{0}', space=sflag, size = 0x8, scoped, tag = 'scoped memory for tpu_custom_call.1']
    #allocation5 [shape = 's32[2]{0}', space=sflag, size = 0x8, scoped, tag = 'scoped memory for tpu_custom_call.1']
    #allocation6 [shape = 's32[2]{0}', space=sflag, size = 0x8, scoped, tag = 'scoped memory for tpu_custom_call.1']
    #allocation7 [shape = 's32[2]{0}', space=sflag, size = 0x8, scoped, tag = 'scoped memory for tpu_custom_call.1']
    #allocation8 [shape = 'u8[2048]{0}', space=smem, size = 0x800, scoped, tag = 'input window, operand 1, single buffered']
    #allocation9 [shape = 'u8[512]{0}', space=smem, size = 0x200, scoped, tag = 'input window, operand 2, single buffered']
    #allocation10 [shape = 'u8[65536]{0}', space=vmem, size = 0x10000, scoped, tag = 'output window, operand 0']
    %8 = vsyncpa [#allocation4], 0
    %s9 = scalar_lea.sflag [#allocation4], 1
    %10 = vsyncpa %s9, 0
    %11 = vsyncpa [#allocation6], 0
    %12 = vsyncpa [#allocation7], 0
    %13 = vsyncpa [#allocation5], 0
    %s14 = scalar_lea.sflag [#allocation5], 1
    %15 = vsyncpa %s14, 0
    loop: start=0, step=1, limit=4
    $region2: #{tpu_custom_call.1} parent=1 // loop_pre_header
      _
    $region3: #{tpu_custom_call.1} parent=1 // loop_header
      %s17 = sphi 0, %s21
      %p18 = scmp.ge.s32.totalorder %s17, 4
      %s27 = sphi 0, %s29
      %s30 = sphi 0, %s27
      %s31 = sphi 0, %s30
      %s47 = sphi 0, %s31
      %s51 = sphi 0, %s51
      %s53 = sphi 0, %s51
      %s54 = sphi 0, %s53
      %s68 = sphi 0, %s54
      %s72 = sphi 0, %s72
      %s74 = sphi 0, %s72
      %s75 = sphi 0, %s74
      %s89 = sphi 0, %s75
      %s95 = sphi 0, %s97
      %s98 = sphi 0, %s95
      %s99 = sphi 0, %s98
      %s115 = sphi 0, %s99
    $region4: #{tpu_custom_call.1} parent=1 // loop_header_branch
      %20 = sbr.rel (%p18) target = $region8
    $region5: #{tpu_custom_call.1} parent=1 // loop_body
      %s22 = ssub.s32 %s17, 1
      %s23 = ssub.s32 %s17, 2
      %s24 = sadd.s32 %s17, 1
      %s25 = ssub.s32 %s17, %s24
      %p26 = scmp.eq.s32.totalorder %s25, 0
      %s28 = sadd.s32 %s27, 1
      %s29 = scalar_select %p26, %s27, %s28
      %p32 = pneg %p26
      %p33 = scmp.eq.s32.totalorder %s17, 1
      %p34 = por %p32, %p33
      %p35 = scmp.ne.s32.totalorder %s27, %s30
      %p36 = scmp.eq.s32.totalorder %s17, 0
      %p37 = por %p35, %p36
      %p38 = scmp.ne.s32.totalorder %s27, %s30
      %p39 = scmp.eq.s32.totalorder %s22, 1
      %p40 = por %p38, %p39
      %p41 = scmp.ne.s32.totalorder %s30, %s31
      %p42 = scmp.eq.s32.totalorder %s22, 0
      %p43 = por %p41, %p42
      %p44 = scmp.ne.s32.totalorder %s30, %s31
      %p45 = scmp.eq.s32.totalorder %s23, 1
      %p46 = por %p44, %p45
      %p48 = scmp.ne.s32.totalorder %s31, %s47
      %p49 = scmp.eq.s32.totalorder %s23, 0
      %p50 = por %p48, %p49
      %s52 = sadd.s32 %s51, 1
      %p55 = scmp.eq.s32.totalorder %s17, 1
      %p56 = scmp.ne.s32.totalorder %s51, %s53
      %p57 = scmp.eq.s32.totalorder %s17, 0
      %p58 = por %p56, %p57
      %p59 = scmp.ne.s32.totalorder %s51, %s53
      %p60 = scmp.eq.s32.totalorder %s22, 1
      %p61 = por %p59, %p60
      %p62 = scmp.ne.s32.totalorder %s53, %s54
      %p63 = scmp.eq.s32.totalorder %s22, 0
      %p64 = por %p62, %p63
      %p65 = scmp.ne.s32.totalorder %s53, %s54
      %p66 = scmp.eq.s32.totalorder %s23, 1
      %p67 = por %p65, %p66
      %p69 = scmp.ne.s32.totalorder %s54, %s68
      %p70 = scmp.eq.s32.totalorder %s23, 0
      %p71 = por %p69, %p70
      %s73 = sadd.s32 %s72, 1
      %p76 = scmp.eq.s32.totalorder %s17, 1
      %p77 = scmp.ne.s32.totalorder %s72, %s74
      %p78 = scmp.eq.s32.totalorder %s17, 0
      %p79 = por %p77, %p78
      %p80 = scmp.ne.s32.totalorder %s72, %s74
      %p81 = scmp.eq.s32.totalorder %s22, 1
      %p82 = por %p80, %p81
      %p83 = scmp.ne.s32.totalorder %s74, %s75
      %p84 = scmp.eq.s32.totalorder %s22, 0
      %p85 = por %p83, %p84
      %p86 = scmp.ne.s32.totalorder %s74, %s75
      %p87 = scmp.eq.s32.totalorder %s23, 1
      %p88 = por %p86, %p87
      %p90 = scmp.ne.s32.totalorder %s75, %s89
      %p91 = scmp.eq.s32.totalorder %s23, 0
      %p92 = por %p90, %p91
      %s93 = ssub.s32 %s17, %s24
      %p94 = scmp.eq.s32.totalorder %s93, 0
      %s96 = sadd.s32 %s95, 1
      %s97 = scalar_select %p94, %s95, %s96
      %p100 = pneg %p94
      %p101 = scmp.eq.s32.totalorder %s17, 1
      %p102 = por %p100, %p101
      %p103 = scmp.ne.s32.totalorder %s95, %s98
      %p104 = scmp.eq.s32.totalorder %s17, 0
      %p105 = por %p103, %p104
      %p106 = scmp.ne.s32.totalorder %s95, %s98
      %p107 = scmp.eq.s32.totalorder %s22, 1
      %p108 = por %p106, %p107
      %p109 = scmp.ne.s32.totalorder %s98, %s99
      %p110 = scmp.eq.s32.totalorder %s22, 0
      %p111 = por %p109, %p110
      %p112 = scmp.ne.s32.totalorder %s98, %s99
      %p113 = scmp.eq.s32.totalorder %s23, 1
      %p114 = por %p112, %p113
      %p116 = scmp.ne.s32.totalorder %s99, %s115
      %p117 = scmp.eq.s32.totalorder %s23, 0
      %p118 = por %p116, %p117
      %p119 = scmp.le.s32.totalorder 1, %s17
      %p120 = scmp.lt.s32.totalorder %s17, 3
      %p121 = pnand %p119, %p120
      %p122 = pneg %p121
      // Predicated region
      $region9: #{tpu_custom_call.1} parent=5 // pred_check
        _
      $region10: #{tpu_custom_call.1} parent=5 // pred_check_branch
        %124 = sbr.rel (%p121) target = $region12
      $region11: #{tpu_custom_call.1} parent=5 // pred_region
        %s125 = ssub.s32 %s17, 1
        // Predicated region
        $region13: #{tpu_custom_call.1} parent=11 // pred_check
          %p126 = pneg %p64
        $region14: #{tpu_custom_call.1} parent=11 // pred_check_branch
          %128 = sbr.rel (%p126) target = $region16
        $region15: #{tpu_custom_call.1} parent=11 // pred_region
          %s130 = ssub.s32 64, 64
          %131 = vsyncadd [#allocation6], %s130
          %134 = dma.hbm_to_smem %s1, 64, [#allocation8], [#allocation6]
        $region16: #{tpu_custom_call.1} parent=11 // pred_fallthru
          _
        // Predicated region
        $region17: #{tpu_custom_call.1} parent=11 // pred_check
          %p135 = pneg %p85
        $region18: #{tpu_custom_call.1} parent=11 // pred_check_branch
          %137 = sbr.rel (%p135) target = $region20
        $region19: #{tpu_custom_call.1} parent=11 // pred_region
          %s139 = ssub.s32 16, 16
          %140 = vsyncadd [#allocation7], %s139
          %s142 = sshll.u32 %s2, 4
          %s143 = int_to_ptr.vmem [resolvable:$true] %s142
          %145 = dma.vmem_to_smem %s143, 16, [#allocation9], [#allocation7]
        $region20: #{tpu_custom_call.1} parent=11 // pred_fallthru
          _
      $region12: #{tpu_custom_call.1} parent=5 // pred_fallthru
        _
      %p146 = scmp.lt.s32.totalorder %s17, 2
      // Predicated region
      $region21: #{tpu_custom_call.1} parent=5 // pred_check
        %p147 = pneg %p146
      $region22: #{tpu_custom_call.1} parent=5 // pred_check_branch
        %149 = sbr.rel (%p147) target = $region24
      $region23: #{tpu_custom_call.1} parent=5 // pred_region
        // Predicated region
        $region25: #{tpu_custom_call.1} parent=23 // pred_check
          %p150 = pneg %p37
        $region26: #{tpu_custom_call.1} parent=23 // pred_check_branch
          %152 = sbr.rel (%p150) target = $region28
        $region27: #{tpu_custom_call.1} parent=23 // pred_region
          %s153 = sand.u32 %s27, 1
          %s154 = scalar_lea.sflag [#allocation4], %s153
          %s155 = sand.u32 %s27, 1
          %s156 = smul.addr %s155, 64
          %s157 = scalar_lea.vmem [#allocation3], %s156
          %s159 = ssub.s32 1024, 1024
          %160 = vsyncadd %s154, %s159
          %s161 = smul.addr %s17, 8
          %s162 = smul.addr %s161, 128
          %s163 = scalar_lea.hbm %s0, %s162
          %s164 = sshll.u32 %s157, 4
          %s165 = int_to_ptr.vmem [resolvable:$true] %s164
          %170 = dma.hbm_to_vmem [thread:$0]  %s163, 1024, %s165, %s154, 128, 128, 8
        $region28: #{tpu_custom_call.1} parent=23 // pred_fallthru
          _
      $region24: #{tpu_custom_call.1} parent=5 // pred_fallthru
        _
      %p171 = scmp.le.s32.totalorder 1, %s17
      %p172 = scmp.lt.s32.totalorder %s17, 3
      %p173 = pnand %p171, %p172
      %p174 = pneg %p173
      // Predicated region
      $region29: #{tpu_custom_call.1} parent=5 // pred_check
        _
      $region30: #{tpu_custom_call.1} parent=5 // pred_check_branch
        %176 = sbr.rel (%p173) target = $region32
      $region31: #{tpu_custom_call.1} parent=5 // pred_region
        %s177 = ssub.s32 %s17, 1
        %s178 = sand.u32 %s30, 1
        %s179 = scalar_lea.sflag [#allocation4], %s178
        %s180 = sand.u32 %s30, 1
        %s181 = smul.addr %s180, 64
        %s182 = scalar_lea.vmem [#allocation3], %s181
        // Predicated region
        $region33: #{tpu_custom_call.1} parent=31 // pred_check
          %p183 = pneg %p43
        $region34: #{tpu_custom_call.1} parent=31 // pred_check_branch
          %185 = sbr.rel (%p183) target = $region36
        $region35: #{tpu_custom_call.1} parent=31 // pred_region
          %186 = dma.done %s179, 1024
        $region36: #{tpu_custom_call.1} parent=31 // pred_fallthru
          _
        // Predicated region
        $region37: #{tpu_custom_call.1} parent=31 // pred_check
          %p187 = pneg %p64
        $region38: #{tpu_custom_call.1} parent=31 // pred_check_branch
          %189 = sbr.rel (%p187) target = $region40
        $region39: #{tpu_custom_call.1} parent=31 // pred_region
          %190 = dma.done [#allocation6], 64
        $region40: #{tpu_custom_call.1} parent=31 // pred_fallthru
          _
        // Predicated region
        $region41: #{tpu_custom_call.1} parent=31 // pred_check
          %p191 = pneg %p85
        $region42: #{tpu_custom_call.1} parent=31 // pred_check_branch
          %193 = sbr.rel (%p191) target = $region44
        $region43: #{tpu_custom_call.1} parent=31 // pred_region
          %194 = dma.done [#allocation7], 16
        $region44: #{tpu_custom_call.1} parent=31 // pred_fallthru
          _
        %195 = sfence
        %s196 = sand.u32 %s30, 1
        %s197 = scalar_lea.sflag [#allocation4], %s196
        %s198 = sand.u32 %s30, 1
        %s199 = smul.addr %s198, 64
        %s200 = scalar_lea.vmem [#allocation3], %s199
        %p201 = pneg %p43
        %p202 = pneg %p40
        %p203 = pneg %p64
        %p204 = pneg %p61
        %p205 = pneg %p85
        %p206 = pneg %p82
        %p207 = pneg %p111
        %p208 = pneg %p108
        %s209 = sand.u32 %s98, 1
        %s210 = scalar_lea.sflag [#allocation5], %s209
        %s211 = sand.u32 %s98, 1
        %s212 = smul.addr %s211, 64
        %s213 = scalar_lea.vmem [#allocation10], %s212
        %vm214 = vcmask 146432
        %215 = vst.msk [vmem:[#allocation2] sm:$0xff] %vm214, 0.0
        %216 = vst.msk [vmem:[#allocation2 + $0x8] sm:$0xff] %vm214, 0.0
        %vm217 = vcmask 140288
        %218 = vst.msk [vmem:[#allocation2 + $0x10] sm:$0x3] %vm217, 0.0
        %219 = vst.msk [vmem:[#allocation2 + $0x18] sm:$0xff] %vm214, 0.0
        %220 = vst.msk [vmem:[#allocation2 + $0x20] sm:$0xff] %vm214, 0.0
        %221 = vst.msk [vmem:[#allocation2 + $0x28] sm:$0x3] %vm217, 0.0
        %222 = vst.msk [vmem:[#allocation2 + $0x30] sm:$0xff] %vm214, 0.0
        %223 = vst.msk [vmem:[#allocation2 + $0x38] sm:$0xff] %vm214, 0.0
        %224 = vst.msk [vmem:[#allocation2 + $0x40] sm:$0x3] %vm217, 0.0
        %225 = vst.msk [vmem:[#allocation2 + $0x48] sm:$0xff] %vm214, 0.0
        %226 = vst.msk [vmem:[#allocation2 + $0x50] sm:$0xff] %vm214, 0.0
        %227 = vst.msk [vmem:[#allocation2 + $0x58] sm:$0x3] %vm217, 0.0
        %v228 = vld [vmem:[%s182] sm:$0xff]
        %v229 = vld [vmem:[%s182 + $0x8] sm:$0xff]
        %232 = vrot.lane.b32.xlu0 %v228, 1
        %v233 = vpop.permute.xlu0 %232
        %234 = vrot.lane.b32.xlu0 %v229, 1
        %v235 = vpop.permute.xlu0 %234
        %vm238 = vcmask 138248
        %239 = vst.msk [vmem:[#allocation2 + $0x1] sm:$0xff] %vm238, %v233
        %240 = vst.msk [vmem:[#allocation2 + $0x9] sm:$0xff] %vm238, %v235
        %s241 = scalar_lea.vmem %s182, 16 [#allocation3]
        %v242 = vld [vmem:[%s241] sm:$0xff]
        %v243 = vld [vmem:[%s241 + $0x8] sm:$0xff]
        %246 = vrot.lane.b32.xlu0 %v242, 1
        %v247 = vpop.permute.xlu0 %246
        %248 = vrot.lane.b32.xlu0 %v243, 1
        %v249 = vpop.permute.xlu0 %248
        %s252 = scalar_lea.vmem [#allocation2], 24
        %253 = vst.msk [vmem:[%s252 + $0x1] sm:$0xff] %vm238, %v247
        %254 = vst.msk [vmem:[%s252 + $0x9] sm:$0xff] %vm238, %v249
        %s255 = scalar_lea.vmem %s182, 32 [#allocation3]
        %v256 = vld [vmem:[%s255] sm:$0xff]
        %v257 = vld [vmem:[%s255 + $0x8] sm:$0xff]
        %260 = vrot.lane.b32.xlu0 %v256, 1
        %v261 = vpop.permute.xlu0 %260
        %262 = vrot.lane.b32.xlu0 %v257, 1
        %v263 = vpop.permute.xlu0 %262
        %s266 = scalar_lea.vmem [#allocation2], 48
        %267 = vst.msk [vmem:[%s266 + $0x1] sm:$0xff] %vm238, %v261
        %268 = vst.msk [vmem:[%s266 + $0x9] sm:$0xff] %vm238, %v263
        %s269 = scalar_lea.vmem %s182, 48 [#allocation3]
        %v270 = vld [vmem:[%s269] sm:$0xff]
        %v271 = vld [vmem:[%s269 + $0x8] sm:$0xff]
        %274 = vrot.lane.b32.xlu0 %v270, 1
        %v275 = vpop.permute.xlu0 %274
        %276 = vrot.lane.b32.xlu0 %v271, 1
        %v277 = vpop.permute.xlu0 %276
        %s280 = scalar_lea.vmem [#allocation2], 72
        %281 = vst.msk [vmem:[%s280 + $0x1] sm:$0xff] %vm238, %v275
        %282 = vst.msk [vmem:[%s280 + $0x9] sm:$0xff] %vm238, %v277
        %v283 = vld [vmem:[#allocation2] sm:$0xff]
        %v284 = vld [vmem:[#allocation2 + $0x8] sm:$0xff]
        %v285 = vld [vmem:[#allocation2 + $0x10] sm:$0x3]
        %v286 = vld [vmem:[%s252] sm:$0xff]
        %v287 = vld [vmem:[%s252 + $0x8] sm:$0xff]
        %v288 = vld [vmem:[%s252 + $0x10] sm:$0x3]
        %v289 = vld [vmem:[%s266] sm:$0xff]
        %v290 = vld [vmem:[%s266 + $0x8] sm:$0xff]
        %v291 = vld [vmem:[%s266 + $0x10] sm:$0x3]
        %v292 = vld [vmem:[%s280] sm:$0xff]
        %v293 = vld [vmem:[%s280 + $0x8] sm:$0xff]
        %v294 = vld [vmem:[%s280 + $0x10] sm:$0x3]
        %s295 = sld [smem:[#allocation9]]
        %v296 = vstv %s295
        %s297 = sld [smem:[#allocation8]]
        %v298 = vstv %s297
        %v299 = vmul.f32 %v298, %v283
        %v300 = vmul.f32 %v298, %v284
        %v301 = vadd.f32 %v296, %v299
        %v302 = vadd.f32 %v296, %v300
        %s303 = sld [smem:[#allocation8 + $0x1]]
        %v304 = vstv %s303
        %v305 = vmul.f32 %v304, %v283
        %v306 = vmul.f32 %v304, %v284
        %309 = vrot.lane.b32.xlu0 %v305, 127
        %v310 = vpop.permute.xlu0 %309
        %311 = vrot.lane.b32.xlu0 %v306, 127
        %v312 = vpop.permute.xlu0 %311
        %v315 = vadd.f32 %v301, %v310
        %v316 = vadd.f32 %v302, %v312
        %s317 = sld [smem:[#allocation8 + $0x2]]
        %v318 = vstv %s317
        %v319 = vmul.f32 %v318, %v283
        %v320 = vmul.f32 %v318, %v284
        %323 = vrot.lane.b32.xlu0 %v319, 126
        %v324 = vpop.permute.xlu0 %323
        %325 = vrot.lane.b32.xlu0 %v320, 126
        %v326 = vpop.permute.xlu0 %325
        %v329 = vadd.f32 %v315, %v324
        %v330 = vadd.f32 %v316, %v326
        %s331 = sld [smem:[#allocation8 + $0x3]]
        %v332 = vstv %s331
        %v333 = vmul.f32 %v332, %v283
        %v334 = vmul.f32 %v332, %v284
        %v335 = vmul.f32 %v332, %v285
        %vm339 = vcmask 1046528
        %v340 = vrot.slane %v333, 1
        %v341 = vrot.slane %v334, 1
        %v342 = vsel %vm339, %v340, %v341
        %v343 = vrot.slane %v335, 1
        %v344 = vsel %vm339, %v341, %v343
        %v347 = vadd.f32 %v329, %v342
        %v348 = vadd.f32 %v330, %v344
        %s349 = sld [smem:[#allocation8 + $0x4]]
        %v350 = vstv %s349
        %v351 = vmul.f32 %v350, %v283
        %v352 = vmul.f32 %v350, %v284
        %v353 = vmul.f32 %v350, %v285
        %v357 = vrot.slane %v351, 1
        %v358 = vrot.slane %v352, 1
        %v359 = vsel %vm339, %v357, %v358
        %v360 = vrot.slane %v353, 1
        %v361 = vsel %vm339, %v358, %v360
        %362 = vrot.lane.b32.xlu0 %v359, 127
        %v363 = vpop.permute.xlu0 %362
        %364 = vrot.lane.b32.xlu0 %v361, 127
        %v365 = vpop.permute.xlu0 %364
        %v368 = vadd.f32 %v347, %v363
        %v369 = vadd.f32 %v348, %v365
        %s370 = sld [smem:[#allocation8 + $0x5]]
        %v371 = vstv %s370
        %v372 = vmul.f32 %v371, %v283
        %v373 = vmul.f32 %v371, %v284
        %v374 = vmul.f32 %v371, %v285
        %v378 = vrot.slane %v372, 1
        %v379 = vrot.slane %v373, 1
        %v380 = vsel %vm339, %v378, %v379
        %v381 = vrot.slane %v374, 1
        %v382 = vsel %vm339, %v379, %v381
        %383 = vrot.lane.b32.xlu0 %v380, 126
        %v384 = vpop.permute.xlu0 %383
        %385 = vrot.lane.b32.xlu0 %v382, 126
        %v386 = vpop.permute.xlu0 %385
        %v389 = vadd.f32 %v368, %v384
        %v390 = vadd.f32 %v369, %v386
        %s391 = sld [smem:[#allocation8 + $0x6]]
        %v392 = vstv %s391
        %v393 = vmul.f32 %v392, %v283
        %v394 = vmul.f32 %v392, %v284
        %v395 = vmul.f32 %v392, %v285
        %vm399 = vcmask 1045504
        %v400 = vrot.slane %v393, 2
        %v401 = vrot.slane %v394, 2
        %v402 = vsel %vm399, %v400, %v401
        %v403 = vrot.slane %v395, 2
        %v404 = vsel %vm399, %v401, %v403
        %v407 = vadd.f32 %v389, %v402
        %v408 = vadd.f32 %v390, %v404
        %s409 = sld [smem:[#allocation8 + $0x7]]
        %v410 = vstv %s409
        %v411 = vmul.f32 %v410, %v283
        %v412 = vmul.f32 %v410, %v284
        %v413 = vmul.f32 %v410, %v285
        %v417 = vrot.slane %v411, 2
        %v418 = vrot.slane %v412, 2
        %v419 = vsel %vm399, %v417, %v418
        %v420 = vrot.slane %v413, 2
        %v421 = vsel %vm399, %v418, %v420
        %422 = vrot.lane.b32.xlu0 %v419, 127
        %v423 = vpop.permute.xlu0 %422
        %424 = vrot.lane.b32.xlu0 %v421, 127
        %v425 = vpop.permute.xlu0 %424
        %v428 = vadd.f32 %v407, %v423
        %v429 = vadd.f32 %v408, %v425
        %s430 = sld [smem:[#allocation8 + $0x8]]
        %v431 = vstv %s430
        %v432 = vmul.f32 %v431, %v283
        %v433 = vmul.f32 %v431, %v284
        %v434 = vmul.f32 %v431, %v285
        %v438 = vrot.slane %v432, 2
        %v439 = vrot.slane %v433, 2
        %v440 = vsel %vm399, %v438, %v439
        %v441 = vrot.slane %v434, 2
        %v442 = vsel %vm399, %v439, %v441
        %443 = vrot.lane.b32.xlu0 %v440, 126
        %v444 = vpop.permute.xlu0 %443
        %445 = vrot.lane.b32.xlu0 %v442, 126
        %v446 = vpop.permute.xlu0 %445
        %v449 = vadd.f32 %v428, %v444
        %v450 = vadd.f32 %v429, %v446
        %s451 = sld [smem:[#allocation8 + $0x9]]
        %v452 = vstv %s451
        %v453 = vmul.f32 %v452, %v286
        %v454 = vmul.f32 %v452, %v287
        %v455 = vadd.f32 %v449, %v453
        %v456 = vadd.f32 %v450, %v454
        %s457 = sld [smem:[#allocation8 + $0xa]]
        %v458 = vstv %s457
        %v459 = vmul.f32 %v458, %v286
        %v460 = vmul.f32 %v458, %v287
        %463 = vrot.lane.b32.xlu0 %v459, 127
        %v464 = vpop.permute.xlu0 %463
        %465 = vrot.lane.b32.xlu0 %v460, 127
        %v466 = vpop.permute.xlu0 %465
        %v469 = vadd.f32 %v455, %v464
        %v470 = vadd.f32 %v456, %v466
        %s471 = sld [smem:[#allocation8 + $0xb]]
        %v472 = vstv %s471
        %v473 = vmul.f32 %v472, %v286
        %v474 = vmul.f32 %v472, %v287
        %477 = vrot.lane.b32.xlu0 %v473, 126
        %v478 = vpop.permute.xlu0 %477
        %479 = vrot.lane.b32.xlu0 %v474, 126
        %v480 = vpop.permute.xlu0 %479
        %v483 = vadd.f32 %v469, %v478
        %v484 = vadd.f32 %v470, %v480
        %s485 = sld [smem:[#allocation8 + $0xc]]
        %v486 = vstv %s485
        %v487 = vmul.f32 %v486, %v286
        %v488 = vmul.f32 %v486, %v287
        %v489 = vmul.f32 %v486, %v288
        %v493 = vrot.slane %v487, 1
        %v494 = vrot.slane %v488, 1
        %v495 = vsel %vm339, %v493, %v494
        %v496 = vrot.slane %v489, 1
        %v497 = vsel %vm339, %v494, %v496
        %v500 = vadd.f32 %v483, %v495
        %v501 = vadd.f32 %v484, %v497
        %s502 = sld [smem:[#allocation8 + $0xd]]
        %v503 = vstv %s502
        %v504 = vmul.f32 %v503, %v286
        %v505 = vmul.f32 %v503, %v287
        %v506 = vmul.f32 %v503, %v288
        %v510 = vrot.slane %v504, 1
        %v511 = vrot.slane %v505, 1
        %v512 = vsel %vm339, %v510, %v511
        %v513 = vrot.slane %v506, 1
        %v514 = vsel %vm339, %v511, %v513
        %515 = vrot.lane.b32.xlu0 %v512, 127
        %v516 = vpop.permute.xlu0 %515
        %517 = vrot.lane.b32.xlu0 %v514, 127
        %v518 = vpop.permute.xlu0 %517
        %v521 = vadd.f32 %v500, %v516
        %v522 = vadd.f32 %v501, %v518
        %s523 = sld [smem:[#allocation8 + $0xe]]
        %v524 = vstv %s523
        %v525 = vmul.f32 %v524, %v286
        %v526 = vmul.f32 %v524, %v287
        %v527 = vmul.f32 %v524, %v288
        %v531 = vrot.slane %v525, 1
        %v532 = vrot.slane %v526, 1
        %v533 = vsel %vm339, %v531, %v532
        %v534 = vrot.slane %v527, 1
        %v535 = vsel %vm339, %v532, %v534
        %536 = vrot.lane.b32.xlu0 %v533, 126
        %v537 = vpop.permute.xlu0 %536
        %538 = vrot.lane.b32.xlu0 %v535, 126
        %v539 = vpop.permute.xlu0 %538
        %v542 = vadd.f32 %v521, %v537
        %v543 = vadd.f32 %v522, %v539
        %s544 = sld [smem:[#allocation8 + $0xf]]
        %v545 = vstv %s544
        %v546 = vmul.f32 %v545, %v286
        %v547 = vmul.f32 %v545, %v287
        %v548 = vmul.f32 %v545, %v288
        %v552 = vrot.slane %v546, 2
        %v553 = vrot.slane %v547, 2
        %v554 = vsel %vm399, %v552, %v553
        %v555 = vrot.slane %v548, 2
        %v556 = vsel %vm399, %v553, %v555
        %v559 = vadd.f32 %v542, %v554
        %v560 = vadd.f32 %v543, %v556
        %s561 = sld [smem:[#allocation8 + $0x10]]
        %v562 = vstv %s561
        %v563 = vmul.f32 %v562, %v286
        %v564 = vmul.f32 %v562, %v287
        %v565 = vmul.f32 %v562, %v288
        %v569 = vrot.slane %v563, 2
        %v570 = vrot.slane %v564, 2
        %v571 = vsel %vm399, %v569, %v570
        %v572 = vrot.slane %v565, 2
        %v573 = vsel %vm399, %v570, %v572
        %574 = vrot.lane.b32.xlu0 %v571, 127
        %v575 = vpop.permute.xlu0 %574
        %576 = vrot.lane.b32.xlu0 %v573, 127
        %v577 = vpop.permute.xlu0 %576
        %v580 = vadd.f32 %v559, %v575
        %v581 = vadd.f32 %v560, %v577
        %s582 = sld [smem:[#allocation8 + $0x11]]
        %v583 = vstv %s582
        %v584 = vmul.f32 %v583, %v286
        %v585 = vmul.f32 %v583, %v287
        %v586 = vmul.f32 %v583, %v288
        %v590 = vrot.slane %v584, 2
        %v591 = vrot.slane %v585, 2
        %v592 = vsel %vm399, %v590, %v591
        %v593 = vrot.slane %v586, 2
        %v594 = vsel %vm399, %v591, %v593
        %595 = vrot.lane.b32.xlu0 %v592, 126
        %v596 = vpop.permute.xlu0 %595
        %597 = vrot.lane.b32.xlu0 %v594, 126
        %v598 = vpop.permute.xlu0 %597
        %v601 = vadd.f32 %v580, %v596
        %v602 = vadd.f32 %v581, %v598
        %s603 = sld [smem:[#allocation8 + $0x12]]
        %v604 = vstv %s603
        %v605 = vmul.f32 %v604, %v289
        %v606 = vmul.f32 %v604, %v290
        %v607 = vadd.f32 %v601, %v605
        %v608 = vadd.f32 %v602, %v606
        %s609 = sld [smem:[#allocation8 + $0x13]]
        %v610 = vstv %s609
        %v611 = vmul.f32 %v610, %v289
        %v612 = vmul.f32 %v610, %v290
        %615 = vrot.lane.b32.xlu0 %v611, 127
        %v616 = vpop.permute.xlu0 %615
        %617 = vrot.lane.b32.xlu0 %v612, 127
        %v618 = vpop.permute.xlu0 %617
        %v621 = vadd.f32 %v607, %v616
        %v622 = vadd.f32 %v608, %v618
        %s623 = sld [smem:[#allocation8 + $0x14]]
        %v624 = vstv %s623
        %v625 = vmul.f32 %v624, %v289
        %v626 = vmul.f32 %v624, %v290
        %629 = vrot.lane.b32.xlu0 %v625, 126
        %v630 = vpop.permute.xlu0 %629
        %631 = vrot.lane.b32.xlu0 %v626, 126
        %v632 = vpop.permute.xlu0 %631
        %v635 = vadd.f32 %v621, %v630
        %v636 = vadd.f32 %v622, %v632
        %s637 = sld [smem:[#allocation8 + $0x15]]
        %v638 = vstv %s637
        %v639 = vmul.f32 %v638, %v289
        %v640 = vmul.f32 %v638, %v290
        %v641 = vmul.f32 %v638, %v291
        %v645 = vrot.slane %v639, 1
        %v646 = vrot.slane %v640, 1
        %v647 = vsel %vm339, %v645, %v646
        %v648 = vrot.slane %v641, 1
        %v649 = vsel %vm339, %v646, %v648
        %v652 = vadd.f32 %v635, %v647
        %v653 = vadd.f32 %v636, %v649
        %s654 = sld [smem:[#allocation8 + $0x16]]
        %v655 = vstv %s654
        %v656 = vmul.f32 %v655, %v289
        %v657 = vmul.f32 %v655, %v290
        %v658 = vmul.f32 %v655, %v291
        %v662 = vrot.slane %v656, 1
        %v663 = vrot.slane %v657, 1
        %v664 = vsel %vm339, %v662, %v663
        %v665 = vrot.slane %v658, 1
        %v666 = vsel %vm339, %v663, %v665
        %667 = vrot.lane.b32.xlu0 %v664, 127
        %v668 = vpop.permute.xlu0 %667
        %669 = vrot.lane.b32.xlu0 %v666, 127
        %v670 = vpop.permute.xlu0 %669
        %v673 = vadd.f32 %v652, %v668
        %v674 = vadd.f32 %v653, %v670
        %s675 = sld [smem:[#allocation8 + $0x17]]
        %v676 = vstv %s675
        %v677 = vmul.f32 %v676, %v289
        %v678 = vmul.f32 %v676, %v290
        %v679 = vmul.f32 %v676, %v291
        %v683 = vrot.slane %v677, 1
        %v684 = vrot.slane %v678, 1
        %v685 = vsel %vm339, %v683, %v684
        %v686 = vrot.slane %v679, 1
        %v687 = vsel %vm339, %v684, %v686
        %688 = vrot.lane.b32.xlu0 %v685, 126
        %v689 = vpop.permute.xlu0 %688
        %690 = vrot.lane.b32.xlu0 %v687, 126
        %v691 = vpop.permute.xlu0 %690
        %v694 = vadd.f32 %v673, %v689
        %v695 = vadd.f32 %v674, %v691
        %s696 = sld [smem:[#allocation8 + $0x18]]
        %v697 = vstv %s696
        %v698 = vmul.f32 %v697, %v289
        %v699 = vmul.f32 %v697, %v290
        %v700 = vmul.f32 %v697, %v291
        %v704 = vrot.slane %v698, 2
        %v705 = vrot.slane %v699, 2
        %v706 = vsel %vm399, %v704, %v705
        %v707 = vrot.slane %v700, 2
        %v708 = vsel %vm399, %v705, %v707
        %v711 = vadd.f32 %v694, %v706
        %v712 = vadd.f32 %v695, %v708
        %s713 = sld [smem:[#allocation8 + $0x19]]
        %v714 = vstv %s713
        %v715 = vmul.f32 %v714, %v289
        %v716 = vmul.f32 %v714, %v290
        %v717 = vmul.f32 %v714, %v291
        %v721 = vrot.slane %v715, 2
        %v722 = vrot.slane %v716, 2
        %v723 = vsel %vm399, %v721, %v722
        %v724 = vrot.slane %v717, 2
        %v725 = vsel %vm399, %v722, %v724
        %726 = vrot.lane.b32.xlu0 %v723, 127
        %v727 = vpop.permute.xlu0 %726
        %728 = vrot.lane.b32.xlu0 %v725, 127
        %v729 = vpop.permute.xlu0 %728
        %v732 = vadd.f32 %v711, %v727
        %v733 = vadd.f32 %v712, %v729
        %s734 = sld [smem:[#allocation8 + $0x1a]]
        %v735 = vstv %s734
        %v736 = vmul.f32 %v735, %v289
        %v737 = vmul.f32 %v735, %v290
        %v738 = vmul.f32 %v735, %v291
        %v742 = vrot.slane %v736, 2
        %v743 = vrot.slane %v737, 2
        %v744 = vsel %vm399, %v742, %v743
        %v745 = vrot.slane %v738, 2
        %v746 = vsel %vm399, %v743, %v745
        %747 = vrot.lane.b32.xlu0 %v744, 126
        %v748 = vpop.permute.xlu0 %747
        %749 = vrot.lane.b32.xlu0 %v746, 126
        %v750 = vpop.permute.xlu0 %749
        %v753 = vadd.f32 %v732, %v748
        %v754 = vadd.f32 %v733, %v750
        %s755 = sld [smem:[#allocation8 + $0x1b]]
        %v756 = vstv %s755
        %v757 = vmul.f32 %v756, %v292
        %v758 = vmul.f32 %v756, %v293
        %v759 = vadd.f32 %v753, %v757
        %v760 = vadd.f32 %v754, %v758
        %s761 = sld [smem:[#allocation8 + $0x1c]]
        %v762 = vstv %s761
        %v763 = vmul.f32 %v762, %v292
        %v764 = vmul.f32 %v762, %v293
        %767 = vrot.lane.b32.xlu0 %v763, 127
        %v768 = vpop.permute.xlu0 %767
        %769 = vrot.lane.b32.xlu0 %v764, 127
        %v770 = vpop.permute.xlu0 %769
        %v773 = vadd.f32 %v759, %v768
        %v774 = vadd.f32 %v760, %v770
        %s775 = sld [smem:[#allocation8 + $0x1d]]
        %v776 = vstv %s775
        %v777 = vmul.f32 %v776, %v292
        %v778 = vmul.f32 %v776, %v293
        %781 = vrot.lane.b32.xlu0 %v777, 126
        %v782 = vpop.permute.xlu0 %781
        %783 = vrot.lane.b32.xlu0 %v778, 126
        %v784 = vpop.permute.xlu0 %783
        %v787 = vadd.f32 %v773, %v782
        %v788 = vadd.f32 %v774, %v784
        %s789 = sld [smem:[#allocation8 + $0x1e]]
        %v790 = vstv %s789
        %v791 = vmul.f32 %v790, %v292
        %v792 = vmul.f32 %v790, %v293
        %v793 = vmul.f32 %v790, %v294
        %v797 = vrot.slane %v791, 1
        %v798 = vrot.slane %v792, 1
        %v799 = vsel %vm339, %v797, %v798
        %v800 = vrot.slane %v793, 1
        %v801 = vsel %vm339, %v798, %v800
        %v804 = vadd.f32 %v787, %v799
        %v805 = vadd.f32 %v788, %v801
        %s806 = sld [smem:[#allocation8 + $0x1f]]
        %v807 = vstv %s806
        %v808 = vmul.f32 %v807, %v292
        %v809 = vmul.f32 %v807, %v293
        %v810 = vmul.f32 %v807, %v294
        %v814 = vrot.slane %v808, 1
        %v815 = vrot.slane %v809, 1
        %v816 = vsel %vm339, %v814, %v815
        %v817 = vrot.slane %v810, 1
        %v818 = vsel %vm339, %v815, %v817
        %819 = vrot.lane.b32.xlu0 %v816, 127
        %v820 = vpop.permute.xlu0 %819
        %821 = vrot.lane.b32.xlu0 %v818, 127
        %v822 = vpop.permute.xlu0 %821
        %v825 = vadd.f32 %v804, %v820
        %v826 = vadd.f32 %v805, %v822
        %s827 = sld [smem:[#allocation8 + $0x20]]
        %v828 = vstv %s827
        %v829 = vmul.f32 %v828, %v292
        %v830 = vmul.f32 %v828, %v293
        %v831 = vmul.f32 %v828, %v294
        %v835 = vrot.slane %v829, 1
        %v836 = vrot.slane %v830, 1
        %v837 = vsel %vm339, %v835, %v836
        %v838 = vrot.slane %v831, 1
        %v839 = vsel %vm339, %v836, %v838
        %840 = vrot.lane.b32.xlu0 %v837, 126
        %v841 = vpop.permute.xlu0 %840
        %842 = vrot.lane.b32.xlu0 %v839, 126
        %v843 = vpop.permute.xlu0 %842
        %v846 = vadd.f32 %v825, %v841
        %v847 = vadd.f32 %v826, %v843
        %s848 = sld [smem:[#allocation8 + $0x21]]
        %v849 = vstv %s848
        %v850 = vmul.f32 %v849, %v292
        %v851 = vmul.f32 %v849, %v293
        %v852 = vmul.f32 %v849, %v294
        %v856 = vrot.slane %v850, 2
        %v857 = vrot.slane %v851, 2
        %v858 = vsel %vm399, %v856, %v857
        %v859 = vrot.slane %v852, 2
        %v860 = vsel %vm399, %v857, %v859
        %v863 = vadd.f32 %v846, %v858
        %v864 = vadd.f32 %v847, %v860
        %s865 = sld [smem:[#allocation8 + $0x22]]
        %v866 = vstv %s865
        %v867 = vmul.f32 %v866, %v292
        %v868 = vmul.f32 %v866, %v293
        %v869 = vmul.f32 %v866, %v294
        %v873 = vrot.slane %v867, 2
        %v874 = vrot.slane %v868, 2
        %v875 = vsel %vm399, %v873, %v874
        %v876 = vrot.slane %v869, 2
        %v877 = vsel %vm399, %v874, %v876
        %878 = vrot.lane.b32.xlu0 %v875, 127
        %v879 = vpop.permute.xlu0 %878
        %880 = vrot.lane.b32.xlu0 %v877, 127
        %v881 = vpop.permute.xlu0 %880
        %v884 = vadd.f32 %v863, %v879
        %v885 = vadd.f32 %v864, %v881
        %s886 = sld [smem:[#allocation8 + $0x23]]
        %v887 = vstv %s886
        %v888 = vmul.f32 %v887, %v292
        %v889 = vmul.f32 %v887, %v293
        %v890 = vmul.f32 %v887, %v294
        %v894 = vrot.slane %v888, 2
        %v895 = vrot.slane %v889, 2
        %v896 = vsel %vm399, %v894, %v895
        %v897 = vrot.slane %v890, 2
        %v898 = vsel %vm399, %v895, %v897
        %899 = vrot.lane.b32.xlu0 %v896, 126
        %v900 = vpop.permute.xlu0 %899
        %901 = vrot.lane.b32.xlu0 %v898, 126
        %v902 = vpop.permute.xlu0 %901
        %v905 = vadd.f32 %v884, %v900
        %v906 = vadd.f32 %v885, %v902
        %v907 = vmax.f32 %v905, 0.0
        %v908 = vmax.f32 %v906, 0.0
        %s909 = sld [smem:[#allocation9 + $0x1]]
        %v910 = vstv %s909
        %s911 = sld [smem:[#allocation8 + $0x24]]
        %v912 = vstv %s911
        %v913 = vmul.f32 %v912, %v283
        %v914 = vmul.f32 %v912, %v284
        %v915 = vadd.f32 %v910, %v913
        %v916 = vadd.f32 %v910, %v914
        %s917 = sld [smem:[#allocation8 + $0x25]]
        %v918 = vstv %s917
        %v919 = vmul.f32 %v918, %v283
        %v920 = vmul.f32 %v918, %v284
        %923 = vrot.lane.b32.xlu0 %v919, 127
        %v924 = vpop.permute.xlu0 %923
        %925 = vrot.lane.b32.xlu0 %v920, 127
        %v926 = vpop.permute.xlu0 %925
        %v929 = vadd.f32 %v915, %v924
        %v930 = vadd.f32 %v916, %v926
        %s931 = sld [smem:[#allocation8 + $0x26]]
        %v932 = vstv %s931
        %v933 = vmul.f32 %v932, %v283
        %v934 = vmul.f32 %v932, %v284
        %937 = vrot.lane.b32.xlu0 %v933, 126
        %v938 = vpop.permute.xlu0 %937
        %939 = vrot.lane.b32.xlu0 %v934, 126
        %v940 = vpop.permute.xlu0 %939
        %v943 = vadd.f32 %v929, %v938
        %v944 = vadd.f32 %v930, %v940
        %s945 = sld [smem:[#allocation8 + $0x27]]
        %v946 = vstv %s945
        %v947 = vmul.f32 %v946, %v283
        %v948 = vmul.f32 %v946, %v284
        %v949 = vmul.f32 %v946, %v285
        %v953 = vrot.slane %v947, 1
        %v954 = vrot.slane %v948, 1
        %v955 = vsel %vm339, %v953, %v954
        %v956 = vrot.slane %v949, 1
        %v957 = vsel %vm339, %v954, %v956
        %v960 = vadd.f32 %v943, %v955
        %v961 = vadd.f32 %v944, %v957
        %s962 = sld [smem:[#allocation8 + $0x28]]
        %v963 = vstv %s962
        %v964 = vmul.f32 %v963, %v283
        %v965 = vmul.f32 %v963, %v284
        %v966 = vmul.f32 %v963, %v285
        %v970 = vrot.slane %v964, 1
        %v971 = vrot.slane %v965, 1
        %v972 = vsel %vm339, %v970, %v971
        %v973 = vrot.slane %v966, 1
        %v974 = vsel %vm339, %v971, %v973
        %975 = vrot.lane.b32.xlu0 %v972, 127
        %v976 = vpop.permute.xlu0 %975
        %977 = vrot.lane.b32.xlu0 %v974, 127
        %v978 = vpop.permute.xlu0 %977
        %v981 = vadd.f32 %v960, %v976
        %v982 = vadd.f32 %v961, %v978
        %s983 = sld [smem:[#allocation8 + $0x29]]
        %v984 = vstv %s983
        %v985 = vmul.f32 %v984, %v283
        %v986 = vmul.f32 %v984, %v284
        %v987 = vmul.f32 %v984, %v285
        %v991 = vrot.slane %v985, 1
        %v992 = vrot.slane %v986, 1
        %v993 = vsel %vm339, %v991, %v992
        %v994 = vrot.slane %v987, 1
        %v995 = vsel %vm339, %v992, %v994
        %996 = vrot.lane.b32.xlu0 %v993, 126
        %v997 = vpop.permute.xlu0 %996
        %998 = vrot.lane.b32.xlu0 %v995, 126
        %v999 = vpop.permute.xlu0 %998
        %v1002 = vadd.f32 %v981, %v997
        %v1003 = vadd.f32 %v982, %v999
        %s1004 = sld [smem:[#allocation8 + $0x2a]]
        %v1005 = vstv %s1004
        %v1006 = vmul.f32 %v1005, %v283
        %v1007 = vmul.f32 %v1005, %v284
        %v1008 = vmul.f32 %v1005, %v285
        %v1012 = vrot.slane %v1006, 2
        %v1013 = vrot.slane %v1007, 2
        %v1014 = vsel %vm399, %v1012, %v1013
        %v1015 = vrot.slane %v1008, 2
        %v1016 = vsel %vm399, %v1013, %v1015
        %v1019 = vadd.f32 %v1002, %v1014
        %v1020 = vadd.f32 %v1003, %v1016
        %s1021 = sld [smem:[#allocation8 + $0x2b]]
        %v1022 = vstv %s1021
        %v1023 = vmul.f32 %v1022, %v283
        %v1024 = vmul.f32 %v1022, %v284
        %v1025 = vmul.f32 %v1022, %v285
        %v1029 = vrot.slane %v1023, 2
        %v1030 = vrot.slane %v1024, 2
        %v1031 = vsel %vm399, %v1029, %v1030
        %v1032 = vrot.slane %v1025, 2
        %v1033 = vsel %vm399, %v1030, %v1032
        %1034 = vrot.lane.b32.xlu0 %v1031, 127
        %v1035 = vpop.permute.xlu0 %1034
        %1036 = vrot.lane.b32.xlu0 %v1033, 127
        %v1037 = vpop.permute.xlu0 %1036
        %v1040 = vadd.f32 %v1019, %v1035
        %v1041 = vadd.f32 %v1020, %v1037
        %s1042 = sld [smem:[#allocation8 + $0x2c]]
        %v1043 = vstv %s1042
        %v1044 = vmul.f32 %v1043, %v283
        %v1045 = vmul.f32 %v1043, %v284
        %v1046 = vmul.f32 %v1043, %v285
        %v1050 = vrot.slane %v1044, 2
        %v1051 = vrot.slane %v1045, 2
        %v1052 = vsel %vm399, %v1050, %v1051
        %v1053 = vrot.slane %v1046, 2
        %v1054 = vsel %vm399, %v1051, %v1053
        %1055 = vrot.lane.b32.xlu0 %v1052, 126
        %v1056 = vpop.permute.xlu0 %1055
        %1057 = vrot.lane.b32.xlu0 %v1054, 126
        %v1058 = vpop.permute.xlu0 %1057
        %v1061 = vadd.f32 %v1040, %v1056
        %v1062 = vadd.f32 %v1041, %v1058
        %s1063 = sld [smem:[#allocation8 + $0x2d]]
        %v1064 = vstv %s1063
        %v1065 = vmul.f32 %v1064, %v286
        %v1066 = vmul.f32 %v1064, %v287
        %v1067 = vadd.f32 %v1061, %v1065
        %v1068 = vadd.f32 %v1062, %v1066
        %s1069 = sld [smem:[#allocation8 + $0x2e]]
        %v1070 = vstv %s1069
        %v1071 = vmul.f32 %v1070, %v286
        %v1072 = vmul.f32 %v1070, %v287
        %1075 = vrot.lane.b32.xlu0 %v1071, 127
        %v1076 = vpop.permute.xlu0 %1075
        %1077 = vrot.lane.b32.xlu0 %v1072, 127
        %v1078 = vpop.permute.xlu0 %1077
        %v1081 = vadd.f32 %v1067, %v1076
        %v1082 = vadd.f32 %v1068, %v1078
        %s1083 = sld [smem:[#allocation8 + $0x2f]]
        %v1084 = vstv %s1083
        %v1085 = vmul.f32 %v1084, %v286
        %v1086 = vmul.f32 %v1084, %v287
        %1089 = vrot.lane.b32.xlu0 %v1085, 126
        %v1090 = vpop.permute.xlu0 %1089
        %1091 = vrot.lane.b32.xlu0 %v1086, 126
        %v1092 = vpop.permute.xlu0 %1091
        %v1095 = vadd.f32 %v1081, %v1090
        %v1096 = vadd.f32 %v1082, %v1092
        %s1097 = sld [smem:[#allocation8 + $0x30]]
        %v1098 = vstv %s1097
        %v1099 = vmul.f32 %v1098, %v286
        %v1100 = vmul.f32 %v1098, %v287
        %v1101 = vmul.f32 %v1098, %v288
        %v1105 = vrot.slane %v1099, 1
        %v1106 = vrot.slane %v1100, 1
        %v1107 = vsel %vm339, %v1105, %v1106
        %v1108 = vrot.slane %v1101, 1
        %v1109 = vsel %vm339, %v1106, %v1108
        %v1112 = vadd.f32 %v1095, %v1107
        %v1113 = vadd.f32 %v1096, %v1109
        %s1114 = sld [smem:[#allocation8 + $0x31]]
        %v1115 = vstv %s1114
        %v1116 = vmul.f32 %v1115, %v286
        %v1117 = vmul.f32 %v1115, %v287
        %v1118 = vmul.f32 %v1115, %v288
        %v1122 = vrot.slane %v1116, 1
        %v1123 = vrot.slane %v1117, 1
        %v1124 = vsel %vm339, %v1122, %v1123
        %v1125 = vrot.slane %v1118, 1
        %v1126 = vsel %vm339, %v1123, %v1125
        %1127 = vrot.lane.b32.xlu0 %v1124, 127
        %v1128 = vpop.permute.xlu0 %1127
        %1129 = vrot.lane.b32.xlu0 %v1126, 127
        %v1130 = vpop.permute.xlu0 %1129
        %v1133 = vadd.f32 %v1112, %v1128
        %v1134 = vadd.f32 %v1113, %v1130
        %s1135 = sld [smem:[#allocation8 + $0x32]]
        %v1136 = vstv %s1135
        %v1137 = vmul.f32 %v1136, %v286
        %v1138 = vmul.f32 %v1136, %v287
        %v1139 = vmul.f32 %v1136, %v288
        %v1143 = vrot.slane %v1137, 1
        %v1144 = vrot.slane %v1138, 1
        %v1145 = vsel %vm339, %v1143, %v1144
        %v1146 = vrot.slane %v1139, 1
        %v1147 = vsel %vm339, %v1144, %v1146
        %1148 = vrot.lane.b32.xlu0 %v1145, 126
        %v1149 = vpop.permute.xlu0 %1148
        %1150 = vrot.lane.b32.xlu0 %v1147, 126
        %v1151 = vpop.permute.xlu0 %1150
        %v1154 = vadd.f32 %v1133, %v1149
        %v1155 = vadd.f32 %v1134, %v1151
        %s1156 = sld [smem:[#allocation8 + $0x33]]
        %v1157 = vstv %s1156
        %v1158 = vmul.f32 %v1157, %v286
        %v1159 = vmul.f32 %v1157, %v287
        %v1160 = vmul.f32 %v1157, %v288
        %v1164 = vrot.slane %v1158, 2
        %v1165 = vrot.slane %v1159, 2
        %v1166 = vsel %vm399, %v1164, %v1165
        %v1167 = vrot.slane %v1160, 2
        %v1168 = vsel %vm399, %v1165, %v1167
        %v1171 = vadd.f32 %v1154, %v1166
        %v1172 = vadd.f32 %v1155, %v1168
        %s1173 = sld [smem:[#allocation8 + $0x34]]
        %v1174 = vstv %s1173
        %v1175 = vmul.f32 %v1174, %v286
        %v1176 = vmul.f32 %v1174, %v287
        %v1177 = vmul.f32 %v1174, %v288
        %v1181 = vrot.slane %v1175, 2
        %v1182 = vrot.slane %v1176, 2
        %v1183 = vsel %vm399, %v1181, %v1182
        %v1184 = vrot.slane %v1177, 2
        %v1185 = vsel %vm399, %v1182, %v1184
        %1186 = vrot.lane.b32.xlu0 %v1183, 127
        %v1187 = vpop.permute.xlu0 %1186
        %1188 = vrot.lane.b32.xlu0 %v1185, 127
        %v1189 = vpop.permute.xlu0 %1188
        %v1192 = vadd.f32 %v1171, %v1187
        %v1193 = vadd.f32 %v1172, %v1189
        %s1194 = sld [smem:[#allocation8 + $0x35]]
        %v1195 = vstv %s1194
        %v1196 = vmul.f32 %v1195, %v286
        %v1197 = vmul.f32 %v1195, %v287
        %v1198 = vmul.f32 %v1195, %v288
        %v1202 = vrot.slane %v1196, 2
        %v1203 = vrot.slane %v1197, 2
        %v1204 = vsel %vm399, %v1202, %v1203
        %v1205 = vrot.slane %v1198, 2
        %v1206 = vsel %vm399, %v1203, %v1205
        %1207 = vrot.lane.b32.xlu0 %v1204, 126
        %v1208 = vpop.permute.xlu0 %1207
        %1209 = vrot.lane.b32.xlu0 %v1206, 126
        %v1210 = vpop.permute.xlu0 %1209
        %v1213 = vadd.f32 %v1192, %v1208
        %v1214 = vadd.f32 %v1193, %v1210
        %s1215 = sld [smem:[#allocation8 + $0x36]]
        %v1216 = vstv %s1215
        %v1217 = vmul.f32 %v1216, %v289
        %v1218 = vmul.f32 %v1216, %v290
        %v1219 = vadd.f32 %v1213, %v1217
        %v1220 = vadd.f32 %v1214, %v1218
        %s1221 = sld [smem:[#allocation8 + $0x37]]
        %v1222 = vstv %s1221
        %v1223 = vmul.f32 %v1222, %v289
        %v1224 = vmul.f32 %v1222, %v290
        %1227 = vrot.lane.b32.xlu0 %v1223, 127
        %v1228 = vpop.permute.xlu0 %1227
        %1229 = vrot.lane.b32.xlu0 %v1224, 127
        %v1230 = vpop.permute.xlu0 %1229
        %v1233 = vadd.f32 %v1219, %v1228
        %v1234 = vadd.f32 %v1220, %v1230
        %s1235 = sld [smem:[#allocation8 + $0x38]]
        %v1236 = vstv %s1235
        %v1237 = vmul.f32 %v1236, %v289
        %v1238 = vmul.f32 %v1236, %v290
        %1241 = vrot.lane.b32.xlu0 %v1237, 126
        %v1242 = vpop.permute.xlu0 %1241
        %1243 = vrot.lane.b32.xlu0 %v1238, 126
        %v1244 = vpop.permute.xlu0 %1243
        %v1247 = vadd.f32 %v1233, %v1242
        %v1248 = vadd.f32 %v1234, %v1244
        %s1249 = sld [smem:[#allocation8 + $0x39]]
        %v1250 = vstv %s1249
        %v1251 = vmul.f32 %v1250, %v289
        %v1252 = vmul.f32 %v1250, %v290
        %v1253 = vmul.f32 %v1250, %v291
        %v1257 = vrot.slane %v1251, 1
        %v1258 = vrot.slane %v1252, 1
        %v1259 = vsel %vm339, %v1257, %v1258
        %v1260 = vrot.slane %v1253, 1
        %v1261 = vsel %vm339, %v1258, %v1260
        %v1264 = vadd.f32 %v1247, %v1259
        %v1265 = vadd.f32 %v1248, %v1261
        %s1266 = sld [smem:[#allocation8 + $0x3a]]
        %v1267 = vstv %s1266
        %v1268 = vmul.f32 %v1267, %v289
        %v1269 = vmul.f32 %v1267, %v290
        %v1270 = vmul.f32 %v1267, %v291
        %v1274 = vrot.slane %v1268, 1
        %v1275 = vrot.slane %v1269, 1
        %v1276 = vsel %vm339, %v1274, %v1275
        %v1277 = vrot.slane %v1270, 1
        %v1278 = vsel %vm339, %v1275, %v1277
        %1279 = vrot.lane.b32.xlu0 %v1276, 127
        %v1280 = vpop.permute.xlu0 %1279
        %1281 = vrot.lane.b32.xlu0 %v1278, 127
        %v1282 = vpop.permute.xlu0 %1281
        %v1285 = vadd.f32 %v1264, %v1280
        %v1286 = vadd.f32 %v1265, %v1282
        %s1287 = sld [smem:[#allocation8 + $0x3b]]
        %v1288 = vstv %s1287
        %v1289 = vmul.f32 %v1288, %v289
        %v1290 = vmul.f32 %v1288, %v290
        %v1291 = vmul.f32 %v1288, %v291
        %v1295 = vrot.slane %v1289, 1
        %v1296 = vrot.slane %v1290, 1
        %v1297 = vsel %vm339, %v1295, %v1296
        %v1298 = vrot.slane %v1291, 1
        %v1299 = vsel %vm339, %v1296, %v1298
        %1300 = vrot.lane.b32.xlu0 %v1297, 126
        %v1301 = vpop.permute.xlu0 %1300
        %1302 = vrot.lane.b32.xlu0 %v1299, 126
        %v1303 = vpop.permute.xlu0 %1302
        %v1306 = vadd.f32 %v1285, %v1301
        %v1307 = vadd.f32 %v1286, %v1303
        %s1308 = sld [smem:[#allocation8 + $0x3c]]
        %v1309 = vstv %s1308
        %v1310 = vmul.f32 %v1309, %v289
        %v1311 = vmul.f32 %v1309, %v290
        %v1312 = vmul.f32 %v1309, %v291
        %v1316 = vrot.slane %v1310, 2
        %v1317 = vrot.slane %v1311, 2
        %v1318 = vsel %vm399, %v1316, %v1317
        %v1319 = vrot.slane %v1312, 2
        %v1320 = vsel %vm399, %v1317, %v1319
        %v1323 = vadd.f32 %v1306, %v1318
        %v1324 = vadd.f32 %v1307, %v1320
        %s1325 = sld [smem:[#allocation8 + $0x3d]]
        %v1326 = vstv %s1325
        %v1327 = vmul.f32 %v1326, %v289
        %v1328 = vmul.f32 %v1326, %v290
        %v1329 = vmul.f32 %v1326, %v291
        %v1333 = vrot.slane %v1327, 2
        %v1334 = vrot.slane %v1328, 2
        %v1335 = vsel %vm399, %v1333, %v1334
        %v1336 = vrot.slane %v1329, 2
        %v1337 = vsel %vm399, %v1334, %v1336
        %1338 = vrot.lane.b32.xlu0 %v1335, 127
        %v1339 = vpop.permute.xlu0 %1338
        %1340 = vrot.lane.b32.xlu0 %v1337, 127
        %v1341 = vpop.permute.xlu0 %1340
        %v1344 = vadd.f32 %v1323, %v1339
        %v1345 = vadd.f32 %v1324, %v1341
        %s1346 = sld [smem:[#allocation8 + $0x3e]]
        %v1347 = vstv %s1346
        %v1348 = vmul.f32 %v1347, %v289
        %v1349 = vmul.f32 %v1347, %v290
        %v1350 = vmul.f32 %v1347, %v291
        %v1354 = vrot.slane %v1348, 2
        %v1355 = vrot.slane %v1349, 2
        %v1356 = vsel %vm399, %v1354, %v1355
        %v1357 = vrot.slane %v1350, 2
        %v1358 = vsel %vm399, %v1355, %v1357
        %1359 = vrot.lane.b32.xlu0 %v1356, 126
        %v1360 = vpop.permute.xlu0 %1359
        %1361 = vrot.lane.b32.xlu0 %v1358, 126
        %v1362 = vpop.permute.xlu0 %1361
        %v1365 = vadd.f32 %v1344, %v1360
        %v1366 = vadd.f32 %v1345, %v1362
        %s1367 = sld [smem:[#allocation8 + $0x3f]]
        %v1368 = vstv %s1367
        %v1369 = vmul.f32 %v1368, %v292
        %v1370 = vmul.f32 %v1368, %v293
        %v1371 = vadd.f32 %v1365, %v1369
        %v1372 = vadd.f32 %v1366, %v1370
        %s1373 = sld [smem:[#allocation8 + $0x40]]
        %v1374 = vstv %s1373
        %v1375 = vmul.f32 %v1374, %v292
        %v1376 = vmul.f32 %v1374, %v293
        %1379 = vrot.lane.b32.xlu0 %v1375, 127
        %v1380 = vpop.permute.xlu0 %1379
        %1381 = vrot.lane.b32.xlu0 %v1376, 127
        %v1382 = vpop.permute.xlu0 %1381
        %v1385 = vadd.f32 %v1371, %v1380
        %v1386 = vadd.f32 %v1372, %v1382
        %s1387 = sld [smem:[#allocation8 + $0x41]]
        %v1388 = vstv %s1387
        %v1389 = vmul.f32 %v1388, %v292
        %v1390 = vmul.f32 %v1388, %v293
        %1393 = vrot.lane.b32.xlu0 %v1389, 126
        %v1394 = vpop.permute.xlu0 %1393
        %1395 = vrot.lane.b32.xlu0 %v1390, 126
        %v1396 = vpop.permute.xlu0 %1395
        %v1399 = vadd.f32 %v1385, %v1394
        %v1400 = vadd.f32 %v1386, %v1396
        %s1401 = sld [smem:[#allocation8 + $0x42]]
        %v1402 = vstv %s1401
        %v1403 = vmul.f32 %v1402, %v292
        %v1404 = vmul.f32 %v1402, %v293
        %v1405 = vmul.f32 %v1402, %v294
        %v1409 = vrot.slane %v1403, 1
        %v1410 = vrot.slane %v1404, 1
        %v1411 = vsel %vm339, %v1409, %v1410
        %v1412 = vrot.slane %v1405, 1
        %v1413 = vsel %vm339, %v1410, %v1412
        %v1416 = vadd.f32 %v1399, %v1411
        %v1417 = vadd.f32 %v1400, %v1413
        %s1418 = sld [smem:[#allocation8 + $0x43]]
        %v1419 = vstv %s1418
        %v1420 = vmul.f32 %v1419, %v292
        %v1421 = vmul.f32 %v1419, %v293
        %v1422 = vmul.f32 %v1419, %v294
        %v1426 = vrot.slane %v1420, 1
        %v1427 = vrot.slane %v1421, 1
        %v1428 = vsel %vm339, %v1426, %v1427
        %v1429 = vrot.slane %v1422, 1
        %v1430 = vsel %vm339, %v1427, %v1429
        %1431 = vrot.lane.b32.xlu0 %v1428, 127
        %v1432 = vpop.permute.xlu0 %1431
        %1433 = vrot.lane.b32.xlu0 %v1430, 127
        %v1434 = vpop.permute.xlu0 %1433
        %v1437 = vadd.f32 %v1416, %v1432
        %v1438 = vadd.f32 %v1417, %v1434
        %s1439 = sld [smem:[#allocation8 + $0x44]]
        %v1440 = vstv %s1439
        %v1441 = vmul.f32 %v1440, %v292
        %v1442 = vmul.f32 %v1440, %v293
        %v1443 = vmul.f32 %v1440, %v294
        %v1447 = vrot.slane %v1441, 1
        %v1448 = vrot.slane %v1442, 1
        %v1449 = vsel %vm339, %v1447, %v1448
        %v1450 = vrot.slane %v1443, 1
        %v1451 = vsel %vm339, %v1448, %v1450
        %1452 = vrot.lane.b32.xlu0 %v1449, 126
        %v1453 = vpop.permute.xlu0 %1452
        %1454 = vrot.lane.b32.xlu0 %v1451, 126
        %v1455 = vpop.permute.xlu0 %1454
        %v1458 = vadd.f32 %v1437, %v1453
        %v1459 = vadd.f32 %v1438, %v1455
        %s1460 = sld [smem:[#allocation8 + $0x45]]
        %v1461 = vstv %s1460
        %v1462 = vmul.f32 %v1461, %v292
        %v1463 = vmul.f32 %v1461, %v293
        %v1464 = vmul.f32 %v1461, %v294
        %v1468 = vrot.slane %v1462, 2
        %v1469 = vrot.slane %v1463, 2
        %v1470 = vsel %vm399, %v1468, %v1469
        %v1471 = vrot.slane %v1464, 2
        %v1472 = vsel %vm399, %v1469, %v1471
        %v1475 = vadd.f32 %v1458, %v1470
        %v1476 = vadd.f32 %v1459, %v1472
        %s1477 = sld [smem:[#allocation8 + $0x46]]
        %v1478 = vstv %s1477
        %v1479 = vmul.f32 %v1478, %v292
        %v1480 = vmul.f32 %v1478, %v293
        %v1481 = vmul.f32 %v1478, %v294
        %v1485 = vrot.slane %v1479, 2
        %v1486 = vrot.slane %v1480, 2
        %v1487 = vsel %vm399, %v1485, %v1486
        %v1488 = vrot.slane %v1481, 2
        %v1489 = vsel %vm399, %v1486, %v1488
        %1490 = vrot.lane.b32.xlu0 %v1487, 127
        %v1491 = vpop.permute.xlu0 %1490
        %1492 = vrot.lane.b32.xlu0 %v1489, 127
        %v1493 = vpop.permute.xlu0 %1492
        %v1496 = vadd.f32 %v1475, %v1491
        %v1497 = vadd.f32 %v1476, %v1493
        %s1498 = sld [smem:[#allocation8 + $0x47]]
        %v1499 = vstv %s1498
        %v1500 = vmul.f32 %v1499, %v292
        %v1501 = vmul.f32 %v1499, %v293
        %v1502 = vmul.f32 %v1499, %v294
        %v1506 = vrot.slane %v1500, 2
        %v1507 = vrot.slane %v1501, 2
        %v1508 = vsel %vm399, %v1506, %v1507
        %v1509 = vrot.slane %v1502, 2
        %v1510 = vsel %vm399, %v1507, %v1509
        %1511 = vrot.lane.b32.xlu0 %v1508, 126
        %v1512 = vpop.permute.xlu0 %1511
        %1513 = vrot.lane.b32.xlu0 %v1510, 126
        %v1514 = vpop.permute.xlu0 %1513
        %v1517 = vadd.f32 %v1496, %v1512
        %v1518 = vadd.f32 %v1497, %v1514
        %v1519 = vmax.f32 %v1517, 0.0
        %v1520 = vmax.f32 %v1518, 0.0
        %s1521 = sld [smem:[#allocation9 + $0x2]]
        %v1522 = vstv %s1521
        %s1523 = sld [smem:[#allocation8 + $0x48]]
        %v1524 = vstv %s1523
        %v1525 = vmul.f32 %v1524, %v283
        %v1526 = vmul.f32 %v1524, %v284
        %v1527 = vadd.f32 %v1522, %v1525
        %v1528 = vadd.f32 %v1522, %v1526
        %s1529 = sld [smem:[#allocation8 + $0x49]]
        %v1530 = vstv %s1529
        %v1531 = vmul.f32 %v1530, %v283
        %v1532 = vmul.f32 %v1530, %v284
        %1535 = vrot.lane.b32.xlu0 %v1531, 127
        %v1536 = vpop.permute.xlu0 %1535
        %1537 = vrot.lane.b32.xlu0 %v1532, 127
        %v1538 = vpop.permute.xlu0 %1537
        %v1541 = vadd.f32 %v1527, %v1536
        %v1542 = vadd.f32 %v1528, %v1538
        %s1543 = sld [smem:[#allocation8 + $0x4a]]
        %v1544 = vstv %s1543
        %v1545 = vmul.f32 %v1544, %v283
        %v1546 = vmul.f32 %v1544, %v284
        %1549 = vrot.lane.b32.xlu0 %v1545, 126
        %v1550 = vpop.permute.xlu0 %1549
        %1551 = vrot.lane.b32.xlu0 %v1546, 126
        %v1552 = vpop.permute.xlu0 %1551
        %v1555 = vadd.f32 %v1541, %v1550
        %v1556 = vadd.f32 %v1542, %v1552
        %s1557 = sld [smem:[#allocation8 + $0x4b]]
        %v1558 = vstv %s1557
        %v1559 = vmul.f32 %v1558, %v283
        %v1560 = vmul.f32 %v1558, %v284
        %v1561 = vmul.f32 %v1558, %v285
        %v1565 = vrot.slane %v1559, 1
        %v1566 = vrot.slane %v1560, 1
        %v1567 = vsel %vm339, %v1565, %v1566
        %v1568 = vrot.slane %v1561, 1
        %v1569 = vsel %vm339, %v1566, %v1568
        %v1572 = vadd.f32 %v1555, %v1567
        %v1573 = vadd.f32 %v1556, %v1569
        %s1574 = sld [smem:[#allocation8 + $0x4c]]
        %v1575 = vstv %s1574
        %v1576 = vmul.f32 %v1575, %v283
        %v1577 = vmul.f32 %v1575, %v284
        %v1578 = vmul.f32 %v1575, %v285
        %v1582 = vrot.slane %v1576, 1
        %v1583 = vrot.slane %v1577, 1
        %v1584 = vsel %vm339, %v1582, %v1583
        %v1585 = vrot.slane %v1578, 1
        %v1586 = vsel %vm339, %v1583, %v1585
        %1587 = vrot.lane.b32.xlu0 %v1584, 127
        %v1588 = vpop.permute.xlu0 %1587
        %1589 = vrot.lane.b32.xlu0 %v1586, 127
        %v1590 = vpop.permute.xlu0 %1589
        %v1593 = vadd.f32 %v1572, %v1588
        %v1594 = vadd.f32 %v1573, %v1590
        %s1595 = sld [smem:[#allocation8 + $0x4d]]
        %v1596 = vstv %s1595
        %v1597 = vmul.f32 %v1596, %v283
        %v1598 = vmul.f32 %v1596, %v284
        %v1599 = vmul.f32 %v1596, %v285
        %v1603 = vrot.slane %v1597, 1
        %v1604 = vrot.slane %v1598, 1
        %v1605 = vsel %vm339, %v1603, %v1604
        %v1606 = vrot.slane %v1599, 1
        %v1607 = vsel %vm339, %v1604, %v1606
        %1608 = vrot.lane.b32.xlu0 %v1605, 126
        %v1609 = vpop.permute.xlu0 %1608
        %1610 = vrot.lane.b32.xlu0 %v1607, 126
        %v1611 = vpop.permute.xlu0 %1610
        %v1614 = vadd.f32 %v1593, %v1609
        %v1615 = vadd.f32 %v1594, %v1611
        %s1616 = sld [smem:[#allocation8 + $0x4e]]
        %v1617 = vstv %s1616
        %v1618 = vmul.f32 %v1617, %v283
        %v1619 = vmul.f32 %v1617, %v284
        %v1620 = vmul.f32 %v1617, %v285
        %v1624 = vrot.slane %v1618, 2
        %v1625 = vrot.slane %v1619, 2
        %v1626 = vsel %vm399, %v1624, %v1625
        %v1627 = vrot.slane %v1620, 2
        %v1628 = vsel %vm399, %v1625, %v1627
        %v1631 = vadd.f32 %v1614, %v1626
        %v1632 = vadd.f32 %v1615, %v1628
        %s1633 = sld [smem:[#allocation8 + $0x4f]]
        %v1634 = vstv %s1633
        %v1635 = vmul.f32 %v1634, %v283
        %v1636 = vmul.f32 %v1634, %v284
        %v1637 = vmul.f32 %v1634, %v285
        %v1641 = vrot.slane %v1635, 2
        %v1642 = vrot.slane %v1636, 2
        %v1643 = vsel %vm399, %v1641, %v1642
        %v1644 = vrot.slane %v1637, 2
        %v1645 = vsel %vm399, %v1642, %v1644
        %1646 = vrot.lane.b32.xlu0 %v1643, 127
        %v1647 = vpop.permute.xlu0 %1646
        %1648 = vrot.lane.b32.xlu0 %v1645, 127
        %v1649 = vpop.permute.xlu0 %1648
        %v1652 = vadd.f32 %v1631, %v1647
        %v1653 = vadd.f32 %v1632, %v1649
        %s1654 = sld [smem:[#allocation8 + $0x50]]
        %v1655 = vstv %s1654
        %v1656 = vmul.f32 %v1655, %v283
        %v1657 = vmul.f32 %v1655, %v284
        %v1658 = vmul.f32 %v1655, %v285
        %v1662 = vrot.slane %v1656, 2
        %v1663 = vrot.slane %v1657, 2
        %v1664 = vsel %vm399, %v1662, %v1663
        %v1665 = vrot.slane %v1658, 2
        %v1666 = vsel %vm399, %v1663, %v1665
        %1667 = vrot.lane.b32.xlu0 %v1664, 126
        %v1668 = vpop.permute.xlu0 %1667
        %1669 = vrot.lane.b32.xlu0 %v1666, 126
        %v1670 = vpop.permute.xlu0 %1669
        %v1673 = vadd.f32 %v1652, %v1668
        %v1674 = vadd.f32 %v1653, %v1670
        %s1675 = sld [smem:[#allocation8 + $0x51]]
        %v1676 = vstv %s1675
        %v1677 = vmul.f32 %v1676, %v286
        %v1678 = vmul.f32 %v1676, %v287
        %v1679 = vadd.f32 %v1673, %v1677
        %v1680 = vadd.f32 %v1674, %v1678
        %s1681 = sld [smem:[#allocation8 + $0x52]]
        %v1682 = vstv %s1681
        %v1683 = vmul.f32 %v1682, %v286
        %v1684 = vmul.f32 %v1682, %v287
        %1687 = vrot.lane.b32.xlu0 %v1683, 127
        %v1688 = vpop.permute.xlu0 %1687
        %1689 = vrot.lane.b32.xlu0 %v1684, 127
        %v1690 = vpop.permute.xlu0 %1689
        %v1693 = vadd.f32 %v1679, %v1688
        %v1694 = vadd.f32 %v1680, %v1690
        %s1695 = sld [smem:[#allocation8 + $0x53]]
        %v1696 = vstv %s1695
        %v1697 = vmul.f32 %v1696, %v286
        %v1698 = vmul.f32 %v1696, %v287
        %1701 = vrot.lane.b32.xlu0 %v1697, 126
        %v1702 = vpop.permute.xlu0 %1701
        %1703 = vrot.lane.b32.xlu0 %v1698, 126
        %v1704 = vpop.permute.xlu0 %1703
        %v1707 = vadd.f32 %v1693, %v1702
        %v1708 = vadd.f32 %v1694, %v1704
        %s1709 = sld [smem:[#allocation8 + $0x54]]
        %v1710 = vstv %s1709
        %v1711 = vmul.f32 %v1710, %v286
        %v1712 = vmul.f32 %v1710, %v287
        %v1713 = vmul.f32 %v1710, %v288
        %v1717 = vrot.slane %v1711, 1
        %v1718 = vrot.slane %v1712, 1
        %v1719 = vsel %vm339, %v1717, %v1718
        %v1720 = vrot.slane %v1713, 1
        %v1721 = vsel %vm339, %v1718, %v1720
        %v1724 = vadd.f32 %v1707, %v1719
        %v1725 = vadd.f32 %v1708, %v1721
        %s1726 = sld [smem:[#allocation8 + $0x55]]
        %v1727 = vstv %s1726
        %v1728 = vmul.f32 %v1727, %v286
        %v1729 = vmul.f32 %v1727, %v287
        %v1730 = vmul.f32 %v1727, %v288
        %v1734 = vrot.slane %v1728, 1
        %v1735 = vrot.slane %v1729, 1
        %v1736 = vsel %vm339, %v1734, %v1735
        %v1737 = vrot.slane %v1730, 1
        %v1738 = vsel %vm339, %v1735, %v1737
        %1739 = vrot.lane.b32.xlu0 %v1736, 127
        %v1740 = vpop.permute.xlu0 %1739
        %1741 = vrot.lane.b32.xlu0 %v1738, 127
        %v1742 = vpop.permute.xlu0 %1741
        %v1745 = vadd.f32 %v1724, %v1740
        %v1746 = vadd.f32 %v1725, %v1742
        %s1747 = sld [smem:[#allocation8 + $0x56]]
        %v1748 = vstv %s1747
        %v1749 = vmul.f32 %v1748, %v286
        %v1750 = vmul.f32 %v1748, %v287
        %v1751 = vmul.f32 %v1748, %v288
        %v1755 = vrot.slane %v1749, 1
        %v1756 = vrot.slane %v1750, 1
        %v1757 = vsel %vm339, %v1755, %v1756
        %v1758 = vrot.slane %v1751, 1
        %v1759 = vsel %vm339, %v1756, %v1758
        %1760 = vrot.lane.b32.xlu0 %v1757, 126
        %v1761 = vpop.permute.xlu0 %1760
        %1762 = vrot.lane.b32.xlu0 %v1759, 126
        %v1763 = vpop.permute.xlu0 %1762
        %v1766 = vadd.f32 %v1745, %v1761
        %v1767 = vadd.f32 %v1746, %v1763
        %s1768 = sld [smem:[#allocation8 + $0x57]]
        %v1769 = vstv %s1768
        %v1770 = vmul.f32 %v1769, %v286
        %v1771 = vmul.f32 %v1769, %v287
        %v1772 = vmul.f32 %v1769, %v288
        %v1776 = vrot.slane %v1770, 2
        %v1777 = vrot.slane %v1771, 2
        %v1778 = vsel %vm399, %v1776, %v1777
        %v1779 = vrot.slane %v1772, 2
        %v1780 = vsel %vm399, %v1777, %v1779
        %v1783 = vadd.f32 %v1766, %v1778
        %v1784 = vadd.f32 %v1767, %v1780
        %s1785 = sld [smem:[#allocation8 + $0x58]]
        %v1786 = vstv %s1785
        %v1787 = vmul.f32 %v1786, %v286
        %v1788 = vmul.f32 %v1786, %v287
        %v1789 = vmul.f32 %v1786, %v288
        %v1793 = vrot.slane %v1787, 2
        %v1794 = vrot.slane %v1788, 2
        %v1795 = vsel %vm399, %v1793, %v1794
        %v1796 = vrot.slane %v1789, 2
        %v1797 = vsel %vm399, %v1794, %v1796
        %1798 = vrot.lane.b32.xlu0 %v1795, 127
        %v1799 = vpop.permute.xlu0 %1798
        %1800 = vrot.lane.b32.xlu0 %v1797, 127
        %v1801 = vpop.permute.xlu0 %1800
        %v1804 = vadd.f32 %v1783, %v1799
        %v1805 = vadd.f32 %v1784, %v1801
        %s1806 = sld [smem:[#allocation8 + $0x59]]
        %v1807 = vstv %s1806
        %v1808 = vmul.f32 %v1807, %v286
        %v1809 = vmul.f32 %v1807, %v287
        %v1810 = vmul.f32 %v1807, %v288
        %v1814 = vrot.slane %v1808, 2
        %v1815 = vrot.slane %v1809, 2
        %v1816 = vsel %vm399, %v1814, %v1815
        %v1817 = vrot.slane %v1810, 2
        %v1818 = vsel %vm399, %v1815, %v1817
        %1819 = vrot.lane.b32.xlu0 %v1816, 126
        %v1820 = vpop.permute.xlu0 %1819
        %1821 = vrot.lane.b32.xlu0 %v1818, 126
        %v1822 = vpop.permute.xlu0 %1821
        %v1825 = vadd.f32 %v1804, %v1820
        %v1826 = vadd.f32 %v1805, %v1822
        %s1827 = sld [smem:[#allocation8 + $0x5a]]
        %v1828 = vstv %s1827
        %v1829 = vmul.f32 %v1828, %v289
        %v1830 = vmul.f32 %v1828, %v290
        %v1831 = vadd.f32 %v1825, %v1829
        %v1832 = vadd.f32 %v1826, %v1830
        %s1833 = sld [smem:[#allocation8 + $0x5b]]
        %v1834 = vstv %s1833
        %v1835 = vmul.f32 %v1834, %v289
        %v1836 = vmul.f32 %v1834, %v290
        %1839 = vrot.lane.b32.xlu0 %v1835, 127
        %v1840 = vpop.permute.xlu0 %1839
        %1841 = vrot.lane.b32.xlu0 %v1836, 127
        %v1842 = vpop.permute.xlu0 %1841
        %v1845 = vadd.f32 %v1831, %v1840
        %v1846 = vadd.f32 %v1832, %v1842
        %s1847 = sld [smem:[#allocation8 + $0x5c]]
        %v1848 = vstv %s1847
        %v1849 = vmul.f32 %v1848, %v289
        %v1850 = vmul.f32 %v1848, %v290
        %1853 = vrot.lane.b32.xlu0 %v1849, 126
        %v1854 = vpop.permute.xlu0 %1853
        %1855 = vrot.lane.b32.xlu0 %v1850, 126
        %v1856 = vpop.permute.xlu0 %1855
        %v1859 = vadd.f32 %v1845, %v1854
        %v1860 = vadd.f32 %v1846, %v1856
        %s1861 = sld [smem:[#allocation8 + $0x5d]]
        %v1862 = vstv %s1861
        %v1863 = vmul.f32 %v1862, %v289
        %v1864 = vmul.f32 %v1862, %v290
        %v1865 = vmul.f32 %v1862, %v291
        %v1869 = vrot.slane %v1863, 1
        %v1870 = vrot.slane %v1864, 1
        %v1871 = vsel %vm339, %v1869, %v1870
        %v1872 = vrot.slane %v1865, 1
        %v1873 = vsel %vm339, %v1870, %v1872
        %v1876 = vadd.f32 %v1859, %v1871
        %v1877 = vadd.f32 %v1860, %v1873
        %s1878 = sld [smem:[#allocation8 + $0x5e]]
        %v1879 = vstv %s1878
        %v1880 = vmul.f32 %v1879, %v289
        %v1881 = vmul.f32 %v1879, %v290
        %v1882 = vmul.f32 %v1879, %v291
        %v1886 = vrot.slane %v1880, 1
        %v1887 = vrot.slane %v1881, 1
        %v1888 = vsel %vm339, %v1886, %v1887
        %v1889 = vrot.slane %v1882, 1
        %v1890 = vsel %vm339, %v1887, %v1889
        %1891 = vrot.lane.b32.xlu0 %v1888, 127
        %v1892 = vpop.permute.xlu0 %1891
        %1893 = vrot.lane.b32.xlu0 %v1890, 127
        %v1894 = vpop.permute.xlu0 %1893
        %v1897 = vadd.f32 %v1876, %v1892
        %v1898 = vadd.f32 %v1877, %v1894
        %s1899 = sld [smem:[#allocation8 + $0x5f]]
        %v1900 = vstv %s1899
        %v1901 = vmul.f32 %v1900, %v289
        %v1902 = vmul.f32 %v1900, %v290
        %v1903 = vmul.f32 %v1900, %v291
        %v1907 = vrot.slane %v1901, 1
        %v1908 = vrot.slane %v1902, 1
        %v1909 = vsel %vm339, %v1907, %v1908
        %v1910 = vrot.slane %v1903, 1
        %v1911 = vsel %vm339, %v1908, %v1910
        %1912 = vrot.lane.b32.xlu0 %v1909, 126
        %v1913 = vpop.permute.xlu0 %1912
        %1914 = vrot.lane.b32.xlu0 %v1911, 126
        %v1915 = vpop.permute.xlu0 %1914
        %v1918 = vadd.f32 %v1897, %v1913
        %v1919 = vadd.f32 %v1898, %v1915
        %s1920 = sld [smem:[#allocation8 + $0x60]]
        %v1921 = vstv %s1920
        %v1922 = vmul.f32 %v1921, %v289
        %v1923 = vmul.f32 %v1921, %v290
        %v1924 = vmul.f32 %v1921, %v291
        %v1928 = vrot.slane %v1922, 2
        %v1929 = vrot.slane %v1923, 2
        %v1930 = vsel %vm399, %v1928, %v1929
        %v1931 = vrot.slane %v1924, 2
        %v1932 = vsel %vm399, %v1929, %v1931
        %v1935 = vadd.f32 %v1918, %v1930
        %v1936 = vadd.f32 %v1919, %v1932
        %s1937 = sld [smem:[#allocation8 + $0x61]]
        %v1938 = vstv %s1937
        %v1939 = vmul.f32 %v1938, %v289
        %v1940 = vmul.f32 %v1938, %v290
        %v1941 = vmul.f32 %v1938, %v291
        %v1945 = vrot.slane %v1939, 2
        %v1946 = vrot.slane %v1940, 2
        %v1947 = vsel %vm399, %v1945, %v1946
        %v1948 = vrot.slane %v1941, 2
        %v1949 = vsel %vm399, %v1946, %v1948
        %1950 = vrot.lane.b32.xlu0 %v1947, 127
        %v1951 = vpop.permute.xlu0 %1950
        %1952 = vrot.lane.b32.xlu0 %v1949, 127
        %v1953 = vpop.permute.xlu0 %1952
        %v1956 = vadd.f32 %v1935, %v1951
        %v1957 = vadd.f32 %v1936, %v1953
        %s1958 = sld [smem:[#allocation8 + $0x62]]
        %v1959 = vstv %s1958
        %v1960 = vmul.f32 %v1959, %v289
        %v1961 = vmul.f32 %v1959, %v290
        %v1962 = vmul.f32 %v1959, %v291
        %v1966 = vrot.slane %v1960, 2
        %v1967 = vrot.slane %v1961, 2
        %v1968 = vsel %vm399, %v1966, %v1967
        %v1969 = vrot.slane %v1962, 2
        %v1970 = vsel %vm399, %v1967, %v1969
        %1971 = vrot.lane.b32.xlu0 %v1968, 126
        %v1972 = vpop.permute.xlu0 %1971
        %1973 = vrot.lane.b32.xlu0 %v1970, 126
        %v1974 = vpop.permute.xlu0 %1973
        %v1977 = vadd.f32 %v1956, %v1972
        %v1978 = vadd.f32 %v1957, %v1974
        %s1979 = sld [smem:[#allocation8 + $0x63]]
        %v1980 = vstv %s1979
        %v1981 = vmul.f32 %v1980, %v292
        %v1982 = vmul.f32 %v1980, %v293
        %v1983 = vadd.f32 %v1977, %v1981
        %v1984 = vadd.f32 %v1978, %v1982
        %s1985 = sld [smem:[#allocation8 + $0x64]]
        %v1986 = vstv %s1985
        %v1987 = vmul.f32 %v1986, %v292
        %v1988 = vmul.f32 %v1986, %v293
        %1991 = vrot.lane.b32.xlu0 %v1987, 127
        %v1992 = vpop.permute.xlu0 %1991
        %1993 = vrot.lane.b32.xlu0 %v1988, 127
        %v1994 = vpop.permute.xlu0 %1993
        %v1997 = vadd.f32 %v1983, %v1992
        %v1998 = vadd.f32 %v1984, %v1994
        %s1999 = sld [smem:[#allocation8 + $0x65]]
        %v2000 = vstv %s1999
        %v2001 = vmul.f32 %v2000, %v292
        %v2002 = vmul.f32 %v2000, %v293
        %2005 = vrot.lane.b32.xlu0 %v2001, 126
        %v2006 = vpop.permute.xlu0 %2005
        %2007 = vrot.lane.b32.xlu0 %v2002, 126
        %v2008 = vpop.permute.xlu0 %2007
        %v2011 = vadd.f32 %v1997, %v2006
        %v2012 = vadd.f32 %v1998, %v2008
        %s2013 = sld [smem:[#allocation8 + $0x66]]
        %v2014 = vstv %s2013
        %v2015 = vmul.f32 %v2014, %v292
        %v2016 = vmul.f32 %v2014, %v293
        %v2017 = vmul.f32 %v2014, %v294
        %v2021 = vrot.slane %v2015, 1
        %v2022 = vrot.slane %v2016, 1
        %v2023 = vsel %vm339, %v2021, %v2022
        %v2024 = vrot.slane %v2017, 1
        %v2025 = vsel %vm339, %v2022, %v2024
        %v2028 = vadd.f32 %v2011, %v2023
        %v2029 = vadd.f32 %v2012, %v2025
        %s2030 = sld [smem:[#allocation8 + $0x67]]
        %v2031 = vstv %s2030
        %v2032 = vmul.f32 %v2031, %v292
        %v2033 = vmul.f32 %v2031, %v293
        %v2034 = vmul.f32 %v2031, %v294
        %v2038 = vrot.slane %v2032, 1
        %v2039 = vrot.slane %v2033, 1
        %v2040 = vsel %vm339, %v2038, %v2039
        %v2041 = vrot.slane %v2034, 1
        %v2042 = vsel %vm339, %v2039, %v2041
        %2043 = vrot.lane.b32.xlu0 %v2040, 127
        %v2044 = vpop.permute.xlu0 %2043
        %2045 = vrot.lane.b32.xlu0 %v2042, 127
        %v2046 = vpop.permute.xlu0 %2045
        %v2049 = vadd.f32 %v2028, %v2044
        %v2050 = vadd.f32 %v2029, %v2046
        %s2051 = sld [smem:[#allocation8 + $0x68]]
        %v2052 = vstv %s2051
        %v2053 = vmul.f32 %v2052, %v292
        %v2054 = vmul.f32 %v2052, %v293
        %v2055 = vmul.f32 %v2052, %v294
        %v2059 = vrot.slane %v2053, 1
        %v2060 = vrot.slane %v2054, 1
        %v2061 = vsel %vm339, %v2059, %v2060
        %v2062 = vrot.slane %v2055, 1
        %v2063 = vsel %vm339, %v2060, %v2062
        %2064 = vrot.lane.b32.xlu0 %v2061, 126
        %v2065 = vpop.permute.xlu0 %2064
        %2066 = vrot.lane.b32.xlu0 %v2063, 126
        %v2067 = vpop.permute.xlu0 %2066
        %v2070 = vadd.f32 %v2049, %v2065
        %v2071 = vadd.f32 %v2050, %v2067
        %s2072 = sld [smem:[#allocation8 + $0x69]]
        %v2073 = vstv %s2072
        %v2074 = vmul.f32 %v2073, %v292
        %v2075 = vmul.f32 %v2073, %v293
        %v2076 = vmul.f32 %v2073, %v294
        %v2080 = vrot.slane %v2074, 2
        %v2081 = vrot.slane %v2075, 2
        %v2082 = vsel %vm399, %v2080, %v2081
        %v2083 = vrot.slane %v2076, 2
        %v2084 = vsel %vm399, %v2081, %v2083
        %v2087 = vadd.f32 %v2070, %v2082
        %v2088 = vadd.f32 %v2071, %v2084
        %s2089 = sld [smem:[#allocation8 + $0x6a]]
        %v2090 = vstv %s2089
        %v2091 = vmul.f32 %v2090, %v292
        %v2092 = vmul.f32 %v2090, %v293
        %v2093 = vmul.f32 %v2090, %v294
        %v2097 = vrot.slane %v2091, 2
        %v2098 = vrot.slane %v2092, 2
        %v2099 = vsel %vm399, %v2097, %v2098
        %v2100 = vrot.slane %v2093, 2
        %v2101 = vsel %vm399, %v2098, %v2100
        %2102 = vrot.lane.b32.xlu0 %v2099, 127
        %v2103 = vpop.permute.xlu0 %2102
        %2104 = vrot.lane.b32.xlu0 %v2101, 127
        %v2105 = vpop.permute.xlu0 %2104
        %v2108 = vadd.f32 %v2087, %v2103
        %v2109 = vadd.f32 %v2088, %v2105
        %s2110 = sld [smem:[#allocation8 + $0x6b]]
        %v2111 = vstv %s2110
        %v2112 = vmul.f32 %v2111, %v292
        %v2113 = vmul.f32 %v2111, %v293
        %v2114 = vmul.f32 %v2111, %v294
        %v2118 = vrot.slane %v2112, 2
        %v2119 = vrot.slane %v2113, 2
        %v2120 = vsel %vm399, %v2118, %v2119
        %v2121 = vrot.slane %v2114, 2
        %v2122 = vsel %vm399, %v2119, %v2121
        %2123 = vrot.lane.b32.xlu0 %v2120, 126
        %v2124 = vpop.permute.xlu0 %2123
        %2125 = vrot.lane.b32.xlu0 %v2122, 126
        %v2126 = vpop.permute.xlu0 %2125
        %v2129 = vadd.f32 %v2108, %v2124
        %v2130 = vadd.f32 %v2109, %v2126
        %v2131 = vmax.f32 %v2129, 0.0
        %v2132 = vmax.f32 %v2130, 0.0
        %s2133 = sld [smem:[#allocation9 + $0x3]]
        %v2134 = vstv %s2133
        %s2135 = sld [smem:[#allocation8 + $0x6c]]
        %v2136 = vstv %s2135
        %v2137 = vmul.f32 %v2136, %v283
        %v2138 = vmul.f32 %v2136, %v284
        %v2139 = vadd.f32 %v2134, %v2137
        %v2140 = vadd.f32 %v2134, %v2138
        %s2141 = sld [smem:[#allocation8 + $0x6d]]
        %v2142 = vstv %s2141
        %v2143 = vmul.f32 %v2142, %v283
        %v2144 = vmul.f32 %v2142, %v284
        %2147 = vrot.lane.b32.xlu0 %v2143, 127
        %v2148 = vpop.permute.xlu0 %2147
        %2149 = vrot.lane.b32.xlu0 %v2144, 127
        %v2150 = vpop.permute.xlu0 %2149
        %v2153 = vadd.f32 %v2139, %v2148
        %v2154 = vadd.f32 %v2140, %v2150
        %s2155 = sld [smem:[#allocation8 + $0x6e]]
        %v2156 = vstv %s2155
        %v2157 = vmul.f32 %v2156, %v283
        %v2158 = vmul.f32 %v2156, %v284
        %2161 = vrot.lane.b32.xlu0 %v2157, 126
        %v2162 = vpop.permute.xlu0 %2161
        %2163 = vrot.lane.b32.xlu0 %v2158, 126
        %v2164 = vpop.permute.xlu0 %2163
        %v2167 = vadd.f32 %v2153, %v2162
        %v2168 = vadd.f32 %v2154, %v2164
        %s2169 = sld [smem:[#allocation8 + $0x6f]]
        %v2170 = vstv %s2169
        %v2171 = vmul.f32 %v2170, %v283
        %v2172 = vmul.f32 %v2170, %v284
        %v2173 = vmul.f32 %v2170, %v285
        %v2177 = vrot.slane %v2171, 1
        %v2178 = vrot.slane %v2172, 1
        %v2179 = vsel %vm339, %v2177, %v2178
        %v2180 = vrot.slane %v2173, 1
        %v2181 = vsel %vm339, %v2178, %v2180
        %v2184 = vadd.f32 %v2167, %v2179
        %v2185 = vadd.f32 %v2168, %v2181
        %s2186 = sld [smem:[#allocation8 + $0x70]]
        %v2187 = vstv %s2186
        %v2188 = vmul.f32 %v2187, %v283
        %v2189 = vmul.f32 %v2187, %v284
        %v2190 = vmul.f32 %v2187, %v285
        %v2194 = vrot.slane %v2188, 1
        %v2195 = vrot.slane %v2189, 1
        %v2196 = vsel %vm339, %v2194, %v2195
        %v2197 = vrot.slane %v2190, 1
        %v2198 = vsel %vm339, %v2195, %v2197
        %2199 = vrot.lane.b32.xlu0 %v2196, 127
        %v2200 = vpop.permute.xlu0 %2199
        %2201 = vrot.lane.b32.xlu0 %v2198, 127
        %v2202 = vpop.permute.xlu0 %2201
        %v2205 = vadd.f32 %v2184, %v2200
        %v2206 = vadd.f32 %v2185, %v2202
        %s2207 = sld [smem:[#allocation8 + $0x71]]
        %v2208 = vstv %s2207
        %v2209 = vmul.f32 %v2208, %v283
        %v2210 = vmul.f32 %v2208, %v284
        %v2211 = vmul.f32 %v2208, %v285
        %v2215 = vrot.slane %v2209, 1
        %v2216 = vrot.slane %v2210, 1
        %v2217 = vsel %vm339, %v2215, %v2216
        %v2218 = vrot.slane %v2211, 1
        %v2219 = vsel %vm339, %v2216, %v2218
        %2220 = vrot.lane.b32.xlu0 %v2217, 126
        %v2221 = vpop.permute.xlu0 %2220
        %2222 = vrot.lane.b32.xlu0 %v2219, 126
        %v2223 = vpop.permute.xlu0 %2222
        %v2226 = vadd.f32 %v2205, %v2221
        %v2227 = vadd.f32 %v2206, %v2223
        %s2228 = sld [smem:[#allocation8 + $0x72]]
        %v2229 = vstv %s2228
        %v2230 = vmul.f32 %v2229, %v283
        %v2231 = vmul.f32 %v2229, %v284
        %v2232 = vmul.f32 %v2229, %v285
        %v2236 = vrot.slane %v2230, 2
        %v2237 = vrot.slane %v2231, 2
        %v2238 = vsel %vm399, %v2236, %v2237
        %v2239 = vrot.slane %v2232, 2
        %v2240 = vsel %vm399, %v2237, %v2239
        %v2243 = vadd.f32 %v2226, %v2238
        %v2244 = vadd.f32 %v2227, %v2240
        %s2245 = sld [smem:[#allocation8 + $0x73]]
        %v2246 = vstv %s2245
        %v2247 = vmul.f32 %v2246, %v283
        %v2248 = vmul.f32 %v2246, %v284
        %v2249 = vmul.f32 %v2246, %v285
        %v2253 = vrot.slane %v2247, 2
        %v2254 = vrot.slane %v2248, 2
        %v2255 = vsel %vm399, %v2253, %v2254
        %v2256 = vrot.slane %v2249, 2
        %v2257 = vsel %vm399, %v2254, %v2256
        %2258 = vrot.lane.b32.xlu0 %v2255, 127
        %v2259 = vpop.permute.xlu0 %2258
        %2260 = vrot.lane.b32.xlu0 %v2257, 127
        %v2261 = vpop.permute.xlu0 %2260
        %v2264 = vadd.f32 %v2243, %v2259
        %v2265 = vadd.f32 %v2244, %v2261
        %s2266 = sld [smem:[#allocation8 + $0x74]]
        %v2267 = vstv %s2266
        %v2268 = vmul.f32 %v2267, %v283
        %v2269 = vmul.f32 %v2267, %v284
        %v2270 = vmul.f32 %v2267, %v285
        %v2274 = vrot.slane %v2268, 2
        %v2275 = vrot.slane %v2269, 2
        %v2276 = vsel %vm399, %v2274, %v2275
        %v2277 = vrot.slane %v2270, 2
        %v2278 = vsel %vm399, %v2275, %v2277
        %2279 = vrot.lane.b32.xlu0 %v2276, 126
        %v2280 = vpop.permute.xlu0 %2279
        %2281 = vrot.lane.b32.xlu0 %v2278, 126
        %v2282 = vpop.permute.xlu0 %2281
        %v2285 = vadd.f32 %v2264, %v2280
        %v2286 = vadd.f32 %v2265, %v2282
        %s2287 = sld [smem:[#allocation8 + $0x75]]
        %v2288 = vstv %s2287
        %v2289 = vmul.f32 %v2288, %v286
        %v2290 = vmul.f32 %v2288, %v287
        %v2291 = vadd.f32 %v2285, %v2289
        %v2292 = vadd.f32 %v2286, %v2290
        %s2293 = sld [smem:[#allocation8 + $0x76]]
        %v2294 = vstv %s2293
        %v2295 = vmul.f32 %v2294, %v286
        %v2296 = vmul.f32 %v2294, %v287
        %2299 = vrot.lane.b32.xlu0 %v2295, 127
        %v2300 = vpop.permute.xlu0 %2299
        %2301 = vrot.lane.b32.xlu0 %v2296, 127
        %v2302 = vpop.permute.xlu0 %2301
        %v2305 = vadd.f32 %v2291, %v2300
        %v2306 = vadd.f32 %v2292, %v2302
        %s2307 = sld [smem:[#allocation8 + $0x77]]
        %v2308 = vstv %s2307
        %v2309 = vmul.f32 %v2308, %v286
        %v2310 = vmul.f32 %v2308, %v287
        %2313 = vrot.lane.b32.xlu0 %v2309, 126
        %v2314 = vpop.permute.xlu0 %2313
        %2315 = vrot.lane.b32.xlu0 %v2310, 126
        %v2316 = vpop.permute.xlu0 %2315
        %v2319 = vadd.f32 %v2305, %v2314
        %v2320 = vadd.f32 %v2306, %v2316
        %s2321 = sld [smem:[#allocation8 + $0x78]]
        %v2322 = vstv %s2321
        %v2323 = vmul.f32 %v2322, %v286
        %v2324 = vmul.f32 %v2322, %v287
        %v2325 = vmul.f32 %v2322, %v288
        %v2329 = vrot.slane %v2323, 1
        %v2330 = vrot.slane %v2324, 1
        %v2331 = vsel %vm339, %v2329, %v2330
        %v2332 = vrot.slane %v2325, 1
        %v2333 = vsel %vm339, %v2330, %v2332
        %v2336 = vadd.f32 %v2319, %v2331
        %v2337 = vadd.f32 %v2320, %v2333
        %s2338 = sld [smem:[#allocation8 + $0x79]]
        %v2339 = vstv %s2338
        %v2340 = vmul.f32 %v2339, %v286
        %v2341 = vmul.f32 %v2339, %v287
        %v2342 = vmul.f32 %v2339, %v288
        %v2346 = vrot.slane %v2340, 1
        %v2347 = vrot.slane %v2341, 1
        %v2348 = vsel %vm339, %v2346, %v2347
        %v2349 = vrot.slane %v2342, 1
        %v2350 = vsel %vm339, %v2347, %v2349
        %2351 = vrot.lane.b32.xlu0 %v2348, 127
        %v2352 = vpop.permute.xlu0 %2351
        %2353 = vrot.lane.b32.xlu0 %v2350, 127
        %v2354 = vpop.permute.xlu0 %2353
        %v2357 = vadd.f32 %v2336, %v2352
        %v2358 = vadd.f32 %v2337, %v2354
        %s2359 = sld [smem:[#allocation8 + $0x7a]]
        %v2360 = vstv %s2359
        %v2361 = vmul.f32 %v2360, %v286
        %v2362 = vmul.f32 %v2360, %v287
        %v2363 = vmul.f32 %v2360, %v288
        %v2367 = vrot.slane %v2361, 1
        %v2368 = vrot.slane %v2362, 1
        %v2369 = vsel %vm339, %v2367, %v2368
        %v2370 = vrot.slane %v2363, 1
        %v2371 = vsel %vm339, %v2368, %v2370
        %2372 = vrot.lane.b32.xlu0 %v2369, 126
        %v2373 = vpop.permute.xlu0 %2372
        %2374 = vrot.lane.b32.xlu0 %v2371, 126
        %v2375 = vpop.permute.xlu0 %2374
        %v2378 = vadd.f32 %v2357, %v2373
        %v2379 = vadd.f32 %v2358, %v2375
        %s2380 = sld [smem:[#allocation8 + $0x7b]]
        %v2381 = vstv %s2380
        %v2382 = vmul.f32 %v2381, %v286
        %v2383 = vmul.f32 %v2381, %v287
        %v2384 = vmul.f32 %v2381, %v288
        %v2388 = vrot.slane %v2382, 2
        %v2389 = vrot.slane %v2383, 2
        %v2390 = vsel %vm399, %v2388, %v2389
        %v2391 = vrot.slane %v2384, 2
        %v2392 = vsel %vm399, %v2389, %v2391
        %v2395 = vadd.f32 %v2378, %v2390
        %v2396 = vadd.f32 %v2379, %v2392
        %s2397 = sld [smem:[#allocation8 + $0x7c]]
        %v2398 = vstv %s2397
        %v2399 = vmul.f32 %v2398, %v286
        %v2400 = vmul.f32 %v2398, %v287
        %v2401 = vmul.f32 %v2398, %v288
        %v2405 = vrot.slane %v2399, 2
        %v2406 = vrot.slane %v2400, 2
        %v2407 = vsel %vm399, %v2405, %v2406
        %v2408 = vrot.slane %v2401, 2
        %v2409 = vsel %vm399, %v2406, %v2408
        %2410 = vrot.lane.b32.xlu0 %v2407, 127
        %v2411 = vpop.permute.xlu0 %2410
        %2412 = vrot.lane.b32.xlu0 %v2409, 127
        %v2413 = vpop.permute.xlu0 %2412
        %v2416 = vadd.f32 %v2395, %v2411
        %v2417 = vadd.f32 %v2396, %v2413
        %s2418 = sld [smem:[#allocation8 + $0x7d]]
        %v2419 = vstv %s2418
        %v2420 = vmul.f32 %v2419, %v286
        %v2421 = vmul.f32 %v2419, %v287
        %v2422 = vmul.f32 %v2419, %v288
        %v2426 = vrot.slane %v2420, 2
        %v2427 = vrot.slane %v2421, 2
        %v2428 = vsel %vm399, %v2426, %v2427
        %v2429 = vrot.slane %v2422, 2
        %v2430 = vsel %vm399, %v2427, %v2429
        %2431 = vrot.lane.b32.xlu0 %v2428, 126
        %v2432 = vpop.permute.xlu0 %2431
        %2433 = vrot.lane.b32.xlu0 %v2430, 126
        %v2434 = vpop.permute.xlu0 %2433
        %v2437 = vadd.f32 %v2416, %v2432
        %v2438 = vadd.f32 %v2417, %v2434
        %s2439 = sld [smem:[#allocation8 + $0x7e]]
        %v2440 = vstv %s2439
        %v2441 = vmul.f32 %v2440, %v289
        %v2442 = vmul.f32 %v2440, %v290
        %v2443 = vadd.f32 %v2437, %v2441
        %v2444 = vadd.f32 %v2438, %v2442
        %s2445 = sld [smem:[#allocation8 + $0x7f]]
        %v2446 = vstv %s2445
        %v2447 = vmul.f32 %v2446, %v289
        %v2448 = vmul.f32 %v2446, %v290
        %2451 = vrot.lane.b32.xlu0 %v2447, 127
        %v2452 = vpop.permute.xlu0 %2451
        %2453 = vrot.lane.b32.xlu0 %v2448, 127
        %v2454 = vpop.permute.xlu0 %2453
        %v2457 = vadd.f32 %v2443, %v2452
        %v2458 = vadd.f32 %v2444, %v2454
        %s2459 = sld [smem:[#allocation8 + $0x80]]
        %v2460 = vstv %s2459
        %v2461 = vmul.f32 %v2460, %v289
        %v2462 = vmul.f32 %v2460, %v290
        %2465 = vrot.lane.b32.xlu0 %v2461, 126
        %v2466 = vpop.permute.xlu0 %2465
        %2467 = vrot.lane.b32.xlu0 %v2462, 126
        %v2468 = vpop.permute.xlu0 %2467
        %v2471 = vadd.f32 %v2457, %v2466
        %v2472 = vadd.f32 %v2458, %v2468
        %s2473 = sld [smem:[#allocation8 + $0x81]]
        %v2474 = vstv %s2473
        %v2475 = vmul.f32 %v2474, %v289
        %v2476 = vmul.f32 %v2474, %v290
        %v2477 = vmul.f32 %v2474, %v291
        %v2481 = vrot.slane %v2475, 1
        %v2482 = vrot.slane %v2476, 1
        %v2483 = vsel %vm339, %v2481, %v2482
        %v2484 = vrot.slane %v2477, 1
        %v2485 = vsel %vm339, %v2482, %v2484
        %v2488 = vadd.f32 %v2471, %v2483
        %v2489 = vadd.f32 %v2472, %v2485
        %s2490 = sld [smem:[#allocation8 + $0x82]]
        %v2491 = vstv %s2490
        %v2492 = vmul.f32 %v2491, %v289
        %v2493 = vmul.f32 %v2491, %v290
        %v2494 = vmul.f32 %v2491, %v291
        %v2498 = vrot.slane %v2492, 1
        %v2499 = vrot.slane %v2493, 1
        %v2500 = vsel %vm339, %v2498, %v2499
        %v2501 = vrot.slane %v2494, 1
        %v2502 = vsel %vm339, %v2499, %v2501
        %2503 = vrot.lane.b32.xlu0 %v2500, 127
        %v2504 = vpop.permute.xlu0 %2503
        %2505 = vrot.lane.b32.xlu0 %v2502, 127
        %v2506 = vpop.permute.xlu0 %2505
        %v2509 = vadd.f32 %v2488, %v2504
        %v2510 = vadd.f32 %v2489, %v2506
        %s2511 = sld [smem:[#allocation8 + $0x83]]
        %v2512 = vstv %s2511
        %v2513 = vmul.f32 %v2512, %v289
        %v2514 = vmul.f32 %v2512, %v290
        %v2515 = vmul.f32 %v2512, %v291
        %v2519 = vrot.slane %v2513, 1
        %v2520 = vrot.slane %v2514, 1
        %v2521 = vsel %vm339, %v2519, %v2520
        %v2522 = vrot.slane %v2515, 1
        %v2523 = vsel %vm339, %v2520, %v2522
        %2524 = vrot.lane.b32.xlu0 %v2521, 126
        %v2525 = vpop.permute.xlu0 %2524
        %2526 = vrot.lane.b32.xlu0 %v2523, 126
        %v2527 = vpop.permute.xlu0 %2526
        %v2530 = vadd.f32 %v2509, %v2525
        %v2531 = vadd.f32 %v2510, %v2527
        %s2532 = sld [smem:[#allocation8 + $0x84]]
        %v2533 = vstv %s2532
        %v2534 = vmul.f32 %v2533, %v289
        %v2535 = vmul.f32 %v2533, %v290
        %v2536 = vmul.f32 %v2533, %v291
        %v2540 = vrot.slane %v2534, 2
        %v2541 = vrot.slane %v2535, 2
        %v2542 = vsel %vm399, %v2540, %v2541
        %v2543 = vrot.slane %v2536, 2
        %v2544 = vsel %vm399, %v2541, %v2543
        %v2547 = vadd.f32 %v2530, %v2542
        %v2548 = vadd.f32 %v2531, %v2544
        %s2549 = sld [smem:[#allocation8 + $0x85]]
        %v2550 = vstv %s2549
        %v2551 = vmul.f32 %v2550, %v289
        %v2552 = vmul.f32 %v2550, %v290
        %v2553 = vmul.f32 %v2550, %v291
        %v2557 = vrot.slane %v2551, 2
        %v2558 = vrot.slane %v2552, 2
        %v2559 = vsel %vm399, %v2557, %v2558
        %v2560 = vrot.slane %v2553, 2
        %v2561 = vsel %vm399, %v2558, %v2560
        %2562 = vrot.lane.b32.xlu0 %v2559, 127
        %v2563 = vpop.permute.xlu0 %2562
        %2564 = vrot.lane.b32.xlu0 %v2561, 127
        %v2565 = vpop.permute.xlu0 %2564
        %v2568 = vadd.f32 %v2547, %v2563
        %v2569 = vadd.f32 %v2548, %v2565
        %s2570 = sld [smem:[#allocation8 + $0x86]]
        %v2571 = vstv %s2570
        %v2572 = vmul.f32 %v2571, %v289
        %v2573 = vmul.f32 %v2571, %v290
        %v2574 = vmul.f32 %v2571, %v291
        %v2578 = vrot.slane %v2572, 2
        %v2579 = vrot.slane %v2573, 2
        %v2580 = vsel %vm399, %v2578, %v2579
        %v2581 = vrot.slane %v2574, 2
        %v2582 = vsel %vm399, %v2579, %v2581
        %2583 = vrot.lane.b32.xlu0 %v2580, 126
        %v2584 = vpop.permute.xlu0 %2583
        %2585 = vrot.lane.b32.xlu0 %v2582, 126
        %v2586 = vpop.permute.xlu0 %2585
        %v2589 = vadd.f32 %v2568, %v2584
        %v2590 = vadd.f32 %v2569, %v2586
        %s2591 = sld [smem:[#allocation8 + $0x87]]
        %v2592 = vstv %s2591
        %v2593 = vmul.f32 %v2592, %v292
        %v2594 = vmul.f32 %v2592, %v293
        %v2595 = vadd.f32 %v2589, %v2593
        %v2596 = vadd.f32 %v2590, %v2594
        %s2597 = sld [smem:[#allocation8 + $0x88]]
        %v2598 = vstv %s2597
        %v2599 = vmul.f32 %v2598, %v292
        %v2600 = vmul.f32 %v2598, %v293
        %2603 = vrot.lane.b32.xlu0 %v2599, 127
        %v2604 = vpop.permute.xlu0 %2603
        %2605 = vrot.lane.b32.xlu0 %v2600, 127
        %v2606 = vpop.permute.xlu0 %2605
        %v2609 = vadd.f32 %v2595, %v2604
        %v2610 = vadd.f32 %v2596, %v2606
        %s2611 = sld [smem:[#allocation8 + $0x89]]
        %v2612 = vstv %s2611
        %v2613 = vmul.f32 %v2612, %v292
        %v2614 = vmul.f32 %v2612, %v293
        %2617 = vrot.lane.b32.xlu0 %v2613, 126
        %v2618 = vpop.permute.xlu0 %2617
        %2619 = vrot.lane.b32.xlu0 %v2614, 126
        %v2620 = vpop.permute.xlu0 %2619
        %v2623 = vadd.f32 %v2609, %v2618
        %v2624 = vadd.f32 %v2610, %v2620
        %s2625 = sld [smem:[#allocation8 + $0x8a]]
        %v2626 = vstv %s2625
        %v2627 = vmul.f32 %v2626, %v292
        %v2628 = vmul.f32 %v2626, %v293
        %v2629 = vmul.f32 %v2626, %v294
        %v2633 = vrot.slane %v2627, 1
        %v2634 = vrot.slane %v2628, 1
        %v2635 = vsel %vm339, %v2633, %v2634
        %v2636 = vrot.slane %v2629, 1
        %v2637 = vsel %vm339, %v2634, %v2636
        %v2640 = vadd.f32 %v2623, %v2635
        %v2641 = vadd.f32 %v2624, %v2637
        %s2642 = sld [smem:[#allocation8 + $0x8b]]
        %v2643 = vstv %s2642
        %v2644 = vmul.f32 %v2643, %v292
        %v2645 = vmul.f32 %v2643, %v293
        %v2646 = vmul.f32 %v2643, %v294
        %v2650 = vrot.slane %v2644, 1
        %v2651 = vrot.slane %v2645, 1
        %v2652 = vsel %vm339, %v2650, %v2651
        %v2653 = vrot.slane %v2646, 1
        %v2654 = vsel %vm339, %v2651, %v2653
        %2655 = vrot.lane.b32.xlu0 %v2652, 127
        %v2656 = vpop.permute.xlu0 %2655
        %2657 = vrot.lane.b32.xlu0 %v2654, 127
        %v2658 = vpop.permute.xlu0 %2657
        %v2661 = vadd.f32 %v2640, %v2656
        %v2662 = vadd.f32 %v2641, %v2658
        %s2663 = sld [smem:[#allocation8 + $0x8c]]
        %v2664 = vstv %s2663
        %v2665 = vmul.f32 %v2664, %v292
        %v2666 = vmul.f32 %v2664, %v293
        %v2667 = vmul.f32 %v2664, %v294
        %v2671 = vrot.slane %v2665, 1
        %v2672 = vrot.slane %v2666, 1
        %v2673 = vsel %vm339, %v2671, %v2672
        %v2674 = vrot.slane %v2667, 1
        %v2675 = vsel %vm339, %v2672, %v2674
        %2676 = vrot.lane.b32.xlu0 %v2673, 126
        %v2677 = vpop.permute.xlu0 %2676
        %2678 = vrot.lane.b32.xlu0 %v2675, 126
        %v2679 = vpop.permute.xlu0 %2678
        %v2682 = vadd.f32 %v2661, %v2677
        %v2683 = vadd.f32 %v2662, %v2679
        %s2684 = sld [smem:[#allocation8 + $0x8d]]
        %v2685 = vstv %s2684
        %v2686 = vmul.f32 %v2685, %v292
        %v2687 = vmul.f32 %v2685, %v293
        %v2688 = vmul.f32 %v2685, %v294
        %v2692 = vrot.slane %v2686, 2
        %v2693 = vrot.slane %v2687, 2
        %v2694 = vsel %vm399, %v2692, %v2693
        %v2695 = vrot.slane %v2688, 2
        %v2696 = vsel %vm399, %v2693, %v2695
        %v2699 = vadd.f32 %v2682, %v2694
        %v2700 = vadd.f32 %v2683, %v2696
        %s2701 = sld [smem:[#allocation8 + $0x8e]]
        %v2702 = vstv %s2701
        %v2703 = vmul.f32 %v2702, %v292
        %v2704 = vmul.f32 %v2702, %v293
        %v2705 = vmul.f32 %v2702, %v294
        %v2709 = vrot.slane %v2703, 2
        %v2710 = vrot.slane %v2704, 2
        %v2711 = vsel %vm399, %v2709, %v2710
        %v2712 = vrot.slane %v2705, 2
        %v2713 = vsel %vm399, %v2710, %v2712
        %2714 = vrot.lane.b32.xlu0 %v2711, 127
        %v2715 = vpop.permute.xlu0 %2714
        %2716 = vrot.lane.b32.xlu0 %v2713, 127
        %v2717 = vpop.permute.xlu0 %2716
        %v2720 = vadd.f32 %v2699, %v2715
        %v2721 = vadd.f32 %v2700, %v2717
        %s2722 = sld [smem:[#allocation8 + $0x8f]]
        %v2723 = vstv %s2722
        %v2724 = vmul.f32 %v2723, %v292
        %v2725 = vmul.f32 %v2723, %v293
        %v2726 = vmul.f32 %v2723, %v294
        %v2730 = vrot.slane %v2724, 2
        %v2731 = vrot.slane %v2725, 2
        %v2732 = vsel %vm399, %v2730, %v2731
        %v2733 = vrot.slane %v2726, 2
        %v2734 = vsel %vm399, %v2731, %v2733
        %2735 = vrot.lane.b32.xlu0 %v2732, 126
        %v2736 = vpop.permute.xlu0 %2735
        %2737 = vrot.lane.b32.xlu0 %v2734, 126
        %v2738 = vpop.permute.xlu0 %2737
        %v2741 = vadd.f32 %v2720, %v2736
        %v2742 = vadd.f32 %v2721, %v2738
        %v2743 = vmax.f32 %v2741, 0.0
        %v2744 = vmax.f32 %v2742, 0.0
        %2747 = vrot.lane.b32.xlu0 %v907, 1
        %v2748 = vpop.permute.xlu0 %2747
        %2749 = vrot.lane.b32.xlu0 %v908, 1
        %v2750 = vpop.permute.xlu0 %2749
        %2753 = vst.msk [vmem:[#allocation2 + $0x1] sm:$0xff] %vm238, %v2748
        %2754 = vst.msk [vmem:[#allocation2 + $0x9] sm:$0xff] %vm238, %v2750
        %2757 = vrot.lane.b32.xlu0 %v1519, 1
        %v2758 = vpop.permute.xlu0 %2757
        %2759 = vrot.lane.b32.xlu0 %v1520, 1
        %v2760 = vpop.permute.xlu0 %2759
        %2763 = vst.msk [vmem:[%s252 + $0x1] sm:$0xff] %vm238, %v2758
        %2764 = vst.msk [vmem:[%s252 + $0x9] sm:$0xff] %vm238, %v2760
        %2767 = vrot.lane.b32.xlu0 %v2131, 1
        %v2768 = vpop.permute.xlu0 %2767
        %2769 = vrot.lane.b32.xlu0 %v2132, 1
        %v2770 = vpop.permute.xlu0 %2769
        %2773 = vst.msk [vmem:[%s266 + $0x1] sm:$0xff] %vm238, %v2768
        %2774 = vst.msk [vmem:[%s266 + $0x9] sm:$0xff] %vm238, %v2770
        %2777 = vrot.lane.b32.xlu0 %v2743, 1
        %v2778 = vpop.permute.xlu0 %2777
        %2779 = vrot.lane.b32.xlu0 %v2744, 1
        %v2780 = vpop.permute.xlu0 %2779
        %2783 = vst.msk [vmem:[%s280 + $0x1] sm:$0xff] %vm238, %v2778
        %2784 = vst.msk [vmem:[%s280 + $0x9] sm:$0xff] %vm238, %v2780
        %v2785 = vld [vmem:[#allocation2] sm:$0xff]
        %v2786 = vld [vmem:[#allocation2 + $0x8] sm:$0xff]
        %v2787 = vld [vmem:[#allocation2 + $0x10] sm:$0x3]
        %v2788 = vld [vmem:[%s252] sm:$0xff]
        %v2789 = vld [vmem:[%s252 + $0x8] sm:$0xff]
        %v2790 = vld [vmem:[%s252 + $0x10] sm:$0x3]
        %v2791 = vld [vmem:[%s266] sm:$0xff]
        %v2792 = vld [vmem:[%s266 + $0x8] sm:$0xff]
        %v2793 = vld [vmem:[%s266 + $0x10] sm:$0x3]
        %v2794 = vld [vmem:[%s280] sm:$0xff]
        %v2795 = vld [vmem:[%s280 + $0x8] sm:$0xff]
        %v2796 = vld [vmem:[%s280 + $0x10] sm:$0x3]
        %s2797 = sld [smem:[#allocation9 + $0x4]]
        %v2798 = vstv %s2797
        %s2799 = sld [smem:[#allocation8 + $0x90]]
        %v2800 = vstv %s2799
        %v2801 = vmul.f32 %v2800, %v2785
        %v2802 = vmul.f32 %v2800, %v2786
        %v2803 = vadd.f32 %v2798, %v2801
        %v2804 = vadd.f32 %v2798, %v2802
        %s2805 = sld [smem:[#allocation8 + $0x91]]
        %v2806 = vstv %s2805
        %v2807 = vmul.f32 %v2806, %v2785
        %v2808 = vmul.f32 %v2806, %v2786
        %2811 = vrot.lane.b32.xlu0 %v2807, 127
        %v2812 = vpop.permute.xlu0 %2811
        %2813 = vrot.lane.b32.xlu0 %v2808, 127
        %v2814 = vpop.permute.xlu0 %2813
        %v2817 = vadd.f32 %v2803, %v2812
        %v2818 = vadd.f32 %v2804, %v2814
        %s2819 = sld [smem:[#allocation8 + $0x92]]
        %v2820 = vstv %s2819
        %v2821 = vmul.f32 %v2820, %v2785
        %v2822 = vmul.f32 %v2820, %v2786
        %2825 = vrot.lane.b32.xlu0 %v2821, 126
        %v2826 = vpop.permute.xlu0 %2825
        %2827 = vrot.lane.b32.xlu0 %v2822, 126
        %v2828 = vpop.permute.xlu0 %2827
        %v2831 = vadd.f32 %v2817, %v2826
        %v2832 = vadd.f32 %v2818, %v2828
        %s2833 = sld [smem:[#allocation8 + $0x93]]
        %v2834 = vstv %s2833
        %v2835 = vmul.f32 %v2834, %v2785
        %v2836 = vmul.f32 %v2834, %v2786
        %v2837 = vmul.f32 %v2834, %v2787
        %v2841 = vrot.slane %v2835, 1
        %v2842 = vrot.slane %v2836, 1
        %v2843 = vsel %vm339, %v2841, %v2842
        %v2844 = vrot.slane %v2837, 1
        %v2845 = vsel %vm339, %v2842, %v2844
        %v2848 = vadd.f32 %v2831, %v2843
        %v2849 = vadd.f32 %v2832, %v2845
        %s2850 = sld [smem:[#allocation8 + $0x94]]
        %v2851 = vstv %s2850
        %v2852 = vmul.f32 %v2851, %v2785
        %v2853 = vmul.f32 %v2851, %v2786
        %v2854 = vmul.f32 %v2851, %v2787
        %v2858 = vrot.slane %v2852, 1
        %v2859 = vrot.slane %v2853, 1
        %v2860 = vsel %vm339, %v2858, %v2859
        %v2861 = vrot.slane %v2854, 1
        %v2862 = vsel %vm339, %v2859, %v2861
        %2863 = vrot.lane.b32.xlu0 %v2860, 127
        %v2864 = vpop.permute.xlu0 %2863
        %2865 = vrot.lane.b32.xlu0 %v2862, 127
        %v2866 = vpop.permute.xlu0 %2865
        %v2869 = vadd.f32 %v2848, %v2864
        %v2870 = vadd.f32 %v2849, %v2866
        %s2871 = sld [smem:[#allocation8 + $0x95]]
        %v2872 = vstv %s2871
        %v2873 = vmul.f32 %v2872, %v2785
        %v2874 = vmul.f32 %v2872, %v2786
        %v2875 = vmul.f32 %v2872, %v2787
        %v2879 = vrot.slane %v2873, 1
        %v2880 = vrot.slane %v2874, 1
        %v2881 = vsel %vm339, %v2879, %v2880
        %v2882 = vrot.slane %v2875, 1
        %v2883 = vsel %vm339, %v2880, %v2882
        %2884 = vrot.lane.b32.xlu0 %v2881, 126
        %v2885 = vpop.permute.xlu0 %2884
        %2886 = vrot.lane.b32.xlu0 %v2883, 126
        %v2887 = vpop.permute.xlu0 %2886
        %v2890 = vadd.f32 %v2869, %v2885
        %v2891 = vadd.f32 %v2870, %v2887
        %s2892 = sld [smem:[#allocation8 + $0x96]]
        %v2893 = vstv %s2892
        %v2894 = vmul.f32 %v2893, %v2785
        %v2895 = vmul.f32 %v2893, %v2786
        %v2896 = vmul.f32 %v2893, %v2787
        %v2900 = vrot.slane %v2894, 2
        %v2901 = vrot.slane %v2895, 2
        %v2902 = vsel %vm399, %v2900, %v2901
        %v2903 = vrot.slane %v2896, 2
        %v2904 = vsel %vm399, %v2901, %v2903
        %v2907 = vadd.f32 %v2890, %v2902
        %v2908 = vadd.f32 %v2891, %v2904
        %s2909 = sld [smem:[#allocation8 + $0x97]]
        %v2910 = vstv %s2909
        %v2911 = vmul.f32 %v2910, %v2785
        %v2912 = vmul.f32 %v2910, %v2786
        %v2913 = vmul.f32 %v2910, %v2787
        %v2917 = vrot.slane %v2911, 2
        %v2918 = vrot.slane %v2912, 2
        %v2919 = vsel %vm399, %v2917, %v2918
        %v2920 = vrot.slane %v2913, 2
        %v2921 = vsel %vm399, %v2918, %v2920
        %2922 = vrot.lane.b32.xlu0 %v2919, 127
        %v2923 = vpop.permute.xlu0 %2922
        %2924 = vrot.lane.b32.xlu0 %v2921, 127
        %v2925 = vpop.permute.xlu0 %2924
        %v2928 = vadd.f32 %v2907, %v2923
        %v2929 = vadd.f32 %v2908, %v2925
        %s2930 = sld [smem:[#allocation8 + $0x98]]
        %v2931 = vstv %s2930
        %v2932 = vmul.f32 %v2931, %v2785
        %v2933 = vmul.f32 %v2931, %v2786
        %v2934 = vmul.f32 %v2931, %v2787
        %v2938 = vrot.slane %v2932, 2
        %v2939 = vrot.slane %v2933, 2
        %v2940 = vsel %vm399, %v2938, %v2939
        %v2941 = vrot.slane %v2934, 2
        %v2942 = vsel %vm399, %v2939, %v2941
        %2943 = vrot.lane.b32.xlu0 %v2940, 126
        %v2944 = vpop.permute.xlu0 %2943
        %2945 = vrot.lane.b32.xlu0 %v2942, 126
        %v2946 = vpop.permute.xlu0 %2945
        %v2949 = vadd.f32 %v2928, %v2944
        %v2950 = vadd.f32 %v2929, %v2946
        %s2951 = sld [smem:[#allocation8 + $0x99]]
        %v2952 = vstv %s2951
        %v2953 = vmul.f32 %v2952, %v2788
        %v2954 = vmul.f32 %v2952, %v2789
        %v2955 = vadd.f32 %v2949, %v2953
        %v2956 = vadd.f32 %v2950, %v2954
        %s2957 = sld [smem:[#allocation8 + $0x9a]]
        %v2958 = vstv %s2957
        %v2959 = vmul.f32 %v2958, %v2788
        %v2960 = vmul.f32 %v2958, %v2789
        %2963 = vrot.lane.b32.xlu0 %v2959, 127
        %v2964 = vpop.permute.xlu0 %2963
        %2965 = vrot.lane.b32.xlu0 %v2960, 127
        %v2966 = vpop.permute.xlu0 %2965
        %v2969 = vadd.f32 %v2955, %v2964
        %v2970 = vadd.f32 %v2956, %v2966
        %s2971 = sld [smem:[#allocation8 + $0x9b]]
        %v2972 = vstv %s2971
        %v2973 = vmul.f32 %v2972, %v2788
        %v2974 = vmul.f32 %v2972, %v2789
        %2977 = vrot.lane.b32.xlu0 %v2973, 126
        %v2978 = vpop.permute.xlu0 %2977
        %2979 = vrot.lane.b32.xlu0 %v2974, 126
        %v2980 = vpop.permute.xlu0 %2979
        %v2983 = vadd.f32 %v2969, %v2978
        %v2984 = vadd.f32 %v2970, %v2980
        %s2985 = sld [smem:[#allocation8 + $0x9c]]
        %v2986 = vstv %s2985
        %v2987 = vmul.f32 %v2986, %v2788
        %v2988 = vmul.f32 %v2986, %v2789
        %v2989 = vmul.f32 %v2986, %v2790
        %v2993 = vrot.slane %v2987, 1
        %v2994 = vrot.slane %v2988, 1
        %v2995 = vsel %vm339, %v2993, %v2994
        %v2996 = vrot.slane %v2989, 1
        %v2997 = vsel %vm339, %v2994, %v2996
        %v3000 = vadd.f32 %v2983, %v2995
        %v3001 = vadd.f32 %v2984, %v2997
        %s3002 = sld [smem:[#allocation8 + $0x9d]]
        %v3003 = vstv %s3002
        %v3004 = vmul.f32 %v3003, %v2788
        %v3005 = vmul.f32 %v3003, %v2789
        %v3006 = vmul.f32 %v3003, %v2790
        %v3010 = vrot.slane %v3004, 1
        %v3011 = vrot.slane %v3005, 1
        %v3012 = vsel %vm339, %v3010, %v3011
        %v3013 = vrot.slane %v3006, 1
        %v3014 = vsel %vm339, %v3011, %v3013
        %3015 = vrot.lane.b32.xlu0 %v3012, 127
        %v3016 = vpop.permute.xlu0 %3015
        %3017 = vrot.lane.b32.xlu0 %v3014, 127
        %v3018 = vpop.permute.xlu0 %3017
        %v3021 = vadd.f32 %v3000, %v3016
        %v3022 = vadd.f32 %v3001, %v3018
        %s3023 = sld [smem:[#allocation8 + $0x9e]]
        %v3024 = vstv %s3023
        %v3025 = vmul.f32 %v3024, %v2788
        %v3026 = vmul.f32 %v3024, %v2789
        %v3027 = vmul.f32 %v3024, %v2790
        %v3031 = vrot.slane %v3025, 1
        %v3032 = vrot.slane %v3026, 1
        %v3033 = vsel %vm339, %v3031, %v3032
        %v3034 = vrot.slane %v3027, 1
        %v3035 = vsel %vm339, %v3032, %v3034
        %3036 = vrot.lane.b32.xlu0 %v3033, 126
        %v3037 = vpop.permute.xlu0 %3036
        %3038 = vrot.lane.b32.xlu0 %v3035, 126
        %v3039 = vpop.permute.xlu0 %3038
        %v3042 = vadd.f32 %v3021, %v3037
        %v3043 = vadd.f32 %v3022, %v3039
        %s3044 = sld [smem:[#allocation8 + $0x9f]]
        %v3045 = vstv %s3044
        %v3046 = vmul.f32 %v3045, %v2788
        %v3047 = vmul.f32 %v3045, %v2789
        %v3048 = vmul.f32 %v3045, %v2790
        %v3052 = vrot.slane %v3046, 2
        %v3053 = vrot.slane %v3047, 2
        %v3054 = vsel %vm399, %v3052, %v3053
        %v3055 = vrot.slane %v3048, 2
        %v3056 = vsel %vm399, %v3053, %v3055
        %v3059 = vadd.f32 %v3042, %v3054
        %v3060 = vadd.f32 %v3043, %v3056
        %s3061 = sld [smem:[#allocation8 + $0xa0]]
        %v3062 = vstv %s3061
        %v3063 = vmul.f32 %v3062, %v2788
        %v3064 = vmul.f32 %v3062, %v2789
        %v3065 = vmul.f32 %v3062, %v2790
        %v3069 = vrot.slane %v3063, 2
        %v3070 = vrot.slane %v3064, 2
        %v3071 = vsel %vm399, %v3069, %v3070
        %v3072 = vrot.slane %v3065, 2
        %v3073 = vsel %vm399, %v3070, %v3072
        %3074 = vrot.lane.b32.xlu0 %v3071, 127
        %v3075 = vpop.permute.xlu0 %3074
        %3076 = vrot.lane.b32.xlu0 %v3073, 127
        %v3077 = vpop.permute.xlu0 %3076
        %v3080 = vadd.f32 %v3059, %v3075
        %v3081 = vadd.f32 %v3060, %v3077
        %s3082 = sld [smem:[#allocation8 + $0xa1]]
        %v3083 = vstv %s3082
        %v3084 = vmul.f32 %v3083, %v2788
        %v3085 = vmul.f32 %v3083, %v2789
        %v3086 = vmul.f32 %v3083, %v2790
        %v3090 = vrot.slane %v3084, 2
        %v3091 = vrot.slane %v3085, 2
        %v3092 = vsel %vm399, %v3090, %v3091
        %v3093 = vrot.slane %v3086, 2
        %v3094 = vsel %vm399, %v3091, %v3093
        %3095 = vrot.lane.b32.xlu0 %v3092, 126
        %v3096 = vpop.permute.xlu0 %3095
        %3097 = vrot.lane.b32.xlu0 %v3094, 126
        %v3098 = vpop.permute.xlu0 %3097
        %v3101 = vadd.f32 %v3080, %v3096
        %v3102 = vadd.f32 %v3081, %v3098
        %s3103 = sld [smem:[#allocation8 + $0xa2]]
        %v3104 = vstv %s3103
        %v3105 = vmul.f32 %v3104, %v2791
        %v3106 = vmul.f32 %v3104, %v2792
        %v3107 = vadd.f32 %v3101, %v3105
        %v3108 = vadd.f32 %v3102, %v3106
        %s3109 = sld [smem:[#allocation8 + $0xa3]]
        %v3110 = vstv %s3109
        %v3111 = vmul.f32 %v3110, %v2791
        %v3112 = vmul.f32 %v3110, %v2792
        %3115 = vrot.lane.b32.xlu0 %v3111, 127
        %v3116 = vpop.permute.xlu0 %3115
        %3117 = vrot.lane.b32.xlu0 %v3112, 127
        %v3118 = vpop.permute.xlu0 %3117
        %v3121 = vadd.f32 %v3107, %v3116
        %v3122 = vadd.f32 %v3108, %v3118
        %s3123 = sld [smem:[#allocation8 + $0xa4]]
        %v3124 = vstv %s3123
        %v3125 = vmul.f32 %v3124, %v2791
        %v3126 = vmul.f32 %v3124, %v2792
        %3129 = vrot.lane.b32.xlu0 %v3125, 126
        %v3130 = vpop.permute.xlu0 %3129
        %3131 = vrot.lane.b32.xlu0 %v3126, 126
        %v3132 = vpop.permute.xlu0 %3131
        %v3135 = vadd.f32 %v3121, %v3130
        %v3136 = vadd.f32 %v3122, %v3132
        %s3137 = sld [smem:[#allocation8 + $0xa5]]
        %v3138 = vstv %s3137
        %v3139 = vmul.f32 %v3138, %v2791
        %v3140 = vmul.f32 %v3138, %v2792
        %v3141 = vmul.f32 %v3138, %v2793
        %v3145 = vrot.slane %v3139, 1
        %v3146 = vrot.slane %v3140, 1
        %v3147 = vsel %vm339, %v3145, %v3146
        %v3148 = vrot.slane %v3141, 1
        %v3149 = vsel %vm339, %v3146, %v3148
        %v3152 = vadd.f32 %v3135, %v3147
        %v3153 = vadd.f32 %v3136, %v3149
        %s3154 = sld [smem:[#allocation8 + $0xa6]]
        %v3155 = vstv %s3154
        %v3156 = vmul.f32 %v3155, %v2791
        %v3157 = vmul.f32 %v3155, %v2792
        %v3158 = vmul.f32 %v3155, %v2793
        %v3162 = vrot.slane %v3156, 1
        %v3163 = vrot.slane %v3157, 1
        %v3164 = vsel %vm339, %v3162, %v3163
        %v3165 = vrot.slane %v3158, 1
        %v3166 = vsel %vm339, %v3163, %v3165
        %3167 = vrot.lane.b32.xlu0 %v3164, 127
        %v3168 = vpop.permute.xlu0 %3167
        %3169 = vrot.lane.b32.xlu0 %v3166, 127
        %v3170 = vpop.permute.xlu0 %3169
        %v3173 = vadd.f32 %v3152, %v3168
        %v3174 = vadd.f32 %v3153, %v3170
        %s3175 = sld [smem:[#allocation8 + $0xa7]]
        %v3176 = vstv %s3175
        %v3177 = vmul.f32 %v3176, %v2791
        %v3178 = vmul.f32 %v3176, %v2792
        %v3179 = vmul.f32 %v3176, %v2793
        %v3183 = vrot.slane %v3177, 1
        %v3184 = vrot.slane %v3178, 1
        %v3185 = vsel %vm339, %v3183, %v3184
        %v3186 = vrot.slane %v3179, 1
        %v3187 = vsel %vm339, %v3184, %v3186
        %3188 = vrot.lane.b32.xlu0 %v3185, 126
        %v3189 = vpop.permute.xlu0 %3188
        %3190 = vrot.lane.b32.xlu0 %v3187, 126
        %v3191 = vpop.permute.xlu0 %3190
        %v3194 = vadd.f32 %v3173, %v3189
        %v3195 = vadd.f32 %v3174, %v3191
        %s3196 = sld [smem:[#allocation8 + $0xa8]]
        %v3197 = vstv %s3196
        %v3198 = vmul.f32 %v3197, %v2791
        %v3199 = vmul.f32 %v3197, %v2792
        %v3200 = vmul.f32 %v3197, %v2793
        %v3204 = vrot.slane %v3198, 2
        %v3205 = vrot.slane %v3199, 2
        %v3206 = vsel %vm399, %v3204, %v3205
        %v3207 = vrot.slane %v3200, 2
        %v3208 = vsel %vm399, %v3205, %v3207
        %v3211 = vadd.f32 %v3194, %v3206
        %v3212 = vadd.f32 %v3195, %v3208
        %s3213 = sld [smem:[#allocation8 + $0xa9]]
        %v3214 = vstv %s3213
        %v3215 = vmul.f32 %v3214, %v2791
        %v3216 = vmul.f32 %v3214, %v2792
        %v3217 = vmul.f32 %v3214, %v2793
        %v3221 = vrot.slane %v3215, 2
        %v3222 = vrot.slane %v3216, 2
        %v3223 = vsel %vm399, %v3221, %v3222
        %v3224 = vrot.slane %v3217, 2
        %v3225 = vsel %vm399, %v3222, %v3224
        %3226 = vrot.lane.b32.xlu0 %v3223, 127
        %v3227 = vpop.permute.xlu0 %3226
        %3228 = vrot.lane.b32.xlu0 %v3225, 127
        %v3229 = vpop.permute.xlu0 %3228
        %v3232 = vadd.f32 %v3211, %v3227
        %v3233 = vadd.f32 %v3212, %v3229
        %s3234 = sld [smem:[#allocation8 + $0xaa]]
        %v3235 = vstv %s3234
        %v3236 = vmul.f32 %v3235, %v2791
        %v3237 = vmul.f32 %v3235, %v2792
        %v3238 = vmul.f32 %v3235, %v2793
        %v3242 = vrot.slane %v3236, 2
        %v3243 = vrot.slane %v3237, 2
        %v3244 = vsel %vm399, %v3242, %v3243
        %v3245 = vrot.slane %v3238, 2
        %v3246 = vsel %vm399, %v3243, %v3245
        %3247 = vrot.lane.b32.xlu0 %v3244, 126
        %v3248 = vpop.permute.xlu0 %3247
        %3249 = vrot.lane.b32.xlu0 %v3246, 126
        %v3250 = vpop.permute.xlu0 %3249
        %v3253 = vadd.f32 %v3232, %v3248
        %v3254 = vadd.f32 %v3233, %v3250
        %s3255 = sld [smem:[#allocation8 + $0xab]]
        %v3256 = vstv %s3255
        %v3257 = vmul.f32 %v3256, %v2794
        %v3258 = vmul.f32 %v3256, %v2795
        %v3259 = vadd.f32 %v3253, %v3257
        %v3260 = vadd.f32 %v3254, %v3258
        %s3261 = sld [smem:[#allocation8 + $0xac]]
        %v3262 = vstv %s3261
        %v3263 = vmul.f32 %v3262, %v2794
        %v3264 = vmul.f32 %v3262, %v2795
        %3267 = vrot.lane.b32.xlu0 %v3263, 127
        %v3268 = vpop.permute.xlu0 %3267
        %3269 = vrot.lane.b32.xlu0 %v3264, 127
        %v3270 = vpop.permute.xlu0 %3269
        %v3273 = vadd.f32 %v3259, %v3268
        %v3274 = vadd.f32 %v3260, %v3270
        %s3275 = sld [smem:[#allocation8 + $0xad]]
        %v3276 = vstv %s3275
        %v3277 = vmul.f32 %v3276, %v2794
        %v3278 = vmul.f32 %v3276, %v2795
        %3281 = vrot.lane.b32.xlu0 %v3277, 126
        %v3282 = vpop.permute.xlu0 %3281
        %3283 = vrot.lane.b32.xlu0 %v3278, 126
        %v3284 = vpop.permute.xlu0 %3283
        %v3287 = vadd.f32 %v3273, %v3282
        %v3288 = vadd.f32 %v3274, %v3284
        %s3289 = sld [smem:[#allocation8 + $0xae]]
        %v3290 = vstv %s3289
        %v3291 = vmul.f32 %v3290, %v2794
        %v3292 = vmul.f32 %v3290, %v2795
        %v3293 = vmul.f32 %v3290, %v2796
        %v3297 = vrot.slane %v3291, 1
        %v3298 = vrot.slane %v3292, 1
        %v3299 = vsel %vm339, %v3297, %v3298
        %v3300 = vrot.slane %v3293, 1
        %v3301 = vsel %vm339, %v3298, %v3300
        %v3304 = vadd.f32 %v3287, %v3299
        %v3305 = vadd.f32 %v3288, %v3301
        %s3306 = sld [smem:[#allocation8 + $0xaf]]
        %v3307 = vstv %s3306
        %v3308 = vmul.f32 %v3307, %v2794
        %v3309 = vmul.f32 %v3307, %v2795
        %v3310 = vmul.f32 %v3307, %v2796
        %v3314 = vrot.slane %v3308, 1
        %v3315 = vrot.slane %v3309, 1
        %v3316 = vsel %vm339, %v3314, %v3315
        %v3317 = vrot.slane %v3310, 1
        %v3318 = vsel %vm339, %v3315, %v3317
        %3319 = vrot.lane.b32.xlu0 %v3316, 127
        %v3320 = vpop.permute.xlu0 %3319
        %3321 = vrot.lane.b32.xlu0 %v3318, 127
        %v3322 = vpop.permute.xlu0 %3321
        %v3325 = vadd.f32 %v3304, %v3320
        %v3326 = vadd.f32 %v3305, %v3322
        %s3327 = sld [smem:[#allocation8 + $0xb0]]
        %v3328 = vstv %s3327
        %v3329 = vmul.f32 %v3328, %v2794
        %v3330 = vmul.f32 %v3328, %v2795
        %v3331 = vmul.f32 %v3328, %v2796
        %v3335 = vrot.slane %v3329, 1
        %v3336 = vrot.slane %v3330, 1
        %v3337 = vsel %vm339, %v3335, %v3336
        %v3338 = vrot.slane %v3331, 1
        %v3339 = vsel %vm339, %v3336, %v3338
        %3340 = vrot.lane.b32.xlu0 %v3337, 126
        %v3341 = vpop.permute.xlu0 %3340
        %3342 = vrot.lane.b32.xlu0 %v3339, 126
        %v3343 = vpop.permute.xlu0 %3342
        %v3346 = vadd.f32 %v3325, %v3341
        %v3347 = vadd.f32 %v3326, %v3343
        %s3348 = sld [smem:[#allocation8 + $0xb1]]
        %v3349 = vstv %s3348
        %v3350 = vmul.f32 %v3349, %v2794
        %v3351 = vmul.f32 %v3349, %v2795
        %v3352 = vmul.f32 %v3349, %v2796
        %v3356 = vrot.slane %v3350, 2
        %v3357 = vrot.slane %v3351, 2
        %v3358 = vsel %vm399, %v3356, %v3357
        %v3359 = vrot.slane %v3352, 2
        %v3360 = vsel %vm399, %v3357, %v3359
        %v3363 = vadd.f32 %v3346, %v3358
        %v3364 = vadd.f32 %v3347, %v3360
        %s3365 = sld [smem:[#allocation8 + $0xb2]]
        %v3366 = vstv %s3365
        %v3367 = vmul.f32 %v3366, %v2794
        %v3368 = vmul.f32 %v3366, %v2795
        %v3369 = vmul.f32 %v3366, %v2796
        %v3373 = vrot.slane %v3367, 2
        %v3374 = vrot.slane %v3368, 2
        %v3375 = vsel %vm399, %v3373, %v3374
        %v3376 = vrot.slane %v3369, 2
        %v3377 = vsel %vm399, %v3374, %v3376
        %3378 = vrot.lane.b32.xlu0 %v3375, 127
        %v3379 = vpop.permute.xlu0 %3378
        %3380 = vrot.lane.b32.xlu0 %v3377, 127
        %v3381 = vpop.permute.xlu0 %3380
        %v3384 = vadd.f32 %v3363, %v3379
        %v3385 = vadd.f32 %v3364, %v3381
        %s3386 = sld [smem:[#allocation8 + $0xb3]]
        %v3387 = vstv %s3386
        %v3388 = vmul.f32 %v3387, %v2794
        %v3389 = vmul.f32 %v3387, %v2795
        %v3390 = vmul.f32 %v3387, %v2796
        %v3394 = vrot.slane %v3388, 2
        %v3395 = vrot.slane %v3389, 2
        %v3396 = vsel %vm399, %v3394, %v3395
        %v3397 = vrot.slane %v3390, 2
        %v3398 = vsel %vm399, %v3395, %v3397
        %3399 = vrot.lane.b32.xlu0 %v3396, 126
        %v3400 = vpop.permute.xlu0 %3399
        %3401 = vrot.lane.b32.xlu0 %v3398, 126
        %v3402 = vpop.permute.xlu0 %3401
        %v3405 = vadd.f32 %v3384, %v3400
        %v3406 = vadd.f32 %v3385, %v3402
        %v3407 = vmax.f32 %v3405, 0.0
        %v3408 = vmax.f32 %v3406, 0.0
        %s3409 = sld [smem:[#allocation9 + $0x5]]
        %v3410 = vstv %s3409
        %s3411 = sld [smem:[#allocation8 + $0xb4]]
        %v3412 = vstv %s3411
        %v3413 = vmul.f32 %v3412, %v2785
        %v3414 = vmul.f32 %v3412, %v2786
        %v3415 = vadd.f32 %v3410, %v3413
        %v3416 = vadd.f32 %v3410, %v3414
        %s3417 = sld [smem:[#allocation8 + $0xb5]]
        %v3418 = vstv %s3417
        %v3419 = vmul.f32 %v3418, %v2785
        %v3420 = vmul.f32 %v3418, %v2786
        %3423 = vrot.lane.b32.xlu0 %v3419, 127
        %v3424 = vpop.permute.xlu0 %3423
        %3425 = vrot.lane.b32.xlu0 %v3420, 127
        %v3426 = vpop.permute.xlu0 %3425
        %v3429 = vadd.f32 %v3415, %v3424
        %v3430 = vadd.f32 %v3416, %v3426
        %s3431 = sld [smem:[#allocation8 + $0xb6]]
        %v3432 = vstv %s3431
        %v3433 = vmul.f32 %v3432, %v2785
        %v3434 = vmul.f32 %v3432, %v2786
        %3437 = vrot.lane.b32.xlu0 %v3433, 126
        %v3438 = vpop.permute.xlu0 %3437
        %3439 = vrot.lane.b32.xlu0 %v3434, 126
        %v3440 = vpop.permute.xlu0 %3439
        %v3443 = vadd.f32 %v3429, %v3438
        %v3444 = vadd.f32 %v3430, %v3440
        %s3445 = sld [smem:[#allocation8 + $0xb7]]
        %v3446 = vstv %s3445
        %v3447 = vmul.f32 %v3446, %v2785
        %v3448 = vmul.f32 %v3446, %v2786
        %v3449 = vmul.f32 %v3446, %v2787
        %v3453 = vrot.slane %v3447, 1
        %v3454 = vrot.slane %v3448, 1
        %v3455 = vsel %vm339, %v3453, %v3454
        %v3456 = vrot.slane %v3449, 1
        %v3457 = vsel %vm339, %v3454, %v3456
        %v3460 = vadd.f32 %v3443, %v3455
        %v3461 = vadd.f32 %v3444, %v3457
        %s3462 = sld [smem:[#allocation8 + $0xb8]]
        %v3463 = vstv %s3462
        %v3464 = vmul.f32 %v3463, %v2785
        %v3465 = vmul.f32 %v3463, %v2786
        %v3466 = vmul.f32 %v3463, %v2787
        %v3470 = vrot.slane %v3464, 1
        %v3471 = vrot.slane %v3465, 1
        %v3472 = vsel %vm339, %v3470, %v3471
        %v3473 = vrot.slane %v3466, 1
        %v3474 = vsel %vm339, %v3471, %v3473
        %3475 = vrot.lane.b32.xlu0 %v3472, 127
        %v3476 = vpop.permute.xlu0 %3475
        %3477 = vrot.lane.b32.xlu0 %v3474, 127
        %v3478 = vpop.permute.xlu0 %3477
        %v3481 = vadd.f32 %v3460, %v3476
        %v3482 = vadd.f32 %v3461, %v3478
        %s3483 = sld [smem:[#allocation8 + $0xb9]]
        %v3484 = vstv %s3483
        %v3485 = vmul.f32 %v3484, %v2785
        %v3486 = vmul.f32 %v3484, %v2786
        %v3487 = vmul.f32 %v3484, %v2787
        %v3491 = vrot.slane %v3485, 1
        %v3492 = vrot.slane %v3486, 1
        %v3493 = vsel %vm339, %v3491, %v3492
        %v3494 = vrot.slane %v3487, 1
        %v3495 = vsel %vm339, %v3492, %v3494
        %3496 = vrot.lane.b32.xlu0 %v3493, 126
        %v3497 = vpop.permute.xlu0 %3496
        %3498 = vrot.lane.b32.xlu0 %v3495, 126
        %v3499 = vpop.permute.xlu0 %3498
        %v3502 = vadd.f32 %v3481, %v3497
        %v3503 = vadd.f32 %v3482, %v3499
        %s3504 = sld [smem:[#allocation8 + $0xba]]
        %v3505 = vstv %s3504
        %v3506 = vmul.f32 %v3505, %v2785
        %v3507 = vmul.f32 %v3505, %v2786
        %v3508 = vmul.f32 %v3505, %v2787
        %v3512 = vrot.slane %v3506, 2
        %v3513 = vrot.slane %v3507, 2
        %v3514 = vsel %vm399, %v3512, %v3513
        %v3515 = vrot.slane %v3508, 2
        %v3516 = vsel %vm399, %v3513, %v3515
        %v3519 = vadd.f32 %v3502, %v3514
        %v3520 = vadd.f32 %v3503, %v3516
        %s3521 = sld [smem:[#allocation8 + $0xbb]]
        %v3522 = vstv %s3521
        %v3523 = vmul.f32 %v3522, %v2785
        %v3524 = vmul.f32 %v3522, %v2786
        %v3525 = vmul.f32 %v3522, %v2787
        %v3529 = vrot.slane %v3523, 2
        %v3530 = vrot.slane %v3524, 2
        %v3531 = vsel %vm399, %v3529, %v3530
        %v3532 = vrot.slane %v3525, 2
        %v3533 = vsel %vm399, %v3530, %v3532
        %3534 = vrot.lane.b32.xlu0 %v3531, 127
        %v3535 = vpop.permute.xlu0 %3534
        %3536 = vrot.lane.b32.xlu0 %v3533, 127
        %v3537 = vpop.permute.xlu0 %3536
        %v3540 = vadd.f32 %v3519, %v3535
        %v3541 = vadd.f32 %v3520, %v3537
        %s3542 = sld [smem:[#allocation8 + $0xbc]]
        %v3543 = vstv %s3542
        %v3544 = vmul.f32 %v3543, %v2785
        %v3545 = vmul.f32 %v3543, %v2786
        %v3546 = vmul.f32 %v3543, %v2787
        %v3550 = vrot.slane %v3544, 2
        %v3551 = vrot.slane %v3545, 2
        %v3552 = vsel %vm399, %v3550, %v3551
        %v3553 = vrot.slane %v3546, 2
        %v3554 = vsel %vm399, %v3551, %v3553
        %3555 = vrot.lane.b32.xlu0 %v3552, 126
        %v3556 = vpop.permute.xlu0 %3555
        %3557 = vrot.lane.b32.xlu0 %v3554, 126
        %v3558 = vpop.permute.xlu0 %3557
        %v3561 = vadd.f32 %v3540, %v3556
        %v3562 = vadd.f32 %v3541, %v3558
        %s3563 = sld [smem:[#allocation8 + $0xbd]]
        %v3564 = vstv %s3563
        %v3565 = vmul.f32 %v3564, %v2788
        %v3566 = vmul.f32 %v3564, %v2789
        %v3567 = vadd.f32 %v3561, %v3565
        %v3568 = vadd.f32 %v3562, %v3566
        %s3569 = sld [smem:[#allocation8 + $0xbe]]
        %v3570 = vstv %s3569
        %v3571 = vmul.f32 %v3570, %v2788
        %v3572 = vmul.f32 %v3570, %v2789
        %3575 = vrot.lane.b32.xlu0 %v3571, 127
        %v3576 = vpop.permute.xlu0 %3575
        %3577 = vrot.lane.b32.xlu0 %v3572, 127
        %v3578 = vpop.permute.xlu0 %3577
        %v3581 = vadd.f32 %v3567, %v3576
        %v3582 = vadd.f32 %v3568, %v3578
        %s3583 = sld [smem:[#allocation8 + $0xbf]]
        %v3584 = vstv %s3583
        %v3585 = vmul.f32 %v3584, %v2788
        %v3586 = vmul.f32 %v3584, %v2789
        %3589 = vrot.lane.b32.xlu0 %v3585, 126
        %v3590 = vpop.permute.xlu0 %3589
        %3591 = vrot.lane.b32.xlu0 %v3586, 126
        %v3592 = vpop.permute.xlu0 %3591
        %v3595 = vadd.f32 %v3581, %v3590
        %v3596 = vadd.f32 %v3582, %v3592
        %s3597 = sld [smem:[#allocation8 + $0xc0]]
        %v3598 = vstv %s3597
        %v3599 = vmul.f32 %v3598, %v2788
        %v3600 = vmul.f32 %v3598, %v2789
        %v3601 = vmul.f32 %v3598, %v2790
        %v3605 = vrot.slane %v3599, 1
        %v3606 = vrot.slane %v3600, 1
        %v3607 = vsel %vm339, %v3605, %v3606
        %v3608 = vrot.slane %v3601, 1
        %v3609 = vsel %vm339, %v3606, %v3608
        %v3612 = vadd.f32 %v3595, %v3607
        %v3613 = vadd.f32 %v3596, %v3609
        %s3614 = sld [smem:[#allocation8 + $0xc1]]
        %v3615 = vstv %s3614
        %v3616 = vmul.f32 %v3615, %v2788
        %v3617 = vmul.f32 %v3615, %v2789
        %v3618 = vmul.f32 %v3615, %v2790
        %v3622 = vrot.slane %v3616, 1
        %v3623 = vrot.slane %v3617, 1
        %v3624 = vsel %vm339, %v3622, %v3623
        %v3625 = vrot.slane %v3618, 1
        %v3626 = vsel %vm339, %v3623, %v3625
        %3627 = vrot.lane.b32.xlu0 %v3624, 127
        %v3628 = vpop.permute.xlu0 %3627
        %3629 = vrot.lane.b32.xlu0 %v3626, 127
        %v3630 = vpop.permute.xlu0 %3629
        %v3633 = vadd.f32 %v3612, %v3628
        %v3634 = vadd.f32 %v3613, %v3630
        %s3635 = sld [smem:[#allocation8 + $0xc2]]
        %v3636 = vstv %s3635
        %v3637 = vmul.f32 %v3636, %v2788
        %v3638 = vmul.f32 %v3636, %v2789
        %v3639 = vmul.f32 %v3636, %v2790
        %v3643 = vrot.slane %v3637, 1
        %v3644 = vrot.slane %v3638, 1
        %v3645 = vsel %vm339, %v3643, %v3644
        %v3646 = vrot.slane %v3639, 1
        %v3647 = vsel %vm339, %v3644, %v3646
        %3648 = vrot.lane.b32.xlu0 %v3645, 126
        %v3649 = vpop.permute.xlu0 %3648
        %3650 = vrot.lane.b32.xlu0 %v3647, 126
        %v3651 = vpop.permute.xlu0 %3650
        %v3654 = vadd.f32 %v3633, %v3649
        %v3655 = vadd.f32 %v3634, %v3651
        %s3656 = sld [smem:[#allocation8 + $0xc3]]
        %v3657 = vstv %s3656
        %v3658 = vmul.f32 %v3657, %v2788
        %v3659 = vmul.f32 %v3657, %v2789
        %v3660 = vmul.f32 %v3657, %v2790
        %v3664 = vrot.slane %v3658, 2
        %v3665 = vrot.slane %v3659, 2
        %v3666 = vsel %vm399, %v3664, %v3665
        %v3667 = vrot.slane %v3660, 2
        %v3668 = vsel %vm399, %v3665, %v3667
        %v3671 = vadd.f32 %v3654, %v3666
        %v3672 = vadd.f32 %v3655, %v3668
        %s3673 = sld [smem:[#allocation8 + $0xc4]]
        %v3674 = vstv %s3673
        %v3675 = vmul.f32 %v3674, %v2788
        %v3676 = vmul.f32 %v3674, %v2789
        %v3677 = vmul.f32 %v3674, %v2790
        %v3681 = vrot.slane %v3675, 2
        %v3682 = vrot.slane %v3676, 2
        %v3683 = vsel %vm399, %v3681, %v3682
        %v3684 = vrot.slane %v3677, 2
        %v3685 = vsel %vm399, %v3682, %v3684
        %3686 = vrot.lane.b32.xlu0 %v3683, 127
        %v3687 = vpop.permute.xlu0 %3686
        %3688 = vrot.lane.b32.xlu0 %v3685, 127
        %v3689 = vpop.permute.xlu0 %3688
        %v3692 = vadd.f32 %v3671, %v3687
        %v3693 = vadd.f32 %v3672, %v3689
        %s3694 = sld [smem:[#allocation8 + $0xc5]]
        %v3695 = vstv %s3694
        %v3696 = vmul.f32 %v3695, %v2788
        %v3697 = vmul.f32 %v3695, %v2789
        %v3698 = vmul.f32 %v3695, %v2790
        %v3702 = vrot.slane %v3696, 2
        %v3703 = vrot.slane %v3697, 2
        %v3704 = vsel %vm399, %v3702, %v3703
        %v3705 = vrot.slane %v3698, 2
        %v3706 = vsel %vm399, %v3703, %v3705
        %3707 = vrot.lane.b32.xlu0 %v3704, 126
        %v3708 = vpop.permute.xlu0 %3707
        %3709 = vrot.lane.b32.xlu0 %v3706, 126
        %v3710 = vpop.permute.xlu0 %3709
        %v3713 = vadd.f32 %v3692, %v3708
        %v3714 = vadd.f32 %v3693, %v3710
        %s3715 = sld [smem:[#allocation8 + $0xc6]]
        %v3716 = vstv %s3715
        %v3717 = vmul.f32 %v3716, %v2791
        %v3718 = vmul.f32 %v3716, %v2792
        %v3719 = vadd.f32 %v3713, %v3717
        %v3720 = vadd.f32 %v3714, %v3718
        %s3721 = sld [smem:[#allocation8 + $0xc7]]
        %v3722 = vstv %s3721
        %v3723 = vmul.f32 %v3722, %v2791
        %v3724 = vmul.f32 %v3722, %v2792
        %3727 = vrot.lane.b32.xlu0 %v3723, 127
        %v3728 = vpop.permute.xlu0 %3727
        %3729 = vrot.lane.b32.xlu0 %v3724, 127
        %v3730 = vpop.permute.xlu0 %3729
        %v3733 = vadd.f32 %v3719, %v3728
        %v3734 = vadd.f32 %v3720, %v3730
        %s3735 = sld [smem:[#allocation8 + $0xc8]]
        %v3736 = vstv %s3735
        %v3737 = vmul.f32 %v3736, %v2791
        %v3738 = vmul.f32 %v3736, %v2792
        %3741 = vrot.lane.b32.xlu0 %v3737, 126
        %v3742 = vpop.permute.xlu0 %3741
        %3743 = vrot.lane.b32.xlu0 %v3738, 126
        %v3744 = vpop.permute.xlu0 %3743
        %v3747 = vadd.f32 %v3733, %v3742
        %v3748 = vadd.f32 %v3734, %v3744
        %s3749 = sld [smem:[#allocation8 + $0xc9]]
        %v3750 = vstv %s3749
        %v3751 = vmul.f32 %v3750, %v2791
        %v3752 = vmul.f32 %v3750, %v2792
        %v3753 = vmul.f32 %v3750, %v2793
        %v3757 = vrot.slane %v3751, 1
        %v3758 = vrot.slane %v3752, 1
        %v3759 = vsel %vm339, %v3757, %v3758
        %v3760 = vrot.slane %v3753, 1
        %v3761 = vsel %vm339, %v3758, %v3760
        %v3764 = vadd.f32 %v3747, %v3759
        %v3765 = vadd.f32 %v3748, %v3761
        %s3766 = sld [smem:[#allocation8 + $0xca]]
        %v3767 = vstv %s3766
        %v3768 = vmul.f32 %v3767, %v2791
        %v3769 = vmul.f32 %v3767, %v2792
        %v3770 = vmul.f32 %v3767, %v2793
        %v3774 = vrot.slane %v3768, 1
        %v3775 = vrot.slane %v3769, 1
        %v3776 = vsel %vm339, %v3774, %v3775
        %v3777 = vrot.slane %v3770, 1
        %v3778 = vsel %vm339, %v3775, %v3777
        %3779 = vrot.lane.b32.xlu0 %v3776, 127
        %v3780 = vpop.permute.xlu0 %3779
        %3781 = vrot.lane.b32.xlu0 %v3778, 127
        %v3782 = vpop.permute.xlu0 %3781
        %v3785 = vadd.f32 %v3764, %v3780
        %v3786 = vadd.f32 %v3765, %v3782
        %s3787 = sld [smem:[#allocation8 + $0xcb]]
        %v3788 = vstv %s3787
        %v3789 = vmul.f32 %v3788, %v2791
        %v3790 = vmul.f32 %v3788, %v2792
        %v3791 = vmul.f32 %v3788, %v2793
        %v3795 = vrot.slane %v3789, 1
        %v3796 = vrot.slane %v3790, 1
        %v3797 = vsel %vm339, %v3795, %v3796
        %v3798 = vrot.slane %v3791, 1
        %v3799 = vsel %vm339, %v3796, %v3798
        %3800 = vrot.lane.b32.xlu0 %v3797, 126
        %v3801 = vpop.permute.xlu0 %3800
        %3802 = vrot.lane.b32.xlu0 %v3799, 126
        %v3803 = vpop.permute.xlu0 %3802
        %v3806 = vadd.f32 %v3785, %v3801
        %v3807 = vadd.f32 %v3786, %v3803
        %s3808 = sld [smem:[#allocation8 + $0xcc]]
        %v3809 = vstv %s3808
        %v3810 = vmul.f32 %v3809, %v2791
        %v3811 = vmul.f32 %v3809, %v2792
        %v3812 = vmul.f32 %v3809, %v2793
        %v3816 = vrot.slane %v3810, 2
        %v3817 = vrot.slane %v3811, 2
        %v3818 = vsel %vm399, %v3816, %v3817
        %v3819 = vrot.slane %v3812, 2
        %v3820 = vsel %vm399, %v3817, %v3819
        %v3823 = vadd.f32 %v3806, %v3818
        %v3824 = vadd.f32 %v3807, %v3820
        %s3825 = sld [smem:[#allocation8 + $0xcd]]
        %v3826 = vstv %s3825
        %v3827 = vmul.f32 %v3826, %v2791
        %v3828 = vmul.f32 %v3826, %v2792
        %v3829 = vmul.f32 %v3826, %v2793
        %v3833 = vrot.slane %v3827, 2
        %v3834 = vrot.slane %v3828, 2
        %v3835 = vsel %vm399, %v3833, %v3834
        %v3836 = vrot.slane %v3829, 2
        %v3837 = vsel %vm399, %v3834, %v3836
        %3838 = vrot.lane.b32.xlu0 %v3835, 127
        %v3839 = vpop.permute.xlu0 %3838
        %3840 = vrot.lane.b32.xlu0 %v3837, 127
        %v3841 = vpop.permute.xlu0 %3840
        %v3844 = vadd.f32 %v3823, %v3839
        %v3845 = vadd.f32 %v3824, %v3841
        %s3846 = sld [smem:[#allocation8 + $0xce]]
        %v3847 = vstv %s3846
        %v3848 = vmul.f32 %v3847, %v2791
        %v3849 = vmul.f32 %v3847, %v2792
        %v3850 = vmul.f32 %v3847, %v2793
        %v3854 = vrot.slane %v3848, 2
        %v3855 = vrot.slane %v3849, 2
        %v3856 = vsel %vm399, %v3854, %v3855
        %v3857 = vrot.slane %v3850, 2
        %v3858 = vsel %vm399, %v3855, %v3857
        %3859 = vrot.lane.b32.xlu0 %v3856, 126
        %v3860 = vpop.permute.xlu0 %3859
        %3861 = vrot.lane.b32.xlu0 %v3858, 126
        %v3862 = vpop.permute.xlu0 %3861
        %v3865 = vadd.f32 %v3844, %v3860
        %v3866 = vadd.f32 %v3845, %v3862
        %s3867 = sld [smem:[#allocation8 + $0xcf]]
        %v3868 = vstv %s3867
        %v3869 = vmul.f32 %v3868, %v2794
        %v3870 = vmul.f32 %v3868, %v2795
        %v3871 = vadd.f32 %v3865, %v3869
        %v3872 = vadd.f32 %v3866, %v3870
        %s3873 = sld [smem:[#allocation8 + $0xd0]]
        %v3874 = vstv %s3873
        %v3875 = vmul.f32 %v3874, %v2794
        %v3876 = vmul.f32 %v3874, %v2795
        %3879 = vrot.lane.b32.xlu0 %v3875, 127
        %v3880 = vpop.permute.xlu0 %3879
        %3881 = vrot.lane.b32.xlu0 %v3876, 127
        %v3882 = vpop.permute.xlu0 %3881
        %v3885 = vadd.f32 %v3871, %v3880
        %v3886 = vadd.f32 %v3872, %v3882
        %s3887 = sld [smem:[#allocation8 + $0xd1]]
        %v3888 = vstv %s3887
        %v3889 = vmul.f32 %v3888, %v2794
        %v3890 = vmul.f32 %v3888, %v2795
        %3893 = vrot.lane.b32.xlu0 %v3889, 126
        %v3894 = vpop.permute.xlu0 %3893
        %3895 = vrot.lane.b32.xlu0 %v3890, 126
        %v3896 = vpop.permute.xlu0 %3895
        %v3899 = vadd.f32 %v3885, %v3894
        %v3900 = vadd.f32 %v3886, %v3896
        %s3901 = sld [smem:[#allocation8 + $0xd2]]
        %v3902 = vstv %s3901
        %v3903 = vmul.f32 %v3902, %v2794
        %v3904 = vmul.f32 %v3902, %v2795
        %v3905 = vmul.f32 %v3902, %v2796
        %v3909 = vrot.slane %v3903, 1
        %v3910 = vrot.slane %v3904, 1
        %v3911 = vsel %vm339, %v3909, %v3910
        %v3912 = vrot.slane %v3905, 1
        %v3913 = vsel %vm339, %v3910, %v3912
        %v3916 = vadd.f32 %v3899, %v3911
        %v3917 = vadd.f32 %v3900, %v3913
        %s3918 = sld [smem:[#allocation8 + $0xd3]]
        %v3919 = vstv %s3918
        %v3920 = vmul.f32 %v3919, %v2794
        %v3921 = vmul.f32 %v3919, %v2795
        %v3922 = vmul.f32 %v3919, %v2796
        %v3926 = vrot.slane %v3920, 1
        %v3927 = vrot.slane %v3921, 1
        %v3928 = vsel %vm339, %v3926, %v3927
        %v3929 = vrot.slane %v3922, 1
        %v3930 = vsel %vm339, %v3927, %v3929
        %3931 = vrot.lane.b32.xlu0 %v3928, 127
        %v3932 = vpop.permute.xlu0 %3931
        %3933 = vrot.lane.b32.xlu0 %v3930, 127
        %v3934 = vpop.permute.xlu0 %3933
        %v3937 = vadd.f32 %v3916, %v3932
        %v3938 = vadd.f32 %v3917, %v3934
        %s3939 = sld [smem:[#allocation8 + $0xd4]]
        %v3940 = vstv %s3939
        %v3941 = vmul.f32 %v3940, %v2794
        %v3942 = vmul.f32 %v3940, %v2795
        %v3943 = vmul.f32 %v3940, %v2796
        %v3947 = vrot.slane %v3941, 1
        %v3948 = vrot.slane %v3942, 1
        %v3949 = vsel %vm339, %v3947, %v3948
        %v3950 = vrot.slane %v3943, 1
        %v3951 = vsel %vm339, %v3948, %v3950
        %3952 = vrot.lane.b32.xlu0 %v3949, 126
        %v3953 = vpop.permute.xlu0 %3952
        %3954 = vrot.lane.b32.xlu0 %v3951, 126
        %v3955 = vpop.permute.xlu0 %3954
        %v3958 = vadd.f32 %v3937, %v3953
        %v3959 = vadd.f32 %v3938, %v3955
        %s3960 = sld [smem:[#allocation8 + $0xd5]]
        %v3961 = vstv %s3960
        %v3962 = vmul.f32 %v3961, %v2794
        %v3963 = vmul.f32 %v3961, %v2795
        %v3964 = vmul.f32 %v3961, %v2796
        %v3968 = vrot.slane %v3962, 2
        %v3969 = vrot.slane %v3963, 2
        %v3970 = vsel %vm399, %v3968, %v3969
        %v3971 = vrot.slane %v3964, 2
        %v3972 = vsel %vm399, %v3969, %v3971
        %v3975 = vadd.f32 %v3958, %v3970
        %v3976 = vadd.f32 %v3959, %v3972
        %s3977 = sld [smem:[#allocation8 + $0xd6]]
        %v3978 = vstv %s3977
        %v3979 = vmul.f32 %v3978, %v2794
        %v3980 = vmul.f32 %v3978, %v2795
        %v3981 = vmul.f32 %v3978, %v2796
        %v3985 = vrot.slane %v3979, 2
        %v3986 = vrot.slane %v3980, 2
        %v3987 = vsel %vm399, %v3985, %v3986
        %v3988 = vrot.slane %v3981, 2
        %v3989 = vsel %vm399, %v3986, %v3988
        %3990 = vrot.lane.b32.xlu0 %v3987, 127
        %v3991 = vpop.permute.xlu0 %3990
        %3992 = vrot.lane.b32.xlu0 %v3989, 127
        %v3993 = vpop.permute.xlu0 %3992
        %v3996 = vadd.f32 %v3975, %v3991
        %v3997 = vadd.f32 %v3976, %v3993
        %s3998 = sld [smem:[#allocation8 + $0xd7]]
        %v3999 = vstv %s3998
        %v4000 = vmul.f32 %v3999, %v2794
        %v4001 = vmul.f32 %v3999, %v2795
        %v4002 = vmul.f32 %v3999, %v2796
        %v4006 = vrot.slane %v4000, 2
        %v4007 = vrot.slane %v4001, 2
        %v4008 = vsel %vm399, %v4006, %v4007
        %v4009 = vrot.slane %v4002, 2
        %v4010 = vsel %vm399, %v4007, %v4009
        %4011 = vrot.lane.b32.xlu0 %v4008, 126
        %v4012 = vpop.permute.xlu0 %4011
        %4013 = vrot.lane.b32.xlu0 %v4010, 126
        %v4014 = vpop.permute.xlu0 %4013
        %v4017 = vadd.f32 %v3996, %v4012
        %v4018 = vadd.f32 %v3997, %v4014
        %v4019 = vmax.f32 %v4017, 0.0
        %v4020 = vmax.f32 %v4018, 0.0
        %s4021 = sld [smem:[#allocation9 + $0x6]]
        %v4022 = vstv %s4021
        %s4023 = sld [smem:[#allocation8 + $0xd8]]
        %v4024 = vstv %s4023
        %v4025 = vmul.f32 %v4024, %v2785
        %v4026 = vmul.f32 %v4024, %v2786
        %v4027 = vadd.f32 %v4022, %v4025
        %v4028 = vadd.f32 %v4022, %v4026
        %s4029 = sld [smem:[#allocation8 + $0xd9]]
        %v4030 = vstv %s4029
        %v4031 = vmul.f32 %v4030, %v2785
        %v4032 = vmul.f32 %v4030, %v2786
        %4035 = vrot.lane.b32.xlu0 %v4031, 127
        %v4036 = vpop.permute.xlu0 %4035
        %4037 = vrot.lane.b32.xlu0 %v4032, 127
        %v4038 = vpop.permute.xlu0 %4037
        %v4041 = vadd.f32 %v4027, %v4036
        %v4042 = vadd.f32 %v4028, %v4038
        %s4043 = sld [smem:[#allocation8 + $0xda]]
        %v4044 = vstv %s4043
        %v4045 = vmul.f32 %v4044, %v2785
        %v4046 = vmul.f32 %v4044, %v2786
        %4049 = vrot.lane.b32.xlu0 %v4045, 126
        %v4050 = vpop.permute.xlu0 %4049
        %4051 = vrot.lane.b32.xlu0 %v4046, 126
        %v4052 = vpop.permute.xlu0 %4051
        %v4055 = vadd.f32 %v4041, %v4050
        %v4056 = vadd.f32 %v4042, %v4052
        %s4057 = sld [smem:[#allocation8 + $0xdb]]
        %v4058 = vstv %s4057
        %v4059 = vmul.f32 %v4058, %v2785
        %v4060 = vmul.f32 %v4058, %v2786
        %v4061 = vmul.f32 %v4058, %v2787
        %v4065 = vrot.slane %v4059, 1
        %v4066 = vrot.slane %v4060, 1
        %v4067 = vsel %vm339, %v4065, %v4066
        %v4068 = vrot.slane %v4061, 1
        %v4069 = vsel %vm339, %v4066, %v4068
        %v4072 = vadd.f32 %v4055, %v4067
        %v4073 = vadd.f32 %v4056, %v4069
        %s4074 = sld [smem:[#allocation8 + $0xdc]]
        %v4075 = vstv %s4074
        %v4076 = vmul.f32 %v4075, %v2785
        %v4077 = vmul.f32 %v4075, %v2786
        %v4078 = vmul.f32 %v4075, %v2787
        %v4082 = vrot.slane %v4076, 1
        %v4083 = vrot.slane %v4077, 1
        %v4084 = vsel %vm339, %v4082, %v4083
        %v4085 = vrot.slane %v4078, 1
        %v4086 = vsel %vm339, %v4083, %v4085
        %4087 = vrot.lane.b32.xlu0 %v4084, 127
        %v4088 = vpop.permute.xlu0 %4087
        %4089 = vrot.lane.b32.xlu0 %v4086, 127
        %v4090 = vpop.permute.xlu0 %4089
        %v4093 = vadd.f32 %v4072, %v4088
        %v4094 = vadd.f32 %v4073, %v4090
        %s4095 = sld [smem:[#allocation8 + $0xdd]]
        %v4096 = vstv %s4095
        %v4097 = vmul.f32 %v4096, %v2785
        %v4098 = vmul.f32 %v4096, %v2786
        %v4099 = vmul.f32 %v4096, %v2787
        %v4103 = vrot.slane %v4097, 1
        %v4104 = vrot.slane %v4098, 1
        %v4105 = vsel %vm339, %v4103, %v4104
        %v4106 = vrot.slane %v4099, 1
        %v4107 = vsel %vm339, %v4104, %v4106
        %4108 = vrot.lane.b32.xlu0 %v4105, 126
        %v4109 = vpop.permute.xlu0 %4108
        %4110 = vrot.lane.b32.xlu0 %v4107, 126
        %v4111 = vpop.permute.xlu0 %4110
        %v4114 = vadd.f32 %v4093, %v4109
        %v4115 = vadd.f32 %v4094, %v4111
        %s4116 = sld [smem:[#allocation8 + $0xde]]
        %v4117 = vstv %s4116
        %v4118 = vmul.f32 %v4117, %v2785
        %v4119 = vmul.f32 %v4117, %v2786
        %v4120 = vmul.f32 %v4117, %v2787
        %v4124 = vrot.slane %v4118, 2
        %v4125 = vrot.slane %v4119, 2
        %v4126 = vsel %vm399, %v4124, %v4125
        %v4127 = vrot.slane %v4120, 2
        %v4128 = vsel %vm399, %v4125, %v4127
        %v4131 = vadd.f32 %v4114, %v4126
        %v4132 = vadd.f32 %v4115, %v4128
        %s4133 = sld [smem:[#allocation8 + $0xdf]]
        %v4134 = vstv %s4133
        %v4135 = vmul.f32 %v4134, %v2785
        %v4136 = vmul.f32 %v4134, %v2786
        %v4137 = vmul.f32 %v4134, %v2787
        %v4141 = vrot.slane %v4135, 2
        %v4142 = vrot.slane %v4136, 2
        %v4143 = vsel %vm399, %v4141, %v4142
        %v4144 = vrot.slane %v4137, 2
        %v4145 = vsel %vm399, %v4142, %v4144
        %4146 = vrot.lane.b32.xlu0 %v4143, 127
        %v4147 = vpop.permute.xlu0 %4146
        %4148 = vrot.lane.b32.xlu0 %v4145, 127
        %v4149 = vpop.permute.xlu0 %4148
        %v4152 = vadd.f32 %v4131, %v4147
        %v4153 = vadd.f32 %v4132, %v4149
        %s4154 = sld [smem:[#allocation8 + $0xe0]]
        %v4155 = vstv %s4154
        %v4156 = vmul.f32 %v4155, %v2785
        %v4157 = vmul.f32 %v4155, %v2786
        %v4158 = vmul.f32 %v4155, %v2787
        %v4162 = vrot.slane %v4156, 2
        %v4163 = vrot.slane %v4157, 2
        %v4164 = vsel %vm399, %v4162, %v4163
        %v4165 = vrot.slane %v4158, 2
        %v4166 = vsel %vm399, %v4163, %v4165
        %4167 = vrot.lane.b32.xlu0 %v4164, 126
        %v4168 = vpop.permute.xlu0 %4167
        %4169 = vrot.lane.b32.xlu0 %v4166, 126
        %v4170 = vpop.permute.xlu0 %4169
        %v4173 = vadd.f32 %v4152, %v4168
        %v4174 = vadd.f32 %v4153, %v4170
        %s4175 = sld [smem:[#allocation8 + $0xe1]]
        %v4176 = vstv %s4175
        %v4177 = vmul.f32 %v4176, %v2788
        %v4178 = vmul.f32 %v4176, %v2789
        %v4179 = vadd.f32 %v4173, %v4177
        %v4180 = vadd.f32 %v4174, %v4178
        %s4181 = sld [smem:[#allocation8 + $0xe2]]
        %v4182 = vstv %s4181
        %v4183 = vmul.f32 %v4182, %v2788
        %v4184 = vmul.f32 %v4182, %v2789
        %4187 = vrot.lane.b32.xlu0 %v4183, 127
        %v4188 = vpop.permute.xlu0 %4187
        %4189 = vrot.lane.b32.xlu0 %v4184, 127
        %v4190 = vpop.permute.xlu0 %4189
        %v4193 = vadd.f32 %v4179, %v4188
        %v4194 = vadd.f32 %v4180, %v4190
        %s4195 = sld [smem:[#allocation8 + $0xe3]]
        %v4196 = vstv %s4195
        %v4197 = vmul.f32 %v4196, %v2788
        %v4198 = vmul.f32 %v4196, %v2789
        %4201 = vrot.lane.b32.xlu0 %v4197, 126
        %v4202 = vpop.permute.xlu0 %4201
        %4203 = vrot.lane.b32.xlu0 %v4198, 126
        %v4204 = vpop.permute.xlu0 %4203
        %v4207 = vadd.f32 %v4193, %v4202
        %v4208 = vadd.f32 %v4194, %v4204
        %s4209 = sld [smem:[#allocation8 + $0xe4]]
        %v4210 = vstv %s4209
        %v4211 = vmul.f32 %v4210, %v2788
        %v4212 = vmul.f32 %v4210, %v2789
        %v4213 = vmul.f32 %v4210, %v2790
        %v4217 = vrot.slane %v4211, 1
        %v4218 = vrot.slane %v4212, 1
        %v4219 = vsel %vm339, %v4217, %v4218
        %v4220 = vrot.slane %v4213, 1
        %v4221 = vsel %vm339, %v4218, %v4220
        %v4224 = vadd.f32 %v4207, %v4219
        %v4225 = vadd.f32 %v4208, %v4221
        %s4226 = sld [smem:[#allocation8 + $0xe5]]
        %v4227 = vstv %s4226
        %v4228 = vmul.f32 %v4227, %v2788
        %v4229 = vmul.f32 %v4227, %v2789
        %v4230 = vmul.f32 %v4227, %v2790
        %v4234 = vrot.slane %v4228, 1
        %v4235 = vrot.slane %v4229, 1
        %v4236 = vsel %vm339, %v4234, %v4235
        %v4237 = vrot.slane %v4230, 1
        %v4238 = vsel %vm339, %v4235, %v4237
        %4239 = vrot.lane.b32.xlu0 %v4236, 127
        %v4240 = vpop.permute.xlu0 %4239
        %4241 = vrot.lane.b32.xlu0 %v4238, 127
        %v4242 = vpop.permute.xlu0 %4241
        %v4245 = vadd.f32 %v4224, %v4240
        %v4246 = vadd.f32 %v4225, %v4242
        %s4247 = sld [smem:[#allocation8 + $0xe6]]
        %v4248 = vstv %s4247
        %v4249 = vmul.f32 %v4248, %v2788
        %v4250 = vmul.f32 %v4248, %v2789
        %v4251 = vmul.f32 %v4248, %v2790
        %v4255 = vrot.slane %v4249, 1
        %v4256 = vrot.slane %v4250, 1
        %v4257 = vsel %vm339, %v4255, %v4256
        %v4258 = vrot.slane %v4251, 1
        %v4259 = vsel %vm339, %v4256, %v4258
        %4260 = vrot.lane.b32.xlu0 %v4257, 126
        %v4261 = vpop.permute.xlu0 %4260
        %4262 = vrot.lane.b32.xlu0 %v4259, 126
        %v4263 = vpop.permute.xlu0 %4262
        %v4266 = vadd.f32 %v4245, %v4261
        %v4267 = vadd.f32 %v4246, %v4263
        %s4268 = sld [smem:[#allocation8 + $0xe7]]
        %v4269 = vstv %s4268
        %v4270 = vmul.f32 %v4269, %v2788
        %v4271 = vmul.f32 %v4269, %v2789
        %v4272 = vmul.f32 %v4269, %v2790
        %v4276 = vrot.slane %v4270, 2
        %v4277 = vrot.slane %v4271, 2
        %v4278 = vsel %vm399, %v4276, %v4277
        %v4279 = vrot.slane %v4272, 2
        %v4280 = vsel %vm399, %v4277, %v4279
        %v4283 = vadd.f32 %v4266, %v4278
        %v4284 = vadd.f32 %v4267, %v4280
        %s4285 = sld [smem:[#allocation8 + $0xe8]]
        %v4286 = vstv %s4285
        %v4287 = vmul.f32 %v4286, %v2788
        %v4288 = vmul.f32 %v4286, %v2789
        %v4289 = vmul.f32 %v4286, %v2790
        %v4293 = vrot.slane %v4287, 2
        %v4294 = vrot.slane %v4288, 2
        %v4295 = vsel %vm399, %v4293, %v4294
        %v4296 = vrot.slane %v4289, 2
        %v4297 = vsel %vm399, %v4294, %v4296
        %4298 = vrot.lane.b32.xlu0 %v4295, 127
        %v4299 = vpop.permute.xlu0 %4298
        %4300 = vrot.lane.b32.xlu0 %v4297, 127
        %v4301 = vpop.permute.xlu0 %4300
        %v4304 = vadd.f32 %v4283, %v4299
        %v4305 = vadd.f32 %v4284, %v4301
        %s4306 = sld [smem:[#allocation8 + $0xe9]]
        %v4307 = vstv %s4306
        %v4308 = vmul.f32 %v4307, %v2788
        %v4309 = vmul.f32 %v4307, %v2789
        %v4310 = vmul.f32 %v4307, %v2790
        %v4314 = vrot.slane %v4308, 2
        %v4315 = vrot.slane %v4309, 2
        %v4316 = vsel %vm399, %v4314, %v4315
        %v4317 = vrot.slane %v4310, 2
        %v4318 = vsel %vm399, %v4315, %v4317
        %4319 = vrot.lane.b32.xlu0 %v4316, 126
        %v4320 = vpop.permute.xlu0 %4319
        %4321 = vrot.lane.b32.xlu0 %v4318, 126
        %v4322 = vpop.permute.xlu0 %4321
        %v4325 = vadd.f32 %v4304, %v4320
        %v4326 = vadd.f32 %v4305, %v4322
        %s4327 = sld [smem:[#allocation8 + $0xea]]
        %v4328 = vstv %s4327
        %v4329 = vmul.f32 %v4328, %v2791
        %v4330 = vmul.f32 %v4328, %v2792
        %v4331 = vadd.f32 %v4325, %v4329
        %v4332 = vadd.f32 %v4326, %v4330
        %s4333 = sld [smem:[#allocation8 + $0xeb]]
        %v4334 = vstv %s4333
        %v4335 = vmul.f32 %v4334, %v2791
        %v4336 = vmul.f32 %v4334, %v2792
        %4339 = vrot.lane.b32.xlu0 %v4335, 127
        %v4340 = vpop.permute.xlu0 %4339
        %4341 = vrot.lane.b32.xlu0 %v4336, 127
        %v4342 = vpop.permute.xlu0 %4341
        %v4345 = vadd.f32 %v4331, %v4340
        %v4346 = vadd.f32 %v4332, %v4342
        %s4347 = sld [smem:[#allocation8 + $0xec]]
        %v4348 = vstv %s4347
        %v4349 = vmul.f32 %v4348, %v2791
        %v4350 = vmul.f32 %v4348, %v2792
        %4353 = vrot.lane.b32.xlu0 %v4349, 126
        %v4354 = vpop.permute.xlu0 %4353
        %4355 = vrot.lane.b32.xlu0 %v4350, 126
        %v4356 = vpop.permute.xlu0 %4355
        %v4359 = vadd.f32 %v4345, %v4354
        %v4360 = vadd.f32 %v4346, %v4356
        %s4361 = sld [smem:[#allocation8 + $0xed]]
        %v4362 = vstv %s4361
        %v4363 = vmul.f32 %v4362, %v2791
        %v4364 = vmul.f32 %v4362, %v2792
        %v4365 = vmul.f32 %v4362, %v2793
        %v4369 = vrot.slane %v4363, 1
        %v4370 = vrot.slane %v4364, 1
        %v4371 = vsel %vm339, %v4369, %v4370
        %v4372 = vrot.slane %v4365, 1
        %v4373 = vsel %vm339, %v4370, %v4372
        %v4376 = vadd.f32 %v4359, %v4371
        %v4377 = vadd.f32 %v4360, %v4373
        %s4378 = sld [smem:[#allocation8 + $0xee]]
        %v4379 = vstv %s4378
        %v4380 = vmul.f32 %v4379, %v2791
        %v4381 = vmul.f32 %v4379, %v2792
        %v4382 = vmul.f32 %v4379, %v2793
        %v4386 = vrot.slane %v4380, 1
        %v4387 = vrot.slane %v4381, 1
        %v4388 = vsel %vm339, %v4386, %v4387
        %v4389 = vrot.slane %v4382, 1
        %v4390 = vsel %vm339, %v4387, %v4389
        %4391 = vrot.lane.b32.xlu0 %v4388, 127
        %v4392 = vpop.permute.xlu0 %4391
        %4393 = vrot.lane.b32.xlu0 %v4390, 127
        %v4394 = vpop.permute.xlu0 %4393
        %v4397 = vadd.f32 %v4376, %v4392
        %v4398 = vadd.f32 %v4377, %v4394
        %s4399 = sld [smem:[#allocation8 + $0xef]]
        %v4400 = vstv %s4399
        %v4401 = vmul.f32 %v4400, %v2791
        %v4402 = vmul.f32 %v4400, %v2792
        %v4403 = vmul.f32 %v4400, %v2793
        %v4407 = vrot.slane %v4401, 1
        %v4408 = vrot.slane %v4402, 1
        %v4409 = vsel %vm339, %v4407, %v4408
        %v4410 = vrot.slane %v4403, 1
        %v4411 = vsel %vm339, %v4408, %v4410
        %4412 = vrot.lane.b32.xlu0 %v4409, 126
        %v4413 = vpop.permute.xlu0 %4412
        %4414 = vrot.lane.b32.xlu0 %v4411, 126
        %v4415 = vpop.permute.xlu0 %4414
        %v4418 = vadd.f32 %v4397, %v4413
        %v4419 = vadd.f32 %v4398, %v4415
        %s4420 = sld [smem:[#allocation8 + $0xf0]]
        %v4421 = vstv %s4420
        %v4422 = vmul.f32 %v4421, %v2791
        %v4423 = vmul.f32 %v4421, %v2792
        %v4424 = vmul.f32 %v4421, %v2793
        %v4428 = vrot.slane %v4422, 2
        %v4429 = vrot.slane %v4423, 2
        %v4430 = vsel %vm399, %v4428, %v4429
        %v4431 = vrot.slane %v4424, 2
        %v4432 = vsel %vm399, %v4429, %v4431
        %v4435 = vadd.f32 %v4418, %v4430
        %v4436 = vadd.f32 %v4419, %v4432
        %s4437 = sld [smem:[#allocation8 + $0xf1]]
        %v4438 = vstv %s4437
        %v4439 = vmul.f32 %v4438, %v2791
        %v4440 = vmul.f32 %v4438, %v2792
        %v4441 = vmul.f32 %v4438, %v2793
        %v4445 = vrot.slane %v4439, 2
        %v4446 = vrot.slane %v4440, 2
        %v4447 = vsel %vm399, %v4445, %v4446
        %v4448 = vrot.slane %v4441, 2
        %v4449 = vsel %vm399, %v4446, %v4448
        %4450 = vrot.lane.b32.xlu0 %v4447, 127
        %v4451 = vpop.permute.xlu0 %4450
        %4452 = vrot.lane.b32.xlu0 %v4449, 127
        %v4453 = vpop.permute.xlu0 %4452
        %v4456 = vadd.f32 %v4435, %v4451
        %v4457 = vadd.f32 %v4436, %v4453
        %s4458 = sld [smem:[#allocation8 + $0xf2]]
        %v4459 = vstv %s4458
        %v4460 = vmul.f32 %v4459, %v2791
        %v4461 = vmul.f32 %v4459, %v2792
        %v4462 = vmul.f32 %v4459, %v2793
        %v4466 = vrot.slane %v4460, 2
        %v4467 = vrot.slane %v4461, 2
        %v4468 = vsel %vm399, %v4466, %v4467
        %v4469 = vrot.slane %v4462, 2
        %v4470 = vsel %vm399, %v4467, %v4469
        %4471 = vrot.lane.b32.xlu0 %v4468, 126
        %v4472 = vpop.permute.xlu0 %4471
        %4473 = vrot.lane.b32.xlu0 %v4470, 126
        %v4474 = vpop.permute.xlu0 %4473
        %v4477 = vadd.f32 %v4456, %v4472
        %v4478 = vadd.f32 %v4457, %v4474
        %s4479 = sld [smem:[#allocation8 + $0xf3]]
        %v4480 = vstv %s4479
        %v4481 = vmul.f32 %v4480, %v2794
        %v4482 = vmul.f32 %v4480, %v2795
        %v4483 = vadd.f32 %v4477, %v4481
        %v4484 = vadd.f32 %v4478, %v4482
        %s4485 = sld [smem:[#allocation8 + $0xf4]]
        %v4486 = vstv %s4485
        %v4487 = vmul.f32 %v4486, %v2794
        %v4488 = vmul.f32 %v4486, %v2795
        %4491 = vrot.lane.b32.xlu0 %v4487, 127
        %v4492 = vpop.permute.xlu0 %4491
        %4493 = vrot.lane.b32.xlu0 %v4488, 127
        %v4494 = vpop.permute.xlu0 %4493
        %v4497 = vadd.f32 %v4483, %v4492
        %v4498 = vadd.f32 %v4484, %v4494
        %s4499 = sld [smem:[#allocation8 + $0xf5]]
        %v4500 = vstv %s4499
        %v4501 = vmul.f32 %v4500, %v2794
        %v4502 = vmul.f32 %v4500, %v2795
        %4505 = vrot.lane.b32.xlu0 %v4501, 126
        %v4506 = vpop.permute.xlu0 %4505
        %4507 = vrot.lane.b32.xlu0 %v4502, 126
        %v4508 = vpop.permute.xlu0 %4507
        %v4511 = vadd.f32 %v4497, %v4506
        %v4512 = vadd.f32 %v4498, %v4508
        %s4513 = sld [smem:[#allocation8 + $0xf6]]
        %v4514 = vstv %s4513
        %v4515 = vmul.f32 %v4514, %v2794
        %v4516 = vmul.f32 %v4514, %v2795
        %v4517 = vmul.f32 %v4514, %v2796
        %v4521 = vrot.slane %v4515, 1
        %v4522 = vrot.slane %v4516, 1
        %v4523 = vsel %vm339, %v4521, %v4522
        %v4524 = vrot.slane %v4517, 1
        %v4525 = vsel %vm339, %v4522, %v4524
        %v4528 = vadd.f32 %v4511, %v4523
        %v4529 = vadd.f32 %v4512, %v4525
        %s4530 = sld [smem:[#allocation8 + $0xf7]]
        %v4531 = vstv %s4530
        %v4532 = vmul.f32 %v4531, %v2794
        %v4533 = vmul.f32 %v4531, %v2795
        %v4534 = vmul.f32 %v4531, %v2796
        %v4538 = vrot.slane %v4532, 1
        %v4539 = vrot.slane %v4533, 1
        %v4540 = vsel %vm339, %v4538, %v4539
        %v4541 = vrot.slane %v4534, 1
        %v4542 = vsel %vm339, %v4539, %v4541
        %4543 = vrot.lane.b32.xlu0 %v4540, 127
        %v4544 = vpop.permute.xlu0 %4543
        %4545 = vrot.lane.b32.xlu0 %v4542, 127
        %v4546 = vpop.permute.xlu0 %4545
        %v4549 = vadd.f32 %v4528, %v4544
        %v4550 = vadd.f32 %v4529, %v4546
        %s4551 = sld [smem:[#allocation8 + $0xf8]]
        %v4552 = vstv %s4551
        %v4553 = vmul.f32 %v4552, %v2794
        %v4554 = vmul.f32 %v4552, %v2795
        %v4555 = vmul.f32 %v4552, %v2796
        %v4559 = vrot.slane %v4553, 1
        %v4560 = vrot.slane %v4554, 1
        %v4561 = vsel %vm339, %v4559, %v4560
        %v4562 = vrot.slane %v4555, 1
        %v4563 = vsel %vm339, %v4560, %v4562
        %4564 = vrot.lane.b32.xlu0 %v4561, 126
        %v4565 = vpop.permute.xlu0 %4564
        %4566 = vrot.lane.b32.xlu0 %v4563, 126
        %v4567 = vpop.permute.xlu0 %4566
        %v4570 = vadd.f32 %v4549, %v4565
        %v4571 = vadd.f32 %v4550, %v4567
        %s4572 = sld [smem:[#allocation8 + $0xf9]]
        %v4573 = vstv %s4572
        %v4574 = vmul.f32 %v4573, %v2794
        %v4575 = vmul.f32 %v4573, %v2795
        %v4576 = vmul.f32 %v4573, %v2796
        %v4580 = vrot.slane %v4574, 2
        %v4581 = vrot.slane %v4575, 2
        %v4582 = vsel %vm399, %v4580, %v4581
        %v4583 = vrot.slane %v4576, 2
        %v4584 = vsel %vm399, %v4581, %v4583
        %v4587 = vadd.f32 %v4570, %v4582
        %v4588 = vadd.f32 %v4571, %v4584
        %s4589 = sld [smem:[#allocation8 + $0xfa]]
        %v4590 = vstv %s4589
        %v4591 = vmul.f32 %v4590, %v2794
        %v4592 = vmul.f32 %v4590, %v2795
        %v4593 = vmul.f32 %v4590, %v2796
        %v4597 = vrot.slane %v4591, 2
        %v4598 = vrot.slane %v4592, 2
        %v4599 = vsel %vm399, %v4597, %v4598
        %v4600 = vrot.slane %v4593, 2
        %v4601 = vsel %vm399, %v4598, %v4600
        %4602 = vrot.lane.b32.xlu0 %v4599, 127
        %v4603 = vpop.permute.xlu0 %4602
        %4604 = vrot.lane.b32.xlu0 %v4601, 127
        %v4605 = vpop.permute.xlu0 %4604
        %v4608 = vadd.f32 %v4587, %v4603
        %v4609 = vadd.f32 %v4588, %v4605
        %s4610 = sld [smem:[#allocation8 + $0xfb]]
        %v4611 = vstv %s4610
        %v4612 = vmul.f32 %v4611, %v2794
        %v4613 = vmul.f32 %v4611, %v2795
        %v4614 = vmul.f32 %v4611, %v2796
        %v4618 = vrot.slane %v4612, 2
        %v4619 = vrot.slane %v4613, 2
        %v4620 = vsel %vm399, %v4618, %v4619
        %v4621 = vrot.slane %v4614, 2
        %v4622 = vsel %vm399, %v4619, %v4621
        %4623 = vrot.lane.b32.xlu0 %v4620, 126
        %v4624 = vpop.permute.xlu0 %4623
        %4625 = vrot.lane.b32.xlu0 %v4622, 126
        %v4626 = vpop.permute.xlu0 %4625
        %v4629 = vadd.f32 %v4608, %v4624
        %v4630 = vadd.f32 %v4609, %v4626
        %v4631 = vmax.f32 %v4629, 0.0
        %v4632 = vmax.f32 %v4630, 0.0
        %s4633 = sld [smem:[#allocation9 + $0x7]]
        %v4634 = vstv %s4633
        %s4635 = sld [smem:[#allocation8 + $0xfc]]
        %v4636 = vstv %s4635
        %v4637 = vmul.f32 %v4636, %v2785
        %v4638 = vmul.f32 %v4636, %v2786
        %v4639 = vadd.f32 %v4634, %v4637
        %v4640 = vadd.f32 %v4634, %v4638
        %s4641 = sld [smem:[#allocation8 + $0xfd]]
        %v4642 = vstv %s4641
        %v4643 = vmul.f32 %v4642, %v2785
        %v4644 = vmul.f32 %v4642, %v2786
        %4647 = vrot.lane.b32.xlu0 %v4643, 127
        %v4648 = vpop.permute.xlu0 %4647
        %4649 = vrot.lane.b32.xlu0 %v4644, 127
        %v4650 = vpop.permute.xlu0 %4649
        %v4653 = vadd.f32 %v4639, %v4648
        %v4654 = vadd.f32 %v4640, %v4650
        %s4655 = sld [smem:[#allocation8 + $0xfe]]
        %v4656 = vstv %s4655
        %v4657 = vmul.f32 %v4656, %v2785
        %v4658 = vmul.f32 %v4656, %v2786
        %4661 = vrot.lane.b32.xlu0 %v4657, 126
        %v4662 = vpop.permute.xlu0 %4661
        %4663 = vrot.lane.b32.xlu0 %v4658, 126
        %v4664 = vpop.permute.xlu0 %4663
        %v4667 = vadd.f32 %v4653, %v4662
        %v4668 = vadd.f32 %v4654, %v4664
        %s4669 = sld [smem:[#allocation8 + $0xff]]
        %v4670 = vstv %s4669
        %v4671 = vmul.f32 %v4670, %v2785
        %v4672 = vmul.f32 %v4670, %v2786
        %v4673 = vmul.f32 %v4670, %v2787
        %v4677 = vrot.slane %v4671, 1
        %v4678 = vrot.slane %v4672, 1
        %v4679 = vsel %vm339, %v4677, %v4678
        %v4680 = vrot.slane %v4673, 1
        %v4681 = vsel %vm339, %v4678, %v4680
        %v4684 = vadd.f32 %v4667, %v4679
        %v4685 = vadd.f32 %v4668, %v4681
        %s4686 = sld [smem:[#allocation8 + $0x100]]
        %v4687 = vstv %s4686
        %v4688 = vmul.f32 %v4687, %v2785
        %v4689 = vmul.f32 %v4687, %v2786
        %v4690 = vmul.f32 %v4687, %v2787
        %v4694 = vrot.slane %v4688, 1
        %v4695 = vrot.slane %v4689, 1
        %v4696 = vsel %vm339, %v4694, %v4695
        %v4697 = vrot.slane %v4690, 1
        %v4698 = vsel %vm339, %v4695, %v4697
        %4699 = vrot.lane.b32.xlu0 %v4696, 127
        %v4700 = vpop.permute.xlu0 %4699
        %4701 = vrot.lane.b32.xlu0 %v4698, 127
        %v4702 = vpop.permute.xlu0 %4701
        %v4705 = vadd.f32 %v4684, %v4700
        %v4706 = vadd.f32 %v4685, %v4702
        %s4707 = sld [smem:[#allocation8 + $0x101]]
        %v4708 = vstv %s4707
        %v4709 = vmul.f32 %v4708, %v2785
        %v4710 = vmul.f32 %v4708, %v2786
        %v4711 = vmul.f32 %v4708, %v2787
        %v4715 = vrot.slane %v4709, 1
        %v4716 = vrot.slane %v4710, 1
        %v4717 = vsel %vm339, %v4715, %v4716
        %v4718 = vrot.slane %v4711, 1
        %v4719 = vsel %vm339, %v4716, %v4718
        %4720 = vrot.lane.b32.xlu0 %v4717, 126
        %v4721 = vpop.permute.xlu0 %4720
        %4722 = vrot.lane.b32.xlu0 %v4719, 126
        %v4723 = vpop.permute.xlu0 %4722
        %v4726 = vadd.f32 %v4705, %v4721
        %v4727 = vadd.f32 %v4706, %v4723
        %s4728 = sld [smem:[#allocation8 + $0x102]]
        %v4729 = vstv %s4728
        %v4730 = vmul.f32 %v4729, %v2785
        %v4731 = vmul.f32 %v4729, %v2786
        %v4732 = vmul.f32 %v4729, %v2787
        %v4736 = vrot.slane %v4730, 2
        %v4737 = vrot.slane %v4731, 2
        %v4738 = vsel %vm399, %v4736, %v4737
        %v4739 = vrot.slane %v4732, 2
        %v4740 = vsel %vm399, %v4737, %v4739
        %v4743 = vadd.f32 %v4726, %v4738
        %v4744 = vadd.f32 %v4727, %v4740
        %s4745 = sld [smem:[#allocation8 + $0x103]]
        %v4746 = vstv %s4745
        %v4747 = vmul.f32 %v4746, %v2785
        %v4748 = vmul.f32 %v4746, %v2786
        %v4749 = vmul.f32 %v4746, %v2787
        %v4753 = vrot.slane %v4747, 2
        %v4754 = vrot.slane %v4748, 2
        %v4755 = vsel %vm399, %v4753, %v4754
        %v4756 = vrot.slane %v4749, 2
        %v4757 = vsel %vm399, %v4754, %v4756
        %4758 = vrot.lane.b32.xlu0 %v4755, 127
        %v4759 = vpop.permute.xlu0 %4758
        %4760 = vrot.lane.b32.xlu0 %v4757, 127
        %v4761 = vpop.permute.xlu0 %4760
        %v4764 = vadd.f32 %v4743, %v4759
        %v4765 = vadd.f32 %v4744, %v4761
        %s4766 = sld [smem:[#allocation8 + $0x104]]
        %v4767 = vstv %s4766
        %v4768 = vmul.f32 %v4767, %v2785
        %v4769 = vmul.f32 %v4767, %v2786
        %v4770 = vmul.f32 %v4767, %v2787
        %v4774 = vrot.slane %v4768, 2
        %v4775 = vrot.slane %v4769, 2
        %v4776 = vsel %vm399, %v4774, %v4775
        %v4777 = vrot.slane %v4770, 2
        %v4778 = vsel %vm399, %v4775, %v4777
        %4779 = vrot.lane.b32.xlu0 %v4776, 126
        %v4780 = vpop.permute.xlu0 %4779
        %4781 = vrot.lane.b32.xlu0 %v4778, 126
        %v4782 = vpop.permute.xlu0 %4781
        %v4785 = vadd.f32 %v4764, %v4780
        %v4786 = vadd.f32 %v4765, %v4782
        %s4787 = sld [smem:[#allocation8 + $0x105]]
        %v4788 = vstv %s4787
        %v4789 = vmul.f32 %v4788, %v2788
        %v4790 = vmul.f32 %v4788, %v2789
        %v4791 = vadd.f32 %v4785, %v4789
        %v4792 = vadd.f32 %v4786, %v4790
        %s4793 = sld [smem:[#allocation8 + $0x106]]
        %v4794 = vstv %s4793
        %v4795 = vmul.f32 %v4794, %v2788
        %v4796 = vmul.f32 %v4794, %v2789
        %4799 = vrot.lane.b32.xlu0 %v4795, 127
        %v4800 = vpop.permute.xlu0 %4799
        %4801 = vrot.lane.b32.xlu0 %v4796, 127
        %v4802 = vpop.permute.xlu0 %4801
        %v4805 = vadd.f32 %v4791, %v4800
        %v4806 = vadd.f32 %v4792, %v4802
        %s4807 = sld [smem:[#allocation8 + $0x107]]
        %v4808 = vstv %s4807
        %v4809 = vmul.f32 %v4808, %v2788
        %v4810 = vmul.f32 %v4808, %v2789
        %4813 = vrot.lane.b32.xlu0 %v4809, 126
        %v4814 = vpop.permute.xlu0 %4813
        %4815 = vrot.lane.b32.xlu0 %v4810, 126
        %v4816 = vpop.permute.xlu0 %4815
        %v4819 = vadd.f32 %v4805, %v4814
        %v4820 = vadd.f32 %v4806, %v4816
        %s4821 = sld [smem:[#allocation8 + $0x108]]
        %v4822 = vstv %s4821
        %v4823 = vmul.f32 %v4822, %v2788
        %v4824 = vmul.f32 %v4822, %v2789
        %v4825 = vmul.f32 %v4822, %v2790
        %v4829 = vrot.slane %v4823, 1
        %v4830 = vrot.slane %v4824, 1
        %v4831 = vsel %vm339, %v4829, %v4830
        %v4832 = vrot.slane %v4825, 1
        %v4833 = vsel %vm339, %v4830, %v4832
        %v4836 = vadd.f32 %v4819, %v4831
        %v4837 = vadd.f32 %v4820, %v4833
        %s4838 = sld [smem:[#allocation8 + $0x109]]
        %v4839 = vstv %s4838
        %v4840 = vmul.f32 %v4839, %v2788
        %v4841 = vmul.f32 %v4839, %v2789
        %v4842 = vmul.f32 %v4839, %v2790
        %v4846 = vrot.slane %v4840, 1
        %v4847 = vrot.slane %v4841, 1
        %v4848 = vsel %vm339, %v4846, %v4847
        %v4849 = vrot.slane %v4842, 1
        %v4850 = vsel %vm339, %v4847, %v4849
        %4851 = vrot.lane.b32.xlu0 %v4848, 127
        %v4852 = vpop.permute.xlu0 %4851
        %4853 = vrot.lane.b32.xlu0 %v4850, 127
        %v4854 = vpop.permute.xlu0 %4853
        %v4857 = vadd.f32 %v4836, %v4852
        %v4858 = vadd.f32 %v4837, %v4854
        %s4859 = sld [smem:[#allocation8 + $0x10a]]
        %v4860 = vstv %s4859
        %v4861 = vmul.f32 %v4860, %v2788
        %v4862 = vmul.f32 %v4860, %v2789
        %v4863 = vmul.f32 %v4860, %v2790
        %v4867 = vrot.slane %v4861, 1
        %v4868 = vrot.slane %v4862, 1
        %v4869 = vsel %vm339, %v4867, %v4868
        %v4870 = vrot.slane %v4863, 1
        %v4871 = vsel %vm339, %v4868, %v4870
        %4872 = vrot.lane.b32.xlu0 %v4869, 126
        %v4873 = vpop.permute.xlu0 %4872
        %4874 = vrot.lane.b32.xlu0 %v4871, 126
        %v4875 = vpop.permute.xlu0 %4874
        %v4878 = vadd.f32 %v4857, %v4873
        %v4879 = vadd.f32 %v4858, %v4875
        %s4880 = sld [smem:[#allocation8 + $0x10b]]
        %v4881 = vstv %s4880
        %v4882 = vmul.f32 %v4881, %v2788
        %v4883 = vmul.f32 %v4881, %v2789
        %v4884 = vmul.f32 %v4881, %v2790
        %v4888 = vrot.slane %v4882, 2
        %v4889 = vrot.slane %v4883, 2
        %v4890 = vsel %vm399, %v4888, %v4889
        %v4891 = vrot.slane %v4884, 2
        %v4892 = vsel %vm399, %v4889, %v4891
        %v4895 = vadd.f32 %v4878, %v4890
        %v4896 = vadd.f32 %v4879, %v4892
        %s4897 = sld [smem:[#allocation8 + $0x10c]]
        %v4898 = vstv %s4897
        %v4899 = vmul.f32 %v4898, %v2788
        %v4900 = vmul.f32 %v4898, %v2789
        %v4901 = vmul.f32 %v4898, %v2790
        %v4905 = vrot.slane %v4899, 2
        %v4906 = vrot.slane %v4900, 2
        %v4907 = vsel %vm399, %v4905, %v4906
        %v4908 = vrot.slane %v4901, 2
        %v4909 = vsel %vm399, %v4906, %v4908
        %4910 = vrot.lane.b32.xlu0 %v4907, 127
        %v4911 = vpop.permute.xlu0 %4910
        %4912 = vrot.lane.b32.xlu0 %v4909, 127
        %v4913 = vpop.permute.xlu0 %4912
        %v4916 = vadd.f32 %v4895, %v4911
        %v4917 = vadd.f32 %v4896, %v4913
        %s4918 = sld [smem:[#allocation8 + $0x10d]]
        %v4919 = vstv %s4918
        %v4920 = vmul.f32 %v4919, %v2788
        %v4921 = vmul.f32 %v4919, %v2789
        %v4922 = vmul.f32 %v4919, %v2790
        %v4926 = vrot.slane %v4920, 2
        %v4927 = vrot.slane %v4921, 2
        %v4928 = vsel %vm399, %v4926, %v4927
        %v4929 = vrot.slane %v4922, 2
        %v4930 = vsel %vm399, %v4927, %v4929
        %4931 = vrot.lane.b32.xlu0 %v4928, 126
        %v4932 = vpop.permute.xlu0 %4931
        %4933 = vrot.lane.b32.xlu0 %v4930, 126
        %v4934 = vpop.permute.xlu0 %4933
        %v4937 = vadd.f32 %v4916, %v4932
        %v4938 = vadd.f32 %v4917, %v4934
        %s4939 = sld [smem:[#allocation8 + $0x10e]]
        %v4940 = vstv %s4939
        %v4941 = vmul.f32 %v4940, %v2791
        %v4942 = vmul.f32 %v4940, %v2792
        %v4943 = vadd.f32 %v4937, %v4941
        %v4944 = vadd.f32 %v4938, %v4942
        %s4945 = sld [smem:[#allocation8 + $0x10f]]
        %v4946 = vstv %s4945
        %v4947 = vmul.f32 %v4946, %v2791
        %v4948 = vmul.f32 %v4946, %v2792
        %4951 = vrot.lane.b32.xlu0 %v4947, 127
        %v4952 = vpop.permute.xlu0 %4951
        %4953 = vrot.lane.b32.xlu0 %v4948, 127
        %v4954 = vpop.permute.xlu0 %4953
        %v4957 = vadd.f32 %v4943, %v4952
        %v4958 = vadd.f32 %v4944, %v4954
        %s4959 = sld [smem:[#allocation8 + $0x110]]
        %v4960 = vstv %s4959
        %v4961 = vmul.f32 %v4960, %v2791
        %v4962 = vmul.f32 %v4960, %v2792
        %4965 = vrot.lane.b32.xlu0 %v4961, 126
        %v4966 = vpop.permute.xlu0 %4965
        %4967 = vrot.lane.b32.xlu0 %v4962, 126
        %v4968 = vpop.permute.xlu0 %4967
        %v4971 = vadd.f32 %v4957, %v4966
        %v4972 = vadd.f32 %v4958, %v4968
        %s4973 = sld [smem:[#allocation8 + $0x111]]
        %v4974 = vstv %s4973
        %v4975 = vmul.f32 %v4974, %v2791
        %v4976 = vmul.f32 %v4974, %v2792
        %v4977 = vmul.f32 %v4974, %v2793
        %v4981 = vrot.slane %v4975, 1
        %v4982 = vrot.slane %v4976, 1
        %v4983 = vsel %vm339, %v4981, %v4982
        %v4984 = vrot.slane %v4977, 1
        %v4985 = vsel %vm339, %v4982, %v4984
        %v4988 = vadd.f32 %v4971, %v4983
        %v4989 = vadd.f32 %v4972, %v4985
        %s4990 = sld [smem:[#allocation8 + $0x112]]
        %v4991 = vstv %s4990
        %v4992 = vmul.f32 %v4991, %v2791
        %v4993 = vmul.f32 %v4991, %v2792
        %v4994 = vmul.f32 %v4991, %v2793
        %v4998 = vrot.slane %v4992, 1
        %v4999 = vrot.slane %v4993, 1
        %v5000 = vsel %vm339, %v4998, %v4999
        %v5001 = vrot.slane %v4994, 1
        %v5002 = vsel %vm339, %v4999, %v5001
        %5003 = vrot.lane.b32.xlu0 %v5000, 127
        %v5004 = vpop.permute.xlu0 %5003
        %5005 = vrot.lane.b32.xlu0 %v5002, 127
        %v5006 = vpop.permute.xlu0 %5005
        %v5009 = vadd.f32 %v4988, %v5004
        %v5010 = vadd.f32 %v4989, %v5006
        %s5011 = sld [smem:[#allocation8 + $0x113]]
        %v5012 = vstv %s5011
        %v5013 = vmul.f32 %v5012, %v2791
        %v5014 = vmul.f32 %v5012, %v2792
        %v5015 = vmul.f32 %v5012, %v2793
        %v5019 = vrot.slane %v5013, 1
        %v5020 = vrot.slane %v5014, 1
        %v5021 = vsel %vm339, %v5019, %v5020
        %v5022 = vrot.slane %v5015, 1
        %v5023 = vsel %vm339, %v5020, %v5022
        %5024 = vrot.lane.b32.xlu0 %v5021, 126
        %v5025 = vpop.permute.xlu0 %5024
        %5026 = vrot.lane.b32.xlu0 %v5023, 126
        %v5027 = vpop.permute.xlu0 %5026
        %v5030 = vadd.f32 %v5009, %v5025
        %v5031 = vadd.f32 %v5010, %v5027
        %s5032 = sld [smem:[#allocation8 + $0x114]]
        %v5033 = vstv %s5032
        %v5034 = vmul.f32 %v5033, %v2791
        %v5035 = vmul.f32 %v5033, %v2792
        %v5036 = vmul.f32 %v5033, %v2793
        %v5040 = vrot.slane %v5034, 2
        %v5041 = vrot.slane %v5035, 2
        %v5042 = vsel %vm399, %v5040, %v5041
        %v5043 = vrot.slane %v5036, 2
        %v5044 = vsel %vm399, %v5041, %v5043
        %v5047 = vadd.f32 %v5030, %v5042
        %v5048 = vadd.f32 %v5031, %v5044
        %s5049 = sld [smem:[#allocation8 + $0x115]]
        %v5050 = vstv %s5049
        %v5051 = vmul.f32 %v5050, %v2791
        %v5052 = vmul.f32 %v5050, %v2792
        %v5053 = vmul.f32 %v5050, %v2793
        %v5057 = vrot.slane %v5051, 2
        %v5058 = vrot.slane %v5052, 2
        %v5059 = vsel %vm399, %v5057, %v5058
        %v5060 = vrot.slane %v5053, 2
        %v5061 = vsel %vm399, %v5058, %v5060
        %5062 = vrot.lane.b32.xlu0 %v5059, 127
        %v5063 = vpop.permute.xlu0 %5062
        %5064 = vrot.lane.b32.xlu0 %v5061, 127
        %v5065 = vpop.permute.xlu0 %5064
        %v5068 = vadd.f32 %v5047, %v5063
        %v5069 = vadd.f32 %v5048, %v5065
        %s5070 = sld [smem:[#allocation8 + $0x116]]
        %v5071 = vstv %s5070
        %v5072 = vmul.f32 %v5071, %v2791
        %v5073 = vmul.f32 %v5071, %v2792
        %v5074 = vmul.f32 %v5071, %v2793
        %v5078 = vrot.slane %v5072, 2
        %v5079 = vrot.slane %v5073, 2
        %v5080 = vsel %vm399, %v5078, %v5079
        %v5081 = vrot.slane %v5074, 2
        %v5082 = vsel %vm399, %v5079, %v5081
        %5083 = vrot.lane.b32.xlu0 %v5080, 126
        %v5084 = vpop.permute.xlu0 %5083
        %5085 = vrot.lane.b32.xlu0 %v5082, 126
        %v5086 = vpop.permute.xlu0 %5085
        %v5089 = vadd.f32 %v5068, %v5084
        %v5090 = vadd.f32 %v5069, %v5086
        %s5091 = sld [smem:[#allocation8 + $0x117]]
        %v5092 = vstv %s5091
        %v5093 = vmul.f32 %v5092, %v2794
        %v5094 = vmul.f32 %v5092, %v2795
        %v5095 = vadd.f32 %v5089, %v5093
        %v5096 = vadd.f32 %v5090, %v5094
        %s5097 = sld [smem:[#allocation8 + $0x118]]
        %v5098 = vstv %s5097
        %v5099 = vmul.f32 %v5098, %v2794
        %v5100 = vmul.f32 %v5098, %v2795
        %5103 = vrot.lane.b32.xlu0 %v5099, 127
        %v5104 = vpop.permute.xlu0 %5103
        %5105 = vrot.lane.b32.xlu0 %v5100, 127
        %v5106 = vpop.permute.xlu0 %5105
        %v5109 = vadd.f32 %v5095, %v5104
        %v5110 = vadd.f32 %v5096, %v5106
        %s5111 = sld [smem:[#allocation8 + $0x119]]
        %v5112 = vstv %s5111
        %v5113 = vmul.f32 %v5112, %v2794
        %v5114 = vmul.f32 %v5112, %v2795
        %5117 = vrot.lane.b32.xlu0 %v5113, 126
        %v5118 = vpop.permute.xlu0 %5117
        %5119 = vrot.lane.b32.xlu0 %v5114, 126
        %v5120 = vpop.permute.xlu0 %5119
        %v5123 = vadd.f32 %v5109, %v5118
        %v5124 = vadd.f32 %v5110, %v5120
        %s5125 = sld [smem:[#allocation8 + $0x11a]]
        %v5126 = vstv %s5125
        %v5127 = vmul.f32 %v5126, %v2794
        %v5128 = vmul.f32 %v5126, %v2795
        %v5129 = vmul.f32 %v5126, %v2796
        %v5133 = vrot.slane %v5127, 1
        %v5134 = vrot.slane %v5128, 1
        %v5135 = vsel %vm339, %v5133, %v5134
        %v5136 = vrot.slane %v5129, 1
        %v5137 = vsel %vm339, %v5134, %v5136
        %v5140 = vadd.f32 %v5123, %v5135
        %v5141 = vadd.f32 %v5124, %v5137
        %s5142 = sld [smem:[#allocation8 + $0x11b]]
        %v5143 = vstv %s5142
        %v5144 = vmul.f32 %v5143, %v2794
        %v5145 = vmul.f32 %v5143, %v2795
        %v5146 = vmul.f32 %v5143, %v2796
        %v5150 = vrot.slane %v5144, 1
        %v5151 = vrot.slane %v5145, 1
        %v5152 = vsel %vm339, %v5150, %v5151
        %v5153 = vrot.slane %v5146, 1
        %v5154 = vsel %vm339, %v5151, %v5153
        %5155 = vrot.lane.b32.xlu0 %v5152, 127
        %v5156 = vpop.permute.xlu0 %5155
        %5157 = vrot.lane.b32.xlu0 %v5154, 127
        %v5158 = vpop.permute.xlu0 %5157
        %v5161 = vadd.f32 %v5140, %v5156
        %v5162 = vadd.f32 %v5141, %v5158
        %s5163 = sld [smem:[#allocation8 + $0x11c]]
        %v5164 = vstv %s5163
        %v5165 = vmul.f32 %v5164, %v2794
        %v5166 = vmul.f32 %v5164, %v2795
        %v5167 = vmul.f32 %v5164, %v2796
        %v5171 = vrot.slane %v5165, 1
        %v5172 = vrot.slane %v5166, 1
        %v5173 = vsel %vm339, %v5171, %v5172
        %v5174 = vrot.slane %v5167, 1
        %v5175 = vsel %vm339, %v5172, %v5174
        %5176 = vrot.lane.b32.xlu0 %v5173, 126
        %v5177 = vpop.permute.xlu0 %5176
        %5178 = vrot.lane.b32.xlu0 %v5175, 126
        %v5179 = vpop.permute.xlu0 %5178
        %v5182 = vadd.f32 %v5161, %v5177
        %v5183 = vadd.f32 %v5162, %v5179
        %s5184 = sld [smem:[#allocation8 + $0x11d]]
        %v5185 = vstv %s5184
        %v5186 = vmul.f32 %v5185, %v2794
        %v5187 = vmul.f32 %v5185, %v2795
        %v5188 = vmul.f32 %v5185, %v2796
        %v5192 = vrot.slane %v5186, 2
        %v5193 = vrot.slane %v5187, 2
        %v5194 = vsel %vm399, %v5192, %v5193
        %v5195 = vrot.slane %v5188, 2
        %v5196 = vsel %vm399, %v5193, %v5195
        %v5199 = vadd.f32 %v5182, %v5194
        %v5200 = vadd.f32 %v5183, %v5196
        %s5201 = sld [smem:[#allocation8 + $0x11e]]
        %v5202 = vstv %s5201
        %v5203 = vmul.f32 %v5202, %v2794
        %v5204 = vmul.f32 %v5202, %v2795
        %v5205 = vmul.f32 %v5202, %v2796
        %v5209 = vrot.slane %v5203, 2
        %v5210 = vrot.slane %v5204, 2
        %v5211 = vsel %vm399, %v5209, %v5210
        %v5212 = vrot.slane %v5205, 2
        %v5213 = vsel %vm399, %v5210, %v5212
        %5214 = vrot.lane.b32.xlu0 %v5211, 127
        %v5215 = vpop.permute.xlu0 %5214
        %5216 = vrot.lane.b32.xlu0 %v5213, 127
        %v5217 = vpop.permute.xlu0 %5216
        %v5220 = vadd.f32 %v5199, %v5215
        %v5221 = vadd.f32 %v5200, %v5217
        %s5222 = sld [smem:[#allocation8 + $0x11f]]
        %v5223 = vstv %s5222
        %v5224 = vmul.f32 %v5223, %v2794
        %v5225 = vmul.f32 %v5223, %v2795
        %v5226 = vmul.f32 %v5223, %v2796
        %v5230 = vrot.slane %v5224, 2
        %v5231 = vrot.slane %v5225, 2
        %v5232 = vsel %vm399, %v5230, %v5231
        %v5233 = vrot.slane %v5226, 2
        %v5234 = vsel %vm399, %v5231, %v5233
        %5235 = vrot.lane.b32.xlu0 %v5232, 126
        %v5236 = vpop.permute.xlu0 %5235
        %5237 = vrot.lane.b32.xlu0 %v5234, 126
        %v5238 = vpop.permute.xlu0 %5237
        %v5241 = vadd.f32 %v5220, %v5236
        %v5242 = vadd.f32 %v5221, %v5238
        %v5243 = vmax.f32 %v5241, 0.0
        %v5244 = vmax.f32 %v5242, 0.0
        %5247 = vrot.lane.b32.xlu0 %v3407, 1
        %v5248 = vpop.permute.xlu0 %5247
        %5249 = vrot.lane.b32.xlu0 %v3408, 1
        %v5250 = vpop.permute.xlu0 %5249
        %5253 = vst.msk [vmem:[#allocation2 + $0x1] sm:$0xff] %vm238, %v5248
        %5254 = vst.msk [vmem:[#allocation2 + $0x9] sm:$0xff] %vm238, %v5250
        %5257 = vrot.lane.b32.xlu0 %v4019, 1
        %v5258 = vpop.permute.xlu0 %5257
        %5259 = vrot.lane.b32.xlu0 %v4020, 1
        %v5260 = vpop.permute.xlu0 %5259
        %5263 = vst.msk [vmem:[%s252 + $0x1] sm:$0xff] %vm238, %v5258
        %5264 = vst.msk [vmem:[%s252 + $0x9] sm:$0xff] %vm238, %v5260
        %5267 = vrot.lane.b32.xlu0 %v4631, 1
        %v5268 = vpop.permute.xlu0 %5267
        %5269 = vrot.lane.b32.xlu0 %v4632, 1
        %v5270 = vpop.permute.xlu0 %5269
        %5273 = vst.msk [vmem:[%s266 + $0x1] sm:$0xff] %vm238, %v5268
        %5274 = vst.msk [vmem:[%s266 + $0x9] sm:$0xff] %vm238, %v5270
        %5277 = vrot.lane.b32.xlu0 %v5243, 1
        %v5278 = vpop.permute.xlu0 %5277
        %5279 = vrot.lane.b32.xlu0 %v5244, 1
        %v5280 = vpop.permute.xlu0 %5279
        %5283 = vst.msk [vmem:[%s280 + $0x1] sm:$0xff] %vm238, %v5278
        %5284 = vst.msk [vmem:[%s280 + $0x9] sm:$0xff] %vm238, %v5280
        %v5285 = vld [vmem:[#allocation2] sm:$0xff]
        %v5286 = vld [vmem:[#allocation2 + $0x8] sm:$0xff]
        %v5287 = vld [vmem:[#allocation2 + $0x10] sm:$0x3]
        %v5288 = vld [vmem:[%s252] sm:$0xff]
        %v5289 = vld [vmem:[%s252 + $0x8] sm:$0xff]
        %v5290 = vld [vmem:[%s252 + $0x10] sm:$0x3]
        %v5291 = vld [vmem:[%s266] sm:$0xff]
        %v5292 = vld [vmem:[%s266 + $0x8] sm:$0xff]
        %v5293 = vld [vmem:[%s266 + $0x10] sm:$0x3]
        %v5294 = vld [vmem:[%s280] sm:$0xff]
        %v5295 = vld [vmem:[%s280 + $0x8] sm:$0xff]
        %v5296 = vld [vmem:[%s280 + $0x10] sm:$0x3]
        %s5297 = sld [smem:[#allocation9 + $0x8]]
        %v5298 = vstv %s5297
        %s5299 = sld [smem:[#allocation8 + $0x120]]
        %v5300 = vstv %s5299
        %v5301 = vmul.f32 %v5300, %v5285
        %v5302 = vmul.f32 %v5300, %v5286
        %v5303 = vadd.f32 %v5298, %v5301
        %v5304 = vadd.f32 %v5298, %v5302
        %s5305 = sld [smem:[#allocation8 + $0x121]]
        %v5306 = vstv %s5305
        %v5307 = vmul.f32 %v5306, %v5285
        %v5308 = vmul.f32 %v5306, %v5286
        %5311 = vrot.lane.b32.xlu0 %v5307, 127
        %v5312 = vpop.permute.xlu0 %5311
        %5313 = vrot.lane.b32.xlu0 %v5308, 127
        %v5314 = vpop.permute.xlu0 %5313
        %v5317 = vadd.f32 %v5303, %v5312
        %v5318 = vadd.f32 %v5304, %v5314
        %s5319 = sld [smem:[#allocation8 + $0x122]]
        %v5320 = vstv %s5319
        %v5321 = vmul.f32 %v5320, %v5285
        %v5322 = vmul.f32 %v5320, %v5286
        %5325 = vrot.lane.b32.xlu0 %v5321, 126
        %v5326 = vpop.permute.xlu0 %5325
        %5327 = vrot.lane.b32.xlu0 %v5322, 126
        %v5328 = vpop.permute.xlu0 %5327
        %v5331 = vadd.f32 %v5317, %v5326
        %v5332 = vadd.f32 %v5318, %v5328
        %s5333 = sld [smem:[#allocation8 + $0x123]]
        %v5334 = vstv %s5333
        %v5335 = vmul.f32 %v5334, %v5285
        %v5336 = vmul.f32 %v5334, %v5286
        %v5337 = vmul.f32 %v5334, %v5287
        %v5341 = vrot.slane %v5335, 1
        %v5342 = vrot.slane %v5336, 1
        %v5343 = vsel %vm339, %v5341, %v5342
        %v5344 = vrot.slane %v5337, 1
        %v5345 = vsel %vm339, %v5342, %v5344
        %v5348 = vadd.f32 %v5331, %v5343
        %v5349 = vadd.f32 %v5332, %v5345
        %s5350 = sld [smem:[#allocation8 + $0x124]]
        %v5351 = vstv %s5350
        %v5352 = vmul.f32 %v5351, %v5285
        %v5353 = vmul.f32 %v5351, %v5286
        %v5354 = vmul.f32 %v5351, %v5287
        %v5358 = vrot.slane %v5352, 1
        %v5359 = vrot.slane %v5353, 1
        %v5360 = vsel %vm339, %v5358, %v5359
        %v5361 = vrot.slane %v5354, 1
        %v5362 = vsel %vm339, %v5359, %v5361
        %5363 = vrot.lane.b32.xlu0 %v5360, 127
        %v5364 = vpop.permute.xlu0 %5363
        %5365 = vrot.lane.b32.xlu0 %v5362, 127
        %v5366 = vpop.permute.xlu0 %5365
        %v5369 = vadd.f32 %v5348, %v5364
        %v5370 = vadd.f32 %v5349, %v5366
        %s5371 = sld [smem:[#allocation8 + $0x125]]
        %v5372 = vstv %s5371
        %v5373 = vmul.f32 %v5372, %v5285
        %v5374 = vmul.f32 %v5372, %v5286
        %v5375 = vmul.f32 %v5372, %v5287
        %v5379 = vrot.slane %v5373, 1
        %v5380 = vrot.slane %v5374, 1
        %v5381 = vsel %vm339, %v5379, %v5380
        %v5382 = vrot.slane %v5375, 1
        %v5383 = vsel %vm339, %v5380, %v5382
        %5384 = vrot.lane.b32.xlu0 %v5381, 126
        %v5385 = vpop.permute.xlu0 %5384
        %5386 = vrot.lane.b32.xlu0 %v5383, 126
        %v5387 = vpop.permute.xlu0 %5386
        %v5390 = vadd.f32 %v5369, %v5385
        %v5391 = vadd.f32 %v5370, %v5387
        %s5392 = sld [smem:[#allocation8 + $0x126]]
        %v5393 = vstv %s5392
        %v5394 = vmul.f32 %v5393, %v5285
        %v5395 = vmul.f32 %v5393, %v5286
        %v5396 = vmul.f32 %v5393, %v5287
        %v5400 = vrot.slane %v5394, 2
        %v5401 = vrot.slane %v5395, 2
        %v5402 = vsel %vm399, %v5400, %v5401
        %v5403 = vrot.slane %v5396, 2
        %v5404 = vsel %vm399, %v5401, %v5403
        %v5407 = vadd.f32 %v5390, %v5402
        %v5408 = vadd.f32 %v5391, %v5404
        %s5409 = sld [smem:[#allocation8 + $0x127]]
        %v5410 = vstv %s5409
        %v5411 = vmul.f32 %v5410, %v5285
        %v5412 = vmul.f32 %v5410, %v5286
        %v5413 = vmul.f32 %v5410, %v5287
        %v5417 = vrot.slane %v5411, 2
        %v5418 = vrot.slane %v5412, 2
        %v5419 = vsel %vm399, %v5417, %v5418
        %v5420 = vrot.slane %v5413, 2
        %v5421 = vsel %vm399, %v5418, %v5420
        %5422 = vrot.lane.b32.xlu0 %v5419, 127
        %v5423 = vpop.permute.xlu0 %5422
        %5424 = vrot.lane.b32.xlu0 %v5421, 127
        %v5425 = vpop.permute.xlu0 %5424
        %v5428 = vadd.f32 %v5407, %v5423
        %v5429 = vadd.f32 %v5408, %v5425
        %s5430 = sld [smem:[#allocation8 + $0x128]]
        %v5431 = vstv %s5430
        %v5432 = vmul.f32 %v5431, %v5285
        %v5433 = vmul.f32 %v5431, %v5286
        %v5434 = vmul.f32 %v5431, %v5287
        %v5438 = vrot.slane %v5432, 2
        %v5439 = vrot.slane %v5433, 2
        %v5440 = vsel %vm399, %v5438, %v5439
        %v5441 = vrot.slane %v5434, 2
        %v5442 = vsel %vm399, %v5439, %v5441
        %5443 = vrot.lane.b32.xlu0 %v5440, 126
        %v5444 = vpop.permute.xlu0 %5443
        %5445 = vrot.lane.b32.xlu0 %v5442, 126
        %v5446 = vpop.permute.xlu0 %5445
        %v5449 = vadd.f32 %v5428, %v5444
        %v5450 = vadd.f32 %v5429, %v5446
        %s5451 = sld [smem:[#allocation8 + $0x129]]
        %v5452 = vstv %s5451
        %v5453 = vmul.f32 %v5452, %v5288
        %v5454 = vmul.f32 %v5452, %v5289
        %v5455 = vadd.f32 %v5449, %v5453
        %v5456 = vadd.f32 %v5450, %v5454
        %s5457 = sld [smem:[#allocation8 + $0x12a]]
        %v5458 = vstv %s5457
        %v5459 = vmul.f32 %v5458, %v5288
        %v5460 = vmul.f32 %v5458, %v5289
        %5463 = vrot.lane.b32.xlu0 %v5459, 127
        %v5464 = vpop.permute.xlu0 %5463
        %5465 = vrot.lane.b32.xlu0 %v5460, 127
        %v5466 = vpop.permute.xlu0 %5465
        %v5469 = vadd.f32 %v5455, %v5464
        %v5470 = vadd.f32 %v5456, %v5466
        %s5471 = sld [smem:[#allocation8 + $0x12b]]
        %v5472 = vstv %s5471
        %v5473 = vmul.f32 %v5472, %v5288
        %v5474 = vmul.f32 %v5472, %v5289
        %5477 = vrot.lane.b32.xlu0 %v5473, 126
        %v5478 = vpop.permute.xlu0 %5477
        %5479 = vrot.lane.b32.xlu0 %v5474, 126
        %v5480 = vpop.permute.xlu0 %5479
        %v5483 = vadd.f32 %v5469, %v5478
        %v5484 = vadd.f32 %v5470, %v5480
        %s5485 = sld [smem:[#allocation8 + $0x12c]]
        %v5486 = vstv %s5485
        %v5487 = vmul.f32 %v5486, %v5288
        %v5488 = vmul.f32 %v5486, %v5289
        %v5489 = vmul.f32 %v5486, %v5290
        %v5493 = vrot.slane %v5487, 1
        %v5494 = vrot.slane %v5488, 1
        %v5495 = vsel %vm339, %v5493, %v5494
        %v5496 = vrot.slane %v5489, 1
        %v5497 = vsel %vm339, %v5494, %v5496
        %v5500 = vadd.f32 %v5483, %v5495
        %v5501 = vadd.f32 %v5484, %v5497
        %s5502 = sld [smem:[#allocation8 + $0x12d]]
        %v5503 = vstv %s5502
        %v5504 = vmul.f32 %v5503, %v5288
        %v5505 = vmul.f32 %v5503, %v5289
        %v5506 = vmul.f32 %v5503, %v5290
        %v5510 = vrot.slane %v5504, 1
        %v5511 = vrot.slane %v5505, 1
        %v5512 = vsel %vm339, %v5510, %v5511
        %v5513 = vrot.slane %v5506, 1
        %v5514 = vsel %vm339, %v5511, %v5513
        %5515 = vrot.lane.b32.xlu0 %v5512, 127
        %v5516 = vpop.permute.xlu0 %5515
        %5517 = vrot.lane.b32.xlu0 %v5514, 127
        %v5518 = vpop.permute.xlu0 %5517
        %v5521 = vadd.f32 %v5500, %v5516
        %v5522 = vadd.f32 %v5501, %v5518
        %s5523 = sld [smem:[#allocation8 + $0x12e]]
        %v5524 = vstv %s5523
        %v5525 = vmul.f32 %v5524, %v5288
        %v5526 = vmul.f32 %v5524, %v5289
        %v5527 = vmul.f32 %v5524, %v5290
        %v5531 = vrot.slane %v5525, 1
        %v5532 = vrot.slane %v5526, 1
        %v5533 = vsel %vm339, %v5531, %v5532
        %v5534 = vrot.slane %v5527, 1
        %v5535 = vsel %vm339, %v5532, %v5534
        %5536 = vrot.lane.b32.xlu0 %v5533, 126
        %v5537 = vpop.permute.xlu0 %5536
        %5538 = vrot.lane.b32.xlu0 %v5535, 126
        %v5539 = vpop.permute.xlu0 %5538
        %v5542 = vadd.f32 %v5521, %v5537
        %v5543 = vadd.f32 %v5522, %v5539
        %s5544 = sld [smem:[#allocation8 + $0x12f]]
        %v5545 = vstv %s5544
        %v5546 = vmul.f32 %v5545, %v5288
        %v5547 = vmul.f32 %v5545, %v5289
        %v5548 = vmul.f32 %v5545, %v5290
        %v5552 = vrot.slane %v5546, 2
        %v5553 = vrot.slane %v5547, 2
        %v5554 = vsel %vm399, %v5552, %v5553
        %v5555 = vrot.slane %v5548, 2
        %v5556 = vsel %vm399, %v5553, %v5555
        %v5559 = vadd.f32 %v5542, %v5554
        %v5560 = vadd.f32 %v5543, %v5556
        %s5561 = sld [smem:[#allocation8 + $0x130]]
        %v5562 = vstv %s5561
        %v5563 = vmul.f32 %v5562, %v5288
        %v5564 = vmul.f32 %v5562, %v5289
        %v5565 = vmul.f32 %v5562, %v5290
        %v5569 = vrot.slane %v5563, 2
        %v5570 = vrot.slane %v5564, 2
        %v5571 = vsel %vm399, %v5569, %v5570
        %v5572 = vrot.slane %v5565, 2
        %v5573 = vsel %vm399, %v5570, %v5572
        %5574 = vrot.lane.b32.xlu0 %v5571, 127
        %v5575 = vpop.permute.xlu0 %5574
        %5576 = vrot.lane.b32.xlu0 %v5573, 127
        %v5577 = vpop.permute.xlu0 %5576
        %v5580 = vadd.f32 %v5559, %v5575
        %v5581 = vadd.f32 %v5560, %v5577
        %s5582 = sld [smem:[#allocation8 + $0x131]]
        %v5583 = vstv %s5582
        %v5584 = vmul.f32 %v5583, %v5288
        %v5585 = vmul.f32 %v5583, %v5289
        %v5586 = vmul.f32 %v5583, %v5290
        %v5590 = vrot.slane %v5584, 2
        %v5591 = vrot.slane %v5585, 2
        %v5592 = vsel %vm399, %v5590, %v5591
        %v5593 = vrot.slane %v5586, 2
        %v5594 = vsel %vm399, %v5591, %v5593
        %5595 = vrot.lane.b32.xlu0 %v5592, 126
        %v5596 = vpop.permute.xlu0 %5595
        %5597 = vrot.lane.b32.xlu0 %v5594, 126
        %v5598 = vpop.permute.xlu0 %5597
        %v5601 = vadd.f32 %v5580, %v5596
        %v5602 = vadd.f32 %v5581, %v5598
        %s5603 = sld [smem:[#allocation8 + $0x132]]
        %v5604 = vstv %s5603
        %v5605 = vmul.f32 %v5604, %v5291
        %v5606 = vmul.f32 %v5604, %v5292
        %v5607 = vadd.f32 %v5601, %v5605
        %v5608 = vadd.f32 %v5602, %v5606
        %s5609 = sld [smem:[#allocation8 + $0x133]]
        %v5610 = vstv %s5609
        %v5611 = vmul.f32 %v5610, %v5291
        %v5612 = vmul.f32 %v5610, %v5292
        %5615 = vrot.lane.b32.xlu0 %v5611, 127
        %v5616 = vpop.permute.xlu0 %5615
        %5617 = vrot.lane.b32.xlu0 %v5612, 127
        %v5618 = vpop.permute.xlu0 %5617
        %v5621 = vadd.f32 %v5607, %v5616
        %v5622 = vadd.f32 %v5608, %v5618
        %s5623 = sld [smem:[#allocation8 + $0x134]]
        %v5624 = vstv %s5623
        %v5625 = vmul.f32 %v5624, %v5291
        %v5626 = vmul.f32 %v5624, %v5292
        %5629 = vrot.lane.b32.xlu0 %v5625, 126
        %v5630 = vpop.permute.xlu0 %5629
        %5631 = vrot.lane.b32.xlu0 %v5626, 126
        %v5632 = vpop.permute.xlu0 %5631
        %v5635 = vadd.f32 %v5621, %v5630
        %v5636 = vadd.f32 %v5622, %v5632
        %s5637 = sld [smem:[#allocation8 + $0x135]]
        %v5638 = vstv %s5637
        %v5639 = vmul.f32 %v5638, %v5291
        %v5640 = vmul.f32 %v5638, %v5292
        %v5641 = vmul.f32 %v5638, %v5293
        %v5645 = vrot.slane %v5639, 1
        %v5646 = vrot.slane %v5640, 1
        %v5647 = vsel %vm339, %v5645, %v5646
        %v5648 = vrot.slane %v5641, 1
        %v5649 = vsel %vm339, %v5646, %v5648
        %v5652 = vadd.f32 %v5635, %v5647
        %v5653 = vadd.f32 %v5636, %v5649
        %s5654 = sld [smem:[#allocation8 + $0x136]]
        %v5655 = vstv %s5654
        %v5656 = vmul.f32 %v5655, %v5291
        %v5657 = vmul.f32 %v5655, %v5292
        %v5658 = vmul.f32 %v5655, %v5293
        %v5662 = vrot.slane %v5656, 1
        %v5663 = vrot.slane %v5657, 1
        %v5664 = vsel %vm339, %v5662, %v5663
        %v5665 = vrot.slane %v5658, 1
        %v5666 = vsel %vm339, %v5663, %v5665
        %5667 = vrot.lane.b32.xlu0 %v5664, 127
        %v5668 = vpop.permute.xlu0 %5667
        %5669 = vrot.lane.b32.xlu0 %v5666, 127
        %v5670 = vpop.permute.xlu0 %5669
        %v5673 = vadd.f32 %v5652, %v5668
        %v5674 = vadd.f32 %v5653, %v5670
        %s5675 = sld [smem:[#allocation8 + $0x137]]
        %v5676 = vstv %s5675
        %v5677 = vmul.f32 %v5676, %v5291
        %v5678 = vmul.f32 %v5676, %v5292
        %v5679 = vmul.f32 %v5676, %v5293
        %v5683 = vrot.slane %v5677, 1
        %v5684 = vrot.slane %v5678, 1
        %v5685 = vsel %vm339, %v5683, %v5684
        %v5686 = vrot.slane %v5679, 1
        %v5687 = vsel %vm339, %v5684, %v5686
        %5688 = vrot.lane.b32.xlu0 %v5685, 126
        %v5689 = vpop.permute.xlu0 %5688
        %5690 = vrot.lane.b32.xlu0 %v5687, 126
        %v5691 = vpop.permute.xlu0 %5690
        %v5694 = vadd.f32 %v5673, %v5689
        %v5695 = vadd.f32 %v5674, %v5691
        %s5696 = sld [smem:[#allocation8 + $0x138]]
        %v5697 = vstv %s5696
        %v5698 = vmul.f32 %v5697, %v5291
        %v5699 = vmul.f32 %v5697, %v5292
        %v5700 = vmul.f32 %v5697, %v5293
        %v5704 = vrot.slane %v5698, 2
        %v5705 = vrot.slane %v5699, 2
        %v5706 = vsel %vm399, %v5704, %v5705
        %v5707 = vrot.slane %v5700, 2
        %v5708 = vsel %vm399, %v5705, %v5707
        %v5711 = vadd.f32 %v5694, %v5706
        %v5712 = vadd.f32 %v5695, %v5708
        %s5713 = sld [smem:[#allocation8 + $0x139]]
        %v5714 = vstv %s5713
        %v5715 = vmul.f32 %v5714, %v5291
        %v5716 = vmul.f32 %v5714, %v5292
        %v5717 = vmul.f32 %v5714, %v5293
        %v5721 = vrot.slane %v5715, 2
        %v5722 = vrot.slane %v5716, 2
        %v5723 = vsel %vm399, %v5721, %v5722
        %v5724 = vrot.slane %v5717, 2
        %v5725 = vsel %vm399, %v5722, %v5724
        %5726 = vrot.lane.b32.xlu0 %v5723, 127
        %v5727 = vpop.permute.xlu0 %5726
        %5728 = vrot.lane.b32.xlu0 %v5725, 127
        %v5729 = vpop.permute.xlu0 %5728
        %v5732 = vadd.f32 %v5711, %v5727
        %v5733 = vadd.f32 %v5712, %v5729
        %s5734 = sld [smem:[#allocation8 + $0x13a]]
        %v5735 = vstv %s5734
        %v5736 = vmul.f32 %v5735, %v5291
        %v5737 = vmul.f32 %v5735, %v5292
        %v5738 = vmul.f32 %v5735, %v5293
        %v5742 = vrot.slane %v5736, 2
        %v5743 = vrot.slane %v5737, 2
        %v5744 = vsel %vm399, %v5742, %v5743
        %v5745 = vrot.slane %v5738, 2
        %v5746 = vsel %vm399, %v5743, %v5745
        %5747 = vrot.lane.b32.xlu0 %v5744, 126
        %v5748 = vpop.permute.xlu0 %5747
        %5749 = vrot.lane.b32.xlu0 %v5746, 126
        %v5750 = vpop.permute.xlu0 %5749
        %v5753 = vadd.f32 %v5732, %v5748
        %v5754 = vadd.f32 %v5733, %v5750
        %s5755 = sld [smem:[#allocation8 + $0x13b]]
        %v5756 = vstv %s5755
        %v5757 = vmul.f32 %v5756, %v5294
        %v5758 = vmul.f32 %v5756, %v5295
        %v5759 = vadd.f32 %v5753, %v5757
        %v5760 = vadd.f32 %v5754, %v5758
        %s5761 = sld [smem:[#allocation8 + $0x13c]]
        %v5762 = vstv %s5761
        %v5763 = vmul.f32 %v5762, %v5294
        %v5764 = vmul.f32 %v5762, %v5295
        %5767 = vrot.lane.b32.xlu0 %v5763, 127
        %v5768 = vpop.permute.xlu0 %5767
        %5769 = vrot.lane.b32.xlu0 %v5764, 127
        %v5770 = vpop.permute.xlu0 %5769
        %v5773 = vadd.f32 %v5759, %v5768
        %v5774 = vadd.f32 %v5760, %v5770
        %s5775 = sld [smem:[#allocation8 + $0x13d]]
        %v5776 = vstv %s5775
        %v5777 = vmul.f32 %v5776, %v5294
        %v5778 = vmul.f32 %v5776, %v5295
        %5781 = vrot.lane.b32.xlu0 %v5777, 126
        %v5782 = vpop.permute.xlu0 %5781
        %5783 = vrot.lane.b32.xlu0 %v5778, 126
        %v5784 = vpop.permute.xlu0 %5783
        %v5787 = vadd.f32 %v5773, %v5782
        %v5788 = vadd.f32 %v5774, %v5784
        %s5789 = sld [smem:[#allocation8 + $0x13e]]
        %v5790 = vstv %s5789
        %v5791 = vmul.f32 %v5790, %v5294
        %v5792 = vmul.f32 %v5790, %v5295
        %v5793 = vmul.f32 %v5790, %v5296
        %v5797 = vrot.slane %v5791, 1
        %v5798 = vrot.slane %v5792, 1
        %v5799 = vsel %vm339, %v5797, %v5798
        %v5800 = vrot.slane %v5793, 1
        %v5801 = vsel %vm339, %v5798, %v5800
        %v5804 = vadd.f32 %v5787, %v5799
        %v5805 = vadd.f32 %v5788, %v5801
        %s5806 = sld [smem:[#allocation8 + $0x13f]]
        %v5807 = vstv %s5806
        %v5808 = vmul.f32 %v5807, %v5294
        %v5809 = vmul.f32 %v5807, %v5295
        %v5810 = vmul.f32 %v5807, %v5296
        %v5814 = vrot.slane %v5808, 1
        %v5815 = vrot.slane %v5809, 1
        %v5816 = vsel %vm339, %v5814, %v5815
        %v5817 = vrot.slane %v5810, 1
        %v5818 = vsel %vm339, %v5815, %v5817
        %5819 = vrot.lane.b32.xlu0 %v5816, 127
        %v5820 = vpop.permute.xlu0 %5819
        %5821 = vrot.lane.b32.xlu0 %v5818, 127
        %v5822 = vpop.permute.xlu0 %5821
        %v5825 = vadd.f32 %v5804, %v5820
        %v5826 = vadd.f32 %v5805, %v5822
        %s5827 = sld [smem:[#allocation8 + $0x140]]
        %v5828 = vstv %s5827
        %v5829 = vmul.f32 %v5828, %v5294
        %v5830 = vmul.f32 %v5828, %v5295
        %v5831 = vmul.f32 %v5828, %v5296
        %v5835 = vrot.slane %v5829, 1
        %v5836 = vrot.slane %v5830, 1
        %v5837 = vsel %vm339, %v5835, %v5836
        %v5838 = vrot.slane %v5831, 1
        %v5839 = vsel %vm339, %v5836, %v5838
        %5840 = vrot.lane.b32.xlu0 %v5837, 126
        %v5841 = vpop.permute.xlu0 %5840
        %5842 = vrot.lane.b32.xlu0 %v5839, 126
        %v5843 = vpop.permute.xlu0 %5842
        %v5846 = vadd.f32 %v5825, %v5841
        %v5847 = vadd.f32 %v5826, %v5843
        %s5848 = sld [smem:[#allocation8 + $0x141]]
        %v5849 = vstv %s5848
        %v5850 = vmul.f32 %v5849, %v5294
        %v5851 = vmul.f32 %v5849, %v5295
        %v5852 = vmul.f32 %v5849, %v5296
        %v5856 = vrot.slane %v5850, 2
        %v5857 = vrot.slane %v5851, 2
        %v5858 = vsel %vm399, %v5856, %v5857
        %v5859 = vrot.slane %v5852, 2
        %v5860 = vsel %vm399, %v5857, %v5859
        %v5863 = vadd.f32 %v5846, %v5858
        %v5864 = vadd.f32 %v5847, %v5860
        %s5865 = sld [smem:[#allocation8 + $0x142]]
        %v5866 = vstv %s5865
        %v5867 = vmul.f32 %v5866, %v5294
        %v5868 = vmul.f32 %v5866, %v5295
        %v5869 = vmul.f32 %v5866, %v5296
        %v5873 = vrot.slane %v5867, 2
        %v5874 = vrot.slane %v5868, 2
        %v5875 = vsel %vm399, %v5873, %v5874
        %v5876 = vrot.slane %v5869, 2
        %v5877 = vsel %vm399, %v5874, %v5876
        %5878 = vrot.lane.b32.xlu0 %v5875, 127
        %v5879 = vpop.permute.xlu0 %5878
        %5880 = vrot.lane.b32.xlu0 %v5877, 127
        %v5881 = vpop.permute.xlu0 %5880
        %v5884 = vadd.f32 %v5863, %v5879
        %v5885 = vadd.f32 %v5864, %v5881
        %s5886 = sld [smem:[#allocation8 + $0x143]]
        %v5887 = vstv %s5886
        %v5888 = vmul.f32 %v5887, %v5294
        %v5889 = vmul.f32 %v5887, %v5295
        %v5890 = vmul.f32 %v5887, %v5296
        %v5894 = vrot.slane %v5888, 2
        %v5895 = vrot.slane %v5889, 2
        %v5896 = vsel %vm399, %v5894, %v5895
        %v5897 = vrot.slane %v5890, 2
        %v5898 = vsel %vm399, %v5895, %v5897
        %5899 = vrot.lane.b32.xlu0 %v5896, 126
        %v5900 = vpop.permute.xlu0 %5899
        %5901 = vrot.lane.b32.xlu0 %v5898, 126
        %v5902 = vpop.permute.xlu0 %5901
        %v5905 = vadd.f32 %v5884, %v5900
        %v5906 = vadd.f32 %v5885, %v5902
        %v5907 = vmax.f32 %v5905, 0.0
        %v5908 = vmax.f32 %v5906, 0.0
        %s5909 = sld [smem:[#allocation9 + $0x9]]
        %v5910 = vstv %s5909
        %s5911 = sld [smem:[#allocation8 + $0x144]]
        %v5912 = vstv %s5911
        %v5913 = vmul.f32 %v5912, %v5285
        %v5914 = vmul.f32 %v5912, %v5286
        %v5915 = vadd.f32 %v5910, %v5913
        %v5916 = vadd.f32 %v5910, %v5914
        %s5917 = sld [smem:[#allocation8 + $0x145]]
        %v5918 = vstv %s5917
        %v5919 = vmul.f32 %v5918, %v5285
        %v5920 = vmul.f32 %v5918, %v5286
        %5923 = vrot.lane.b32.xlu0 %v5919, 127
        %v5924 = vpop.permute.xlu0 %5923
        %5925 = vrot.lane.b32.xlu0 %v5920, 127
        %v5926 = vpop.permute.xlu0 %5925
        %v5929 = vadd.f32 %v5915, %v5924
        %v5930 = vadd.f32 %v5916, %v5926
        %s5931 = sld [smem:[#allocation8 + $0x146]]
        %v5932 = vstv %s5931
        %v5933 = vmul.f32 %v5932, %v5285
        %v5934 = vmul.f32 %v5932, %v5286
        %5937 = vrot.lane.b32.xlu0 %v5933, 126
        %v5938 = vpop.permute.xlu0 %5937
        %5939 = vrot.lane.b32.xlu0 %v5934, 126
        %v5940 = vpop.permute.xlu0 %5939
        %v5943 = vadd.f32 %v5929, %v5938
        %v5944 = vadd.f32 %v5930, %v5940
        %s5945 = sld [smem:[#allocation8 + $0x147]]
        %v5946 = vstv %s5945
        %v5947 = vmul.f32 %v5946, %v5285
        %v5948 = vmul.f32 %v5946, %v5286
        %v5949 = vmul.f32 %v5946, %v5287
        %v5953 = vrot.slane %v5947, 1
        %v5954 = vrot.slane %v5948, 1
        %v5955 = vsel %vm339, %v5953, %v5954
        %v5956 = vrot.slane %v5949, 1
        %v5957 = vsel %vm339, %v5954, %v5956
        %v5960 = vadd.f32 %v5943, %v5955
        %v5961 = vadd.f32 %v5944, %v5957
        %s5962 = sld [smem:[#allocation8 + $0x148]]
        %v5963 = vstv %s5962
        %v5964 = vmul.f32 %v5963, %v5285
        %v5965 = vmul.f32 %v5963, %v5286
        %v5966 = vmul.f32 %v5963, %v5287
        %v5970 = vrot.slane %v5964, 1
        %v5971 = vrot.slane %v5965, 1
        %v5972 = vsel %vm339, %v5970, %v5971
        %v5973 = vrot.slane %v5966, 1
        %v5974 = vsel %vm339, %v5971, %v5973
        %5975 = vrot.lane.b32.xlu0 %v5972, 127
        %v5976 = vpop.permute.xlu0 %5975
        %5977 = vrot.lane.b32.xlu0 %v5974, 127
        %v5978 = vpop.permute.xlu0 %5977
        %v5981 = vadd.f32 %v5960, %v5976
        %v5982 = vadd.f32 %v5961, %v5978
        %s5983 = sld [smem:[#allocation8 + $0x149]]
        %v5984 = vstv %s5983
        %v5985 = vmul.f32 %v5984, %v5285
        %v5986 = vmul.f32 %v5984, %v5286
        %v5987 = vmul.f32 %v5984, %v5287
        %v5991 = vrot.slane %v5985, 1
        %v5992 = vrot.slane %v5986, 1
        %v5993 = vsel %vm339, %v5991, %v5992
        %v5994 = vrot.slane %v5987, 1
        %v5995 = vsel %vm339, %v5992, %v5994
        %5996 = vrot.lane.b32.xlu0 %v5993, 126
        %v5997 = vpop.permute.xlu0 %5996
        %5998 = vrot.lane.b32.xlu0 %v5995, 126
        %v5999 = vpop.permute.xlu0 %5998
        %v6002 = vadd.f32 %v5981, %v5997
        %v6003 = vadd.f32 %v5982, %v5999
        %s6004 = sld [smem:[#allocation8 + $0x14a]]
        %v6005 = vstv %s6004
        %v6006 = vmul.f32 %v6005, %v5285
        %v6007 = vmul.f32 %v6005, %v5286
        %v6008 = vmul.f32 %v6005, %v5287
        %v6012 = vrot.slane %v6006, 2
        %v6013 = vrot.slane %v6007, 2
        %v6014 = vsel %vm399, %v6012, %v6013
        %v6015 = vrot.slane %v6008, 2
        %v6016 = vsel %vm399, %v6013, %v6015
        %v6019 = vadd.f32 %v6002, %v6014
        %v6020 = vadd.f32 %v6003, %v6016
        %s6021 = sld [smem:[#allocation8 + $0x14b]]
        %v6022 = vstv %s6021
        %v6023 = vmul.f32 %v6022, %v5285
        %v6024 = vmul.f32 %v6022, %v5286
        %v6025 = vmul.f32 %v6022, %v5287
        %v6029 = vrot.slane %v6023, 2
        %v6030 = vrot.slane %v6024, 2
        %v6031 = vsel %vm399, %v6029, %v6030
        %v6032 = vrot.slane %v6025, 2
        %v6033 = vsel %vm399, %v6030, %v6032
        %6034 = vrot.lane.b32.xlu0 %v6031, 127
        %v6035 = vpop.permute.xlu0 %6034
        %6036 = vrot.lane.b32.xlu0 %v6033, 127
        %v6037 = vpop.permute.xlu0 %6036
        %v6040 = vadd.f32 %v6019, %v6035
        %v6041 = vadd.f32 %v6020, %v6037
        %s6042 = sld [smem:[#allocation8 + $0x14c]]
        %v6043 = vstv %s6042
        %v6044 = vmul.f32 %v6043, %v5285
        %v6045 = vmul.f32 %v6043, %v5286
        %v6046 = vmul.f32 %v6043, %v5287
        %v6050 = vrot.slane %v6044, 2
        %v6051 = vrot.slane %v6045, 2
        %v6052 = vsel %vm399, %v6050, %v6051
        %v6053 = vrot.slane %v6046, 2
        %v6054 = vsel %vm399, %v6051, %v6053
        %6055 = vrot.lane.b32.xlu0 %v6052, 126
        %v6056 = vpop.permute.xlu0 %6055
        %6057 = vrot.lane.b32.xlu0 %v6054, 126
        %v6058 = vpop.permute.xlu0 %6057
        %v6061 = vadd.f32 %v6040, %v6056
        %v6062 = vadd.f32 %v6041, %v6058
        %s6063 = sld [smem:[#allocation8 + $0x14d]]
        %v6064 = vstv %s6063
        %v6065 = vmul.f32 %v6064, %v5288
        %v6066 = vmul.f32 %v6064, %v5289
        %v6067 = vadd.f32 %v6061, %v6065
        %v6068 = vadd.f32 %v6062, %v6066
        %s6069 = sld [smem:[#allocation8 + $0x14e]]
        %v6070 = vstv %s6069
        %v6071 = vmul.f32 %v6070, %v5288
        %v6072 = vmul.f32 %v6070, %v5289
        %6075 = vrot.lane.b32.xlu0 %v6071, 127
        %v6076 = vpop.permute.xlu0 %6075
        %6077 = vrot.lane.b32.xlu0 %v6072, 127
        %v6078 = vpop.permute.xlu0 %6077
        %v6081 = vadd.f32 %v6067, %v6076
        %v6082 = vadd.f32 %v6068, %v6078
        %s6083 = sld [smem:[#allocation8 + $0x14f]]
        %v6084 = vstv %s6083
        %v6085 = vmul.f32 %v6084, %v5288
        %v6086 = vmul.f32 %v6084, %v5289
        %6089 = vrot.lane.b32.xlu0 %v6085, 126
        %v6090 = vpop.permute.xlu0 %6089
        %6091 = vrot.lane.b32.xlu0 %v6086, 126
        %v6092 = vpop.permute.xlu0 %6091
        %v6095 = vadd.f32 %v6081, %v6090
        %v6096 = vadd.f32 %v6082, %v6092
        %s6097 = sld [smem:[#allocation8 + $0x150]]
        %v6098 = vstv %s6097
        %v6099 = vmul.f32 %v6098, %v5288
        %v6100 = vmul.f32 %v6098, %v5289
        %v6101 = vmul.f32 %v6098, %v5290
        %v6105 = vrot.slane %v6099, 1
        %v6106 = vrot.slane %v6100, 1
        %v6107 = vsel %vm339, %v6105, %v6106
        %v6108 = vrot.slane %v6101, 1
        %v6109 = vsel %vm339, %v6106, %v6108
        %v6112 = vadd.f32 %v6095, %v6107
        %v6113 = vadd.f32 %v6096, %v6109
        %s6114 = sld [smem:[#allocation8 + $0x151]]
        %v6115 = vstv %s6114
        %v6116 = vmul.f32 %v6115, %v5288
        %v6117 = vmul.f32 %v6115, %v5289
        %v6118 = vmul.f32 %v6115, %v5290
        %v6122 = vrot.slane %v6116, 1
        %v6123 = vrot.slane %v6117, 1
        %v6124 = vsel %vm339, %v6122, %v6123
        %v6125 = vrot.slane %v6118, 1
        %v6126 = vsel %vm339, %v6123, %v6125
        %6127 = vrot.lane.b32.xlu0 %v6124, 127
        %v6128 = vpop.permute.xlu0 %6127
        %6129 = vrot.lane.b32.xlu0 %v6126, 127
        %v6130 = vpop.permute.xlu0 %6129
        %v6133 = vadd.f32 %v6112, %v6128
        %v6134 = vadd.f32 %v6113, %v6130
        %s6135 = sld [smem:[#allocation8 + $0x152]]
        %v6136 = vstv %s6135
        %v6137 = vmul.f32 %v6136, %v5288
        %v6138 = vmul.f32 %v6136, %v5289
        %v6139 = vmul.f32 %v6136, %v5290
        %v6143 = vrot.slane %v6137, 1
        %v6144 = vrot.slane %v6138, 1
        %v6145 = vsel %vm339, %v6143, %v6144
        %v6146 = vrot.slane %v6139, 1
        %v6147 = vsel %vm339, %v6144, %v6146
        %6148 = vrot.lane.b32.xlu0 %v6145, 126
        %v6149 = vpop.permute.xlu0 %6148
        %6150 = vrot.lane.b32.xlu0 %v6147, 126
        %v6151 = vpop.permute.xlu0 %6150
        %v6154 = vadd.f32 %v6133, %v6149
        %v6155 = vadd.f32 %v6134, %v6151
        %s6156 = sld [smem:[#allocation8 + $0x153]]
        %v6157 = vstv %s6156
        %v6158 = vmul.f32 %v6157, %v5288
        %v6159 = vmul.f32 %v6157, %v5289
        %v6160 = vmul.f32 %v6157, %v5290
        %v6164 = vrot.slane %v6158, 2
        %v6165 = vrot.slane %v6159, 2
        %v6166 = vsel %vm399, %v6164, %v6165
        %v6167 = vrot.slane %v6160, 2
        %v6168 = vsel %vm399, %v6165, %v6167
        %v6171 = vadd.f32 %v6154, %v6166
        %v6172 = vadd.f32 %v6155, %v6168
        %s6173 = sld [smem:[#allocation8 + $0x154]]
        %v6174 = vstv %s6173
        %v6175 = vmul.f32 %v6174, %v5288
        %v6176 = vmul.f32 %v6174, %v5289
        %v6177 = vmul.f32 %v6174, %v5290
        %v6181 = vrot.slane %v6175, 2
        %v6182 = vrot.slane %v6176, 2
        %v6183 = vsel %vm399, %v6181, %v6182
        %v6184 = vrot.slane %v6177, 2
        %v6185 = vsel %vm399, %v6182, %v6184
        %6186 = vrot.lane.b32.xlu0 %v6183, 127
        %v6187 = vpop.permute.xlu0 %6186
        %6188 = vrot.lane.b32.xlu0 %v6185, 127
        %v6189 = vpop.permute.xlu0 %6188
        %v6192 = vadd.f32 %v6171, %v6187
        %v6193 = vadd.f32 %v6172, %v6189
        %s6194 = sld [smem:[#allocation8 + $0x155]]
        %v6195 = vstv %s6194
        %v6196 = vmul.f32 %v6195, %v5288
        %v6197 = vmul.f32 %v6195, %v5289
        %v6198 = vmul.f32 %v6195, %v5290
        %v6202 = vrot.slane %v6196, 2
        %v6203 = vrot.slane %v6197, 2
        %v6204 = vsel %vm399, %v6202, %v6203
        %v6205 = vrot.slane %v6198, 2
        %v6206 = vsel %vm399, %v6203, %v6205
        %6207 = vrot.lane.b32.xlu0 %v6204, 126
        %v6208 = vpop.permute.xlu0 %6207
        %6209 = vrot.lane.b32.xlu0 %v6206, 126
        %v6210 = vpop.permute.xlu0 %6209
        %v6213 = vadd.f32 %v6192, %v6208
        %v6214 = vadd.f32 %v6193, %v6210
        %s6215 = sld [smem:[#allocation8 + $0x156]]
        %v6216 = vstv %s6215
        %v6217 = vmul.f32 %v6216, %v5291
        %v6218 = vmul.f32 %v6216, %v5292
        %v6219 = vadd.f32 %v6213, %v6217
        %v6220 = vadd.f32 %v6214, %v6218
        %s6221 = sld [smem:[#allocation8 + $0x157]]
        %v6222 = vstv %s6221
        %v6223 = vmul.f32 %v6222, %v5291
        %v6224 = vmul.f32 %v6222, %v5292
        %6227 = vrot.lane.b32.xlu0 %v6223, 127
        %v6228 = vpop.permute.xlu0 %6227
        %6229 = vrot.lane.b32.xlu0 %v6224, 127
        %v6230 = vpop.permute.xlu0 %6229
        %v6233 = vadd.f32 %v6219, %v6228
        %v6234 = vadd.f32 %v6220, %v6230
        %s6235 = sld [smem:[#allocation8 + $0x158]]
        %v6236 = vstv %s6235
        %v6237 = vmul.f32 %v6236, %v5291
        %v6238 = vmul.f32 %v6236, %v5292
        %6241 = vrot.lane.b32.xlu0 %v6237, 126
        %v6242 = vpop.permute.xlu0 %6241
        %6243 = vrot.lane.b32.xlu0 %v6238, 126
        %v6244 = vpop.permute.xlu0 %6243
        %v6247 = vadd.f32 %v6233, %v6242
        %v6248 = vadd.f32 %v6234, %v6244
        %s6249 = sld [smem:[#allocation8 + $0x159]]
        %v6250 = vstv %s6249
        %v6251 = vmul.f32 %v6250, %v5291
        %v6252 = vmul.f32 %v6250, %v5292
        %v6253 = vmul.f32 %v6250, %v5293
        %v6257 = vrot.slane %v6251, 1
        %v6258 = vrot.slane %v6252, 1
        %v6259 = vsel %vm339, %v6257, %v6258
        %v6260 = vrot.slane %v6253, 1
        %v6261 = vsel %vm339, %v6258, %v6260
        %v6264 = vadd.f32 %v6247, %v6259
        %v6265 = vadd.f32 %v6248, %v6261
        %s6266 = sld [smem:[#allocation8 + $0x15a]]
        %v6267 = vstv %s6266
        %v6268 = vmul.f32 %v6267, %v5291
        %v6269 = vmul.f32 %v6267, %v5292
        %v6270 = vmul.f32 %v6267, %v5293
        %v6274 = vrot.slane %v6268, 1
        %v6275 = vrot.slane %v6269, 1
        %v6276 = vsel %vm339, %v6274, %v6275
        %v6277 = vrot.slane %v6270, 1
        %v6278 = vsel %vm339, %v6275, %v6277
        %6279 = vrot.lane.b32.xlu0 %v6276, 127
        %v6280 = vpop.permute.xlu0 %6279
        %6281 = vrot.lane.b32.xlu0 %v6278, 127
        %v6282 = vpop.permute.xlu0 %6281
        %v6285 = vadd.f32 %v6264, %v6280
        %v6286 = vadd.f32 %v6265, %v6282
        %s6287 = sld [smem:[#allocation8 + $0x15b]]
        %v6288 = vstv %s6287
        %v6289 = vmul.f32 %v6288, %v5291
        %v6290 = vmul.f32 %v6288, %v5292
        %v6291 = vmul.f32 %v6288, %v5293
        %v6295 = vrot.slane %v6289, 1
        %v6296 = vrot.slane %v6290, 1
        %v6297 = vsel %vm339, %v6295, %v6296
        %v6298 = vrot.slane %v6291, 1
        %v6299 = vsel %vm339, %v6296, %v6298
        %6300 = vrot.lane.b32.xlu0 %v6297, 126
        %v6301 = vpop.permute.xlu0 %6300
        %6302 = vrot.lane.b32.xlu0 %v6299, 126
        %v6303 = vpop.permute.xlu0 %6302
        %v6306 = vadd.f32 %v6285, %v6301
        %v6307 = vadd.f32 %v6286, %v6303
        %s6308 = sld [smem:[#allocation8 + $0x15c]]
        %v6309 = vstv %s6308
        %v6310 = vmul.f32 %v6309, %v5291
        %v6311 = vmul.f32 %v6309, %v5292
        %v6312 = vmul.f32 %v6309, %v5293
        %v6316 = vrot.slane %v6310, 2
        %v6317 = vrot.slane %v6311, 2
        %v6318 = vsel %vm399, %v6316, %v6317
        %v6319 = vrot.slane %v6312, 2
        %v6320 = vsel %vm399, %v6317, %v6319
        %v6323 = vadd.f32 %v6306, %v6318
        %v6324 = vadd.f32 %v6307, %v6320
        %s6325 = sld [smem:[#allocation8 + $0x15d]]
        %v6326 = vstv %s6325
        %v6327 = vmul.f32 %v6326, %v5291
        %v6328 = vmul.f32 %v6326, %v5292
        %v6329 = vmul.f32 %v6326, %v5293
        %v6333 = vrot.slane %v6327, 2
        %v6334 = vrot.slane %v6328, 2
        %v6335 = vsel %vm399, %v6333, %v6334
        %v6336 = vrot.slane %v6329, 2
        %v6337 = vsel %vm399, %v6334, %v6336
        %6338 = vrot.lane.b32.xlu0 %v6335, 127
        %v6339 = vpop.permute.xlu0 %6338
        %6340 = vrot.lane.b32.xlu0 %v6337, 127
        %v6341 = vpop.permute.xlu0 %6340
        %v6344 = vadd.f32 %v6323, %v6339
        %v6345 = vadd.f32 %v6324, %v6341
        %s6346 = sld [smem:[#allocation8 + $0x15e]]
        %v6347 = vstv %s6346
        %v6348 = vmul.f32 %v6347, %v5291
        %v6349 = vmul.f32 %v6347, %v5292
        %v6350 = vmul.f32 %v6347, %v5293
        %v6354 = vrot.slane %v6348, 2
        %v6355 = vrot.slane %v6349, 2
        %v6356 = vsel %vm399, %v6354, %v6355
        %v6357 = vrot.slane %v6350, 2
        %v6358 = vsel %vm399, %v6355, %v6357
        %6359 = vrot.lane.b32.xlu0 %v6356, 126
        %v6360 = vpop.permute.xlu0 %6359
        %6361 = vrot.lane.b32.xlu0 %v6358, 126
        %v6362 = vpop.permute.xlu0 %6361
        %v6365 = vadd.f32 %v6344, %v6360
        %v6366 = vadd.f32 %v6345, %v6362
        %s6367 = sld [smem:[#allocation8 + $0x15f]]
        %v6368 = vstv %s6367
        %v6369 = vmul.f32 %v6368, %v5294
        %v6370 = vmul.f32 %v6368, %v5295
        %v6371 = vadd.f32 %v6365, %v6369
        %v6372 = vadd.f32 %v6366, %v6370
        %s6373 = sld [smem:[#allocation8 + $0x160]]
        %v6374 = vstv %s6373
        %v6375 = vmul.f32 %v6374, %v5294
        %v6376 = vmul.f32 %v6374, %v5295
        %6379 = vrot.lane.b32.xlu0 %v6375, 127
        %v6380 = vpop.permute.xlu0 %6379
        %6381 = vrot.lane.b32.xlu0 %v6376, 127
        %v6382 = vpop.permute.xlu0 %6381
        %v6385 = vadd.f32 %v6371, %v6380
        %v6386 = vadd.f32 %v6372, %v6382
        %s6387 = sld [smem:[#allocation8 + $0x161]]
        %v6388 = vstv %s6387
        %v6389 = vmul.f32 %v6388, %v5294
        %v6390 = vmul.f32 %v6388, %v5295
        %6393 = vrot.lane.b32.xlu0 %v6389, 126
        %v6394 = vpop.permute.xlu0 %6393
        %6395 = vrot.lane.b32.xlu0 %v6390, 126
        %v6396 = vpop.permute.xlu0 %6395
        %v6399 = vadd.f32 %v6385, %v6394
        %v6400 = vadd.f32 %v6386, %v6396
        %s6401 = sld [smem:[#allocation8 + $0x162]]
        %v6402 = vstv %s6401
        %v6403 = vmul.f32 %v6402, %v5294
        %v6404 = vmul.f32 %v6402, %v5295
        %v6405 = vmul.f32 %v6402, %v5296
        %v6409 = vrot.slane %v6403, 1
        %v6410 = vrot.slane %v6404, 1
        %v6411 = vsel %vm339, %v6409, %v6410
        %v6412 = vrot.slane %v6405, 1
        %v6413 = vsel %vm339, %v6410, %v6412
        %v6416 = vadd.f32 %v6399, %v6411
        %v6417 = vadd.f32 %v6400, %v6413
        %s6418 = sld [smem:[#allocation8 + $0x163]]
        %v6419 = vstv %s6418
        %v6420 = vmul.f32 %v6419, %v5294
        %v6421 = vmul.f32 %v6419, %v5295
        %v6422 = vmul.f32 %v6419, %v5296
        %v6426 = vrot.slane %v6420, 1
        %v6427 = vrot.slane %v6421, 1
        %v6428 = vsel %vm339, %v6426, %v6427
        %v6429 = vrot.slane %v6422, 1
        %v6430 = vsel %vm339, %v6427, %v6429
        %6431 = vrot.lane.b32.xlu0 %v6428, 127
        %v6432 = vpop.permute.xlu0 %6431
        %6433 = vrot.lane.b32.xlu0 %v6430, 127
        %v6434 = vpop.permute.xlu0 %6433
        %v6437 = vadd.f32 %v6416, %v6432
        %v6438 = vadd.f32 %v6417, %v6434
        %s6439 = sld [smem:[#allocation8 + $0x164]]
        %v6440 = vstv %s6439
        %v6441 = vmul.f32 %v6440, %v5294
        %v6442 = vmul.f32 %v6440, %v5295
        %v6443 = vmul.f32 %v6440, %v5296
        %v6447 = vrot.slane %v6441, 1
        %v6448 = vrot.slane %v6442, 1
        %v6449 = vsel %vm339, %v6447, %v6448
        %v6450 = vrot.slane %v6443, 1
        %v6451 = vsel %vm339, %v6448, %v6450
        %6452 = vrot.lane.b32.xlu0 %v6449, 126
        %v6453 = vpop.permute.xlu0 %6452
        %6454 = vrot.lane.b32.xlu0 %v6451, 126
        %v6455 = vpop.permute.xlu0 %6454
        %v6458 = vadd.f32 %v6437, %v6453
        %v6459 = vadd.f32 %v6438, %v6455
        %s6460 = sld [smem:[#allocation8 + $0x165]]
        %v6461 = vstv %s6460
        %v6462 = vmul.f32 %v6461, %v5294
        %v6463 = vmul.f32 %v6461, %v5295
        %v6464 = vmul.f32 %v6461, %v5296
        %v6468 = vrot.slane %v6462, 2
        %v6469 = vrot.slane %v6463, 2
        %v6470 = vsel %vm399, %v6468, %v6469
        %v6471 = vrot.slane %v6464, 2
        %v6472 = vsel %vm399, %v6469, %v6471
        %v6475 = vadd.f32 %v6458, %v6470
        %v6476 = vadd.f32 %v6459, %v6472
        %s6477 = sld [smem:[#allocation8 + $0x166]]
        %v6478 = vstv %s6477
        %v6479 = vmul.f32 %v6478, %v5294
        %v6480 = vmul.f32 %v6478, %v5295
        %v6481 = vmul.f32 %v6478, %v5296
        %v6485 = vrot.slane %v6479, 2
        %v6486 = vrot.slane %v6480, 2
        %v6487 = vsel %vm399, %v6485, %v6486
        %v6488 = vrot.slane %v6481, 2
        %v6489 = vsel %vm399, %v6486, %v6488
        %6490 = vrot.lane.b32.xlu0 %v6487, 127
        %v6491 = vpop.permute.xlu0 %6490
        %6492 = vrot.lane.b32.xlu0 %v6489, 127
        %v6493 = vpop.permute.xlu0 %6492
        %v6496 = vadd.f32 %v6475, %v6491
        %v6497 = vadd.f32 %v6476, %v6493
        %s6498 = sld [smem:[#allocation8 + $0x167]]
        %v6499 = vstv %s6498
        %v6500 = vmul.f32 %v6499, %v5294
        %v6501 = vmul.f32 %v6499, %v5295
        %v6502 = vmul.f32 %v6499, %v5296
        %v6506 = vrot.slane %v6500, 2
        %v6507 = vrot.slane %v6501, 2
        %v6508 = vsel %vm399, %v6506, %v6507
        %v6509 = vrot.slane %v6502, 2
        %v6510 = vsel %vm399, %v6507, %v6509
        %6511 = vrot.lane.b32.xlu0 %v6508, 126
        %v6512 = vpop.permute.xlu0 %6511
        %6513 = vrot.lane.b32.xlu0 %v6510, 126
        %v6514 = vpop.permute.xlu0 %6513
        %v6517 = vadd.f32 %v6496, %v6512
        %v6518 = vadd.f32 %v6497, %v6514
        %v6519 = vmax.f32 %v6517, 0.0
        %v6520 = vmax.f32 %v6518, 0.0
        %s6521 = sld [smem:[#allocation9 + $0xa]]
        %v6522 = vstv %s6521
        %s6523 = sld [smem:[#allocation8 + $0x168]]
        %v6524 = vstv %s6523
        %v6525 = vmul.f32 %v6524, %v5285
        %v6526 = vmul.f32 %v6524, %v5286
        %v6527 = vadd.f32 %v6522, %v6525
        %v6528 = vadd.f32 %v6522, %v6526
        %s6529 = sld [smem:[#allocation8 + $0x169]]
        %v6530 = vstv %s6529
        %v6531 = vmul.f32 %v6530, %v5285
        %v6532 = vmul.f32 %v6530, %v5286
        %6535 = vrot.lane.b32.xlu0 %v6531, 127
        %v6536 = vpop.permute.xlu0 %6535
        %6537 = vrot.lane.b32.xlu0 %v6532, 127
        %v6538 = vpop.permute.xlu0 %6537
        %v6541 = vadd.f32 %v6527, %v6536
        %v6542 = vadd.f32 %v6528, %v6538
        %s6543 = sld [smem:[#allocation8 + $0x16a]]
        %v6544 = vstv %s6543
        %v6545 = vmul.f32 %v6544, %v5285
        %v6546 = vmul.f32 %v6544, %v5286
        %6549 = vrot.lane.b32.xlu0 %v6545, 126
        %v6550 = vpop.permute.xlu0 %6549
        %6551 = vrot.lane.b32.xlu0 %v6546, 126
        %v6552 = vpop.permute.xlu0 %6551
        %v6555 = vadd.f32 %v6541, %v6550
        %v6556 = vadd.f32 %v6542, %v6552
        %s6557 = sld [smem:[#allocation8 + $0x16b]]
        %v6558 = vstv %s6557
        %v6559 = vmul.f32 %v6558, %v5285
        %v6560 = vmul.f32 %v6558, %v5286
        %v6561 = vmul.f32 %v6558, %v5287
        %v6565 = vrot.slane %v6559, 1
        %v6566 = vrot.slane %v6560, 1
        %v6567 = vsel %vm339, %v6565, %v6566
        %v6568 = vrot.slane %v6561, 1
        %v6569 = vsel %vm339, %v6566, %v6568
        %v6572 = vadd.f32 %v6555, %v6567
        %v6573 = vadd.f32 %v6556, %v6569
        %s6574 = sld [smem:[#allocation8 + $0x16c]]
        %v6575 = vstv %s6574
        %v6576 = vmul.f32 %v6575, %v5285
        %v6577 = vmul.f32 %v6575, %v5286
        %v6578 = vmul.f32 %v6575, %v5287
        %v6582 = vrot.slane %v6576, 1
        %v6583 = vrot.slane %v6577, 1
        %v6584 = vsel %vm339, %v6582, %v6583
        %v6585 = vrot.slane %v6578, 1
        %v6586 = vsel %vm339, %v6583, %v6585
        %6587 = vrot.lane.b32.xlu0 %v6584, 127
        %v6588 = vpop.permute.xlu0 %6587
        %6589 = vrot.lane.b32.xlu0 %v6586, 127
        %v6590 = vpop.permute.xlu0 %6589
        %v6593 = vadd.f32 %v6572, %v6588
        %v6594 = vadd.f32 %v6573, %v6590
        %s6595 = sld [smem:[#allocation8 + $0x16d]]
        %v6596 = vstv %s6595
        %v6597 = vmul.f32 %v6596, %v5285
        %v6598 = vmul.f32 %v6596, %v5286
        %v6599 = vmul.f32 %v6596, %v5287
        %v6603 = vrot.slane %v6597, 1
        %v6604 = vrot.slane %v6598, 1
        %v6605 = vsel %vm339, %v6603, %v6604
        %v6606 = vrot.slane %v6599, 1
        %v6607 = vsel %vm339, %v6604, %v6606
        %6608 = vrot.lane.b32.xlu0 %v6605, 126
        %v6609 = vpop.permute.xlu0 %6608
        %6610 = vrot.lane.b32.xlu0 %v6607, 126
        %v6611 = vpop.permute.xlu0 %6610
        %v6614 = vadd.f32 %v6593, %v6609
        %v6615 = vadd.f32 %v6594, %v6611
        %s6616 = sld [smem:[#allocation8 + $0x16e]]
        %v6617 = vstv %s6616
        %v6618 = vmul.f32 %v6617, %v5285
        %v6619 = vmul.f32 %v6617, %v5286
        %v6620 = vmul.f32 %v6617, %v5287
        %v6624 = vrot.slane %v6618, 2
        %v6625 = vrot.slane %v6619, 2
        %v6626 = vsel %vm399, %v6624, %v6625
        %v6627 = vrot.slane %v6620, 2
        %v6628 = vsel %vm399, %v6625, %v6627
        %v6631 = vadd.f32 %v6614, %v6626
        %v6632 = vadd.f32 %v6615, %v6628
        %s6633 = sld [smem:[#allocation8 + $0x16f]]
        %v6634 = vstv %s6633
        %v6635 = vmul.f32 %v6634, %v5285
        %v6636 = vmul.f32 %v6634, %v5286
        %v6637 = vmul.f32 %v6634, %v5287
        %v6641 = vrot.slane %v6635, 2
        %v6642 = vrot.slane %v6636, 2
        %v6643 = vsel %vm399, %v6641, %v6642
        %v6644 = vrot.slane %v6637, 2
        %v6645 = vsel %vm399, %v6642, %v6644
        %6646 = vrot.lane.b32.xlu0 %v6643, 127
        %v6647 = vpop.permute.xlu0 %6646
        %6648 = vrot.lane.b32.xlu0 %v6645, 127
        %v6649 = vpop.permute.xlu0 %6648
        %v6652 = vadd.f32 %v6631, %v6647
        %v6653 = vadd.f32 %v6632, %v6649
        %s6654 = sld [smem:[#allocation8 + $0x170]]
        %v6655 = vstv %s6654
        %v6656 = vmul.f32 %v6655, %v5285
        %v6657 = vmul.f32 %v6655, %v5286
        %v6658 = vmul.f32 %v6655, %v5287
        %v6662 = vrot.slane %v6656, 2
        %v6663 = vrot.slane %v6657, 2
        %v6664 = vsel %vm399, %v6662, %v6663
        %v6665 = vrot.slane %v6658, 2
        %v6666 = vsel %vm399, %v6663, %v6665
        %6667 = vrot.lane.b32.xlu0 %v6664, 126
        %v6668 = vpop.permute.xlu0 %6667
        %6669 = vrot.lane.b32.xlu0 %v6666, 126
        %v6670 = vpop.permute.xlu0 %6669
        %v6673 = vadd.f32 %v6652, %v6668
        %v6674 = vadd.f32 %v6653, %v6670
        %s6675 = sld [smem:[#allocation8 + $0x171]]
        %v6676 = vstv %s6675
        %v6677 = vmul.f32 %v6676, %v5288
        %v6678 = vmul.f32 %v6676, %v5289
        %v6679 = vadd.f32 %v6673, %v6677
        %v6680 = vadd.f32 %v6674, %v6678
        %s6681 = sld [smem:[#allocation8 + $0x172]]
        %v6682 = vstv %s6681
        %v6683 = vmul.f32 %v6682, %v5288
        %v6684 = vmul.f32 %v6682, %v5289
        %6687 = vrot.lane.b32.xlu0 %v6683, 127
        %v6688 = vpop.permute.xlu0 %6687
        %6689 = vrot.lane.b32.xlu0 %v6684, 127
        %v6690 = vpop.permute.xlu0 %6689
        %v6693 = vadd.f32 %v6679, %v6688
        %v6694 = vadd.f32 %v6680, %v6690
        %s6695 = sld [smem:[#allocation8 + $0x173]]
        %v6696 = vstv %s6695
        %v6697 = vmul.f32 %v6696, %v5288
        %v6698 = vmul.f32 %v6696, %v5289
        %6701 = vrot.lane.b32.xlu0 %v6697, 126
        %v6702 = vpop.permute.xlu0 %6701
        %6703 = vrot.lane.b32.xlu0 %v6698, 126
        %v6704 = vpop.permute.xlu0 %6703
        %v6707 = vadd.f32 %v6693, %v6702
        %v6708 = vadd.f32 %v6694, %v6704
        %s6709 = sld [smem:[#allocation8 + $0x174]]
        %v6710 = vstv %s6709
        %v6711 = vmul.f32 %v6710, %v5288
        %v6712 = vmul.f32 %v6710, %v5289
        %v6713 = vmul.f32 %v6710, %v5290
        %v6717 = vrot.slane %v6711, 1
        %v6718 = vrot.slane %v6712, 1
        %v6719 = vsel %vm339, %v6717, %v6718
        %v6720 = vrot.slane %v6713, 1
        %v6721 = vsel %vm339, %v6718, %v6720
        %v6724 = vadd.f32 %v6707, %v6719
        %v6725 = vadd.f32 %v6708, %v6721
        %s6726 = sld [smem:[#allocation8 + $0x175]]
        %v6727 = vstv %s6726
        %v6728 = vmul.f32 %v6727, %v5288
        %v6729 = vmul.f32 %v6727, %v5289
        %v6730 = vmul.f32 %v6727, %v5290
        %v6734 = vrot.slane %v6728, 1
        %v6735 = vrot.slane %v6729, 1
        %v6736 = vsel %vm339, %v6734, %v6735
        %v6737 = vrot.slane %v6730, 1
        %v6738 = vsel %vm339, %v6735, %v6737
        %6739 = vrot.lane.b32.xlu0 %v6736, 127
        %v6740 = vpop.permute.xlu0 %6739
        %6741 = vrot.lane.b32.xlu0 %v6738, 127
        %v6742 = vpop.permute.xlu0 %6741
        %v6745 = vadd.f32 %v6724, %v6740
        %v6746 = vadd.f32 %v6725, %v6742
        %s6747 = sld [smem:[#allocation8 + $0x176]]
        %v6748 = vstv %s6747
        %v6749 = vmul.f32 %v6748, %v5288
        %v6750 = vmul.f32 %v6748, %v5289
        %v6751 = vmul.f32 %v6748, %v5290
        %v6755 = vrot.slane %v6749, 1
        %v6756 = vrot.slane %v6750, 1
        %v6757 = vsel %vm339, %v6755, %v6756
        %v6758 = vrot.slane %v6751, 1
        %v6759 = vsel %vm339, %v6756, %v6758
        %6760 = vrot.lane.b32.xlu0 %v6757, 126
        %v6761 = vpop.permute.xlu0 %6760
        %6762 = vrot.lane.b32.xlu0 %v6759, 126
        %v6763 = vpop.permute.xlu0 %6762
        %v6766 = vadd.f32 %v6745, %v6761
        %v6767 = vadd.f32 %v6746, %v6763
        %s6768 = sld [smem:[#allocation8 + $0x177]]
        %v6769 = vstv %s6768
        %v6770 = vmul.f32 %v6769, %v5288
        %v6771 = vmul.f32 %v6769, %v5289
        %v6772 = vmul.f32 %v6769, %v5290
        %v6776 = vrot.slane %v6770, 2
        %v6777 = vrot.slane %v6771, 2
        %v6778 = vsel %vm399, %v6776, %v6777
        %v6779 = vrot.slane %v6772, 2
        %v6780 = vsel %vm399, %v6777, %v6779
        %v6783 = vadd.f32 %v6766, %v6778
        %v6784 = vadd.f32 %v6767, %v6780
        %s6785 = sld [smem:[#allocation8 + $0x178]]
        %v6786 = vstv %s6785
        %v6787 = vmul.f32 %v6786, %v5288
        %v6788 = vmul.f32 %v6786, %v5289
        %v6789 = vmul.f32 %v6786, %v5290
        %v6793 = vrot.slane %v6787, 2
        %v6794 = vrot.slane %v6788, 2
        %v6795 = vsel %vm399, %v6793, %v6794
        %v6796 = vrot.slane %v6789, 2
        %v6797 = vsel %vm399, %v6794, %v6796
        %6798 = vrot.lane.b32.xlu0 %v6795, 127
        %v6799 = vpop.permute.xlu0 %6798
        %6800 = vrot.lane.b32.xlu0 %v6797, 127
        %v6801 = vpop.permute.xlu0 %6800
        %v6804 = vadd.f32 %v6783, %v6799
        %v6805 = vadd.f32 %v6784, %v6801
        %s6806 = sld [smem:[#allocation8 + $0x179]]
        %v6807 = vstv %s6806
        %v6808 = vmul.f32 %v6807, %v5288
        %v6809 = vmul.f32 %v6807, %v5289
        %v6810 = vmul.f32 %v6807, %v5290
        %v6814 = vrot.slane %v6808, 2
        %v6815 = vrot.slane %v6809, 2
        %v6816 = vsel %vm399, %v6814, %v6815
        %v6817 = vrot.slane %v6810, 2
        %v6818 = vsel %vm399, %v6815, %v6817
        %6819 = vrot.lane.b32.xlu0 %v6816, 126
        %v6820 = vpop.permute.xlu0 %6819
        %6821 = vrot.lane.b32.xlu0 %v6818, 126
        %v6822 = vpop.permute.xlu0 %6821
        %v6825 = vadd.f32 %v6804, %v6820
        %v6826 = vadd.f32 %v6805, %v6822
        %s6827 = sld [smem:[#allocation8 + $0x17a]]
        %v6828 = vstv %s6827
        %v6829 = vmul.f32 %v6828, %v5291
        %v6830 = vmul.f32 %v6828, %v5292
        %v6831 = vadd.f32 %v6825, %v6829
        %v6832 = vadd.f32 %v6826, %v6830
        %s6833 = sld [smem:[#allocation8 + $0x17b]]
        %v6834 = vstv %s6833
        %v6835 = vmul.f32 %v6834, %v5291
        %v6836 = vmul.f32 %v6834, %v5292
        %6839 = vrot.lane.b32.xlu0 %v6835, 127
        %v6840 = vpop.permute.xlu0 %6839
        %6841 = vrot.lane.b32.xlu0 %v6836, 127
        %v6842 = vpop.permute.xlu0 %6841
        %v6845 = vadd.f32 %v6831, %v6840
        %v6846 = vadd.f32 %v6832, %v6842
        %s6847 = sld [smem:[#allocation8 + $0x17c]]
        %v6848 = vstv %s6847
        %v6849 = vmul.f32 %v6848, %v5291
        %v6850 = vmul.f32 %v6848, %v5292
        %6853 = vrot.lane.b32.xlu0 %v6849, 126
        %v6854 = vpop.permute.xlu0 %6853
        %6855 = vrot.lane.b32.xlu0 %v6850, 126
        %v6856 = vpop.permute.xlu0 %6855
        %v6859 = vadd.f32 %v6845, %v6854
        %v6860 = vadd.f32 %v6846, %v6856
        %s6861 = sld [smem:[#allocation8 + $0x17d]]
        %v6862 = vstv %s6861
        %v6863 = vmul.f32 %v6862, %v5291
        %v6864 = vmul.f32 %v6862, %v5292
        %v6865 = vmul.f32 %v6862, %v5293
        %v6869 = vrot.slane %v6863, 1
        %v6870 = vrot.slane %v6864, 1
        %v6871 = vsel %vm339, %v6869, %v6870
        %v6872 = vrot.slane %v6865, 1
        %v6873 = vsel %vm339, %v6870, %v6872
        %v6876 = vadd.f32 %v6859, %v6871
        %v6877 = vadd.f32 %v6860, %v6873
        %s6878 = sld [smem:[#allocation8 + $0x17e]]
        %v6879 = vstv %s6878
        %v6880 = vmul.f32 %v6879, %v5291
        %v6881 = vmul.f32 %v6879, %v5292
        %v6882 = vmul.f32 %v6879, %v5293
        %v6886 = vrot.slane %v6880, 1
        %v6887 = vrot.slane %v6881, 1
        %v6888 = vsel %vm339, %v6886, %v6887
        %v6889 = vrot.slane %v6882, 1
        %v6890 = vsel %vm339, %v6887, %v6889
        %6891 = vrot.lane.b32.xlu0 %v6888, 127
        %v6892 = vpop.permute.xlu0 %6891
        %6893 = vrot.lane.b32.xlu0 %v6890, 127
        %v6894 = vpop.permute.xlu0 %6893
        %v6897 = vadd.f32 %v6876, %v6892
        %v6898 = vadd.f32 %v6877, %v6894
        %s6899 = sld [smem:[#allocation8 + $0x17f]]
        %v6900 = vstv %s6899
        %v6901 = vmul.f32 %v6900, %v5291
        %v6902 = vmul.f32 %v6900, %v5292
        %v6903 = vmul.f32 %v6900, %v5293
        %v6907 = vrot.slane %v6901, 1
        %v6908 = vrot.slane %v6902, 1
        %v6909 = vsel %vm339, %v6907, %v6908
        %v6910 = vrot.slane %v6903, 1
        %v6911 = vsel %vm339, %v6908, %v6910
        %6912 = vrot.lane.b32.xlu0 %v6909, 126
        %v6913 = vpop.permute.xlu0 %6912
        %6914 = vrot.lane.b32.xlu0 %v6911, 126
        %v6915 = vpop.permute.xlu0 %6914
        %v6918 = vadd.f32 %v6897, %v6913
        %v6919 = vadd.f32 %v6898, %v6915
        %s6920 = sld [smem:[#allocation8 + $0x180]]
        %v6921 = vstv %s6920
        %v6922 = vmul.f32 %v6921, %v5291
        %v6923 = vmul.f32 %v6921, %v5292
        %v6924 = vmul.f32 %v6921, %v5293
        %v6928 = vrot.slane %v6922, 2
        %v6929 = vrot.slane %v6923, 2
        %v6930 = vsel %vm399, %v6928, %v6929
        %v6931 = vrot.slane %v6924, 2
        %v6932 = vsel %vm399, %v6929, %v6931
        %v6935 = vadd.f32 %v6918, %v6930
        %v6936 = vadd.f32 %v6919, %v6932
        %s6937 = sld [smem:[#allocation8 + $0x181]]
        %v6938 = vstv %s6937
        %v6939 = vmul.f32 %v6938, %v5291
        %v6940 = vmul.f32 %v6938, %v5292
        %v6941 = vmul.f32 %v6938, %v5293
        %v6945 = vrot.slane %v6939, 2
        %v6946 = vrot.slane %v6940, 2
        %v6947 = vsel %vm399, %v6945, %v6946
        %v6948 = vrot.slane %v6941, 2
        %v6949 = vsel %vm399, %v6946, %v6948
        %6950 = vrot.lane.b32.xlu0 %v6947, 127
        %v6951 = vpop.permute.xlu0 %6950
        %6952 = vrot.lane.b32.xlu0 %v6949, 127
        %v6953 = vpop.permute.xlu0 %6952
        %v6956 = vadd.f32 %v6935, %v6951
        %v6957 = vadd.f32 %v6936, %v6953
        %s6958 = sld [smem:[#allocation8 + $0x182]]
        %v6959 = vstv %s6958
        %v6960 = vmul.f32 %v6959, %v5291
        %v6961 = vmul.f32 %v6959, %v5292
        %v6962 = vmul.f32 %v6959, %v5293
        %v6966 = vrot.slane %v6960, 2
        %v6967 = vrot.slane %v6961, 2
        %v6968 = vsel %vm399, %v6966, %v6967
        %v6969 = vrot.slane %v6962, 2
        %v6970 = vsel %vm399, %v6967, %v6969
        %6971 = vrot.lane.b32.xlu0 %v6968, 126
        %v6972 = vpop.permute.xlu0 %6971
        %6973 = vrot.lane.b32.xlu0 %v6970, 126
        %v6974 = vpop.permute.xlu0 %6973
        %v6977 = vadd.f32 %v6956, %v6972
        %v6978 = vadd.f32 %v6957, %v6974
        %s6979 = sld [smem:[#allocation8 + $0x183]]
        %v6980 = vstv %s6979
        %v6981 = vmul.f32 %v6980, %v5294
        %v6982 = vmul.f32 %v6980, %v5295
        %v6983 = vadd.f32 %v6977, %v6981
        %v6984 = vadd.f32 %v6978, %v6982
        %s6985 = sld [smem:[#allocation8 + $0x184]]
        %v6986 = vstv %s6985
        %v6987 = vmul.f32 %v6986, %v5294
        %v6988 = vmul.f32 %v6986, %v5295
        %6991 = vrot.lane.b32.xlu0 %v6987, 127
        %v6992 = vpop.permute.xlu0 %6991
        %6993 = vrot.lane.b32.xlu0 %v6988, 127
        %v6994 = vpop.permute.xlu0 %6993
        %v6997 = vadd.f32 %v6983, %v6992
        %v6998 = vadd.f32 %v6984, %v6994
        %s6999 = sld [smem:[#allocation8 + $0x185]]
        %v7000 = vstv %s6999
        %v7001 = vmul.f32 %v7000, %v5294
        %v7002 = vmul.f32 %v7000, %v5295
        %7005 = vrot.lane.b32.xlu0 %v7001, 126
        %v7006 = vpop.permute.xlu0 %7005
        %7007 = vrot.lane.b32.xlu0 %v7002, 126
        %v7008 = vpop.permute.xlu0 %7007
        %v7011 = vadd.f32 %v6997, %v7006
        %v7012 = vadd.f32 %v6998, %v7008
        %s7013 = sld [smem:[#allocation8 + $0x186]]
        %v7014 = vstv %s7013
        %v7015 = vmul.f32 %v7014, %v5294
        %v7016 = vmul.f32 %v7014, %v5295
        %v7017 = vmul.f32 %v7014, %v5296
        %v7021 = vrot.slane %v7015, 1
        %v7022 = vrot.slane %v7016, 1
        %v7023 = vsel %vm339, %v7021, %v7022
        %v7024 = vrot.slane %v7017, 1
        %v7025 = vsel %vm339, %v7022, %v7024
        %v7028 = vadd.f32 %v7011, %v7023
        %v7029 = vadd.f32 %v7012, %v7025
        %s7030 = sld [smem:[#allocation8 + $0x187]]
        %v7031 = vstv %s7030
        %v7032 = vmul.f32 %v7031, %v5294
        %v7033 = vmul.f32 %v7031, %v5295
        %v7034 = vmul.f32 %v7031, %v5296
        %v7038 = vrot.slane %v7032, 1
        %v7039 = vrot.slane %v7033, 1
        %v7040 = vsel %vm339, %v7038, %v7039
        %v7041 = vrot.slane %v7034, 1
        %v7042 = vsel %vm339, %v7039, %v7041
        %7043 = vrot.lane.b32.xlu0 %v7040, 127
        %v7044 = vpop.permute.xlu0 %7043
        %7045 = vrot.lane.b32.xlu0 %v7042, 127
        %v7046 = vpop.permute.xlu0 %7045
        %v7049 = vadd.f32 %v7028, %v7044
        %v7050 = vadd.f32 %v7029, %v7046
        %s7051 = sld [smem:[#allocation8 + $0x188]]
        %v7052 = vstv %s7051
        %v7053 = vmul.f32 %v7052, %v5294
        %v7054 = vmul.f32 %v7052, %v5295
        %v7055 = vmul.f32 %v7052, %v5296
        %v7059 = vrot.slane %v7053, 1
        %v7060 = vrot.slane %v7054, 1
        %v7061 = vsel %vm339, %v7059, %v7060
        %v7062 = vrot.slane %v7055, 1
        %v7063 = vsel %vm339, %v7060, %v7062
        %7064 = vrot.lane.b32.xlu0 %v7061, 126
        %v7065 = vpop.permute.xlu0 %7064
        %7066 = vrot.lane.b32.xlu0 %v7063, 126
        %v7067 = vpop.permute.xlu0 %7066
        %v7070 = vadd.f32 %v7049, %v7065
        %v7071 = vadd.f32 %v7050, %v7067
        %s7072 = sld [smem:[#allocation8 + $0x189]]
        %v7073 = vstv %s7072
        %v7074 = vmul.f32 %v7073, %v5294
        %v7075 = vmul.f32 %v7073, %v5295
        %v7076 = vmul.f32 %v7073, %v5296
        %v7080 = vrot.slane %v7074, 2
        %v7081 = vrot.slane %v7075, 2
        %v7082 = vsel %vm399, %v7080, %v7081
        %v7083 = vrot.slane %v7076, 2
        %v7084 = vsel %vm399, %v7081, %v7083
        %v7087 = vadd.f32 %v7070, %v7082
        %v7088 = vadd.f32 %v7071, %v7084
        %s7089 = sld [smem:[#allocation8 + $0x18a]]
        %v7090 = vstv %s7089
        %v7091 = vmul.f32 %v7090, %v5294
        %v7092 = vmul.f32 %v7090, %v5295
        %v7093 = vmul.f32 %v7090, %v5296
        %v7097 = vrot.slane %v7091, 2
        %v7098 = vrot.slane %v7092, 2
        %v7099 = vsel %vm399, %v7097, %v7098
        %v7100 = vrot.slane %v7093, 2
        %v7101 = vsel %vm399, %v7098, %v7100
        %7102 = vrot.lane.b32.xlu0 %v7099, 127
        %v7103 = vpop.permute.xlu0 %7102
        %7104 = vrot.lane.b32.xlu0 %v7101, 127
        %v7105 = vpop.permute.xlu0 %7104
        %v7108 = vadd.f32 %v7087, %v7103
        %v7109 = vadd.f32 %v7088, %v7105
        %s7110 = sld [smem:[#allocation8 + $0x18b]]
        %v7111 = vstv %s7110
        %v7112 = vmul.f32 %v7111, %v5294
        %v7113 = vmul.f32 %v7111, %v5295
        %v7114 = vmul.f32 %v7111, %v5296
        %v7118 = vrot.slane %v7112, 2
        %v7119 = vrot.slane %v7113, 2
        %v7120 = vsel %vm399, %v7118, %v7119
        %v7121 = vrot.slane %v7114, 2
        %v7122 = vsel %vm399, %v7119, %v7121
        %7123 = vrot.lane.b32.xlu0 %v7120, 126
        %v7124 = vpop.permute.xlu0 %7123
        %7125 = vrot.lane.b32.xlu0 %v7122, 126
        %v7126 = vpop.permute.xlu0 %7125
        %v7129 = vadd.f32 %v7108, %v7124
        %v7130 = vadd.f32 %v7109, %v7126
        %v7131 = vmax.f32 %v7129, 0.0
        %v7132 = vmax.f32 %v7130, 0.0
        %s7133 = sld [smem:[#allocation9 + $0xb]]
        %v7134 = vstv %s7133
        %s7135 = sld [smem:[#allocation8 + $0x18c]]
        %v7136 = vstv %s7135
        %v7137 = vmul.f32 %v7136, %v5285
        %v7138 = vmul.f32 %v7136, %v5286
        %v7139 = vadd.f32 %v7134, %v7137
        %v7140 = vadd.f32 %v7134, %v7138
        %s7141 = sld [smem:[#allocation8 + $0x18d]]
        %v7142 = vstv %s7141
        %v7143 = vmul.f32 %v7142, %v5285
        %v7144 = vmul.f32 %v7142, %v5286
        %7147 = vrot.lane.b32.xlu0 %v7143, 127
        %v7148 = vpop.permute.xlu0 %7147
        %7149 = vrot.lane.b32.xlu0 %v7144, 127
        %v7150 = vpop.permute.xlu0 %7149
        %v7153 = vadd.f32 %v7139, %v7148
        %v7154 = vadd.f32 %v7140, %v7150
        %s7155 = sld [smem:[#allocation8 + $0x18e]]
        %v7156 = vstv %s7155
        %v7157 = vmul.f32 %v7156, %v5285
        %v7158 = vmul.f32 %v7156, %v5286
        %7161 = vrot.lane.b32.xlu0 %v7157, 126
        %v7162 = vpop.permute.xlu0 %7161
        %7163 = vrot.lane.b32.xlu0 %v7158, 126
        %v7164 = vpop.permute.xlu0 %7163
        %v7167 = vadd.f32 %v7153, %v7162
        %v7168 = vadd.f32 %v7154, %v7164
        %s7169 = sld [smem:[#allocation8 + $0x18f]]
        %v7170 = vstv %s7169
        %v7171 = vmul.f32 %v7170, %v5285
        %v7172 = vmul.f32 %v7170, %v5286
        %v7173 = vmul.f32 %v7170, %v5287
        %v7177 = vrot.slane %v7171, 1
        %v7178 = vrot.slane %v7172, 1
        %v7179 = vsel %vm339, %v7177, %v7178
        %v7180 = vrot.slane %v7173, 1
        %v7181 = vsel %vm339, %v7178, %v7180
        %v7184 = vadd.f32 %v7167, %v7179
        %v7185 = vadd.f32 %v7168, %v7181
        %s7186 = sld [smem:[#allocation8 + $0x190]]
        %v7187 = vstv %s7186
        %v7188 = vmul.f32 %v7187, %v5285
        %v7189 = vmul.f32 %v7187, %v5286
        %v7190 = vmul.f32 %v7187, %v5287
        %v7194 = vrot.slane %v7188, 1
        %v7195 = vrot.slane %v7189, 1
        %v7196 = vsel %vm339, %v7194, %v7195
        %v7197 = vrot.slane %v7190, 1
        %v7198 = vsel %vm339, %v7195, %v7197
        %7199 = vrot.lane.b32.xlu0 %v7196, 127
        %v7200 = vpop.permute.xlu0 %7199
        %7201 = vrot.lane.b32.xlu0 %v7198, 127
        %v7202 = vpop.permute.xlu0 %7201
        %v7205 = vadd.f32 %v7184, %v7200
        %v7206 = vadd.f32 %v7185, %v7202
        %s7207 = sld [smem:[#allocation8 + $0x191]]
        %v7208 = vstv %s7207
        %v7209 = vmul.f32 %v7208, %v5285
        %v7210 = vmul.f32 %v7208, %v5286
        %v7211 = vmul.f32 %v7208, %v5287
        %v7215 = vrot.slane %v7209, 1
        %v7216 = vrot.slane %v7210, 1
        %v7217 = vsel %vm339, %v7215, %v7216
        %v7218 = vrot.slane %v7211, 1
        %v7219 = vsel %vm339, %v7216, %v7218
        %7220 = vrot.lane.b32.xlu0 %v7217, 126
        %v7221 = vpop.permute.xlu0 %7220
        %7222 = vrot.lane.b32.xlu0 %v7219, 126
        %v7223 = vpop.permute.xlu0 %7222
        %v7226 = vadd.f32 %v7205, %v7221
        %v7227 = vadd.f32 %v7206, %v7223
        %s7228 = sld [smem:[#allocation8 + $0x192]]
        %v7229 = vstv %s7228
        %v7230 = vmul.f32 %v7229, %v5285
        %v7231 = vmul.f32 %v7229, %v5286
        %v7232 = vmul.f32 %v7229, %v5287
        %v7236 = vrot.slane %v7230, 2
        %v7237 = vrot.slane %v7231, 2
        %v7238 = vsel %vm399, %v7236, %v7237
        %v7239 = vrot.slane %v7232, 2
        %v7240 = vsel %vm399, %v7237, %v7239
        %v7243 = vadd.f32 %v7226, %v7238
        %v7244 = vadd.f32 %v7227, %v7240
        %s7245 = sld [smem:[#allocation8 + $0x193]]
        %v7246 = vstv %s7245
        %v7247 = vmul.f32 %v7246, %v5285
        %v7248 = vmul.f32 %v7246, %v5286
        %v7249 = vmul.f32 %v7246, %v5287
        %v7253 = vrot.slane %v7247, 2
        %v7254 = vrot.slane %v7248, 2
        %v7255 = vsel %vm399, %v7253, %v7254
        %v7256 = vrot.slane %v7249, 2
        %v7257 = vsel %vm399, %v7254, %v7256
        %7258 = vrot.lane.b32.xlu0 %v7255, 127
        %v7259 = vpop.permute.xlu0 %7258
        %7260 = vrot.lane.b32.xlu0 %v7257, 127
        %v7261 = vpop.permute.xlu0 %7260
        %v7264 = vadd.f32 %v7243, %v7259
        %v7265 = vadd.f32 %v7244, %v7261
        %s7266 = sld [smem:[#allocation8 + $0x194]]
        %v7267 = vstv %s7266
        %v7268 = vmul.f32 %v7267, %v5285
        %v7269 = vmul.f32 %v7267, %v5286
        %v7270 = vmul.f32 %v7267, %v5287
        %v7274 = vrot.slane %v7268, 2
        %v7275 = vrot.slane %v7269, 2
        %v7276 = vsel %vm399, %v7274, %v7275
        %v7277 = vrot.slane %v7270, 2
        %v7278 = vsel %vm399, %v7275, %v7277
        %7279 = vrot.lane.b32.xlu0 %v7276, 126
        %v7280 = vpop.permute.xlu0 %7279
        %7281 = vrot.lane.b32.xlu0 %v7278, 126
        %v7282 = vpop.permute.xlu0 %7281
        %v7285 = vadd.f32 %v7264, %v7280
        %v7286 = vadd.f32 %v7265, %v7282
        %s7287 = sld [smem:[#allocation8 + $0x195]]
        %v7288 = vstv %s7287
        %v7289 = vmul.f32 %v7288, %v5288
        %v7290 = vmul.f32 %v7288, %v5289
        %v7291 = vadd.f32 %v7285, %v7289
        %v7292 = vadd.f32 %v7286, %v7290
        %s7293 = sld [smem:[#allocation8 + $0x196]]
        %v7294 = vstv %s7293
        %v7295 = vmul.f32 %v7294, %v5288
        %v7296 = vmul.f32 %v7294, %v5289
        %7299 = vrot.lane.b32.xlu0 %v7295, 127
        %v7300 = vpop.permute.xlu0 %7299
        %7301 = vrot.lane.b32.xlu0 %v7296, 127
        %v7302 = vpop.permute.xlu0 %7301
        %v7305 = vadd.f32 %v7291, %v7300
        %v7306 = vadd.f32 %v7292, %v7302
        %s7307 = sld [smem:[#allocation8 + $0x197]]
        %v7308 = vstv %s7307
        %v7309 = vmul.f32 %v7308, %v5288
        %v7310 = vmul.f32 %v7308, %v5289
        %7313 = vrot.lane.b32.xlu0 %v7309, 126
        %v7314 = vpop.permute.xlu0 %7313
        %7315 = vrot.lane.b32.xlu0 %v7310, 126
        %v7316 = vpop.permute.xlu0 %7315
        %v7319 = vadd.f32 %v7305, %v7314
        %v7320 = vadd.f32 %v7306, %v7316
        %s7321 = sld [smem:[#allocation8 + $0x198]]
        %v7322 = vstv %s7321
        %v7323 = vmul.f32 %v7322, %v5288
        %v7324 = vmul.f32 %v7322, %v5289
        %v7325 = vmul.f32 %v7322, %v5290
        %v7329 = vrot.slane %v7323, 1
        %v7330 = vrot.slane %v7324, 1
        %v7331 = vsel %vm339, %v7329, %v7330
        %v7332 = vrot.slane %v7325, 1
        %v7333 = vsel %vm339, %v7330, %v7332
        %v7336 = vadd.f32 %v7319, %v7331
        %v7337 = vadd.f32 %v7320, %v7333
        %s7338 = sld [smem:[#allocation8 + $0x199]]
        %v7339 = vstv %s7338
        %v7340 = vmul.f32 %v7339, %v5288
        %v7341 = vmul.f32 %v7339, %v5289
        %v7342 = vmul.f32 %v7339, %v5290
        %v7346 = vrot.slane %v7340, 1
        %v7347 = vrot.slane %v7341, 1
        %v7348 = vsel %vm339, %v7346, %v7347
        %v7349 = vrot.slane %v7342, 1
        %v7350 = vsel %vm339, %v7347, %v7349
        %7351 = vrot.lane.b32.xlu0 %v7348, 127
        %v7352 = vpop.permute.xlu0 %7351
        %7353 = vrot.lane.b32.xlu0 %v7350, 127
        %v7354 = vpop.permute.xlu0 %7353
        %v7357 = vadd.f32 %v7336, %v7352
        %v7358 = vadd.f32 %v7337, %v7354
        %s7359 = sld [smem:[#allocation8 + $0x19a]]
        %v7360 = vstv %s7359
        %v7361 = vmul.f32 %v7360, %v5288
        %v7362 = vmul.f32 %v7360, %v5289
        %v7363 = vmul.f32 %v7360, %v5290
        %v7367 = vrot.slane %v7361, 1
        %v7368 = vrot.slane %v7362, 1
        %v7369 = vsel %vm339, %v7367, %v7368
        %v7370 = vrot.slane %v7363, 1
        %v7371 = vsel %vm339, %v7368, %v7370
        %7372 = vrot.lane.b32.xlu0 %v7369, 126
        %v7373 = vpop.permute.xlu0 %7372
        %7374 = vrot.lane.b32.xlu0 %v7371, 126
        %v7375 = vpop.permute.xlu0 %7374
        %v7378 = vadd.f32 %v7357, %v7373
        %v7379 = vadd.f32 %v7358, %v7375
        %s7380 = sld [smem:[#allocation8 + $0x19b]]
        %v7381 = vstv %s7380
        %v7382 = vmul.f32 %v7381, %v5288
        %v7383 = vmul.f32 %v7381, %v5289
        %v7384 = vmul.f32 %v7381, %v5290
        %v7388 = vrot.slane %v7382, 2
        %v7389 = vrot.slane %v7383, 2
        %v7390 = vsel %vm399, %v7388, %v7389
        %v7391 = vrot.slane %v7384, 2
        %v7392 = vsel %vm399, %v7389, %v7391
        %v7395 = vadd.f32 %v7378, %v7390
        %v7396 = vadd.f32 %v7379, %v7392
        %s7397 = sld [smem:[#allocation8 + $0x19c]]
        %v7398 = vstv %s7397
        %v7399 = vmul.f32 %v7398, %v5288
        %v7400 = vmul.f32 %v7398, %v5289
        %v7401 = vmul.f32 %v7398, %v5290
        %v7405 = vrot.slane %v7399, 2
        %v7406 = vrot.slane %v7400, 2
        %v7407 = vsel %vm399, %v7405, %v7406
        %v7408 = vrot.slane %v7401, 2
        %v7409 = vsel %vm399, %v7406, %v7408
        %7410 = vrot.lane.b32.xlu0 %v7407, 127
        %v7411 = vpop.permute.xlu0 %7410
        %7412 = vrot.lane.b32.xlu0 %v7409, 127
        %v7413 = vpop.permute.xlu0 %7412
        %v7416 = vadd.f32 %v7395, %v7411
        %v7417 = vadd.f32 %v7396, %v7413
        %s7418 = sld [smem:[#allocation8 + $0x19d]]
        %v7419 = vstv %s7418
        %v7420 = vmul.f32 %v7419, %v5288
        %v7421 = vmul.f32 %v7419, %v5289
        %v7422 = vmul.f32 %v7419, %v5290
        %v7426 = vrot.slane %v7420, 2
        %v7427 = vrot.slane %v7421, 2
        %v7428 = vsel %vm399, %v7426, %v7427
        %v7429 = vrot.slane %v7422, 2
        %v7430 = vsel %vm399, %v7427, %v7429
        %7431 = vrot.lane.b32.xlu0 %v7428, 126
        %v7432 = vpop.permute.xlu0 %7431
        %7433 = vrot.lane.b32.xlu0 %v7430, 126
        %v7434 = vpop.permute.xlu0 %7433
        %v7437 = vadd.f32 %v7416, %v7432
        %v7438 = vadd.f32 %v7417, %v7434
        %s7439 = sld [smem:[#allocation8 + $0x19e]]
        %v7440 = vstv %s7439
        %v7441 = vmul.f32 %v7440, %v5291
        %v7442 = vmul.f32 %v7440, %v5292
        %v7443 = vadd.f32 %v7437, %v7441
        %v7444 = vadd.f32 %v7438, %v7442
        %s7445 = sld [smem:[#allocation8 + $0x19f]]
        %v7446 = vstv %s7445
        %v7447 = vmul.f32 %v7446, %v5291
        %v7448 = vmul.f32 %v7446, %v5292
        %7451 = vrot.lane.b32.xlu0 %v7447, 127
        %v7452 = vpop.permute.xlu0 %7451
        %7453 = vrot.lane.b32.xlu0 %v7448, 127
        %v7454 = vpop.permute.xlu0 %7453
        %v7457 = vadd.f32 %v7443, %v7452
        %v7458 = vadd.f32 %v7444, %v7454
        %s7459 = sld [smem:[#allocation8 + $0x1a0]]
        %v7460 = vstv %s7459
        %v7461 = vmul.f32 %v7460, %v5291
        %v7462 = vmul.f32 %v7460, %v5292
        %7465 = vrot.lane.b32.xlu0 %v7461, 126
        %v7466 = vpop.permute.xlu0 %7465
        %7467 = vrot.lane.b32.xlu0 %v7462, 126
        %v7468 = vpop.permute.xlu0 %7467
        %v7471 = vadd.f32 %v7457, %v7466
        %v7472 = vadd.f32 %v7458, %v7468
        %s7473 = sld [smem:[#allocation8 + $0x1a1]]
        %v7474 = vstv %s7473
        %v7475 = vmul.f32 %v7474, %v5291
        %v7476 = vmul.f32 %v7474, %v5292
        %v7477 = vmul.f32 %v7474, %v5293
        %v7481 = vrot.slane %v7475, 1
        %v7482 = vrot.slane %v7476, 1
        %v7483 = vsel %vm339, %v7481, %v7482
        %v7484 = vrot.slane %v7477, 1
        %v7485 = vsel %vm339, %v7482, %v7484
        %v7488 = vadd.f32 %v7471, %v7483
        %v7489 = vadd.f32 %v7472, %v7485
        %s7490 = sld [smem:[#allocation8 + $0x1a2]]
        %v7491 = vstv %s7490
        %v7492 = vmul.f32 %v7491, %v5291
        %v7493 = vmul.f32 %v7491, %v5292
        %v7494 = vmul.f32 %v7491, %v5293
        %v7498 = vrot.slane %v7492, 1
        %v7499 = vrot.slane %v7493, 1
        %v7500 = vsel %vm339, %v7498, %v7499
        %v7501 = vrot.slane %v7494, 1
        %v7502 = vsel %vm339, %v7499, %v7501
        %7503 = vrot.lane.b32.xlu0 %v7500, 127
        %v7504 = vpop.permute.xlu0 %7503
        %7505 = vrot.lane.b32.xlu0 %v7502, 127
        %v7506 = vpop.permute.xlu0 %7505
        %v7509 = vadd.f32 %v7488, %v7504
        %v7510 = vadd.f32 %v7489, %v7506
        %s7511 = sld [smem:[#allocation8 + $0x1a3]]
        %v7512 = vstv %s7511
        %v7513 = vmul.f32 %v7512, %v5291
        %v7514 = vmul.f32 %v7512, %v5292
        %v7515 = vmul.f32 %v7512, %v5293
        %v7519 = vrot.slane %v7513, 1
        %v7520 = vrot.slane %v7514, 1
        %v7521 = vsel %vm339, %v7519, %v7520
        %v7522 = vrot.slane %v7515, 1
        %v7523 = vsel %vm339, %v7520, %v7522
        %7524 = vrot.lane.b32.xlu0 %v7521, 126
        %v7525 = vpop.permute.xlu0 %7524
        %7526 = vrot.lane.b32.xlu0 %v7523, 126
        %v7527 = vpop.permute.xlu0 %7526
        %v7530 = vadd.f32 %v7509, %v7525
        %v7531 = vadd.f32 %v7510, %v7527
        %s7532 = sld [smem:[#allocation8 + $0x1a4]]
        %v7533 = vstv %s7532
        %v7534 = vmul.f32 %v7533, %v5291
        %v7535 = vmul.f32 %v7533, %v5292
        %v7536 = vmul.f32 %v7533, %v5293
        %v7540 = vrot.slane %v7534, 2
        %v7541 = vrot.slane %v7535, 2
        %v7542 = vsel %vm399, %v7540, %v7541
        %v7543 = vrot.slane %v7536, 2
        %v7544 = vsel %vm399, %v7541, %v7543
        %v7547 = vadd.f32 %v7530, %v7542
        %v7548 = vadd.f32 %v7531, %v7544
        %s7549 = sld [smem:[#allocation8 + $0x1a5]]
        %v7550 = vstv %s7549
        %v7551 = vmul.f32 %v7550, %v5291
        %v7552 = vmul.f32 %v7550, %v5292
        %v7553 = vmul.f32 %v7550, %v5293
        %v7557 = vrot.slane %v7551, 2
        %v7558 = vrot.slane %v7552, 2
        %v7559 = vsel %vm399, %v7557, %v7558
        %v7560 = vrot.slane %v7553, 2
        %v7561 = vsel %vm399, %v7558, %v7560
        %7562 = vrot.lane.b32.xlu0 %v7559, 127
        %v7563 = vpop.permute.xlu0 %7562
        %7564 = vrot.lane.b32.xlu0 %v7561, 127
        %v7565 = vpop.permute.xlu0 %7564
        %v7568 = vadd.f32 %v7547, %v7563
        %v7569 = vadd.f32 %v7548, %v7565
        %s7570 = sld [smem:[#allocation8 + $0x1a6]]
        %v7571 = vstv %s7570
        %v7572 = vmul.f32 %v7571, %v5291
        %v7573 = vmul.f32 %v7571, %v5292
        %v7574 = vmul.f32 %v7571, %v5293
        %v7578 = vrot.slane %v7572, 2
        %v7579 = vrot.slane %v7573, 2
        %v7580 = vsel %vm399, %v7578, %v7579
        %v7581 = vrot.slane %v7574, 2
        %v7582 = vsel %vm399, %v7579, %v7581
        %7583 = vrot.lane.b32.xlu0 %v7580, 126
        %v7584 = vpop.permute.xlu0 %7583
        %7585 = vrot.lane.b32.xlu0 %v7582, 126
        %v7586 = vpop.permute.xlu0 %7585
        %v7589 = vadd.f32 %v7568, %v7584
        %v7590 = vadd.f32 %v7569, %v7586
        %s7591 = sld [smem:[#allocation8 + $0x1a7]]
        %v7592 = vstv %s7591
        %v7593 = vmul.f32 %v7592, %v5294
        %v7594 = vmul.f32 %v7592, %v5295
        %v7595 = vadd.f32 %v7589, %v7593
        %v7596 = vadd.f32 %v7590, %v7594
        %s7597 = sld [smem:[#allocation8 + $0x1a8]]
        %v7598 = vstv %s7597
        %v7599 = vmul.f32 %v7598, %v5294
        %v7600 = vmul.f32 %v7598, %v5295
        %7603 = vrot.lane.b32.xlu0 %v7599, 127
        %v7604 = vpop.permute.xlu0 %7603
        %7605 = vrot.lane.b32.xlu0 %v7600, 127
        %v7606 = vpop.permute.xlu0 %7605
        %v7609 = vadd.f32 %v7595, %v7604
        %v7610 = vadd.f32 %v7596, %v7606
        %s7611 = sld [smem:[#allocation8 + $0x1a9]]
        %v7612 = vstv %s7611
        %v7613 = vmul.f32 %v7612, %v5294
        %v7614 = vmul.f32 %v7612, %v5295
        %7617 = vrot.lane.b32.xlu0 %v7613, 126
        %v7618 = vpop.permute.xlu0 %7617
        %7619 = vrot.lane.b32.xlu0 %v7614, 126
        %v7620 = vpop.permute.xlu0 %7619
        %v7623 = vadd.f32 %v7609, %v7618
        %v7624 = vadd.f32 %v7610, %v7620
        %s7625 = sld [smem:[#allocation8 + $0x1aa]]
        %v7626 = vstv %s7625
        %v7627 = vmul.f32 %v7626, %v5294
        %v7628 = vmul.f32 %v7626, %v5295
        %v7629 = vmul.f32 %v7626, %v5296
        %v7633 = vrot.slane %v7627, 1
        %v7634 = vrot.slane %v7628, 1
        %v7635 = vsel %vm339, %v7633, %v7634
        %v7636 = vrot.slane %v7629, 1
        %v7637 = vsel %vm339, %v7634, %v7636
        %v7640 = vadd.f32 %v7623, %v7635
        %v7641 = vadd.f32 %v7624, %v7637
        %s7642 = sld [smem:[#allocation8 + $0x1ab]]
        %v7643 = vstv %s7642
        %v7644 = vmul.f32 %v7643, %v5294
        %v7645 = vmul.f32 %v7643, %v5295
        %v7646 = vmul.f32 %v7643, %v5296
        %v7650 = vrot.slane %v7644, 1
        %v7651 = vrot.slane %v7645, 1
        %v7652 = vsel %vm339, %v7650, %v7651
        %v7653 = vrot.slane %v7646, 1
        %v7654 = vsel %vm339, %v7651, %v7653
        %7655 = vrot.lane.b32.xlu0 %v7652, 127
        %v7656 = vpop.permute.xlu0 %7655
        %7657 = vrot.lane.b32.xlu0 %v7654, 127
        %v7658 = vpop.permute.xlu0 %7657
        %v7661 = vadd.f32 %v7640, %v7656
        %v7662 = vadd.f32 %v7641, %v7658
        %s7663 = sld [smem:[#allocation8 + $0x1ac]]
        %v7664 = vstv %s7663
        %v7665 = vmul.f32 %v7664, %v5294
        %v7666 = vmul.f32 %v7664, %v5295
        %v7667 = vmul.f32 %v7664, %v5296
        %v7671 = vrot.slane %v7665, 1
        %v7672 = vrot.slane %v7666, 1
        %v7673 = vsel %vm339, %v7671, %v7672
        %v7674 = vrot.slane %v7667, 1
        %v7675 = vsel %vm339, %v7672, %v7674
        %7676 = vrot.lane.b32.xlu0 %v7673, 126
        %v7677 = vpop.permute.xlu0 %7676
        %7678 = vrot.lane.b32.xlu0 %v7675, 126
        %v7679 = vpop.permute.xlu0 %7678
        %v7682 = vadd.f32 %v7661, %v7677
        %v7683 = vadd.f32 %v7662, %v7679
        %s7684 = sld [smem:[#allocation8 + $0x1ad]]
        %v7685 = vstv %s7684
        %v7686 = vmul.f32 %v7685, %v5294
        %v7687 = vmul.f32 %v7685, %v5295
        %v7688 = vmul.f32 %v7685, %v5296
        %v7692 = vrot.slane %v7686, 2
        %v7693 = vrot.slane %v7687, 2
        %v7694 = vsel %vm399, %v7692, %v7693
        %v7695 = vrot.slane %v7688, 2
        %v7696 = vsel %vm399, %v7693, %v7695
        %v7699 = vadd.f32 %v7682, %v7694
        %v7700 = vadd.f32 %v7683, %v7696
        %s7701 = sld [smem:[#allocation8 + $0x1ae]]
        %v7702 = vstv %s7701
        %v7703 = vmul.f32 %v7702, %v5294
        %v7704 = vmul.f32 %v7702, %v5295
        %v7705 = vmul.f32 %v7702, %v5296
        %v7709 = vrot.slane %v7703, 2
        %v7710 = vrot.slane %v7704, 2
        %v7711 = vsel %vm399, %v7709, %v7710
        %v7712 = vrot.slane %v7705, 2
        %v7713 = vsel %vm399, %v7710, %v7712
        %7714 = vrot.lane.b32.xlu0 %v7711, 127
        %v7715 = vpop.permute.xlu0 %7714
        %7716 = vrot.lane.b32.xlu0 %v7713, 127
        %v7717 = vpop.permute.xlu0 %7716
        %v7720 = vadd.f32 %v7699, %v7715
        %v7721 = vadd.f32 %v7700, %v7717
        %s7722 = sld [smem:[#allocation8 + $0x1af]]
        %v7723 = vstv %s7722
        %v7724 = vmul.f32 %v7723, %v5294
        %v7725 = vmul.f32 %v7723, %v5295
        %v7726 = vmul.f32 %v7723, %v5296
        %v7730 = vrot.slane %v7724, 2
        %v7731 = vrot.slane %v7725, 2
        %v7732 = vsel %vm399, %v7730, %v7731
        %v7733 = vrot.slane %v7726, 2
        %v7734 = vsel %vm399, %v7731, %v7733
        %7735 = vrot.lane.b32.xlu0 %v7732, 126
        %v7736 = vpop.permute.xlu0 %7735
        %7737 = vrot.lane.b32.xlu0 %v7734, 126
        %v7738 = vpop.permute.xlu0 %7737
        %v7741 = vadd.f32 %v7720, %v7736
        %v7742 = vadd.f32 %v7721, %v7738
        %v7743 = vmax.f32 %v7741, 0.0
        %v7744 = vmax.f32 %v7742, 0.0
        %vm7745 = vcmask 130048
        %7746 = vst.msk [vmem:[%s213] sm:$0xff] %vm7745, %v5907
        %7747 = vst.msk [vmem:[%s213 + $0x8] sm:$0xff] %vm7745, %v5908
        %s7748 = scalar_lea.vmem %s213, 16 [#allocation10]
        %7749 = vst.msk [vmem:[%s7748] sm:$0xff] %vm7745, %v6519
        %7750 = vst.msk [vmem:[%s7748 + $0x8] sm:$0xff] %vm7745, %v6520
        %s7751 = scalar_lea.vmem %s213, 32 [#allocation10]
        %7752 = vst.msk [vmem:[%s7751] sm:$0xff] %vm7745, %v7131
        %7753 = vst.msk [vmem:[%s7751 + $0x8] sm:$0xff] %vm7745, %v7132
        %s7754 = scalar_lea.vmem %s213, 48 [#allocation10]
        %7755 = vst.msk [vmem:[%s7754] sm:$0xff] %vm7745, %v7743
        %7756 = vst.msk [vmem:[%s7754 + $0x8] sm:$0xff] %vm7745, %v7744
        %s7757 = sand.u32 %s98, 1
        %s7758 = scalar_lea.sflag [#allocation5], %s7757
        %s7759 = sand.u32 %s98, 1
        %s7760 = smul.addr %s7759, 64
        %s7761 = scalar_lea.vmem [#allocation10], %s7760
        // Predicated region
        $region45: #{tpu_custom_call.1} parent=31 // pred_check
          %p7762 = pneg %p108
        $region46: #{tpu_custom_call.1} parent=31 // pred_check_branch
          %7764 = sbr.rel (%p7762) target = $region48
        $region47: #{tpu_custom_call.1} parent=31 // pred_region
          %s7766 = ssub.s32 1024, 1024
          %7767 = vsyncadd %s7758, %s7766
          %s7768 = smul.addr %s22, 8
          %s7769 = smul.addr %s7768, 128
          %s7770 = scalar_lea.hbm %s3, %s7769
          %s7771 = sshll.u32 %s7761, 4
          %s7772 = int_to_ptr.vmem [resolvable:$true] %s7771
          %7777 = dma.vmem_to_hbm [thread:$0]  %s7772, 1024, %s7770, %s7758, 128, 128, 8
        $region48: #{tpu_custom_call.1} parent=31 // pred_fallthru
          _
      $region32: #{tpu_custom_call.1} parent=5 // pred_fallthru
        _
      %p7778 = scmp.le.s32.totalorder 2, %s17
      // Predicated region
      $region49: #{tpu_custom_call.1} parent=5 // pred_check
        %p7779 = pneg %p7778
      $region50: #{tpu_custom_call.1} parent=5 // pred_check_branch
        %7781 = sbr.rel (%p7779) target = $region52
      $region51: #{tpu_custom_call.1} parent=5 // pred_region
        %s7782 = ssub.s32 %s17, 2
        // Predicated region
        $region53: #{tpu_custom_call.1} parent=51 // pred_check
          %p7783 = pneg %p114
        $region54: #{tpu_custom_call.1} parent=51 // pred_check_branch
          %7785 = sbr.rel (%p7783) target = $region56
        $region55: #{tpu_custom_call.1} parent=51 // pred_region
          %s7786 = sand.u32 %s99, 1
          %s7787 = scalar_lea.sflag [#allocation5], %s7786
          %s7788 = sand.u32 %s99, 1
          %s7789 = smul.addr %s7788, 64
          %s7790 = scalar_lea.vmem [#allocation10], %s7789
          %7791 = dma.done %s7787, 1024
        $region56: #{tpu_custom_call.1} parent=51 // pred_fallthru
          _
      $region52: #{tpu_custom_call.1} parent=5 // pred_fallthru
        _
    $region6: #{tpu_custom_call.1} parent=1 // loop_footer
      %s21 = sadd.s32 1, %s17
    $region7: #{tpu_custom_call.1} parent=1 // loop_footer_branch
      %16 = sbr.rel target = $region3
    $region8: #{tpu_custom_call.1} parent=1 // loop_exit
      _
    %7792 = vsyncpa [#allocation4], 1
    %s7793 = scalar_lea.sflag [#allocation4], 1
    %7794 = vsyncpa %s7793, 1
    %7795 = vsyncpa [#allocation5], 1
    %s7796 = scalar_lea.sflag [#allocation5], 1
    %7797 = vsyncpa %s7796, 1
    %7798 = vsyncpa [#allocation6], 1
    %s7799 = scalar_lea.sflag [#allocation6], 1
    %7800 = vsyncpa %s7799, 1
    %7801 = vsyncpa [#allocation7], 1
    %s7802 = scalar_lea.sflag [#allocation7], 1
    %7803 = vsyncpa %s7802, 1

</llo_original>
